<compile_context>
chip_gen: v6e
topology: v6e:2x2x1
jax: 0.10.0
libtpu: 0.0.40
codegen_flags: <defaults>
</compile_context>

<pallas_src>
import functools

import numpy as np

import jax
import jax.numpy as jnp
from jax import lax
from jax.experimental import pallas as pl
from jax.experimental.pallas import tpu as pltpu


# ----------------------------------------------------------------------------
# Host-side weight layout conversion (PyTorch layouts -> kernel layouts).
# ----------------------------------------------------------------------------
def conv3x3_w_to_taps(w):
    """PyTorch Conv2d weight (Cout, Cin, 3, 3) -> (9, Cin, Cout), tap = th*3+tw."""
    cout, cin, kh, kw = w.shape
    return jnp.transpose(w, (2, 3, 1, 0)).reshape(kh * kw, cin, cout)


def conv1x1_w_to_mat(w):
    """PyTorch Conv2d weight (Cout, Cin, 1, 1) -> (Cin, Cout)."""
    return jnp.transpose(w[:, :, 0, 0], (1, 0))


def tconv_w_to_s2d_taps(w, f):
    """ConvTranspose2d(4,2,1) weight (Cin, Cout, 4, 4) -> (9, f*f*Cin, 4*f*f*Cout).

    The layer's input is given space-to-depth packed by f
    (Z[u,v,(ri*f+rj)*Cin+c] = X[f*u+ri, f*v+rj, c]); the output is produced
    packed by 2f (O[u,v,(qi*2f+qj)*Cout+c] = Y[2f*u+qi, 2f*v+qj, c]).  With
    this block-sparse weight each transposed conv is a plain 3x3 conv of the
    1-zero-padded Z (taps th, tw in 0..2).  Derivation: for output sub-phase
    (qi, qj) and polyphase tap (dh, dw), beta = qi//2 + qi%2 + dh - 1 selects
    input phase-row ri and tap row th (beta=-1 -> th=0, ri=f-1; beta=f ->
    th=2, ri=0; else th=1, ri=beta), and the weight value is the original
    w[:, :, 3 - qi%2 - 2*dh, 3 - qj%2 - 2*dw] (validated polyphase mapping).
    """
    cin, cout, kh, kw = w.shape
    assert kh == 4 and kw == 4
    out = np.zeros((9, f * f * cin, 4 * f * f * cout), np.float32)
    for qi in range(2 * f):
        for qj in range(2 * f):
            pi, pj = qi % 2, qj % 2
            for dh in range(2):
                for dw in range(2):
                    bi = qi // 2 + pi + dh - 1
                    bj = qj // 2 + pj + dw - 1
                    if bi < 0:
                        th, ri = 0, f - 1
                    elif bi >= f:
                        th, ri = 2, 0
                    else:
                        th, ri = 1, bi
                    if bj < 0:
                        tw, rj = 0, f - 1
                    elif bj >= f:
                        tw, rj = 2, 0
                    else:
                        tw, rj = 1, bj
                    rb = (ri * f + rj) * cin
                    cb = (qi * 2 * f + qj) * cout
                    out[th * 3 + tw, rb:rb + cin, cb:cb + cout] = \
                        w[:, :, 3 - pi - 2 * dh, 3 - pj - 2 * dw]
    return out


# ----------------------------------------------------------------------------
# Fused decoder kernel (one grid step == one batch image).
# ----------------------------------------------------------------------------
def _decoder_kernel(*refs, n_res, n_tconv, relu_flags, pad_widths):
    x_ref = refs[0]
    wh_ref, bh_ref = refs[1], refs[2]
    res_refs = refs[3:3 + 4 * n_res]
    tc_refs = refs[3 + 4 * n_res:3 + 4 * n_res + 2 * n_tconv]
    o_ref = refs[3 + 4 * n_res + 2 * n_tconv]
    xp_refs = dict(zip(pad_widths, refs[4 + 4 * n_res + 2 * n_tconv:]))

    cdt = wh_ref.dtype                       # MXU operand dtype (bf16 or f32)
    h0, w0 = x_ref.shape[1], x_ref.shape[2]
    m = h0 * w0

    # Zero only the 1-px pad border, once per grid step (unconditional so it
    # is correct under megacore "parallel" partitioning); interiors are fully
    # overwritten before every read.
    for c, xp in xp_refs.items():
        xp[0:1, :, :] = jnp.zeros((1, w0 + 2, c), jnp.float32)
        xp[h0 + 1:h0 + 2, :, :] = jnp.zeros((1, w0 + 2, c), jnp.float32)
        xp[:, 0:1, :] = jnp.zeros((h0 + 2, 1, c), jnp.float32)
        xp[:, w0 + 1:w0 + 2, :] = jnp.zeros((h0 + 2, 1, c), jnp.float32)

    def conv3x3(xval, w_ref, b_ref):
        """xval: (m, Cin) f32; w_ref: (9, Cin, Cout); b_ref: (1, Cout) f32.
        Pad-write interior -> 9 per-tap 2D matmuls accumulated in f32."""
        cin, cout = w_ref.shape[1], w_ref.shape[2]
        xp = xp_refs[cin]
        xp[1:h0 + 1, 1:w0 + 1, :] = xval.reshape(h0, w0, cin)
        acc = jnp.broadcast_to(b_ref[...], (m, cout)).astype(jnp.float32)
        for th in range(3):
            for tw in range(3):
                win = xp[th:th + h0, tw:tw + w0, :].reshape(m, cin)
                acc = acc + jnp.dot(win.astype(cdt), w_ref[th * 3 + tw],
                                    preferred_element_type=jnp.float32)
        return acc

    cin0 = x_ref.shape[3]
    x0 = x_ref[0].reshape(m, cin0).astype(jnp.float32)

    # Head: Conv3x3(in_channel -> channel).
    y = conv3x3(x0, wh_ref, bh_ref)

    # ResBlocks: y += Conv1x1(ReLU(Conv3x3(ReLU(y)))).
    for r in range(n_res):
        w1, b1, w2, b2 = res_refs[4 * r:4 * r + 4]
        h = conv3x3(jnp.maximum(y, 0.0), w1, b1)
        h = jnp.maximum(h, 0.0)
        h = jnp.dot(h.astype(cdt), w2[...],
                    preferred_element_type=jnp.float32) + b2[...]
        y = y + h

    z = jnp.maximum(y, 0.0)                  # ReLU after the res blocks

    # Upsampling chain in the space-to-depth domain (packing doubles/layer).
    for t in range(n_tconv):
        z = conv3x3(z, tc_refs[2 * t], tc_refs[2 * t + 1])
        if relu_flags[t]:
            z = jnp.maximum(z, 0.0)

    o_ref[0] = z.astype(o_ref.dtype)         # (m, 4*f_last^2*Cout): lane-dense


# ----------------------------------------------------------------------------
# Decoder forward (Pallas path).  Mirrors the PyTorch nn.Sequential exactly.
# ----------------------------------------------------------------------------
def decoder_forward_pallas(kparams, x_nchw, cfg):
    n, cin, h0, w0 = x_nchw.shape
    ch = cfg["channel"]
    cout = cfg["out_channel"]
    n_res = len(kparams["res"])
    tconvs = kparams["tconvs"]
    n_t = len(tconvs)
    n_last = tconvs[-1]["w"].shape[2]
    f_total = 2 ** n_t

    relu_flags = [False] * n_t
    if cfg["stride"] == 4:
        relu_flags[-2] = True                # ReLU between t1 and t2
    relu_flags = tuple(relu_flags)

    # Distinct padded-scratch channel widths (head input, res 3x3 convs, and
    # each space-to-depth packed tconv input).
    pad_widths = tuple(sorted({cin, ch} | {t["w"].shape[1] for t in tconvs}))

    x = jnp.transpose(x_nchw, (0, 2, 3, 1))  # NCHW -> NHWC, once

    args = [x, kparams["wh"], kparams["bh"]]
    for blk in kparams["res"]:
        args += [blk["w1"], blk["b1"], blk["w2"], blk["b2"]]
    for t in tconvs:
        args += [t["w"], t["b"]]

    def _full(a):
        return pl.BlockSpec(tuple(a.shape), lambda i, r=a.ndim: (0,) * r)

    in_specs = [pl.BlockSpec((1, h0, w0, cin), lambda i: (i, 0, 0, 0))]
    in_specs += [_full(a) for a in args[1:]]

    out = pl.pallas_call(
        functools.partial(_decoder_kernel, n_res=n_res, n_tconv=n_t,
                          relu_flags=relu_flags, pad_widths=pad_widths),
        out_shape=jax.ShapeDtypeStruct((n, h0 * w0, n_last), x.dtype),
        grid=(n,),
        in_specs=in_specs,
        out_specs=pl.BlockSpec((1, h0 * w0, n_last), lambda i: (i, 0, 0)),
        scratch_shapes=[pltpu.VMEM((h0 + 2, w0 + 2, c), jnp.float32)
                        for c in pad_widths],
        compiler_params=pltpu.CompilerParams(
            dimension_semantics=("parallel",),
            vmem_limit_bytes=32 * 1024 * 1024),
    )(*args)

    # Final depth-to-space + NCHW: pure layout glue on the small final tensor.
    o = out.reshape(n, h0, w0, f_total, f_total, cout)
    o = jnp.transpose(o, (0, 5, 1, 3, 2, 4))
    return o.reshape(n, cout, h0 * f_total, w0 * f_total)


# ----------------------------------------------------------------------------
# Pure-JAX reference (independent path: lax convs, PyTorch-layout weights).
# ----------------------------------------------------------------------------
def _ref_conv2d(x, w, b, pad):
    y = lax.conv_general_dilated(
        x, w, window_strides=(1, 1), padding=[(pad, pad)] * 2,
        dimension_numbers=("NCHW", "OIHW", "NCHW"),
        precision=lax.Precision.HIGHEST)
    return y + b.reshape(1, -1, 1, 1)


def _ref_conv_transpose2d(x, w, b):
    # ConvTranspose2d(4, stride=2, padding=1) == dilated conv with flipped w.
    w_flip = jnp.transpose(jnp.flip(w, axis=(2, 3)), (1, 0, 2, 3))
    y = lax.conv_general_dilated(
        x, w_flip, window_strides=(1, 1), padding=[(2, 2)] * 2,
        lhs_dilation=(2, 2), dimension_numbers=("NCHW", "OIHW", "NCHW"),
        precision=lax.Precision.HIGHEST)
    return y + b.reshape(1, -1, 1, 1)


def decoder_forward_ref(params, x, cfg):
    y = _ref_conv2d(x, params["in_conv"]["w"], params["in_conv"]["b"], 1)
    for blk in params["res"]:
        h = _ref_conv2d(jax.nn.relu(y), blk["c1"]["w"], blk["c1"]["b"], 1)
        h = _ref_conv2d(jax.nn.relu(h), blk["c2"]["w"], blk["c2"]["b"], 0)
        y = y + h
    y = jax.nn.relu(y)
    for p in params["ups"]:
        y = _ref_conv_transpose2d(y, p["w"], p["b"])
    if cfg["stride"] == 4:
        y = _ref_conv_transpose2d(y, params["t1"]["w"], params["t1"]["b"])
        y = jax.nn.relu(y)
        y = _ref_conv_transpose2d(y, params["t2"]["w"], params["t2"]["b"])
    else:
        y = _ref_conv_transpose2d(y, params["t1"]["w"], params["t1"]["b"])
    return y


# ----------------------------------------------------------------------------
# Deterministic parameter init (PyTorch layouts, shapes follow __init__).
# ----------------------------------------------------------------------------
def init_params(key, cfg):
    ic, oc, ch = cfg["in_channel"], cfg["out_channel"], cfg["channel"]
    nrb, nrc = cfg["n_res_block"], cfg["n_res_channel"]
    nadd, stride = cfg["n_additional"], cfg["stride"]

    def conv_p(k, cout, cin, ks):
        kw_, kb_ = jax.random.split(k)
        s = 1.0 / float(cin * ks * ks) ** 0.5
        return {"w": jax.random.uniform(kw_, (cout, cin, ks, ks),
                                        jnp.float32, -s, s),
                "b": jax.random.uniform(kb_, (cout,), jnp.float32, -s, s)}

    def tconv_p(k, cin, cout):
        kw_, kb_ = jax.random.split(k)
        s = 1.0 / float(cin * 16) ** 0.5
        return {"w": jax.random.uniform(kw_, (cin, cout, 4, 4),
                                        jnp.float32, -s, s),
                "b": jax.random.uniform(kb_, (cout,), jnp.float32, -s, s)}

    keys = iter(jax.random.split(key, 4 + 2 * nrb + nadd + 2))
    params = {"in_conv": conv_p(next(keys), ch, ic, 3), "res": [], "ups": []}
    for _ in range(nrb):
        params["res"].append({"c1": conv_p(next(keys), nrc, ch, 3),
                              "c2": conv_p(next(keys), ch, nrc, 1)})
    for _ in range(nadd):
        params["ups"].append(tconv_p(next(keys), ch, ch))
    if stride == 4:
        params["t1"] = tconv_p(next(keys), ch, ch // 2)
        params["t2"] = tconv_p(next(keys), ch // 2, oc)
    elif stride == 2:
        params["t1"] = tconv_p(next(keys), ch, oc)
    return params


def prepare_pallas_params(params, cfg, compute_dtype=jnp.bfloat16):
    wdt = compute_dtype
    kp = {"wh": conv3x3_w_to_taps(params["in_conv"]["w"]).astype(wdt),
          "bh": params["in_conv"]["b"].reshape(1, -1).astype(jnp.float32),
          "res": [], "tconvs": []}
    for blk in params["res"]:
        kp["res"].append({
            "w1": conv3x3_w_to_taps(blk["c1"]["w"]).astype(wdt),
            "b1": blk["c1"]["b"].reshape(1, -1).astype(jnp.float32),
            "w2": conv1x1_w_to_mat(blk["c2"]["w"]).astype(wdt),
            "b2": blk["c2"]["b"].reshape(1, -1).astype(jnp.float32)})
    tconv_list = list(params["ups"]) + [params["t1"]]
    if cfg["stride"] == 4:
        tconv_list.append(params["t2"])
    for t, p in enumerate(tconv_list):
        f = 2 ** t
        wbig = tconv_w_to_s2d_taps(np.asarray(p["w"], np.float32), f)
        bbig = np.tile(np.asarray(p["b"], np.float32), 4 * f * f)
        kp["tconvs"].append(
            {"w": jnp.asarray(wbig).astype(wdt),
             "b": jnp.asarray(bbig).reshape(1, -1).astype(jnp.float32)})
    return kp


if __name__ == "__main__":
    cfg = dict(in_channel=4, out_channel=3, channel=32, n_res_block=2,
               n_res_channel=8, stride=4, n_additional=1)

    key = jax.random.PRNGKey(0)
    kparam_key, kx = jax.random.split(key)
    params = init_params(kparam_key, cfg)

    batch, spatial = 2, 8
    x = jax.random.normal(kx, (batch, cfg["in_channel"], spatial, spatial),
                          jnp.float32)

    ref = jax.block_until_ready(decoder_forward_ref(params, x, cfg))

    # Performance configuration: bf16 MXU operands, f32 accumulation.
    kparams_bf16 = prepare_pallas_params(params, cfg, jnp.bfloat16)
    fwd_bf16 = jax.jit(lambda kp, xin: decoder_forward_pallas(kp, xin, cfg))
    out_bf16 = jax.block_until_ready(fwd_bf16(kparams_bf16, x))
    # total upsampling = 2^(n_additional) * 4 (stride==4): 8x8 -> 64x64
    assert out_bf16.shape == (batch, cfg["out_channel"], 64, 64), out_bf16.shape
    err_bf16 = float(jnp.max(jnp.abs(out_bf16 - ref)))
    assert jnp.allclose(out_bf16, ref, atol=3e-2, rtol=3e-2), err_bf16

    # Strict check: identical kernel with f32 operands holds 1e-3 vs the
    # Precision.HIGHEST reference (validates the weight transforms / fusion).
    kparams_f32 = prepare_pallas_params(params, cfg, jnp.float32)
    fwd_f32 = jax.jit(lambda kp, xin: decoder_forward_pallas(kp, xin, cfg))
    out_f32 = jax.block_until_ready(fwd_f32(kparams_f32, x))
    err_f32 = float(jnp.max(jnp.abs(out_f32 - ref)))
    assert jnp.allclose(out_f32, ref, atol=1e-3, rtol=1e-3), err_f32

    print("KERNEL_OK")
</pallas_src>

<mosaic_0001>
module attributes {stable_mosaic.version = 11 : i64} {
  func.func @_decoder_kernel(%arg0: i32, %arg1: memref<1x8x8x4xf32, #tpu.memory_space<vmem>>, %arg2: memref<9x4x32xbf16, #tpu.memory_space<vmem>>, %arg3: memref<1x32xf32, #tpu.memory_space<vmem>>, %arg4: memref<9x32x8xbf16, #tpu.memory_space<vmem>>, %arg5: memref<1x8xf32, #tpu.memory_space<vmem>>, %arg6: memref<8x32xbf16, #tpu.memory_space<vmem>>, %arg7: memref<1x32xf32, #tpu.memory_space<vmem>>, %arg8: memref<9x32x8xbf16, #tpu.memory_space<vmem>>, %arg9: memref<1x8xf32, #tpu.memory_space<vmem>>, %arg10: memref<8x32xbf16, #tpu.memory_space<vmem>>, %arg11: memref<1x32xf32, #tpu.memory_space<vmem>>, %arg12: memref<9x32x128xbf16, #tpu.memory_space<vmem>>, %arg13: memref<1x128xf32, #tpu.memory_space<vmem>>, %arg14: memref<9x128x256xbf16, #tpu.memory_space<vmem>>, %arg15: memref<1x256xf32, #tpu.memory_space<vmem>>, %arg16: memref<9x256x192xbf16, #tpu.memory_space<vmem>>, %arg17: memref<1x192xf32, #tpu.memory_space<vmem>>, %arg18: memref<1x64x192xf32, #tpu.memory_space<vmem>>, %arg19: memref<10x10x4xf32, #tpu.memory_space<vmem>>, %arg20: memref<10x10x32xf32, #tpu.memory_space<vmem>>, %arg21: memref<10x10x128xf32, #tpu.memory_space<vmem>>, %arg22: memref<10x10x256xf32, #tpu.memory_space<vmem>>) attributes {dimension_semantics = [#tpu.dimension_semantics<parallel>], iteration_bounds = array<i64: 2>, scalar_prefetch = 0 : i64, scratch_operands = 4 : i64, tpu.core_type = #tpu.core_type<tc>, window_params = [{transform_indices = @transform_0, window_bounds = array<i64: 1, 8, 8, 4>}, {pipeline_mode = #tpu.pipeline_mode<synchronous>, transform_indices = @transform_1, window_bounds = array<i64: 9, 4, 32>}, {pipeline_mode = #tpu.pipeline_mode<synchronous>, transform_indices = @transform_2, window_bounds = array<i64: 1, 32>}, {pipeline_mode = #tpu.pipeline_mode<synchronous>, transform_indices = @transform_3, window_bounds = array<i64: 9, 32, 8>}, {pipeline_mode = #tpu.pipeline_mode<synchronous>, transform_indices = @transform_4, window_bounds = array<i64: 1, 8>}, {pipeline_mode = #tpu.pipeline_mode<synchronous>, transform_indices = @transform_5, window_bounds = array<i64: 8, 32>}, {pipeline_mode = #tpu.pipeline_mode<synchronous>, transform_indices = @transform_6, window_bounds = array<i64: 1, 32>}, {pipeline_mode = #tpu.pipeline_mode<synchronous>, transform_indices = @transform_7, window_bounds = array<i64: 9, 32, 8>}, {pipeline_mode = #tpu.pipeline_mode<synchronous>, transform_indices = @transform_8, window_bounds = array<i64: 1, 8>}, {pipeline_mode = #tpu.pipeline_mode<synchronous>, transform_indices = @transform_9, window_bounds = array<i64: 8, 32>}, {pipeline_mode = #tpu.pipeline_mode<synchronous>, transform_indices = @transform_10, window_bounds = array<i64: 1, 32>}, {pipeline_mode = #tpu.pipeline_mode<synchronous>, transform_indices = @transform_11, window_bounds = array<i64: 9, 32, 128>}, {pipeline_mode = #tpu.pipeline_mode<synchronous>, transform_indices = @transform_12, window_bounds = array<i64: 1, 128>}, {pipeline_mode = #tpu.pipeline_mode<synchronous>, transform_indices = @transform_13, window_bounds = array<i64: 9, 128, 256>}, {pipeline_mode = #tpu.pipeline_mode<synchronous>, transform_indices = @transform_14, window_bounds = array<i64: 1, 256>}, {pipeline_mode = #tpu.pipeline_mode<synchronous>, transform_indices = @transform_15, window_bounds = array<i64: 9, 256, 192>}, {pipeline_mode = #tpu.pipeline_mode<synchronous>, transform_indices = @transform_16, window_bounds = array<i64: 1, 192>}, {transform_indices = @transform_17, window_bounds = array<i64: 1, 64, 192>}]} {
    %cst = arith.constant 0.000000e+00 : f32
    %0 = vector.broadcast %cst : f32 to vector<1x10x4xf32>
    %c0 = arith.constant 0 : index
    %c0_0 = arith.constant 0 : index
    %c0_1 = arith.constant 0 : index
    %1 = vector.load %arg19[%c0, %c0_0, %c0_1] : memref<10x10x4xf32, #tpu.memory_space<vmem>>, vector<1x10x4xf32>
    tpu.vector_store %arg19[%c0, %c0_0, %c0_1], %0 {strides = array<i32>} : memref<10x10x4xf32, #tpu.memory_space<vmem>>, vector<1x10x4xf32>,
    %cst_2 = arith.constant 0.000000e+00 : f32
    %2 = vector.broadcast %cst_2 : f32 to vector<1x10x4xf32>
    %c9 = arith.constant 9 : index
    %c0_3 = arith.constant 0 : index
    %c0_4 = arith.constant 0 : index
    %3 = vector.load %arg19[%c9, %c0_3, %c0_4] : memref<10x10x4xf32, #tpu.memory_space<vmem>>, vector<1x10x4xf32>
    tpu.vector_store %arg19[%c9, %c0_3, %c0_4], %2 {strides = array<i32>} : memref<10x10x4xf32, #tpu.memory_space<vmem>>, vector<1x10x4xf32>,
    %cst_5 = arith.constant 0.000000e+00 : f32
    %4 = vector.broadcast %cst_5 : f32 to vector<10x1x4xf32>
    %c0_6 = arith.constant 0 : index
    %c0_7 = arith.constant 0 : index
    %c0_8 = arith.constant 0 : index
    %5 = vector.load %arg19[%c0_6, %c0_7, %c0_8] : memref<10x10x4xf32, #tpu.memory_space<vmem>>, vector<10x1x4xf32>
    tpu.vector_store %arg19[%c0_6, %c0_7, %c0_8], %4 {strides = array<i32>} : memref<10x10x4xf32, #tpu.memory_space<vmem>>, vector<10x1x4xf32>,
    %cst_9 = arith.constant 0.000000e+00 : f32
    %6 = vector.broadcast %cst_9 : f32 to vector<10x1x4xf32>
    %c0_10 = arith.constant 0 : index
    %c9_11 = arith.constant 9 : index
    %c0_12 = arith.constant 0 : index
    %7 = vector.load %arg19[%c0_10, %c9_11, %c0_12] : memref<10x10x4xf32, #tpu.memory_space<vmem>>, vector<10x1x4xf32>
    tpu.vector_store %arg19[%c0_10, %c9_11, %c0_12], %6 {strides = array<i32>} : memref<10x10x4xf32, #tpu.memory_space<vmem>>, vector<10x1x4xf32>,
    %cst_13 = arith.constant 0.000000e+00 : f32
    %8 = vector.broadcast %cst_13 : f32 to vector<1x10x32xf32>
    %c0_14 = arith.constant 0 : index
    %c0_15 = arith.constant 0 : index
    %c0_16 = arith.constant 0 : index
    %9 = vector.load %arg20[%c0_14, %c0_15, %c0_16] : memref<10x10x32xf32, #tpu.memory_space<vmem>>, vector<1x10x32xf32>
    tpu.vector_store %arg20[%c0_14, %c0_15, %c0_16], %8 {strides = array<i32>} : memref<10x10x32xf32, #tpu.memory_space<vmem>>, vector<1x10x32xf32>,
    %cst_17 = arith.constant 0.000000e+00 : f32
    %10 = vector.broadcast %cst_17 : f32 to vector<1x10x32xf32>
    %c9_18 = arith.constant 9 : index
    %c0_19 = arith.constant 0 : index
    %c0_20 = arith.constant 0 : index
    %11 = vector.load %arg20[%c9_18, %c0_19, %c0_20] : memref<10x10x32xf32, #tpu.memory_space<vmem>>, vector<1x10x32xf32>
    tpu.vector_store %arg20[%c9_18, %c0_19, %c0_20], %10 {strides = array<i32>} : memref<10x10x32xf32, #tpu.memory_space<vmem>>, vector<1x10x32xf32>,
    %cst_21 = arith.constant 0.000000e+00 : f32
    %12 = vector.broadcast %cst_21 : f32 to vector<10x1x32xf32>
    %c0_22 = arith.constant 0 : index
    %c0_23 = arith.constant 0 : index
    %c0_24 = arith.constant 0 : index
    %13 = vector.load %arg20[%c0_22, %c0_23, %c0_24] : memref<10x10x32xf32, #tpu.memory_space<vmem>>, vector<10x1x32xf32>
    tpu.vector_store %arg20[%c0_22, %c0_23, %c0_24], %12 {strides = array<i32>} : memref<10x10x32xf32, #tpu.memory_space<vmem>>, vector<10x1x32xf32>,
    %cst_25 = arith.constant 0.000000e+00 : f32
    %14 = vector.broadcast %cst_25 : f32 to vector<10x1x32xf32>
    %c0_26 = arith.constant 0 : index
    %c9_27 = arith.constant 9 : index
    %c0_28 = arith.constant 0 : index
    %15 = vector.load %arg20[%c0_26, %c9_27, %c0_28] : memref<10x10x32xf32, #tpu.memory_space<vmem>>, vector<10x1x32xf32>
    tpu.vector_store %arg20[%c0_26, %c9_27, %c0_28], %14 {strides = array<i32>} : memref<10x10x32xf32, #tpu.memory_space<vmem>>, vector<10x1x32xf32>,
    %cst_29 = arith.constant 0.000000e+00 : f32
    %16 = vector.broadcast %cst_29 : f32 to vector<1x10x128xf32>
    %c0_30 = arith.constant 0 : index
    %c0_31 = arith.constant 0 : index
    %c0_32 = arith.constant 0 : index
    %17 = vector.load %arg21[%c0_30, %c0_31, %c0_32] : memref<10x10x128xf32, #tpu.memory_space<vmem>>, vector<1x10x128xf32>
    tpu.vector_store %arg21[%c0_30, %c0_31, %c0_32], %16 {strides = array<i32>} : memref<10x10x128xf32, #tpu.memory_space<vmem>>, vector<1x10x128xf32>,
    %cst_33 = arith.constant 0.000000e+00 : f32
    %18 = vector.broadcast %cst_33 : f32 to vector<1x10x128xf32>
    %c9_34 = arith.constant 9 : index
    %c0_35 = arith.constant 0 : index
    %c0_36 = arith.constant 0 : index
    %19 = vector.load %arg21[%c9_34, %c0_35, %c0_36] : memref<10x10x128xf32, #tpu.memory_space<vmem>>, vector<1x10x128xf32>
    tpu.vector_store %arg21[%c9_34, %c0_35, %c0_36], %18 {strides = array<i32>} : memref<10x10x128xf32, #tpu.memory_space<vmem>>, vector<1x10x128xf32>,
    %cst_37 = arith.constant 0.000000e+00 : f32
    %20 = vector.broadcast %cst_37 : f32 to vector<10x1x128xf32>
    %c0_38 = arith.constant 0 : index
    %c0_39 = arith.constant 0 : index
    %c0_40 = arith.constant 0 : index
    %21 = vector.load %arg21[%c0_38, %c0_39, %c0_40] : memref<10x10x128xf32, #tpu.memory_space<vmem>>, vector<10x1x128xf32>
    tpu.vector_store %arg21[%c0_38, %c0_39, %c0_40], %20 {strides = array<i32>} : memref<10x10x128xf32, #tpu.memory_space<vmem>>, vector<10x1x128xf32>,
    %cst_41 = arith.constant 0.000000e+00 : f32
    %22 = vector.broadcast %cst_41 : f32 to vector<10x1x128xf32>
    %c0_42 = arith.constant 0 : index
    %c9_43 = arith.constant 9 : index
    %c0_44 = arith.constant 0 : index
    %23 = vector.load %arg21[%c0_42, %c9_43, %c0_44] : memref<10x10x128xf32, #tpu.memory_space<vmem>>, vector<10x1x128xf32>
    tpu.vector_store %arg21[%c0_42, %c9_43, %c0_44], %22 {strides = array<i32>} : memref<10x10x128xf32, #tpu.memory_space<vmem>>, vector<10x1x128xf32>,
    %cst_45 = arith.constant 0.000000e+00 : f32
    %24 = vector.broadcast %cst_45 : f32 to vector<1x10x256xf32>
    %c0_46 = arith.constant 0 : index
    %c0_47 = arith.constant 0 : index
    %c0_48 = arith.constant 0 : index
    %25 = vector.load %arg22[%c0_46, %c0_47, %c0_48] : memref<10x10x256xf32, #tpu.memory_space<vmem>>, vector<1x10x256xf32>
    tpu.vector_store %arg22[%c0_46, %c0_47, %c0_48], %24 {strides = array<i32>} : memref<10x10x256xf32, #tpu.memory_space<vmem>>, vector<1x10x256xf32>,
    %cst_49 = arith.constant 0.000000e+00 : f32
    %26 = vector.broadcast %cst_49 : f32 to vector<1x10x256xf32>
    %c9_50 = arith.constant 9 : index
    %c0_51 = arith.constant 0 : index
    %c0_52 = arith.constant 0 : index
    %27 = vector.load %arg22[%c9_50, %c0_51, %c0_52] : memref<10x10x256xf32, #tpu.memory_space<vmem>>, vector<1x10x256xf32>
    tpu.vector_store %arg22[%c9_50, %c0_51, %c0_52], %26 {strides = array<i32>} : memref<10x10x256xf32, #tpu.memory_space<vmem>>, vector<1x10x256xf32>,
    %cst_53 = arith.constant 0.000000e+00 : f32
    %28 = vector.broadcast %cst_53 : f32 to vector<10x1x256xf32>
    %c0_54 = arith.constant 0 : index
    %c0_55 = arith.constant 0 : index
    %c0_56 = arith.constant 0 : index
    %29 = vector.load %arg22[%c0_54, %c0_55, %c0_56] : memref<10x10x256xf32, #tpu.memory_space<vmem>>, vector<10x1x256xf32>
    tpu.vector_store %arg22[%c0_54, %c0_55, %c0_56], %28 {strides = array<i32>} : memref<10x10x256xf32, #tpu.memory_space<vmem>>, vector<10x1x256xf32>,
    %cst_57 = arith.constant 0.000000e+00 : f32
    %30 = vector.broadcast %cst_57 : f32 to vector<10x1x256xf32>
    %c0_58 = arith.constant 0 : index
    %c9_59 = arith.constant 9 : index
    %c0_60 = arith.constant 0 : index
    %31 = vector.load %arg22[%c0_58, %c9_59, %c0_60] : memref<10x10x256xf32, #tpu.memory_space<vmem>>, vector<10x1x256xf32>
    tpu.vector_store %arg22[%c0_58, %c9_59, %c0_60], %30 {strides = array<i32>} : memref<10x10x256xf32, #tpu.memory_space<vmem>>, vector<10x1x256xf32>,
    %c0_61 = arith.constant 0 : index
    %c0_62 = arith.constant 0 : index
    %c0_63 = arith.constant 0 : index
    %c0_64 = arith.constant 0 : index
    %32 = vector.load %arg1[%c0_61, %c0_62, %c0_63, %c0_64] : memref<1x8x8x4xf32, #tpu.memory_space<vmem>>, vector<1x8x8x4xf32>
    %33 = vector.shape_cast %32 : vector<1x8x8x4xf32> to vector<8x8x4xf32>
    %34 = vector.shape_cast %33 : vector<8x8x4xf32> to vector<64x4xf32>
    %35 = vector.shape_cast %34 : vector<64x4xf32> to vector<8x8x4xf32>
    %c1 = arith.constant 1 : index
    %c1_65 = arith.constant 1 : index
    %c0_66 = arith.constant 0 : index
    %36 = vector.load %arg19[%c1, %c1_65, %c0_66] : memref<10x10x4xf32, #tpu.memory_space<vmem>>, vector<8x8x4xf32>
    tpu.vector_store %arg19[%c1, %c1_65, %c0_66], %35 {strides = array<i32>} : memref<10x10x4xf32, #tpu.memory_space<vmem>>, vector<8x8x4xf32>,
    %c0_67 = arith.constant 0 : index
    %c0_68 = arith.constant 0 : index
    %37 = vector.load %arg3[%c0_67, %c0_68] : memref<1x32xf32, #tpu.memory_space<vmem>>, vector<1x32xf32>
    %38 = vector.shape_cast %37 : vector<1x32xf32> to vector<1x32xf32>
    %39 = vector.broadcast %38 : vector<1x32xf32> to vector<64x32xf32>
    %c0_69 = arith.constant 0 : index
    %c0_70 = arith.constant 0 : index
    %c0_71 = arith.constant 0 : index
    %40 = vector.load %arg19[%c0_69, %c0_70, %c0_71] : memref<10x10x4xf32, #tpu.memory_space<vmem>>, vector<8x8x4xf32>
    %41 = vector.shape_cast %40 : vector<8x8x4xf32> to vector<64x4xf32>
    %42 = arith.truncf %41 : vector<64x4xf32> to vector<64x4xbf16>
    %c0_72 = arith.constant 0 : index
    %c0_73 = arith.constant 0 : index
    %c0_74 = arith.constant 0 : index
    %43 = vector.load %arg2[%c0_72, %c0_73, %c0_74] : memref<9x4x32xbf16, #tpu.memory_space<vmem>>, vector<1x4x32xbf16>
    %44 = vector.shape_cast %43 : vector<1x4x32xbf16> to vector<4x32xbf16>
    %cst_75 = arith.constant dense<0.000000e+00> : vector<64x32xf32>
    %45 = tpu.matmul %42, %44, %cst_75 {dimension_numbers = #tpu.dot_dimension_numbers<[1], [0], [0], [1], [0, 0, 1, 1], [], []>} : vector<64x4xbf16>, vector<4x32xbf16>, vector<64x32xf32> -> vector<64x32xf32>
    %46 = arith.addf %39, %45 : vector<64x32xf32>
    %c0_76 = arith.constant 0 : index
    %c1_77 = arith.constant 1 : index
    %c0_78 = arith.constant 0 : index
    %47 = vector.load %arg19[%c0_76, %c1_77, %c0_78] : memref<10x10x4xf32, #tpu.memory_space<vmem>>, vector<8x8x4xf32>
    %48 = vector.shape_cast %47 : vector<8x8x4xf32> to vector<64x4xf32>
    %49 = arith.truncf %48 : vector<64x4xf32> to vector<64x4xbf16>
    %c1_79 = arith.constant 1 : index
    %c0_80 = arith.constant 0 : index
    %c0_81 = arith.constant 0 : index
    %50 = vector.load %arg2[%c1_79, %c0_80, %c0_81] : memref<9x4x32xbf16, #tpu.memory_space<vmem>>, vector<1x4x32xbf16>
    %51 = vector.shape_cast %50 : vector<1x4x32xbf16> to vector<4x32xbf16>
    %cst_82 = arith.constant dense<0.000000e+00> : vector<64x32xf32>
    %52 = tpu.matmul %49, %51, %cst_82 {dimension_numbers = #tpu.dot_dimension_numbers<[1], [0], [0], [1], [0, 0, 1, 1], [], []>} : vector<64x4xbf16>, vector<4x32xbf16>, vector<64x32xf32> -> vector<64x32xf32>
    %53 = arith.addf %46, %52 : vector<64x32xf32>
    %c0_83 = arith.constant 0 : index
    %c2 = arith.constant 2 : index
    %c0_84 = arith.constant 0 : index
    %54 = vector.load %arg19[%c0_83, %c2, %c0_84] : memref<10x10x4xf32, #tpu.memory_space<vmem>>, vector<8x8x4xf32>
    %55 = vector.shape_cast %54 : vector<8x8x4xf32> to vector<64x4xf32>
    %56 = arith.truncf %55 : vector<64x4xf32> to vector<64x4xbf16>
    %c2_85 = arith.constant 2 : index
    %c0_86 = arith.constant 0 : index
    %c0_87 = arith.constant 0 : index
    %57 = vector.load %arg2[%c2_85, %c0_86, %c0_87] : memref<9x4x32xbf16, #tpu.memory_space<vmem>>, vector<1x4x32xbf16>
    %58 = vector.shape_cast %57 : vector<1x4x32xbf16> to vector<4x32xbf16>
    %cst_88 = arith.constant dense<0.000000e+00> : vector<64x32xf32>
    %59 = tpu.matmul %56, %58, %cst_88 {dimension_numbers = #tpu.dot_dimension_numbers<[1], [0], [0], [1], [0, 0, 1, 1], [], []>} : vector<64x4xbf16>, vector<4x32xbf16>, vector<64x32xf32> -> vector<64x32xf32>
    %60 = arith.addf %53, %59 : vector<64x32xf32>
    %c1_89 = arith.constant 1 : index
    %c0_90 = arith.constant 0 : index
    %c0_91 = arith.constant 0 : index
    %61 = vector.load %arg19[%c1_89, %c0_90, %c0_91] : memref<10x10x4xf32, #tpu.memory_space<vmem>>, vector<8x8x4xf32>
    %62 = vector.shape_cast %61 : vector<8x8x4xf32> to vector<64x4xf32>
    %63 = arith.truncf %62 : vector<64x4xf32> to vector<64x4xbf16>
    %c3 = arith.constant 3 : index
    %c0_92 = arith.constant 0 : index
    %c0_93 = arith.constant 0 : index
    %64 = vector.load %arg2[%c3, %c0_92, %c0_93] : memref<9x4x32xbf16, #tpu.memory_space<vmem>>, vector<1x4x32xbf16>
    %65 = vector.shape_cast %64 : vector<1x4x32xbf16> to vector<4x32xbf16>
    %cst_94 = arith.constant dense<0.000000e+00> : vector<64x32xf32>
    %66 = tpu.matmul %63, %65, %cst_94 {dimension_numbers = #tpu.dot_dimension_numbers<[1], [0], [0], [1], [0, 0, 1, 1], [], []>} : vector<64x4xbf16>, vector<4x32xbf16>, vector<64x32xf32> -> vector<64x32xf32>
    %67 = arith.addf %60, %66 : vector<64x32xf32>
    %c1_95 = arith.constant 1 : index
    %c1_96 = arith.constant 1 : index
    %c0_97 = arith.constant 0 : index
    %68 = vector.load %arg19[%c1_95, %c1_96, %c0_97] : memref<10x10x4xf32, #tpu.memory_space<vmem>>, vector<8x8x4xf32>
    %69 = vector.shape_cast %68 : vector<8x8x4xf32> to vector<64x4xf32>
    %70 = arith.truncf %69 : vector<64x4xf32> to vector<64x4xbf16>
    %c4 = arith.constant 4 : index
    %c0_98 = arith.constant 0 : index
    %c0_99 = arith.constant 0 : index
    %71 = vector.load %arg2[%c4, %c0_98, %c0_99] : memref<9x4x32xbf16, #tpu.memory_space<vmem>>, vector<1x4x32xbf16>
    %72 = vector.shape_cast %71 : vector<1x4x32xbf16> to vector<4x32xbf16>
    %cst_100 = arith.constant dense<0.000000e+00> : vector<64x32xf32>
    %73 = tpu.matmul %70, %72, %cst_100 {dimension_numbers = #tpu.dot_dimension_numbers<[1], [0], [0], [1], [0, 0, 1, 1], [], []>} : vector<64x4xbf16>, vector<4x32xbf16>, vector<64x32xf32> -> vector<64x32xf32>
    %74 = arith.addf %67, %73 : vector<64x32xf32>
    %c1_101 = arith.constant 1 : index
    %c2_102 = arith.constant 2 : index
    %c0_103 = arith.constant 0 : index
    %75 = vector.load %arg19[%c1_101, %c2_102, %c0_103] : memref<10x10x4xf32, #tpu.memory_space<vmem>>, vector<8x8x4xf32>
    %76 = vector.shape_cast %75 : vector<8x8x4xf32> to vector<64x4xf32>
    %77 = arith.truncf %76 : vector<64x4xf32> to vector<64x4xbf16>
    %c5 = arith.constant 5 : index
    %c0_104 = arith.constant 0 : index
    %c0_105 = arith.constant 0 : index
    %78 = vector.load %arg2[%c5, %c0_104, %c0_105] : memref<9x4x32xbf16, #tpu.memory_space<vmem>>, vector<1x4x32xbf16>
    %79 = vector.shape_cast %78 : vector<1x4x32xbf16> to vector<4x32xbf16>
    %cst_106 = arith.constant dense<0.000000e+00> : vector<64x32xf32>
    %80 = tpu.matmul %77, %79, %cst_106 {dimension_numbers = #tpu.dot_dimension_numbers<[1], [0], [0], [1], [0, 0, 1, 1], [], []>} : vector<64x4xbf16>, vector<4x32xbf16>, vector<64x32xf32> -> vector<64x32xf32>
    %81 = arith.addf %74, %80 : vector<64x32xf32>
    %c2_107 = arith.constant 2 : index
    %c0_108 = arith.constant 0 : index
    %c0_109 = arith.constant 0 : index
    %82 = vector.load %arg19[%c2_107, %c0_108, %c0_109] : memref<10x10x4xf32, #tpu.memory_space<vmem>>, vector<8x8x4xf32>
    %83 = vector.shape_cast %82 : vector<8x8x4xf32> to vector<64x4xf32>
    %84 = arith.truncf %83 : vector<64x4xf32> to vector<64x4xbf16>
    %c6 = arith.constant 6 : index
    %c0_110 = arith.constant 0 : index
    %c0_111 = arith.constant 0 : index
    %85 = vector.load %arg2[%c6, %c0_110, %c0_111] : memref<9x4x32xbf16, #tpu.memory_space<vmem>>, vector<1x4x32xbf16>
    %86 = vector.shape_cast %85 : vector<1x4x32xbf16> to vector<4x32xbf16>
    %cst_112 = arith.constant dense<0.000000e+00> : vector<64x32xf32>
    %87 = tpu.matmul %84, %86, %cst_112 {dimension_numbers = #tpu.dot_dimension_numbers<[1], [0], [0], [1], [0, 0, 1, 1], [], []>} : vector<64x4xbf16>, vector<4x32xbf16>, vector<64x32xf32> -> vector<64x32xf32>
    %88 = arith.addf %81, %87 : vector<64x32xf32>
    %c2_113 = arith.constant 2 : index
    %c1_114 = arith.constant 1 : index
    %c0_115 = arith.constant 0 : index
    %89 = vector.load %arg19[%c2_113, %c1_114, %c0_115] : memref<10x10x4xf32, #tpu.memory_space<vmem>>, vector<8x8x4xf32>
    %90 = vector.shape_cast %89 : vector<8x8x4xf32> to vector<64x4xf32>
    %91 = arith.truncf %90 : vector<64x4xf32> to vector<64x4xbf16>
    %c7 = arith.constant 7 : index
    %c0_116 = arith.constant 0 : index
    %c0_117 = arith.constant 0 : index
    %92 = vector.load %arg2[%c7, %c0_116, %c0_117] : memref<9x4x32xbf16, #tpu.memory_space<vmem>>, vector<1x4x32xbf16>
    %93 = vector.shape_cast %92 : vector<1x4x32xbf16> to vector<4x32xbf16>
    %cst_118 = arith.constant dense<0.000000e+00> : vector<64x32xf32>
    %94 = tpu.matmul %91, %93, %cst_118 {dimension_numbers = #tpu.dot_dimension_numbers<[1], [0], [0], [1], [0, 0, 1, 1], [], []>} : vector<64x4xbf16>, vector<4x32xbf16>, vector<64x32xf32> -> vector<64x32xf32>
    %95 = arith.addf %88, %94 : vector<64x32xf32>
    %c2_119 = arith.constant 2 : index
    %c2_120 = arith.constant 2 : index
    %c0_121 = arith.constant 0 : index
    %96 = vector.load %arg19[%c2_119, %c2_120, %c0_121] : memref<10x10x4xf32, #tpu.memory_space<vmem>>, vector<8x8x4xf32>
    %97 = vector.shape_cast %96 : vector<8x8x4xf32> to vector<64x4xf32>
    %98 = arith.truncf %97 : vector<64x4xf32> to vector<64x4xbf16>
    %c8 = arith.constant 8 : index
    %c0_122 = arith.constant 0 : index
    %c0_123 = arith.constant 0 : index
    %99 = vector.load %arg2[%c8, %c0_122, %c0_123] : memref<9x4x32xbf16, #tpu.memory_space<vmem>>, vector<1x4x32xbf16>
    %100 = vector.shape_cast %99 : vector<1x4x32xbf16> to vector<4x32xbf16>
    %cst_124 = arith.constant dense<0.000000e+00> : vector<64x32xf32>
    %101 = tpu.matmul %98, %100, %cst_124 {dimension_numbers = #tpu.dot_dimension_numbers<[1], [0], [0], [1], [0, 0, 1, 1], [], []>} : vector<64x4xbf16>, vector<4x32xbf16>, vector<64x32xf32> -> vector<64x32xf32>
    %102 = arith.addf %95, %101 : vector<64x32xf32>
    %cst_125 = arith.constant 0.000000e+00 : f32
    %103 = vector.broadcast %cst_125 : f32 to vector<64x32xf32>
    %104 = arith.maximumf %102, %103 : vector<64x32xf32>
    %105 = vector.shape_cast %104 : vector<64x32xf32> to vector<8x8x32xf32>
    %c1_126 = arith.constant 1 : index
    %c1_127 = arith.constant 1 : index
    %c0_128 = arith.constant 0 : index
    %106 = vector.load %arg20[%c1_126, %c1_127, %c0_128] : memref<10x10x32xf32, #tpu.memory_space<vmem>>, vector<8x8x32xf32>
    tpu.vector_store %arg20[%c1_126, %c1_127, %c0_128], %105 {strides = array<i32>} : memref<10x10x32xf32, #tpu.memory_space<vmem>>, vector<8x8x32xf32>,
    %c0_129 = arith.constant 0 : index
    %c0_130 = arith.constant 0 : index
    %107 = vector.load %arg5[%c0_129, %c0_130] : memref<1x8xf32, #tpu.memory_space<vmem>>, vector<1x8xf32>
    %108 = vector.shape_cast %107 : vector<1x8xf32> to vector<1x8xf32>
    %109 = vector.broadcast %108 : vector<1x8xf32> to vector<64x8xf32>
    %c0_131 = arith.constant 0 : index
    %c0_132 = arith.constant 0 : index
    %c0_133 = arith.constant 0 : index
    %110 = vector.load %arg20[%c0_131, %c0_132, %c0_133] : memref<10x10x32xf32, #tpu.memory_space<vmem>>, vector<8x8x32xf32>
    %111 = vector.shape_cast %110 : vector<8x8x32xf32> to vector<64x32xf32>
    %112 = arith.truncf %111 : vector<64x32xf32> to vector<64x32xbf16>
    %c0_134 = arith.constant 0 : index
    %c0_135 = arith.constant 0 : index
    %c0_136 = arith.constant 0 : index
    %113 = vector.load %arg4[%c0_134, %c0_135, %c0_136] : memref<9x32x8xbf16, #tpu.memory_space<vmem>>, vector<1x32x8xbf16>
    %114 = vector.shape_cast %113 : vector<1x32x8xbf16> to vector<32x8xbf16>
    %cst_137 = arith.constant dense<0.000000e+00> : vector<64x8xf32>
    %115 = tpu.matmul %112, %114, %cst_137 {dimension_numbers = #tpu.dot_dimension_numbers<[1], [0], [0], [1], [0, 0, 1, 1], [], []>} : vector<64x32xbf16>, vector<32x8xbf16>, vector<64x8xf32> -> vector<64x8xf32>
    %116 = arith.addf %109, %115 : vector<64x8xf32>
    %c0_138 = arith.constant 0 : index
    %c1_139 = arith.constant 1 : index
    %c0_140 = arith.constant 0 : index
    %117 = vector.load %arg20[%c0_138, %c1_139, %c0_140] : memref<10x10x32xf32, #tpu.memory_space<vmem>>, vector<8x8x32xf32>
    %118 = vector.shape_cast %117 : vector<8x8x32xf32> to vector<64x32xf32>
    %119 = arith.truncf %118 : vector<64x32xf32> to vector<64x32xbf16>
    %c1_141 = arith.constant 1 : index
    %c0_142 = arith.constant 0 : index
    %c0_143 = arith.constant 0 : index
    %120 = vector.load %arg4[%c1_141, %c0_142, %c0_143] : memref<9x32x8xbf16, #tpu.memory_space<vmem>>, vector<1x32x8xbf16>
    %121 = vector.shape_cast %120 : vector<1x32x8xbf16> to vector<32x8xbf16>
    %cst_144 = arith.constant dense<0.000000e+00> : vector<64x8xf32>
    %122 = tpu.matmul %119, %121, %cst_144 {dimension_numbers = #tpu.dot_dimension_numbers<[1], [0], [0], [1], [0, 0, 1, 1], [], []>} : vector<64x32xbf16>, vector<32x8xbf16>, vector<64x8xf32> -> vector<64x8xf32>
    %123 = arith.addf %116, %122 : vector<64x8xf32>
    %c0_145 = arith.constant 0 : index
    %c2_146 = arith.constant 2 : index
    %c0_147 = arith.constant 0 : index
    %124 = vector.load %arg20[%c0_145, %c2_146, %c0_147] : memref<10x10x32xf32, #tpu.memory_space<vmem>>, vector<8x8x32xf32>
    %125 = vector.shape_cast %124 : vector<8x8x32xf32> to vector<64x32xf32>
    %126 = arith.truncf %125 : vector<64x32xf32> to vector<64x32xbf16>
    %c2_148 = arith.constant 2 : index
    %c0_149 = arith.constant 0 : index
    %c0_150 = arith.constant 0 : index
    %127 = vector.load %arg4[%c2_148, %c0_149, %c0_150] : memref<9x32x8xbf16, #tpu.memory_space<vmem>>, vector<1x32x8xbf16>
    %128 = vector.shape_cast %127 : vector<1x32x8xbf16> to vector<32x8xbf16>
    %cst_151 = arith.constant dense<0.000000e+00> : vector<64x8xf32>
    %129 = tpu.matmul %126, %128, %cst_151 {dimension_numbers = #tpu.dot_dimension_numbers<[1], [0], [0], [1], [0, 0, 1, 1], [], []>} : vector<64x32xbf16>, vector<32x8xbf16>, vector<64x8xf32> -> vector<64x8xf32>
    %130 = arith.addf %123, %129 : vector<64x8xf32>
    %c1_152 = arith.constant 1 : index
    %c0_153 = arith.constant 0 : index
    %c0_154 = arith.constant 0 : index
    %131 = vector.load %arg20[%c1_152, %c0_153, %c0_154] : memref<10x10x32xf32, #tpu.memory_space<vmem>>, vector<8x8x32xf32>
    %132 = vector.shape_cast %131 : vector<8x8x32xf32> to vector<64x32xf32>
    %133 = arith.truncf %132 : vector<64x32xf32> to vector<64x32xbf16>
    %c3_155 = arith.constant 3 : index
    %c0_156 = arith.constant 0 : index
    %c0_157 = arith.constant 0 : index
    %134 = vector.load %arg4[%c3_155, %c0_156, %c0_157] : memref<9x32x8xbf16, #tpu.memory_space<vmem>>, vector<1x32x8xbf16>
    %135 = vector.shape_cast %134 : vector<1x32x8xbf16> to vector<32x8xbf16>
    %cst_158 = arith.constant dense<0.000000e+00> : vector<64x8xf32>
    %136 = tpu.matmul %133, %135, %cst_158 {dimension_numbers = #tpu.dot_dimension_numbers<[1], [0], [0], [1], [0, 0, 1, 1], [], []>} : vector<64x32xbf16>, vector<32x8xbf16>, vector<64x8xf32> -> vector<64x8xf32>
    %137 = arith.addf %130, %136 : vector<64x8xf32>
    %c1_159 = arith.constant 1 : index
    %c1_160 = arith.constant 1 : index
    %c0_161 = arith.constant 0 : index
    %138 = vector.load %arg20[%c1_159, %c1_160, %c0_161] : memref<10x10x32xf32, #tpu.memory_space<vmem>>, vector<8x8x32xf32>
    %139 = vector.shape_cast %138 : vector<8x8x32xf32> to vector<64x32xf32>
    %140 = arith.truncf %139 : vector<64x32xf32> to vector<64x32xbf16>
    %c4_162 = arith.constant 4 : index
    %c0_163 = arith.constant 0 : index
    %c0_164 = arith.constant 0 : index
    %141 = vector.load %arg4[%c4_162, %c0_163, %c0_164] : memref<9x32x8xbf16, #tpu.memory_space<vmem>>, vector<1x32x8xbf16>
    %142 = vector.shape_cast %141 : vector<1x32x8xbf16> to vector<32x8xbf16>
    %cst_165 = arith.constant dense<0.000000e+00> : vector<64x8xf32>
    %143 = tpu.matmul %140, %142, %cst_165 {dimension_numbers = #tpu.dot_dimension_numbers<[1], [0], [0], [1], [0, 0, 1, 1], [], []>} : vector<64x32xbf16>, vector<32x8xbf16>, vector<64x8xf32> -> vector<64x8xf32>
    %144 = arith.addf %137, %143 : vector<64x8xf32>
    %c1_166 = arith.constant 1 : index
    %c2_167 = arith.constant 2 : index
    %c0_168 = arith.constant 0 : index
    %145 = vector.load %arg20[%c1_166, %c2_167, %c0_168] : memref<10x10x32xf32, #tpu.memory_space<vmem>>, vector<8x8x32xf32>
    %146 = vector.shape_cast %145 : vector<8x8x32xf32> to vector<64x32xf32>
    %147 = arith.truncf %146 : vector<64x32xf32> to vector<64x32xbf16>
    %c5_169 = arith.constant 5 : index
    %c0_170 = arith.constant 0 : index
    %c0_171 = arith.constant 0 : index
    %148 = vector.load %arg4[%c5_169, %c0_170, %c0_171] : memref<9x32x8xbf16, #tpu.memory_space<vmem>>, vector<1x32x8xbf16>
    %149 = vector.shape_cast %148 : vector<1x32x8xbf16> to vector<32x8xbf16>
    %cst_172 = arith.constant dense<0.000000e+00> : vector<64x8xf32>
    %150 = tpu.matmul %147, %149, %cst_172 {dimension_numbers = #tpu.dot_dimension_numbers<[1], [0], [0], [1], [0, 0, 1, 1], [], []>} : vector<64x32xbf16>, vector<32x8xbf16>, vector<64x8xf32> -> vector<64x8xf32>
    %151 = arith.addf %144, %150 : vector<64x8xf32>
    %c2_173 = arith.constant 2 : index
    %c0_174 = arith.constant 0 : index
    %c0_175 = arith.constant 0 : index
    %152 = vector.load %arg20[%c2_173, %c0_174, %c0_175] : memref<10x10x32xf32, #tpu.memory_space<vmem>>, vector<8x8x32xf32>
    %153 = vector.shape_cast %152 : vector<8x8x32xf32> to vector<64x32xf32>
    %154 = arith.truncf %153 : vector<64x32xf32> to vector<64x32xbf16>
    %c6_176 = arith.constant 6 : index
    %c0_177 = arith.constant 0 : index
    %c0_178 = arith.constant 0 : index
    %155 = vector.load %arg4[%c6_176, %c0_177, %c0_178] : memref<9x32x8xbf16, #tpu.memory_space<vmem>>, vector<1x32x8xbf16>
    %156 = vector.shape_cast %155 : vector<1x32x8xbf16> to vector<32x8xbf16>
    %cst_179 = arith.constant dense<0.000000e+00> : vector<64x8xf32>
    %157 = tpu.matmul %154, %156, %cst_179 {dimension_numbers = #tpu.dot_dimension_numbers<[1], [0], [0], [1], [0, 0, 1, 1], [], []>} : vector<64x32xbf16>, vector<32x8xbf16>, vector<64x8xf32> -> vector<64x8xf32>
    %158 = arith.addf %151, %157 : vector<64x8xf32>
    %c2_180 = arith.constant 2 : index
    %c1_181 = arith.constant 1 : index
    %c0_182 = arith.constant 0 : index
    %159 = vector.load %arg20[%c2_180, %c1_181, %c0_182] : memref<10x10x32xf32, #tpu.memory_space<vmem>>, vector<8x8x32xf32>
    %160 = vector.shape_cast %159 : vector<8x8x32xf32> to vector<64x32xf32>
    %161 = arith.truncf %160 : vector<64x32xf32> to vector<64x32xbf16>
    %c7_183 = arith.constant 7 : index
    %c0_184 = arith.constant 0 : index
    %c0_185 = arith.constant 0 : index
    %162 = vector.load %arg4[%c7_183, %c0_184, %c0_185] : memref<9x32x8xbf16, #tpu.memory_space<vmem>>, vector<1x32x8xbf16>
    %163 = vector.shape_cast %162 : vector<1x32x8xbf16> to vector<32x8xbf16>
    %cst_186 = arith.constant dense<0.000000e+00> : vector<64x8xf32>
    %164 = tpu.matmul %161, %163, %cst_186 {dimension_numbers = #tpu.dot_dimension_numbers<[1], [0], [0], [1], [0, 0, 1, 1], [], []>} : vector<64x32xbf16>, vector<32x8xbf16>, vector<64x8xf32> -> vector<64x8xf32>
    %165 = arith.addf %158, %164 : vector<64x8xf32>
    %c2_187 = arith.constant 2 : index
    %c2_188 = arith.constant 2 : index
    %c0_189 = arith.constant 0 : index
    %166 = vector.load %arg20[%c2_187, %c2_188, %c0_189] : memref<10x10x32xf32, #tpu.memory_space<vmem>>, vector<8x8x32xf32>
    %167 = vector.shape_cast %166 : vector<8x8x32xf32> to vector<64x32xf32>
    %168 = arith.truncf %167 : vector<64x32xf32> to vector<64x32xbf16>
    %c8_190 = arith.constant 8 : index
    %c0_191 = arith.constant 0 : index
    %c0_192 = arith.constant 0 : index
    %169 = vector.load %arg4[%c8_190, %c0_191, %c0_192] : memref<9x32x8xbf16, #tpu.memory_space<vmem>>, vector<1x32x8xbf16>
    %170 = vector.shape_cast %169 : vector<1x32x8xbf16> to vector<32x8xbf16>
    %cst_193 = arith.constant dense<0.000000e+00> : vector<64x8xf32>
    %171 = tpu.matmul %168, %170, %cst_193 {dimension_numbers = #tpu.dot_dimension_numbers<[1], [0], [0], [1], [0, 0, 1, 1], [], []>} : vector<64x32xbf16>, vector<32x8xbf16>, vector<64x8xf32> -> vector<64x8xf32>
    %172 = arith.addf %165, %171 : vector<64x8xf32>
    %cst_194 = arith.constant 0.000000e+00 : f32
    %173 = vector.broadcast %cst_194 : f32 to vector<64x8xf32>
    %174 = arith.maximumf %172, %173 : vector<64x8xf32>
    %175 = arith.truncf %174 : vector<64x8xf32> to vector<64x8xbf16>
    %c0_195 = arith.constant 0 : index
    %c0_196 = arith.constant 0 : index
    %176 = vector.load %arg6[%c0_195, %c0_196] : memref<8x32xbf16, #tpu.memory_space<vmem>>, vector<8x32xbf16>
    %cst_197 = arith.constant dense<0.000000e+00> : vector<64x32xf32>
    %177 = tpu.matmul %175, %176, %cst_197 {dimension_numbers = #tpu.dot_dimension_numbers<[1], [0], [0], [1], [0, 0, 1, 1], [], []>} : vector<64x8xbf16>, vector<8x32xbf16>, vector<64x32xf32> -> vector<64x32xf32>
    %c0_198 = arith.constant 0 : index
    %c0_199 = arith.constant 0 : index
    %178 = vector.load %arg7[%c0_198, %c0_199] : memref<1x32xf32, #tpu.memory_space<vmem>>, vector<1x32xf32>
    %179 = vector.broadcast %178 : vector<1x32xf32> to vector<64x32xf32>
    %180 = arith.addf %177, %179 : vector<64x32xf32>
    %181 = arith.addf %102, %180 : vector<64x32xf32>
    %cst_200 = arith.constant 0.000000e+00 : f32
    %182 = vector.broadcast %cst_200 : f32 to vector<64x32xf32>
    %183 = arith.maximumf %181, %182 : vector<64x32xf32>
    %184 = vector.shape_cast %183 : vector<64x32xf32> to vector<8x8x32xf32>
    %c1_201 = arith.constant 1 : index
    %c1_202 = arith.constant 1 : index
    %c0_203 = arith.constant 0 : index
    %185 = vector.load %arg20[%c1_201, %c1_202, %c0_203] : memref<10x10x32xf32, #tpu.memory_space<vmem>>, vector<8x8x32xf32>
    tpu.vector_store %arg20[%c1_201, %c1_202, %c0_203], %184 {strides = array<i32>} : memref<10x10x32xf32, #tpu.memory_space<vmem>>, vector<8x8x32xf32>,
    %c0_204 = arith.constant 0 : index
    %c0_205 = arith.constant 0 : index
    %186 = vector.load %arg9[%c0_204, %c0_205] : memref<1x8xf32, #tpu.memory_space<vmem>>, vector<1x8xf32>
    %187 = vector.shape_cast %186 : vector<1x8xf32> to vector<1x8xf32>
    %188 = vector.broadcast %187 : vector<1x8xf32> to vector<64x8xf32>
    %c0_206 = arith.constant 0 : index
    %c0_207 = arith.constant 0 : index
    %c0_208 = arith.constant 0 : index
    %189 = vector.load %arg20[%c0_206, %c0_207, %c0_208] : memref<10x10x32xf32, #tpu.memory_space<vmem>>, vector<8x8x32xf32>
    %190 = vector.shape_cast %189 : vector<8x8x32xf32> to vector<64x32xf32>
    %191 = arith.truncf %190 : vector<64x32xf32> to vector<64x32xbf16>
    %c0_209 = arith.constant 0 : index
    %c0_210 = arith.constant 0 : index
    %c0_211 = arith.constant 0 : index
    %192 = vector.load %arg8[%c0_209, %c0_210, %c0_211] : memref<9x32x8xbf16, #tpu.memory_space<vmem>>, vector<1x32x8xbf16>
    %193 = vector.shape_cast %192 : vector<1x32x8xbf16> to vector<32x8xbf16>
    %cst_212 = arith.constant dense<0.000000e+00> : vector<64x8xf32>
    %194 = tpu.matmul %191, %193, %cst_212 {dimension_numbers = #tpu.dot_dimension_numbers<[1], [0], [0], [1], [0, 0, 1, 1], [], []>} : vector<64x32xbf16>, vector<32x8xbf16>, vector<64x8xf32> -> vector<64x8xf32>
    %195 = arith.addf %188, %194 : vector<64x8xf32>
    %c0_213 = arith.constant 0 : index
    %c1_214 = arith.constant 1 : index
    %c0_215 = arith.constant 0 : index
    %196 = vector.load %arg20[%c0_213, %c1_214, %c0_215] : memref<10x10x32xf32, #tpu.memory_space<vmem>>, vector<8x8x32xf32>
    %197 = vector.shape_cast %196 : vector<8x8x32xf32> to vector<64x32xf32>
    %198 = arith.truncf %197 : vector<64x32xf32> to vector<64x32xbf16>
    %c1_216 = arith.constant 1 : index
    %c0_217 = arith.constant 0 : index
    %c0_218 = arith.constant 0 : index
    %199 = vector.load %arg8[%c1_216, %c0_217, %c0_218] : memref<9x32x8xbf16, #tpu.memory_space<vmem>>, vector<1x32x8xbf16>
    %200 = vector.shape_cast %199 : vector<1x32x8xbf16> to vector<32x8xbf16>
    %cst_219 = arith.constant dense<0.000000e+00> : vector<64x8xf32>
    %201 = tpu.matmul %198, %200, %cst_219 {dimension_numbers = #tpu.dot_dimension_numbers<[1], [0], [0], [1], [0, 0, 1, 1], [], []>} : vector<64x32xbf16>, vector<32x8xbf16>, vector<64x8xf32> -> vector<64x8xf32>
    %202 = arith.addf %195, %201 : vector<64x8xf32>
    %c0_220 = arith.constant 0 : index
    %c2_221 = arith.constant 2 : index
    %c0_222 = arith.constant 0 : index
    %203 = vector.load %arg20[%c0_220, %c2_221, %c0_222] : memref<10x10x32xf32, #tpu.memory_space<vmem>>, vector<8x8x32xf32>
    %204 = vector.shape_cast %203 : vector<8x8x32xf32> to vector<64x32xf32>
    %205 = arith.truncf %204 : vector<64x32xf32> to vector<64x32xbf16>
    %c2_223 = arith.constant 2 : index
    %c0_224 = arith.constant 0 : index
    %c0_225 = arith.constant 0 : index
    %206 = vector.load %arg8[%c2_223, %c0_224, %c0_225] : memref<9x32x8xbf16, #tpu.memory_space<vmem>>, vector<1x32x8xbf16>
    %207 = vector.shape_cast %206 : vector<1x32x8xbf16> to vector<32x8xbf16>
    %cst_226 = arith.constant dense<0.000000e+00> : vector<64x8xf32>
    %208 = tpu.matmul %205, %207, %cst_226 {dimension_numbers = #tpu.dot_dimension_numbers<[1], [0], [0], [1], [0, 0, 1, 1], [], []>} : vector<64x32xbf16>, vector<32x8xbf16>, vector<64x8xf32> -> vector<64x8xf32>
    %209 = arith.addf %202, %208 : vector<64x8xf32>
    %c1_227 = arith.constant 1 : index
    %c0_228 = arith.constant 0 : index
    %c0_229 = arith.constant 0 : index
    %210 = vector.load %arg20[%c1_227, %c0_228, %c0_229] : memref<10x10x32xf32, #tpu.memory_space<vmem>>, vector<8x8x32xf32>
    %211 = vector.shape_cast %210 : vector<8x8x32xf32> to vector<64x32xf32>
    %212 = arith.truncf %211 : vector<64x32xf32> to vector<64x32xbf16>
    %c3_230 = arith.constant 3 : index
    %c0_231 = arith.constant 0 : index
    %c0_232 = arith.constant 0 : index
    %213 = vector.load %arg8[%c3_230, %c0_231, %c0_232] : memref<9x32x8xbf16, #tpu.memory_space<vmem>>, vector<1x32x8xbf16>
    %214 = vector.shape_cast %213 : vector<1x32x8xbf16> to vector<32x8xbf16>
    %cst_233 = arith.constant dense<0.000000e+00> : vector<64x8xf32>
    %215 = tpu.matmul %212, %214, %cst_233 {dimension_numbers = #tpu.dot_dimension_numbers<[1], [0], [0], [1], [0, 0, 1, 1], [], []>} : vector<64x32xbf16>, vector<32x8xbf16>, vector<64x8xf32> -> vector<64x8xf32>
    %216 = arith.addf %209, %215 : vector<64x8xf32>
    %c1_234 = arith.constant 1 : index
    %c1_235 = arith.constant 1 : index
    %c0_236 = arith.constant 0 : index
    %217 = vector.load %arg20[%c1_234, %c1_235, %c0_236] : memref<10x10x32xf32, #tpu.memory_space<vmem>>, vector<8x8x32xf32>
    %218 = vector.shape_cast %217 : vector<8x8x32xf32> to vector<64x32xf32>
    %219 = arith.truncf %218 : vector<64x32xf32> to vector<64x32xbf16>
    %c4_237 = arith.constant 4 : index
    %c0_238 = arith.constant 0 : index
    %c0_239 = arith.constant 0 : index
    %220 = vector.load %arg8[%c4_237, %c0_238, %c0_239] : memref<9x32x8xbf16, #tpu.memory_space<vmem>>, vector<1x32x8xbf16>
    %221 = vector.shape_cast %220 : vector<1x32x8xbf16> to vector<32x8xbf16>
    %cst_240 = arith.constant dense<0.000000e+00> : vector<64x8xf32>
    %222 = tpu.matmul %219, %221, %cst_240 {dimension_numbers = #tpu.dot_dimension_numbers<[1], [0], [0], [1], [0, 0, 1, 1], [], []>} : vector<64x32xbf16>, vector<32x8xbf16>, vector<64x8xf32> -> vector<64x8xf32>
    %223 = arith.addf %216, %222 : vector<64x8xf32>
    %c1_241 = arith.constant 1 : index
    %c2_242 = arith.constant 2 : index
    %c0_243 = arith.constant 0 : index
    %224 = vector.load %arg20[%c1_241, %c2_242, %c0_243] : memref<10x10x32xf32, #tpu.memory_space<vmem>>, vector<8x8x32xf32>
    %225 = vector.shape_cast %224 : vector<8x8x32xf32> to vector<64x32xf32>
    %226 = arith.truncf %225 : vector<64x32xf32> to vector<64x32xbf16>
    %c5_244 = arith.constant 5 : index
    %c0_245 = arith.constant 0 : index
    %c0_246 = arith.constant 0 : index
    %227 = vector.load %arg8[%c5_244, %c0_245, %c0_246] : memref<9x32x8xbf16, #tpu.memory_space<vmem>>, vector<1x32x8xbf16>
    %228 = vector.shape_cast %227 : vector<1x32x8xbf16> to vector<32x8xbf16>
    %cst_247 = arith.constant dense<0.000000e+00> : vector<64x8xf32>
    %229 = tpu.matmul %226, %228, %cst_247 {dimension_numbers = #tpu.dot_dimension_numbers<[1], [0], [0], [1], [0, 0, 1, 1], [], []>} : vector<64x32xbf16>, vector<32x8xbf16>, vector<64x8xf32> -> vector<64x8xf32>
    %230 = arith.addf %223, %229 : vector<64x8xf32>
    %c2_248 = arith.constant 2 : index
    %c0_249 = arith.constant 0 : index
    %c0_250 = arith.constant 0 : index
    %231 = vector.load %arg20[%c2_248, %c0_249, %c0_250] : memref<10x10x32xf32, #tpu.memory_space<vmem>>, vector<8x8x32xf32>
    %232 = vector.shape_cast %231 : vector<8x8x32xf32> to vector<64x32xf32>
    %233 = arith.truncf %232 : vector<64x32xf32> to vector<64x32xbf16>
    %c6_251 = arith.constant 6 : index
    %c0_252 = arith.constant 0 : index
    %c0_253 = arith.constant 0 : index
    %234 = vector.load %arg8[%c6_251, %c0_252, %c0_253] : memref<9x32x8xbf16, #tpu.memory_space<vmem>>, vector<1x32x8xbf16>
    %235 = vector.shape_cast %234 : vector<1x32x8xbf16> to vector<32x8xbf16>
    %cst_254 = arith.constant dense<0.000000e+00> : vector<64x8xf32>
    %236 = tpu.matmul %233, %235, %cst_254 {dimension_numbers = #tpu.dot_dimension_numbers<[1], [0], [0], [1], [0, 0, 1, 1], [], []>} : vector<64x32xbf16>, vector<32x8xbf16>, vector<64x8xf32> -> vector<64x8xf32>
    %237 = arith.addf %230, %236 : vector<64x8xf32>
    %c2_255 = arith.constant 2 : index
    %c1_256 = arith.constant 1 : index
    %c0_257 = arith.constant 0 : index
    %238 = vector.load %arg20[%c2_255, %c1_256, %c0_257] : memref<10x10x32xf32, #tpu.memory_space<vmem>>, vector<8x8x32xf32>
    %239 = vector.shape_cast %238 : vector<8x8x32xf32> to vector<64x32xf32>
    %240 = arith.truncf %239 : vector<64x32xf32> to vector<64x32xbf16>
    %c7_258 = arith.constant 7 : index
    %c0_259 = arith.constant 0 : index
    %c0_260 = arith.constant 0 : index
    %241 = vector.load %arg8[%c7_258, %c0_259, %c0_260] : memref<9x32x8xbf16, #tpu.memory_space<vmem>>, vector<1x32x8xbf16>
    %242 = vector.shape_cast %241 : vector<1x32x8xbf16> to vector<32x8xbf16>
    %cst_261 = arith.constant dense<0.000000e+00> : vector<64x8xf32>
    %243 = tpu.matmul %240, %242, %cst_261 {dimension_numbers = #tpu.dot_dimension_numbers<[1], [0], [0], [1], [0, 0, 1, 1], [], []>} : vector<64x32xbf16>, vector<32x8xbf16>, vector<64x8xf32> -> vector<64x8xf32>
    %244 = arith.addf %237, %243 : vector<64x8xf32>
    %c2_262 = arith.constant 2 : index
    %c2_263 = arith.constant 2 : index
    %c0_264 = arith.constant 0 : index
    %245 = vector.load %arg20[%c2_262, %c2_263, %c0_264] : memref<10x10x32xf32, #tpu.memory_space<vmem>>, vector<8x8x32xf32>
    %246 = vector.shape_cast %245 : vector<8x8x32xf32> to vector<64x32xf32>
    %247 = arith.truncf %246 : vector<64x32xf32> to vector<64x32xbf16>
    %c8_265 = arith.constant 8 : index
    %c0_266 = arith.constant 0 : index
    %c0_267 = arith.constant 0 : index
    %248 = vector.load %arg8[%c8_265, %c0_266, %c0_267] : memref<9x32x8xbf16, #tpu.memory_space<vmem>>, vector<1x32x8xbf16>
    %249 = vector.shape_cast %248 : vector<1x32x8xbf16> to vector<32x8xbf16>
    %cst_268 = arith.constant dense<0.000000e+00> : vector<64x8xf32>
    %250 = tpu.matmul %247, %249, %cst_268 {dimension_numbers = #tpu.dot_dimension_numbers<[1], [0], [0], [1], [0, 0, 1, 1], [], []>} : vector<64x32xbf16>, vector<32x8xbf16>, vector<64x8xf32> -> vector<64x8xf32>
    %251 = arith.addf %244, %250 : vector<64x8xf32>
    %cst_269 = arith.constant 0.000000e+00 : f32
    %252 = vector.broadcast %cst_269 : f32 to vector<64x8xf32>
    %253 = arith.maximumf %251, %252 : vector<64x8xf32>
    %254 = arith.truncf %253 : vector<64x8xf32> to vector<64x8xbf16>
    %c0_270 = arith.constant 0 : index
    %c0_271 = arith.constant 0 : index
    %255 = vector.load %arg10[%c0_270, %c0_271] : memref<8x32xbf16, #tpu.memory_space<vmem>>, vector<8x32xbf16>
    %cst_272 = arith.constant dense<0.000000e+00> : vector<64x32xf32>
    %256 = tpu.matmul %254, %255, %cst_272 {dimension_numbers = #tpu.dot_dimension_numbers<[1], [0], [0], [1], [0, 0, 1, 1], [], []>} : vector<64x8xbf16>, vector<8x32xbf16>, vector<64x32xf32> -> vector<64x32xf32>
    %c0_273 = arith.constant 0 : index
    %c0_274 = arith.constant 0 : index
    %257 = vector.load %arg11[%c0_273, %c0_274] : memref<1x32xf32, #tpu.memory_space<vmem>>, vector<1x32xf32>
    %258 = vector.broadcast %257 : vector<1x32xf32> to vector<64x32xf32>
    %259 = arith.addf %256, %258 : vector<64x32xf32>
    %260 = arith.addf %181, %259 : vector<64x32xf32>
    %cst_275 = arith.constant 0.000000e+00 : f32
    %261 = vector.broadcast %cst_275 : f32 to vector<64x32xf32>
    %262 = arith.maximumf %260, %261 : vector<64x32xf32>
    %263 = vector.shape_cast %262 : vector<64x32xf32> to vector<8x8x32xf32>
    %c1_276 = arith.constant 1 : index
    %c1_277 = arith.constant 1 : index
    %c0_278 = arith.constant 0 : index
    %264 = vector.load %arg20[%c1_276, %c1_277, %c0_278] : memref<10x10x32xf32, #tpu.memory_space<vmem>>, vector<8x8x32xf32>
    tpu.vector_store %arg20[%c1_276, %c1_277, %c0_278], %263 {strides = array<i32>} : memref<10x10x32xf32, #tpu.memory_space<vmem>>, vector<8x8x32xf32>,
    %c0_279 = arith.constant 0 : index
    %c0_280 = arith.constant 0 : index
    %265 = vector.load %arg13[%c0_279, %c0_280] : memref<1x128xf32, #tpu.memory_space<vmem>>, vector<1x128xf32>
    %266 = vector.shape_cast %265 : vector<1x128xf32> to vector<1x128xf32>
    %267 = vector.broadcast %266 : vector<1x128xf32> to vector<64x128xf32>
    %c0_281 = arith.constant 0 : index
    %c0_282 = arith.constant 0 : index
    %c0_283 = arith.constant 0 : index
    %268 = vector.load %arg20[%c0_281, %c0_282, %c0_283] : memref<10x10x32xf32, #tpu.memory_space<vmem>>, vector<8x8x32xf32>
    %269 = vector.shape_cast %268 : vector<8x8x32xf32> to vector<64x32xf32>
    %270 = arith.truncf %269 : vector<64x32xf32> to vector<64x32xbf16>
    %c0_284 = arith.constant 0 : index
    %c0_285 = arith.constant 0 : index
    %c0_286 = arith.constant 0 : index
    %271 = vector.load %arg12[%c0_284, %c0_285, %c0_286] : memref<9x32x128xbf16, #tpu.memory_space<vmem>>, vector<1x32x128xbf16>
    %272 = vector.shape_cast %271 : vector<1x32x128xbf16> to vector<32x128xbf16>
    %cst_287 = arith.constant dense<0.000000e+00> : vector<64x128xf32>
    %273 = tpu.matmul %270, %272, %cst_287 {dimension_numbers = #tpu.dot_dimension_numbers<[1], [0], [0], [1], [0, 0, 1, 1], [], []>} : vector<64x32xbf16>, vector<32x128xbf16>, vector<64x128xf32> -> vector<64x128xf32>
    %274 = arith.addf %267, %273 : vector<64x128xf32>
    %c0_288 = arith.constant 0 : index
    %c1_289 = arith.constant 1 : index
    %c0_290 = arith.constant 0 : index
    %275 = vector.load %arg20[%c0_288, %c1_289, %c0_290] : memref<10x10x32xf32, #tpu.memory_space<vmem>>, vector<8x8x32xf32>
    %276 = vector.shape_cast %275 : vector<8x8x32xf32> to vector<64x32xf32>
    %277 = arith.truncf %276 : vector<64x32xf32> to vector<64x32xbf16>
    %c1_291 = arith.constant 1 : index
    %c0_292 = arith.constant 0 : index
    %c0_293 = arith.constant 0 : index
    %278 = vector.load %arg12[%c1_291, %c0_292, %c0_293] : memref<9x32x128xbf16, #tpu.memory_space<vmem>>, vector<1x32x128xbf16>
    %279 = vector.shape_cast %278 : vector<1x32x128xbf16> to vector<32x128xbf16>
    %cst_294 = arith.constant dense<0.000000e+00> : vector<64x128xf32>
    %280 = tpu.matmul %277, %279, %cst_294 {dimension_numbers = #tpu.dot_dimension_numbers<[1], [0], [0], [1], [0, 0, 1, 1], [], []>} : vector<64x32xbf16>, vector<32x128xbf16>, vector<64x128xf32> -> vector<64x128xf32>
    %281 = arith.addf %274, %280 : vector<64x128xf32>
    %c0_295 = arith.constant 0 : index
    %c2_296 = arith.constant 2 : index
    %c0_297 = arith.constant 0 : index
    %282 = vector.load %arg20[%c0_295, %c2_296, %c0_297] : memref<10x10x32xf32, #tpu.memory_space<vmem>>, vector<8x8x32xf32>
    %283 = vector.shape_cast %282 : vector<8x8x32xf32> to vector<64x32xf32>
    %284 = arith.truncf %283 : vector<64x32xf32> to vector<64x32xbf16>
    %c2_298 = arith.constant 2 : index
    %c0_299 = arith.constant 0 : index
    %c0_300 = arith.constant 0 : index
    %285 = vector.load %arg12[%c2_298, %c0_299, %c0_300] : memref<9x32x128xbf16, #tpu.memory_space<vmem>>, vector<1x32x128xbf16>
    %286 = vector.shape_cast %285 : vector<1x32x128xbf16> to vector<32x128xbf16>
    %cst_301 = arith.constant dense<0.000000e+00> : vector<64x128xf32>
    %287 = tpu.matmul %284, %286, %cst_301 {dimension_numbers = #tpu.dot_dimension_numbers<[1], [0], [0], [1], [0, 0, 1, 1], [], []>} : vector<64x32xbf16>, vector<32x128xbf16>, vector<64x128xf32> -> vector<64x128xf32>
    %288 = arith.addf %281, %287 : vector<64x128xf32>
    %c1_302 = arith.constant 1 : index
    %c0_303 = arith.constant 0 : index
    %c0_304 = arith.constant 0 : index
    %289 = vector.load %arg20[%c1_302, %c0_303, %c0_304] : memref<10x10x32xf32, #tpu.memory_space<vmem>>, vector<8x8x32xf32>
    %290 = vector.shape_cast %289 : vector<8x8x32xf32> to vector<64x32xf32>
    %291 = arith.truncf %290 : vector<64x32xf32> to vector<64x32xbf16>
    %c3_305 = arith.constant 3 : index
    %c0_306 = arith.constant 0 : index
    %c0_307 = arith.constant 0 : index
    %292 = vector.load %arg12[%c3_305, %c0_306, %c0_307] : memref<9x32x128xbf16, #tpu.memory_space<vmem>>, vector<1x32x128xbf16>
    %293 = vector.shape_cast %292 : vector<1x32x128xbf16> to vector<32x128xbf16>
    %cst_308 = arith.constant dense<0.000000e+00> : vector<64x128xf32>
    %294 = tpu.matmul %291, %293, %cst_308 {dimension_numbers = #tpu.dot_dimension_numbers<[1], [0], [0], [1], [0, 0, 1, 1], [], []>} : vector<64x32xbf16>, vector<32x128xbf16>, vector<64x128xf32> -> vector<64x128xf32>
    %295 = arith.addf %288, %294 : vector<64x128xf32>
    %c1_309 = arith.constant 1 : index
    %c1_310 = arith.constant 1 : index
    %c0_311 = arith.constant 0 : index
    %296 = vector.load %arg20[%c1_309, %c1_310, %c0_311] : memref<10x10x32xf32, #tpu.memory_space<vmem>>, vector<8x8x32xf32>
    %297 = vector.shape_cast %296 : vector<8x8x32xf32> to vector<64x32xf32>
    %298 = arith.truncf %297 : vector<64x32xf32> to vector<64x32xbf16>
    %c4_312 = arith.constant 4 : index
    %c0_313 = arith.constant 0 : index
    %c0_314 = arith.constant 0 : index
    %299 = vector.load %arg12[%c4_312, %c0_313, %c0_314] : memref<9x32x128xbf16, #tpu.memory_space<vmem>>, vector<1x32x128xbf16>
    %300 = vector.shape_cast %299 : vector<1x32x128xbf16> to vector<32x128xbf16>
    %cst_315 = arith.constant dense<0.000000e+00> : vector<64x128xf32>
    %301 = tpu.matmul %298, %300, %cst_315 {dimension_numbers = #tpu.dot_dimension_numbers<[1], [0], [0], [1], [0, 0, 1, 1], [], []>} : vector<64x32xbf16>, vector<32x128xbf16>, vector<64x128xf32> -> vector<64x128xf32>
    %302 = arith.addf %295, %301 : vector<64x128xf32>
    %c1_316 = arith.constant 1 : index
    %c2_317 = arith.constant 2 : index
    %c0_318 = arith.constant 0 : index
    %303 = vector.load %arg20[%c1_316, %c2_317, %c0_318] : memref<10x10x32xf32, #tpu.memory_space<vmem>>, vector<8x8x32xf32>
    %304 = vector.shape_cast %303 : vector<8x8x32xf32> to vector<64x32xf32>
    %305 = arith.truncf %304 : vector<64x32xf32> to vector<64x32xbf16>
    %c5_319 = arith.constant 5 : index
    %c0_320 = arith.constant 0 : index
    %c0_321 = arith.constant 0 : index
    %306 = vector.load %arg12[%c5_319, %c0_320, %c0_321] : memref<9x32x128xbf16, #tpu.memory_space<vmem>>, vector<1x32x128xbf16>
    %307 = vector.shape_cast %306 : vector<1x32x128xbf16> to vector<32x128xbf16>
    %cst_322 = arith.constant dense<0.000000e+00> : vector<64x128xf32>
    %308 = tpu.matmul %305, %307, %cst_322 {dimension_numbers = #tpu.dot_dimension_numbers<[1], [0], [0], [1], [0, 0, 1, 1], [], []>} : vector<64x32xbf16>, vector<32x128xbf16>, vector<64x128xf32> -> vector<64x128xf32>
    %309 = arith.addf %302, %308 : vector<64x128xf32>
    %c2_323 = arith.constant 2 : index
    %c0_324 = arith.constant 0 : index
    %c0_325 = arith.constant 0 : index
    %310 = vector.load %arg20[%c2_323, %c0_324, %c0_325] : memref<10x10x32xf32, #tpu.memory_space<vmem>>, vector<8x8x32xf32>
    %311 = vector.shape_cast %310 : vector<8x8x32xf32> to vector<64x32xf32>
    %312 = arith.truncf %311 : vector<64x32xf32> to vector<64x32xbf16>
    %c6_326 = arith.constant 6 : index
    %c0_327 = arith.constant 0 : index
    %c0_328 = arith.constant 0 : index
    %313 = vector.load %arg12[%c6_326, %c0_327, %c0_328] : memref<9x32x128xbf16, #tpu.memory_space<vmem>>, vector<1x32x128xbf16>
    %314 = vector.shape_cast %313 : vector<1x32x128xbf16> to vector<32x128xbf16>
    %cst_329 = arith.constant dense<0.000000e+00> : vector<64x128xf32>
    %315 = tpu.matmul %312, %314, %cst_329 {dimension_numbers = #tpu.dot_dimension_numbers<[1], [0], [0], [1], [0, 0, 1, 1], [], []>} : vector<64x32xbf16>, vector<32x128xbf16>, vector<64x128xf32> -> vector<64x128xf32>
    %316 = arith.addf %309, %315 : vector<64x128xf32>
    %c2_330 = arith.constant 2 : index
    %c1_331 = arith.constant 1 : index
    %c0_332 = arith.constant 0 : index
    %317 = vector.load %arg20[%c2_330, %c1_331, %c0_332] : memref<10x10x32xf32, #tpu.memory_space<vmem>>, vector<8x8x32xf32>
    %318 = vector.shape_cast %317 : vector<8x8x32xf32> to vector<64x32xf32>
    %319 = arith.truncf %318 : vector<64x32xf32> to vector<64x32xbf16>
    %c7_333 = arith.constant 7 : index
    %c0_334 = arith.constant 0 : index
    %c0_335 = arith.constant 0 : index
    %320 = vector.load %arg12[%c7_333, %c0_334, %c0_335] : memref<9x32x128xbf16, #tpu.memory_space<vmem>>, vector<1x32x128xbf16>
    %321 = vector.shape_cast %320 : vector<1x32x128xbf16> to vector<32x128xbf16>
    %cst_336 = arith.constant dense<0.000000e+00> : vector<64x128xf32>
    %322 = tpu.matmul %319, %321, %cst_336 {dimension_numbers = #tpu.dot_dimension_numbers<[1], [0], [0], [1], [0, 0, 1, 1], [], []>} : vector<64x32xbf16>, vector<32x128xbf16>, vector<64x128xf32> -> vector<64x128xf32>
    %323 = arith.addf %316, %322 : vector<64x128xf32>
    %c2_337 = arith.constant 2 : index
    %c2_338 = arith.constant 2 : index
    %c0_339 = arith.constant 0 : index
    %324 = vector.load %arg20[%c2_337, %c2_338, %c0_339] : memref<10x10x32xf32, #tpu.memory_space<vmem>>, vector<8x8x32xf32>
    %325 = vector.shape_cast %324 : vector<8x8x32xf32> to vector<64x32xf32>
    %326 = arith.truncf %325 : vector<64x32xf32> to vector<64x32xbf16>
    %c8_340 = arith.constant 8 : index
    %c0_341 = arith.constant 0 : index
    %c0_342 = arith.constant 0 : index
    %327 = vector.load %arg12[%c8_340, %c0_341, %c0_342] : memref<9x32x128xbf16, #tpu.memory_space<vmem>>, vector<1x32x128xbf16>
    %328 = vector.shape_cast %327 : vector<1x32x128xbf16> to vector<32x128xbf16>
    %cst_343 = arith.constant dense<0.000000e+00> : vector<64x128xf32>
    %329 = tpu.matmul %326, %328, %cst_343 {dimension_numbers = #tpu.dot_dimension_numbers<[1], [0], [0], [1], [0, 0, 1, 1], [], []>} : vector<64x32xbf16>, vector<32x128xbf16>, vector<64x128xf32> -> vector<64x128xf32>
    %330 = arith.addf %323, %329 : vector<64x128xf32>
    %331 = vector.shape_cast %330 : vector<64x128xf32> to vector<8x8x128xf32>
    %c1_344 = arith.constant 1 : index
    %c1_345 = arith.constant 1 : index
    %c0_346 = arith.constant 0 : index
    %332 = vector.load %arg21[%c1_344, %c1_345, %c0_346] : memref<10x10x128xf32, #tpu.memory_space<vmem>>, vector<8x8x128xf32>
    tpu.vector_store %arg21[%c1_344, %c1_345, %c0_346], %331 {strides = array<i32>} : memref<10x10x128xf32, #tpu.memory_space<vmem>>, vector<8x8x128xf32>,
    %c0_347 = arith.constant 0 : index
    %c0_348 = arith.constant 0 : index
    %333 = vector.load %arg15[%c0_347, %c0_348] : memref<1x256xf32, #tpu.memory_space<vmem>>, vector<1x256xf32>
    %334 = vector.shape_cast %333 : vector<1x256xf32> to vector<1x256xf32>
    %335 = vector.broadcast %334 : vector<1x256xf32> to vector<64x256xf32>
    %c0_349 = arith.constant 0 : index
    %c0_350 = arith.constant 0 : index
    %c0_351 = arith.constant 0 : index
    %336 = vector.load %arg21[%c0_349, %c0_350, %c0_351] : memref<10x10x128xf32, #tpu.memory_space<vmem>>, vector<8x8x128xf32>
    %337 = vector.shape_cast %336 : vector<8x8x128xf32> to vector<64x128xf32>
    %338 = arith.truncf %337 : vector<64x128xf32> to vector<64x128xbf16>
    %c0_352 = arith.constant 0 : index
    %c0_353 = arith.constant 0 : index
    %c0_354 = arith.constant 0 : index
    %339 = vector.load %arg14[%c0_352, %c0_353, %c0_354] : memref<9x128x256xbf16, #tpu.memory_space<vmem>>, vector<1x128x256xbf16>
    %340 = vector.shape_cast %339 : vector<1x128x256xbf16> to vector<128x256xbf16>
    %cst_355 = arith.constant dense<0.000000e+00> : vector<64x256xf32>
    %341 = tpu.matmul %338, %340, %cst_355 {dimension_numbers = #tpu.dot_dimension_numbers<[1], [0], [0], [1], [0, 0, 1, 1], [], []>} : vector<64x128xbf16>, vector<128x256xbf16>, vector<64x256xf32> -> vector<64x256xf32>
    %342 = arith.addf %335, %341 : vector<64x256xf32>
    %c0_356 = arith.constant 0 : index
    %c1_357 = arith.constant 1 : index
    %c0_358 = arith.constant 0 : index
    %343 = vector.load %arg21[%c0_356, %c1_357, %c0_358] : memref<10x10x128xf32, #tpu.memory_space<vmem>>, vector<8x8x128xf32>
    %344 = vector.shape_cast %343 : vector<8x8x128xf32> to vector<64x128xf32>
    %345 = arith.truncf %344 : vector<64x128xf32> to vector<64x128xbf16>
    %c1_359 = arith.constant 1 : index
    %c0_360 = arith.constant 0 : index
    %c0_361 = arith.constant 0 : index
    %346 = vector.load %arg14[%c1_359, %c0_360, %c0_361] : memref<9x128x256xbf16, #tpu.memory_space<vmem>>, vector<1x128x256xbf16>
    %347 = vector.shape_cast %346 : vector<1x128x256xbf16> to vector<128x256xbf16>
    %cst_362 = arith.constant dense<0.000000e+00> : vector<64x256xf32>
    %348 = tpu.matmul %345, %347, %cst_362 {dimension_numbers = #tpu.dot_dimension_numbers<[1], [0], [0], [1], [0, 0, 1, 1], [], []>} : vector<64x128xbf16>, vector<128x256xbf16>, vector<64x256xf32> -> vector<64x256xf32>
    %349 = arith.addf %342, %348 : vector<64x256xf32>
    %c0_363 = arith.constant 0 : index
    %c2_364 = arith.constant 2 : index
    %c0_365 = arith.constant 0 : index
    %350 = vector.load %arg21[%c0_363, %c2_364, %c0_365] : memref<10x10x128xf32, #tpu.memory_space<vmem>>, vector<8x8x128xf32>
    %351 = vector.shape_cast %350 : vector<8x8x128xf32> to vector<64x128xf32>
    %352 = arith.truncf %351 : vector<64x128xf32> to vector<64x128xbf16>
    %c2_366 = arith.constant 2 : index
    %c0_367 = arith.constant 0 : index
    %c0_368 = arith.constant 0 : index
    %353 = vector.load %arg14[%c2_366, %c0_367, %c0_368] : memref<9x128x256xbf16, #tpu.memory_space<vmem>>, vector<1x128x256xbf16>
    %354 = vector.shape_cast %353 : vector<1x128x256xbf16> to vector<128x256xbf16>
    %cst_369 = arith.constant dense<0.000000e+00> : vector<64x256xf32>
    %355 = tpu.matmul %352, %354, %cst_369 {dimension_numbers = #tpu.dot_dimension_numbers<[1], [0], [0], [1], [0, 0, 1, 1], [], []>} : vector<64x128xbf16>, vector<128x256xbf16>, vector<64x256xf32> -> vector<64x256xf32>
    %356 = arith.addf %349, %355 : vector<64x256xf32>
    %c1_370 = arith.constant 1 : index
    %c0_371 = arith.constant 0 : index
    %c0_372 = arith.constant 0 : index
    %357 = vector.load %arg21[%c1_370, %c0_371, %c0_372] : memref<10x10x128xf32, #tpu.memory_space<vmem>>, vector<8x8x128xf32>
    %358 = vector.shape_cast %357 : vector<8x8x128xf32> to vector<64x128xf32>
    %359 = arith.truncf %358 : vector<64x128xf32> to vector<64x128xbf16>
    %c3_373 = arith.constant 3 : index
    %c0_374 = arith.constant 0 : index
    %c0_375 = arith.constant 0 : index
    %360 = vector.load %arg14[%c3_373, %c0_374, %c0_375] : memref<9x128x256xbf16, #tpu.memory_space<vmem>>, vector<1x128x256xbf16>
    %361 = vector.shape_cast %360 : vector<1x128x256xbf16> to vector<128x256xbf16>
    %cst_376 = arith.constant dense<0.000000e+00> : vector<64x256xf32>
    %362 = tpu.matmul %359, %361, %cst_376 {dimension_numbers = #tpu.dot_dimension_numbers<[1], [0], [0], [1], [0, 0, 1, 1], [], []>} : vector<64x128xbf16>, vector<128x256xbf16>, vector<64x256xf32> -> vector<64x256xf32>
    %363 = arith.addf %356, %362 : vector<64x256xf32>
    %c1_377 = arith.constant 1 : index
    %c1_378 = arith.constant 1 : index
    %c0_379 = arith.constant 0 : index
    %364 = vector.load %arg21[%c1_377, %c1_378, %c0_379] : memref<10x10x128xf32, #tpu.memory_space<vmem>>, vector<8x8x128xf32>
    %365 = vector.shape_cast %364 : vector<8x8x128xf32> to vector<64x128xf32>
    %366 = arith.truncf %365 : vector<64x128xf32> to vector<64x128xbf16>
    %c4_380 = arith.constant 4 : index
    %c0_381 = arith.constant 0 : index
    %c0_382 = arith.constant 0 : index
    %367 = vector.load %arg14[%c4_380, %c0_381, %c0_382] : memref<9x128x256xbf16, #tpu.memory_space<vmem>>, vector<1x128x256xbf16>
    %368 = vector.shape_cast %367 : vector<1x128x256xbf16> to vector<128x256xbf16>
    %cst_383 = arith.constant dense<0.000000e+00> : vector<64x256xf32>
    %369 = tpu.matmul %366, %368, %cst_383 {dimension_numbers = #tpu.dot_dimension_numbers<[1], [0], [0], [1], [0, 0, 1, 1], [], []>} : vector<64x128xbf16>, vector<128x256xbf16>, vector<64x256xf32> -> vector<64x256xf32>
    %370 = arith.addf %363, %369 : vector<64x256xf32>
    %c1_384 = arith.constant 1 : index
    %c2_385 = arith.constant 2 : index
    %c0_386 = arith.constant 0 : index
    %371 = vector.load %arg21[%c1_384, %c2_385, %c0_386] : memref<10x10x128xf32, #tpu.memory_space<vmem>>, vector<8x8x128xf32>
    %372 = vector.shape_cast %371 : vector<8x8x128xf32> to vector<64x128xf32>
    %373 = arith.truncf %372 : vector<64x128xf32> to vector<64x128xbf16>
    %c5_387 = arith.constant 5 : index
    %c0_388 = arith.constant 0 : index
    %c0_389 = arith.constant 0 : index
    %374 = vector.load %arg14[%c5_387, %c0_388, %c0_389] : memref<9x128x256xbf16, #tpu.memory_space<vmem>>, vector<1x128x256xbf16>
    %375 = vector.shape_cast %374 : vector<1x128x256xbf16> to vector<128x256xbf16>
    %cst_390 = arith.constant dense<0.000000e+00> : vector<64x256xf32>
    %376 = tpu.matmul %373, %375, %cst_390 {dimension_numbers = #tpu.dot_dimension_numbers<[1], [0], [0], [1], [0, 0, 1, 1], [], []>} : vector<64x128xbf16>, vector<128x256xbf16>, vector<64x256xf32> -> vector<64x256xf32>
    %377 = arith.addf %370, %376 : vector<64x256xf32>
    %c2_391 = arith.constant 2 : index
    %c0_392 = arith.constant 0 : index
    %c0_393 = arith.constant 0 : index
    %378 = vector.load %arg21[%c2_391, %c0_392, %c0_393] : memref<10x10x128xf32, #tpu.memory_space<vmem>>, vector<8x8x128xf32>
    %379 = vector.shape_cast %378 : vector<8x8x128xf32> to vector<64x128xf32>
    %380 = arith.truncf %379 : vector<64x128xf32> to vector<64x128xbf16>
    %c6_394 = arith.constant 6 : index
    %c0_395 = arith.constant 0 : index
    %c0_396 = arith.constant 0 : index
    %381 = vector.load %arg14[%c6_394, %c0_395, %c0_396] : memref<9x128x256xbf16, #tpu.memory_space<vmem>>, vector<1x128x256xbf16>
    %382 = vector.shape_cast %381 : vector<1x128x256xbf16> to vector<128x256xbf16>
    %cst_397 = arith.constant dense<0.000000e+00> : vector<64x256xf32>
    %383 = tpu.matmul %380, %382, %cst_397 {dimension_numbers = #tpu.dot_dimension_numbers<[1], [0], [0], [1], [0, 0, 1, 1], [], []>} : vector<64x128xbf16>, vector<128x256xbf16>, vector<64x256xf32> -> vector<64x256xf32>
    %384 = arith.addf %377, %383 : vector<64x256xf32>
    %c2_398 = arith.constant 2 : index
    %c1_399 = arith.constant 1 : index
    %c0_400 = arith.constant 0 : index
    %385 = vector.load %arg21[%c2_398, %c1_399, %c0_400] : memref<10x10x128xf32, #tpu.memory_space<vmem>>, vector<8x8x128xf32>
    %386 = vector.shape_cast %385 : vector<8x8x128xf32> to vector<64x128xf32>
    %387 = arith.truncf %386 : vector<64x128xf32> to vector<64x128xbf16>
    %c7_401 = arith.constant 7 : index
    %c0_402 = arith.constant 0 : index
    %c0_403 = arith.constant 0 : index
    %388 = vector.load %arg14[%c7_401, %c0_402, %c0_403] : memref<9x128x256xbf16, #tpu.memory_space<vmem>>, vector<1x128x256xbf16>
    %389 = vector.shape_cast %388 : vector<1x128x256xbf16> to vector<128x256xbf16>
    %cst_404 = arith.constant dense<0.000000e+00> : vector<64x256xf32>
    %390 = tpu.matmul %387, %389, %cst_404 {dimension_numbers = #tpu.dot_dimension_numbers<[1], [0], [0], [1], [0, 0, 1, 1], [], []>} : vector<64x128xbf16>, vector<128x256xbf16>, vector<64x256xf32> -> vector<64x256xf32>
    %391 = arith.addf %384, %390 : vector<64x256xf32>
    %c2_405 = arith.constant 2 : index
    %c2_406 = arith.constant 2 : index
    %c0_407 = arith.constant 0 : index
    %392 = vector.load %arg21[%c2_405, %c2_406, %c0_407] : memref<10x10x128xf32, #tpu.memory_space<vmem>>, vector<8x8x128xf32>
    %393 = vector.shape_cast %392 : vector<8x8x128xf32> to vector<64x128xf32>
    %394 = arith.truncf %393 : vector<64x128xf32> to vector<64x128xbf16>
    %c8_408 = arith.constant 8 : index
    %c0_409 = arith.constant 0 : index
    %c0_410 = arith.constant 0 : index
    %395 = vector.load %arg14[%c8_408, %c0_409, %c0_410] : memref<9x128x256xbf16, #tpu.memory_space<vmem>>, vector<1x128x256xbf16>
    %396 = vector.shape_cast %395 : vector<1x128x256xbf16> to vector<128x256xbf16>
    %cst_411 = arith.constant dense<0.000000e+00> : vector<64x256xf32>
    %397 = tpu.matmul %394, %396, %cst_411 {dimension_numbers = #tpu.dot_dimension_numbers<[1], [0], [0], [1], [0, 0, 1, 1], [], []>} : vector<64x128xbf16>, vector<128x256xbf16>, vector<64x256xf32> -> vector<64x256xf32>
    %398 = arith.addf %391, %397 : vector<64x256xf32>
    %cst_412 = arith.constant 0.000000e+00 : f32
    %399 = vector.broadcast %cst_412 : f32 to vector<64x256xf32>
    %400 = arith.maximumf %398, %399 : vector<64x256xf32>
    %401 = vector.shape_cast %400 : vector<64x256xf32> to vector<8x8x256xf32>
    %c1_413 = arith.constant 1 : index
    %c1_414 = arith.constant 1 : index
    %c0_415 = arith.constant 0 : index
    %402 = vector.load %arg22[%c1_413, %c1_414, %c0_415] : memref<10x10x256xf32, #tpu.memory_space<vmem>>, vector<8x8x256xf32>
    tpu.vector_store %arg22[%c1_413, %c1_414, %c0_415], %401 {strides = array<i32>} : memref<10x10x256xf32, #tpu.memory_space<vmem>>, vector<8x8x256xf32>,
    %c0_416 = arith.constant 0 : index
    %c0_417 = arith.constant 0 : index
    %403 = vector.load %arg17[%c0_416, %c0_417] : memref<1x192xf32, #tpu.memory_space<vmem>>, vector<1x192xf32>
    %404 = vector.shape_cast %403 : vector<1x192xf32> to vector<1x192xf32>
    %405 = vector.broadcast %404 : vector<1x192xf32> to vector<64x192xf32>
    %c0_418 = arith.constant 0 : index
    %c0_419 = arith.constant 0 : index
    %c0_420 = arith.constant 0 : index
    %406 = vector.load %arg22[%c0_418, %c0_419, %c0_420] : memref<10x10x256xf32, #tpu.memory_space<vmem>>, vector<8x8x256xf32>
    %407 = vector.shape_cast %406 : vector<8x8x256xf32> to vector<64x256xf32>
    %408 = arith.truncf %407 : vector<64x256xf32> to vector<64x256xbf16>
    %c0_421 = arith.constant 0 : index
    %c0_422 = arith.constant 0 : index
    %c0_423 = arith.constant 0 : index
    %409 = vector.load %arg16[%c0_421, %c0_422, %c0_423] : memref<9x256x192xbf16, #tpu.memory_space<vmem>>, vector<1x256x192xbf16>
    %410 = vector.shape_cast %409 : vector<1x256x192xbf16> to vector<256x192xbf16>
    %cst_424 = arith.constant dense<0.000000e+00> : vector<64x192xf32>
    %411 = tpu.matmul %408, %410, %cst_424 {dimension_numbers = #tpu.dot_dimension_numbers<[1], [0], [0], [1], [0, 0, 1, 1], [], []>} : vector<64x256xbf16>, vector<256x192xbf16>, vector<64x192xf32> -> vector<64x192xf32>
    %412 = arith.addf %405, %411 : vector<64x192xf32>
    %c0_425 = arith.constant 0 : index
    %c1_426 = arith.constant 1 : index
    %c0_427 = arith.constant 0 : index
    %413 = vector.load %arg22[%c0_425, %c1_426, %c0_427] : memref<10x10x256xf32, #tpu.memory_space<vmem>>, vector<8x8x256xf32>
    %414 = vector.shape_cast %413 : vector<8x8x256xf32> to vector<64x256xf32>
    %415 = arith.truncf %414 : vector<64x256xf32> to vector<64x256xbf16>
    %c1_428 = arith.constant 1 : index
    %c0_429 = arith.constant 0 : index
    %c0_430 = arith.constant 0 : index
    %416 = vector.load %arg16[%c1_428, %c0_429, %c0_430] : memref<9x256x192xbf16, #tpu.memory_space<vmem>>, vector<1x256x192xbf16>
    %417 = vector.shape_cast %416 : vector<1x256x192xbf16> to vector<256x192xbf16>
    %cst_431 = arith.constant dense<0.000000e+00> : vector<64x192xf32>
    %418 = tpu.matmul %415, %417, %cst_431 {dimension_numbers = #tpu.dot_dimension_numbers<[1], [0], [0], [1], [0, 0, 1, 1], [], []>} : vector<64x256xbf16>, vector<256x192xbf16>, vector<64x192xf32> -> vector<64x192xf32>
    %419 = arith.addf %412, %418 : vector<64x192xf32>
    %c0_432 = arith.constant 0 : index
    %c2_433 = arith.constant 2 : index
    %c0_434 = arith.constant 0 : index
    %420 = vector.load %arg22[%c0_432, %c2_433, %c0_434] : memref<10x10x256xf32, #tpu.memory_space<vmem>>, vector<8x8x256xf32>
    %421 = vector.shape_cast %420 : vector<8x8x256xf32> to vector<64x256xf32>
    %422 = arith.truncf %421 : vector<64x256xf32> to vector<64x256xbf16>
    %c2_435 = arith.constant 2 : index
    %c0_436 = arith.constant 0 : index
    %c0_437 = arith.constant 0 : index
    %423 = vector.load %arg16[%c2_435, %c0_436, %c0_437] : memref<9x256x192xbf16, #tpu.memory_space<vmem>>, vector<1x256x192xbf16>
    %424 = vector.shape_cast %423 : vector<1x256x192xbf16> to vector<256x192xbf16>
    %cst_438 = arith.constant dense<0.000000e+00> : vector<64x192xf32>
    %425 = tpu.matmul %422, %424, %cst_438 {dimension_numbers = #tpu.dot_dimension_numbers<[1], [0], [0], [1], [0, 0, 1, 1], [], []>} : vector<64x256xbf16>, vector<256x192xbf16>, vector<64x192xf32> -> vector<64x192xf32>
    %426 = arith.addf %419, %425 : vector<64x192xf32>
    %c1_439 = arith.constant 1 : index
    %c0_440 = arith.constant 0 : index
    %c0_441 = arith.constant 0 : index
    %427 = vector.load %arg22[%c1_439, %c0_440, %c0_441] : memref<10x10x256xf32, #tpu.memory_space<vmem>>, vector<8x8x256xf32>
    %428 = vector.shape_cast %427 : vector<8x8x256xf32> to vector<64x256xf32>
    %429 = arith.truncf %428 : vector<64x256xf32> to vector<64x256xbf16>
    %c3_442 = arith.constant 3 : index
    %c0_443 = arith.constant 0 : index
    %c0_444 = arith.constant 0 : index
    %430 = vector.load %arg16[%c3_442, %c0_443, %c0_444] : memref<9x256x192xbf16, #tpu.memory_space<vmem>>, vector<1x256x192xbf16>
    %431 = vector.shape_cast %430 : vector<1x256x192xbf16> to vector<256x192xbf16>
    %cst_445 = arith.constant dense<0.000000e+00> : vector<64x192xf32>
    %432 = tpu.matmul %429, %431, %cst_445 {dimension_numbers = #tpu.dot_dimension_numbers<[1], [0], [0], [1], [0, 0, 1, 1], [], []>} : vector<64x256xbf16>, vector<256x192xbf16>, vector<64x192xf32> -> vector<64x192xf32>
    %433 = arith.addf %426, %432 : vector<64x192xf32>
    %c1_446 = arith.constant 1 : index
    %c1_447 = arith.constant 1 : index
    %c0_448 = arith.constant 0 : index
    %434 = vector.load %arg22[%c1_446, %c1_447, %c0_448] : memref<10x10x256xf32, #tpu.memory_space<vmem>>, vector<8x8x256xf32>
    %435 = vector.shape_cast %434 : vector<8x8x256xf32> to vector<64x256xf32>
    %436 = arith.truncf %435 : vector<64x256xf32> to vector<64x256xbf16>
    %c4_449 = arith.constant 4 : index
    %c0_450 = arith.constant 0 : index
    %c0_451 = arith.constant 0 : index
    %437 = vector.load %arg16[%c4_449, %c0_450, %c0_451] : memref<9x256x192xbf16, #tpu.memory_space<vmem>>, vector<1x256x192xbf16>
    %438 = vector.shape_cast %437 : vector<1x256x192xbf16> to vector<256x192xbf16>
    %cst_452 = arith.constant dense<0.000000e+00> : vector<64x192xf32>
    %439 = tpu.matmul %436, %438, %cst_452 {dimension_numbers = #tpu.dot_dimension_numbers<[1], [0], [0], [1], [0, 0, 1, 1], [], []>} : vector<64x256xbf16>, vector<256x192xbf16>, vector<64x192xf32> -> vector<64x192xf32>
    %440 = arith.addf %433, %439 : vector<64x192xf32>
    %c1_453 = arith.constant 1 : index
    %c2_454 = arith.constant 2 : index
    %c0_455 = arith.constant 0 : index
    %441 = vector.load %arg22[%c1_453, %c2_454, %c0_455] : memref<10x10x256xf32, #tpu.memory_space<vmem>>, vector<8x8x256xf32>
    %442 = vector.shape_cast %441 : vector<8x8x256xf32> to vector<64x256xf32>
    %443 = arith.truncf %442 : vector<64x256xf32> to vector<64x256xbf16>
    %c5_456 = arith.constant 5 : index
    %c0_457 = arith.constant 0 : index
    %c0_458 = arith.constant 0 : index
    %444 = vector.load %arg16[%c5_456, %c0_457, %c0_458] : memref<9x256x192xbf16, #tpu.memory_space<vmem>>, vector<1x256x192xbf16>
    %445 = vector.shape_cast %444 : vector<1x256x192xbf16> to vector<256x192xbf16>
    %cst_459 = arith.constant dense<0.000000e+00> : vector<64x192xf32>
    %446 = tpu.matmul %443, %445, %cst_459 {dimension_numbers = #tpu.dot_dimension_numbers<[1], [0], [0], [1], [0, 0, 1, 1], [], []>} : vector<64x256xbf16>, vector<256x192xbf16>, vector<64x192xf32> -> vector<64x192xf32>
    %447 = arith.addf %440, %446 : vector<64x192xf32>
    %c2_460 = arith.constant 2 : index
    %c0_461 = arith.constant 0 : index
    %c0_462 = arith.constant 0 : index
    %448 = vector.load %arg22[%c2_460, %c0_461, %c0_462] : memref<10x10x256xf32, #tpu.memory_space<vmem>>, vector<8x8x256xf32>
    %449 = vector.shape_cast %448 : vector<8x8x256xf32> to vector<64x256xf32>
    %450 = arith.truncf %449 : vector<64x256xf32> to vector<64x256xbf16>
    %c6_463 = arith.constant 6 : index
    %c0_464 = arith.constant 0 : index
    %c0_465 = arith.constant 0 : index
    %451 = vector.load %arg16[%c6_463, %c0_464, %c0_465] : memref<9x256x192xbf16, #tpu.memory_space<vmem>>, vector<1x256x192xbf16>
    %452 = vector.shape_cast %451 : vector<1x256x192xbf16> to vector<256x192xbf16>
    %cst_466 = arith.constant dense<0.000000e+00> : vector<64x192xf32>
    %453 = tpu.matmul %450, %452, %cst_466 {dimension_numbers = #tpu.dot_dimension_numbers<[1], [0], [0], [1], [0, 0, 1, 1], [], []>} : vector<64x256xbf16>, vector<256x192xbf16>, vector<64x192xf32> -> vector<64x192xf32>
    %454 = arith.addf %447, %453 : vector<64x192xf32>
    %c2_467 = arith.constant 2 : index
    %c1_468 = arith.constant 1 : index
    %c0_469 = arith.constant 0 : index
    %455 = vector.load %arg22[%c2_467, %c1_468, %c0_469] : memref<10x10x256xf32, #tpu.memory_space<vmem>>, vector<8x8x256xf32>
    %456 = vector.shape_cast %455 : vector<8x8x256xf32> to vector<64x256xf32>
    %457 = arith.truncf %456 : vector<64x256xf32> to vector<64x256xbf16>
    %c7_470 = arith.constant 7 : index
    %c0_471 = arith.constant 0 : index
    %c0_472 = arith.constant 0 : index
    %458 = vector.load %arg16[%c7_470, %c0_471, %c0_472] : memref<9x256x192xbf16, #tpu.memory_space<vmem>>, vector<1x256x192xbf16>
    %459 = vector.shape_cast %458 : vector<1x256x192xbf16> to vector<256x192xbf16>
    %cst_473 = arith.constant dense<0.000000e+00> : vector<64x192xf32>
    %460 = tpu.matmul %457, %459, %cst_473 {dimension_numbers = #tpu.dot_dimension_numbers<[1], [0], [0], [1], [0, 0, 1, 1], [], []>} : vector<64x256xbf16>, vector<256x192xbf16>, vector<64x192xf32> -> vector<64x192xf32>
    %461 = arith.addf %454, %460 : vector<64x192xf32>
    %c2_474 = arith.constant 2 : index
    %c2_475 = arith.constant 2 : index
    %c0_476 = arith.constant 0 : index
    %462 = vector.load %arg22[%c2_474, %c2_475, %c0_476] : memref<10x10x256xf32, #tpu.memory_space<vmem>>, vector<8x8x256xf32>
    %463 = vector.shape_cast %462 : vector<8x8x256xf32> to vector<64x256xf32>
    %464 = arith.truncf %463 : vector<64x256xf32> to vector<64x256xbf16>
    %c8_477 = arith.constant 8 : index
    %c0_478 = arith.constant 0 : index
    %c0_479 = arith.constant 0 : index
    %465 = vector.load %arg16[%c8_477, %c0_478, %c0_479] : memref<9x256x192xbf16, #tpu.memory_space<vmem>>, vector<1x256x192xbf16>
    %466 = vector.shape_cast %465 : vector<1x256x192xbf16> to vector<256x192xbf16>
    %cst_480 = arith.constant dense<0.000000e+00> : vector<64x192xf32>
    %467 = tpu.matmul %464, %466, %cst_480 {dimension_numbers = #tpu.dot_dimension_numbers<[1], [0], [0], [1], [0, 0, 1, 1], [], []>} : vector<64x256xbf16>, vector<256x192xbf16>, vector<64x192xf32> -> vector<64x192xf32>
    %468 = arith.addf %461, %467 : vector<64x192xf32>
    %c0_481 = arith.constant 0 : index
    %c0_482 = arith.constant 0 : index
    %c0_483 = arith.constant 0 : index
    %469 = vector.load %arg18[%c0_481, %c0_482, %c0_483] : memref<1x64x192xf32, #tpu.memory_space<vmem>>, vector<1x64x192xf32>
    %470 = vector.shape_cast %469 : vector<1x64x192xf32> to vector<64x192xf32>
    %471 = vector.shape_cast %468 : vector<64x192xf32> to vector<1x64x192xf32>
    tpu.vector_store %arg18[%c0_481, %c0_482, %c0_483], %471 {strides = array<i32>} : memref<1x64x192xf32, #tpu.memory_space<vmem>>, vector<1x64x192xf32>,
    return
  }
  func.func @transform_0(%arg0: i32) -> (i32, i32, i32, i32) {
    %c0_i32 = arith.constant 0 : i32
    %c0_i32_0 = arith.constant 0 : i32
    %c0_i32_1 = arith.constant 0 : i32
    %c0_i32_2 = arith.constant 0 : i32
    return %arg0, %c0_i32, %c0_i32_0, %c0_i32_1 : i32, i32, i32, i32
  }
  func.func @transform_1(%arg0: i32) -> (i32, i32, i32) {
    %c0_i32 = arith.constant 0 : i32
    %c0_i32_0 = arith.constant 0 : i32
    %c0_i32_1 = arith.constant 0 : i32
    %c0_i32_2 = arith.constant 0 : i32
    return %c0_i32, %c0_i32_0, %c0_i32_1 : i32, i32, i32
  }
  func.func @transform_2(%arg0: i32) -> (i32, i32) {
    %c0_i32 = arith.constant 0 : i32
    %c0_i32_0 = arith.constant 0 : i32
    %c0_i32_1 = arith.constant 0 : i32
    return %c0_i32, %c0_i32_0 : i32, i32
  }
  func.func @transform_3(%arg0: i32) -> (i32, i32, i32) {
    %c0_i32 = arith.constant 0 : i32
    %c0_i32_0 = arith.constant 0 : i32
    %c0_i32_1 = arith.constant 0 : i32
    %c0_i32_2 = arith.constant 0 : i32
    return %c0_i32, %c0_i32_0, %c0_i32_1 : i32, i32, i32
  }
  func.func @transform_4(%arg0: i32) -> (i32, i32) {
    %c0_i32 = arith.constant 0 : i32
    %c0_i32_0 = arith.constant 0 : i32
    %c0_i32_1 = arith.constant 0 : i32
    return %c0_i32, %c0_i32_0 : i32, i32
  }
  func.func @transform_5(%arg0: i32) -> (i32, i32) {
    %c0_i32 = arith.constant 0 : i32
    %c0_i32_0 = arith.constant 0 : i32
    %c0_i32_1 = arith.constant 0 : i32
    return %c0_i32, %c0_i32_0 : i32, i32
  }
  func.func @transform_6(%arg0: i32) -> (i32, i32) {
    %c0_i32 = arith.constant 0 : i32
    %c0_i32_0 = arith.constant 0 : i32
    %c0_i32_1 = arith.constant 0 : i32
    return %c0_i32, %c0_i32_0 : i32, i32
  }
  func.func @transform_7(%arg0: i32) -> (i32, i32, i32) {
    %c0_i32 = arith.constant 0 : i32
    %c0_i32_0 = arith.constant 0 : i32
    %c0_i32_1 = arith.constant 0 : i32
    %c0_i32_2 = arith.constant 0 : i32
    return %c0_i32, %c0_i32_0, %c0_i32_1 : i32, i32, i32
  }
  func.func @transform_8(%arg0: i32) -> (i32, i32) {
    %c0_i32 = arith.constant 0 : i32
    %c0_i32_0 = arith.constant 0 : i32
    %c0_i32_1 = arith.constant 0 : i32
    return %c0_i32, %c0_i32_0 : i32, i32
  }
  func.func @transform_9(%arg0: i32) -> (i32, i32) {
    %c0_i32 = arith.constant 0 : i32
    %c0_i32_0 = arith.constant 0 : i32
    %c0_i32_1 = arith.constant 0 : i32
    return %c0_i32, %c0_i32_0 : i32, i32
  }
  func.func @transform_10(%arg0: i32) -> (i32, i32) {
    %c0_i32 = arith.constant 0 : i32
    %c0_i32_0 = arith.constant 0 : i32
    %c0_i32_1 = arith.constant 0 : i32
    return %c0_i32, %c0_i32_0 : i32, i32
  }
  func.func @transform_11(%arg0: i32) -> (i32, i32, i32) {
    %c0_i32 = arith.constant 0 : i32
    %c0_i32_0 = arith.constant 0 : i32
    %c0_i32_1 = arith.constant 0 : i32
    %c0_i32_2 = arith.constant 0 : i32
    return %c0_i32, %c0_i32_0, %c0_i32_1 : i32, i32, i32
  }
  func.func @transform_12(%arg0: i32) -> (i32, i32) {
    %c0_i32 = arith.constant 0 : i32
    %c0_i32_0 = arith.constant 0 : i32
    %c0_i32_1 = arith.constant 0 : i32
    return %c0_i32, %c0_i32_0 : i32, i32
  }
  func.func @transform_13(%arg0: i32) -> (i32, i32, i32) {
    %c0_i32 = arith.constant 0 : i32
    %c0_i32_0 = arith.constant 0 : i32
    %c0_i32_1 = arith.constant 0 : i32
    %c0_i32_2 = arith.constant 0 : i32
    return %c0_i32, %c0_i32_0, %c0_i32_1 : i32, i32, i32
  }
  func.func @transform_14(%arg0: i32) -> (i32, i32) {
    %c0_i32 = arith.constant 0 : i32
    %c0_i32_0 = arith.constant 0 : i32
    %c0_i32_1 = arith.constant 0 : i32
    return %c0_i32, %c0_i32_0 : i32, i32
  }
  func.func @transform_15(%arg0: i32) -> (i32, i32, i32) {
    %c0_i32 = arith.constant 0 : i32
    %c0_i32_0 = arith.constant 0 : i32
    %c0_i32_1 = arith.constant 0 : i32
    %c0_i32_2 = arith.constant 0 : i32
    return %c0_i32, %c0_i32_0, %c0_i32_1 : i32, i32, i32
  }
  func.func @transform_16(%arg0: i32) -> (i32, i32) {
    %c0_i32 = arith.constant 0 : i32
    %c0_i32_0 = arith.constant 0 : i32
    %c0_i32_1 = arith.constant 0 : i32
    return %c0_i32, %c0_i32_0 : i32, i32
  }
  func.func @transform_17(%arg0: i32) -> (i32, i32, i32) {
    %c0_i32 = arith.constant 0 : i32
    %c0_i32_0 = arith.constant 0 : i32
    %c0_i32_1 = arith.constant 0 : i32
    return %arg0, %c0_i32, %c0_i32_0 : i32, i32, i32
  }
}

</mosaic_0001>

<llo_original>
// kernel: _lambda_.1
$region0: #{_lambda_.1}
  #allocation0 [shape = 'u32[]', space=smem, size = 0x4, offset = 0x4, fixed_abs, tag = 'smem constant byte address 0x4 - core index']
  #allocation1 [shape = 'u32[144,128]{1,0:T(1,128)}', space=vmem, size = 0x12000, scoped, tag = 'internal scratch']
  #allocation2 [shape = 'f32[10,10,4]{2,1,0:T(8,128)}', space=vmem, size = 0x14000, scoped, tag = 'scratch operand']
  #allocation3 [shape = 'f32[10,10,32]{2,1,0:T(8,128)}', space=vmem, size = 0x14000, scoped, tag = 'scratch operand']
  #allocation4 [shape = 'f32[10,10,128]{2,1,0:T(8,128)}', space=vmem, size = 0x14000, scoped, tag = 'scratch operand']
  #allocation5 [shape = 'f32[10,10,256]{2,1,0:T(8,128)}', space=vmem, size = 0x28000, scoped, tag = 'scratch operand']
  %s0 = inlined_call_operand.vmem [shape: f32[2,8,8,4], index: 0, kind: input, shape index: {}]
  %s1 = inlined_call_operand.vmem [shape: bf16[9,4,32], index: 1, kind: input, shape index: {}]
  %s2 = inlined_call_operand.vmem [shape: f32[1,32], index: 2, kind: input, shape index: {}]
  %s3 = inlined_call_operand.vmem [shape: bf16[9,32,8], index: 3, kind: input, shape index: {}]
  %s4 = inlined_call_operand.vmem [shape: f32[1,8], index: 4, kind: input, shape index: {}]
  %s5 = inlined_call_operand.vmem [shape: bf16[8,32], index: 5, kind: input, shape index: {}]
  %s6 = inlined_call_operand.vmem [shape: f32[1,32], index: 6, kind: input, shape index: {}]
  %s7 = inlined_call_operand.vmem [shape: bf16[9,32,8], index: 7, kind: input, shape index: {}]
  %s8 = inlined_call_operand.vmem [shape: f32[1,8], index: 8, kind: input, shape index: {}]
  %s9 = inlined_call_operand.vmem [shape: bf16[8,32], index: 9, kind: input, shape index: {}]
  %s10 = inlined_call_operand.vmem [shape: f32[1,32], index: 10, kind: input, shape index: {}]
  %s11 = inlined_call_operand.vmem [shape: bf16[9,32,128], index: 11, kind: input, shape index: {}]
  %s12 = inlined_call_operand.vmem [shape: f32[1,128], index: 12, kind: input, shape index: {}]
  %s13 = inlined_call_operand.vmem [shape: bf16[9,128,256], index: 13, kind: input, shape index: {}]
  %s14 = inlined_call_operand.vmem [shape: f32[1,256], index: 14, kind: input, shape index: {}]
  %s15 = inlined_call_operand.vmem [shape: bf16[9,256,192], index: 15, kind: input, shape index: {}]
  %s16 = inlined_call_operand.vmem [shape: f32[1,192], index: 16, kind: input, shape index: {}]
  %s17 = inlined_call_operand.vmem [shape: f32[2,64,192], index: 17, kind: output, shape index: {}]
  %s18 = sld [smem:[#allocation0]]
  $region101: #{_lambda_.1} parent=0
    _
  %s20 = ssub.s32 1, %s18
  %s21 = scalar_select 0, %s20, %s18
  loop: start=0, step=1, limit=4
  $region2: #{_lambda_.1} parent=0 // loop_pre_header
    _
  $region3: #{_lambda_.1} parent=0 // loop_header
    %s23 = sphi 0, %s27
    %p24 = scmp.ge.s32.totalorder %s23, 4
    %s33 = sphi 0, %s35
    %s36 = sphi 0, %s33
    %s37 = sphi 0, %s36
    %s53 = sphi 0, %s37
    %s57 = sphi 0, %s57
    %s59 = sphi 0, %s57
    %s60 = sphi 0, %s59
    %s74 = sphi 0, %s60
    %s78 = sphi 0, %s78
    %s80 = sphi 0, %s78
    %s81 = sphi 0, %s80
    %s95 = sphi 0, %s81
    %s99 = sphi 0, %s99
    %s101 = sphi 0, %s99
    %s102 = sphi 0, %s101
    %s116 = sphi 0, %s102
    %s120 = sphi 0, %s120
    %s122 = sphi 0, %s120
    %s123 = sphi 0, %s122
    %s137 = sphi 0, %s123
    %s141 = sphi 0, %s141
    %s143 = sphi 0, %s141
    %s144 = sphi 0, %s143
    %s158 = sphi 0, %s144
    %s162 = sphi 0, %s162
    %s164 = sphi 0, %s162
    %s165 = sphi 0, %s164
    %s179 = sphi 0, %s165
    %s183 = sphi 0, %s183
    %s185 = sphi 0, %s183
    %s186 = sphi 0, %s185
    %s200 = sphi 0, %s186
    %s204 = sphi 0, %s204
    %s206 = sphi 0, %s204
    %s207 = sphi 0, %s206
    %s221 = sphi 0, %s207
    %s225 = sphi 0, %s225
    %s227 = sphi 0, %s225
    %s228 = sphi 0, %s227
    %s242 = sphi 0, %s228
    %s246 = sphi 0, %s246
    %s248 = sphi 0, %s246
    %s249 = sphi 0, %s248
    %s263 = sphi 0, %s249
    %s267 = sphi 0, %s267
    %s269 = sphi 0, %s267
    %s270 = sphi 0, %s269
    %s284 = sphi 0, %s270
    %s288 = sphi 0, %s288
    %s290 = sphi 0, %s288
    %s291 = sphi 0, %s290
    %s305 = sphi 0, %s291
    %s309 = sphi 0, %s309
    %s311 = sphi 0, %s309
    %s312 = sphi 0, %s311
    %s326 = sphi 0, %s312
    %s330 = sphi 0, %s330
    %s332 = sphi 0, %s330
    %s333 = sphi 0, %s332
    %s347 = sphi 0, %s333
    %s351 = sphi 0, %s351
    %s353 = sphi 0, %s351
    %s354 = sphi 0, %s353
    %s368 = sphi 0, %s354
    %s372 = sphi 0, %s372
    %s374 = sphi 0, %s372
    %s375 = sphi 0, %s374
    %s389 = sphi 0, %s375
    %s395 = sphi 0, %s397
    %s398 = sphi 0, %s395
    %s399 = sphi 0, %s398
    %s415 = sphi 0, %s399
  $region4: #{_lambda_.1} parent=0 // loop_header_branch
    %26 = sbr.rel (%p24) target = $region8
  $region5: #{_lambda_.1} parent=0 // loop_body
    %s28 = ssub.s32 %s23, 1
    %s29 = ssub.s32 %s23, 2
    %s30 = sadd.s32 %s23, 1
    %s31 = ssub.s32 %s23, %s30
    %p32 = scmp.eq.s32.totalorder %s31, 0
    %s34 = sadd.s32 %s33, 1
    %s35 = scalar_select %p32, %s33, %s34
    %p38 = pneg %p32
    %p39 = scmp.eq.s32.totalorder %s23, 1
    %p40 = por %p38, %p39
    %p41 = scmp.ne.s32.totalorder %s33, %s36
    %p42 = scmp.eq.s32.totalorder %s23, 0
    %p43 = por %p41, %p42
    %p44 = scmp.ne.s32.totalorder %s33, %s36
    %p45 = scmp.eq.s32.totalorder %s28, 1
    %p46 = por %p44, %p45
    %p47 = scmp.ne.s32.totalorder %s36, %s37
    %p48 = scmp.eq.s32.totalorder %s28, 0
    %p49 = por %p47, %p48
    %p50 = scmp.ne.s32.totalorder %s36, %s37
    %p51 = scmp.eq.s32.totalorder %s29, 1
    %p52 = por %p50, %p51
    %p54 = scmp.ne.s32.totalorder %s37, %s53
    %p55 = scmp.eq.s32.totalorder %s29, 0
    %p56 = por %p54, %p55
    %s58 = sadd.s32 %s57, 1
    %p61 = scmp.eq.s32.totalorder %s23, 1
    %p62 = scmp.ne.s32.totalorder %s57, %s59
    %p63 = scmp.eq.s32.totalorder %s23, 0
    %p64 = por %p62, %p63
    %p65 = scmp.ne.s32.totalorder %s57, %s59
    %p66 = scmp.eq.s32.totalorder %s28, 1
    %p67 = por %p65, %p66
    %p68 = scmp.ne.s32.totalorder %s59, %s60
    %p69 = scmp.eq.s32.totalorder %s28, 0
    %p70 = por %p68, %p69
    %p71 = scmp.ne.s32.totalorder %s59, %s60
    %p72 = scmp.eq.s32.totalorder %s29, 1
    %p73 = por %p71, %p72
    %p75 = scmp.ne.s32.totalorder %s60, %s74
    %p76 = scmp.eq.s32.totalorder %s29, 0
    %p77 = por %p75, %p76
    %s79 = sadd.s32 %s78, 1
    %p82 = scmp.eq.s32.totalorder %s23, 1
    %p83 = scmp.ne.s32.totalorder %s78, %s80
    %p84 = scmp.eq.s32.totalorder %s23, 0
    %p85 = por %p83, %p84
    %p86 = scmp.ne.s32.totalorder %s78, %s80
    %p87 = scmp.eq.s32.totalorder %s28, 1
    %p88 = por %p86, %p87
    %p89 = scmp.ne.s32.totalorder %s80, %s81
    %p90 = scmp.eq.s32.totalorder %s28, 0
    %p91 = por %p89, %p90
    %p92 = scmp.ne.s32.totalorder %s80, %s81
    %p93 = scmp.eq.s32.totalorder %s29, 1
    %p94 = por %p92, %p93
    %p96 = scmp.ne.s32.totalorder %s81, %s95
    %p97 = scmp.eq.s32.totalorder %s29, 0
    %p98 = por %p96, %p97
    %s100 = sadd.s32 %s99, 1
    %p103 = scmp.eq.s32.totalorder %s23, 1
    %p104 = scmp.ne.s32.totalorder %s99, %s101
    %p105 = scmp.eq.s32.totalorder %s23, 0
    %p106 = por %p104, %p105
    %p107 = scmp.ne.s32.totalorder %s99, %s101
    %p108 = scmp.eq.s32.totalorder %s28, 1
    %p109 = por %p107, %p108
    %p110 = scmp.ne.s32.totalorder %s101, %s102
    %p111 = scmp.eq.s32.totalorder %s28, 0
    %p112 = por %p110, %p111
    %p113 = scmp.ne.s32.totalorder %s101, %s102
    %p114 = scmp.eq.s32.totalorder %s29, 1
    %p115 = por %p113, %p114
    %p117 = scmp.ne.s32.totalorder %s102, %s116
    %p118 = scmp.eq.s32.totalorder %s29, 0
    %p119 = por %p117, %p118
    %s121 = sadd.s32 %s120, 1
    %p124 = scmp.eq.s32.totalorder %s23, 1
    %p125 = scmp.ne.s32.totalorder %s120, %s122
    %p126 = scmp.eq.s32.totalorder %s23, 0
    %p127 = por %p125, %p126
    %p128 = scmp.ne.s32.totalorder %s120, %s122
    %p129 = scmp.eq.s32.totalorder %s28, 1
    %p130 = por %p128, %p129
    %p131 = scmp.ne.s32.totalorder %s122, %s123
    %p132 = scmp.eq.s32.totalorder %s28, 0
    %p133 = por %p131, %p132
    %p134 = scmp.ne.s32.totalorder %s122, %s123
    %p135 = scmp.eq.s32.totalorder %s29, 1
    %p136 = por %p134, %p135
    %p138 = scmp.ne.s32.totalorder %s123, %s137
    %p139 = scmp.eq.s32.totalorder %s29, 0
    %p140 = por %p138, %p139
    %s142 = sadd.s32 %s141, 1
    %p145 = scmp.eq.s32.totalorder %s23, 1
    %p146 = scmp.ne.s32.totalorder %s141, %s143
    %p147 = scmp.eq.s32.totalorder %s23, 0
    %p148 = por %p146, %p147
    %p149 = scmp.ne.s32.totalorder %s141, %s143
    %p150 = scmp.eq.s32.totalorder %s28, 1
    %p151 = por %p149, %p150
    %p152 = scmp.ne.s32.totalorder %s143, %s144
    %p153 = scmp.eq.s32.totalorder %s28, 0
    %p154 = por %p152, %p153
    %p155 = scmp.ne.s32.totalorder %s143, %s144
    %p156 = scmp.eq.s32.totalorder %s29, 1
    %p157 = por %p155, %p156
    %p159 = scmp.ne.s32.totalorder %s144, %s158
    %p160 = scmp.eq.s32.totalorder %s29, 0
    %p161 = por %p159, %p160
    %s163 = sadd.s32 %s162, 1
    %p166 = scmp.eq.s32.totalorder %s23, 1
    %p167 = scmp.ne.s32.totalorder %s162, %s164
    %p168 = scmp.eq.s32.totalorder %s23, 0
    %p169 = por %p167, %p168
    %p170 = scmp.ne.s32.totalorder %s162, %s164
    %p171 = scmp.eq.s32.totalorder %s28, 1
    %p172 = por %p170, %p171
    %p173 = scmp.ne.s32.totalorder %s164, %s165
    %p174 = scmp.eq.s32.totalorder %s28, 0
    %p175 = por %p173, %p174
    %p176 = scmp.ne.s32.totalorder %s164, %s165
    %p177 = scmp.eq.s32.totalorder %s29, 1
    %p178 = por %p176, %p177
    %p180 = scmp.ne.s32.totalorder %s165, %s179
    %p181 = scmp.eq.s32.totalorder %s29, 0
    %p182 = por %p180, %p181
    %s184 = sadd.s32 %s183, 1
    %p187 = scmp.eq.s32.totalorder %s23, 1
    %p188 = scmp.ne.s32.totalorder %s183, %s185
    %p189 = scmp.eq.s32.totalorder %s23, 0
    %p190 = por %p188, %p189
    %p191 = scmp.ne.s32.totalorder %s183, %s185
    %p192 = scmp.eq.s32.totalorder %s28, 1
    %p193 = por %p191, %p192
    %p194 = scmp.ne.s32.totalorder %s185, %s186
    %p195 = scmp.eq.s32.totalorder %s28, 0
    %p196 = por %p194, %p195
    %p197 = scmp.ne.s32.totalorder %s185, %s186
    %p198 = scmp.eq.s32.totalorder %s29, 1
    %p199 = por %p197, %p198
    %p201 = scmp.ne.s32.totalorder %s186, %s200
    %p202 = scmp.eq.s32.totalorder %s29, 0
    %p203 = por %p201, %p202
    %s205 = sadd.s32 %s204, 1
    %p208 = scmp.eq.s32.totalorder %s23, 1
    %p209 = scmp.ne.s32.totalorder %s204, %s206
    %p210 = scmp.eq.s32.totalorder %s23, 0
    %p211 = por %p209, %p210
    %p212 = scmp.ne.s32.totalorder %s204, %s206
    %p213 = scmp.eq.s32.totalorder %s28, 1
    %p214 = por %p212, %p213
    %p215 = scmp.ne.s32.totalorder %s206, %s207
    %p216 = scmp.eq.s32.totalorder %s28, 0
    %p217 = por %p215, %p216
    %p218 = scmp.ne.s32.totalorder %s206, %s207
    %p219 = scmp.eq.s32.totalorder %s29, 1
    %p220 = por %p218, %p219
    %p222 = scmp.ne.s32.totalorder %s207, %s221
    %p223 = scmp.eq.s32.totalorder %s29, 0
    %p224 = por %p222, %p223
    %s226 = sadd.s32 %s225, 1
    %p229 = scmp.eq.s32.totalorder %s23, 1
    %p230 = scmp.ne.s32.totalorder %s225, %s227
    %p231 = scmp.eq.s32.totalorder %s23, 0
    %p232 = por %p230, %p231
    %p233 = scmp.ne.s32.totalorder %s225, %s227
    %p234 = scmp.eq.s32.totalorder %s28, 1
    %p235 = por %p233, %p234
    %p236 = scmp.ne.s32.totalorder %s227, %s228
    %p237 = scmp.eq.s32.totalorder %s28, 0
    %p238 = por %p236, %p237
    %p239 = scmp.ne.s32.totalorder %s227, %s228
    %p240 = scmp.eq.s32.totalorder %s29, 1
    %p241 = por %p239, %p240
    %p243 = scmp.ne.s32.totalorder %s228, %s242
    %p244 = scmp.eq.s32.totalorder %s29, 0
    %p245 = por %p243, %p244
    %s247 = sadd.s32 %s246, 1
    %p250 = scmp.eq.s32.totalorder %s23, 1
    %p251 = scmp.ne.s32.totalorder %s246, %s248
    %p252 = scmp.eq.s32.totalorder %s23, 0
    %p253 = por %p251, %p252
    %p254 = scmp.ne.s32.totalorder %s246, %s248
    %p255 = scmp.eq.s32.totalorder %s28, 1
    %p256 = por %p254, %p255
    %p257 = scmp.ne.s32.totalorder %s248, %s249
    %p258 = scmp.eq.s32.totalorder %s28, 0
    %p259 = por %p257, %p258
    %p260 = scmp.ne.s32.totalorder %s248, %s249
    %p261 = scmp.eq.s32.totalorder %s29, 1
    %p262 = por %p260, %p261
    %p264 = scmp.ne.s32.totalorder %s249, %s263
    %p265 = scmp.eq.s32.totalorder %s29, 0
    %p266 = por %p264, %p265
    %s268 = sadd.s32 %s267, 1
    %p271 = scmp.eq.s32.totalorder %s23, 1
    %p272 = scmp.ne.s32.totalorder %s267, %s269
    %p273 = scmp.eq.s32.totalorder %s23, 0
    %p274 = por %p272, %p273
    %p275 = scmp.ne.s32.totalorder %s267, %s269
    %p276 = scmp.eq.s32.totalorder %s28, 1
    %p277 = por %p275, %p276
    %p278 = scmp.ne.s32.totalorder %s269, %s270
    %p279 = scmp.eq.s32.totalorder %s28, 0
    %p280 = por %p278, %p279
    %p281 = scmp.ne.s32.totalorder %s269, %s270
    %p282 = scmp.eq.s32.totalorder %s29, 1
    %p283 = por %p281, %p282
    %p285 = scmp.ne.s32.totalorder %s270, %s284
    %p286 = scmp.eq.s32.totalorder %s29, 0
    %p287 = por %p285, %p286
    %s289 = sadd.s32 %s288, 1
    %p292 = scmp.eq.s32.totalorder %s23, 1
    %p293 = scmp.ne.s32.totalorder %s288, %s290
    %p294 = scmp.eq.s32.totalorder %s23, 0
    %p295 = por %p293, %p294
    %p296 = scmp.ne.s32.totalorder %s288, %s290
    %p297 = scmp.eq.s32.totalorder %s28, 1
    %p298 = por %p296, %p297
    %p299 = scmp.ne.s32.totalorder %s290, %s291
    %p300 = scmp.eq.s32.totalorder %s28, 0
    %p301 = por %p299, %p300
    %p302 = scmp.ne.s32.totalorder %s290, %s291
    %p303 = scmp.eq.s32.totalorder %s29, 1
    %p304 = por %p302, %p303
    %p306 = scmp.ne.s32.totalorder %s291, %s305
    %p307 = scmp.eq.s32.totalorder %s29, 0
    %p308 = por %p306, %p307
    %s310 = sadd.s32 %s309, 1
    %p313 = scmp.eq.s32.totalorder %s23, 1
    %p314 = scmp.ne.s32.totalorder %s309, %s311
    %p315 = scmp.eq.s32.totalorder %s23, 0
    %p316 = por %p314, %p315
    %p317 = scmp.ne.s32.totalorder %s309, %s311
    %p318 = scmp.eq.s32.totalorder %s28, 1
    %p319 = por %p317, %p318
    %p320 = scmp.ne.s32.totalorder %s311, %s312
    %p321 = scmp.eq.s32.totalorder %s28, 0
    %p322 = por %p320, %p321
    %p323 = scmp.ne.s32.totalorder %s311, %s312
    %p324 = scmp.eq.s32.totalorder %s29, 1
    %p325 = por %p323, %p324
    %p327 = scmp.ne.s32.totalorder %s312, %s326
    %p328 = scmp.eq.s32.totalorder %s29, 0
    %p329 = por %p327, %p328
    %s331 = sadd.s32 %s330, 1
    %p334 = scmp.eq.s32.totalorder %s23, 1
    %p335 = scmp.ne.s32.totalorder %s330, %s332
    %p336 = scmp.eq.s32.totalorder %s23, 0
    %p337 = por %p335, %p336
    %p338 = scmp.ne.s32.totalorder %s330, %s332
    %p339 = scmp.eq.s32.totalorder %s28, 1
    %p340 = por %p338, %p339
    %p341 = scmp.ne.s32.totalorder %s332, %s333
    %p342 = scmp.eq.s32.totalorder %s28, 0
    %p343 = por %p341, %p342
    %p344 = scmp.ne.s32.totalorder %s332, %s333
    %p345 = scmp.eq.s32.totalorder %s29, 1
    %p346 = por %p344, %p345
    %p348 = scmp.ne.s32.totalorder %s333, %s347
    %p349 = scmp.eq.s32.totalorder %s29, 0
    %p350 = por %p348, %p349
    %s352 = sadd.s32 %s351, 1
    %p355 = scmp.eq.s32.totalorder %s23, 1
    %p356 = scmp.ne.s32.totalorder %s351, %s353
    %p357 = scmp.eq.s32.totalorder %s23, 0
    %p358 = por %p356, %p357
    %p359 = scmp.ne.s32.totalorder %s351, %s353
    %p360 = scmp.eq.s32.totalorder %s28, 1
    %p361 = por %p359, %p360
    %p362 = scmp.ne.s32.totalorder %s353, %s354
    %p363 = scmp.eq.s32.totalorder %s28, 0
    %p364 = por %p362, %p363
    %p365 = scmp.ne.s32.totalorder %s353, %s354
    %p366 = scmp.eq.s32.totalorder %s29, 1
    %p367 = por %p365, %p366
    %p369 = scmp.ne.s32.totalorder %s354, %s368
    %p370 = scmp.eq.s32.totalorder %s29, 0
    %p371 = por %p369, %p370
    %s373 = sadd.s32 %s372, 1
    %p376 = scmp.eq.s32.totalorder %s23, 1
    %p377 = scmp.ne.s32.totalorder %s372, %s374
    %p378 = scmp.eq.s32.totalorder %s23, 0
    %p379 = por %p377, %p378
    %p380 = scmp.ne.s32.totalorder %s372, %s374
    %p381 = scmp.eq.s32.totalorder %s28, 1
    %p382 = por %p380, %p381
    %p383 = scmp.ne.s32.totalorder %s374, %s375
    %p384 = scmp.eq.s32.totalorder %s28, 0
    %p385 = por %p383, %p384
    %p386 = scmp.ne.s32.totalorder %s374, %s375
    %p387 = scmp.eq.s32.totalorder %s29, 1
    %p388 = por %p386, %p387
    %p390 = scmp.ne.s32.totalorder %s375, %s389
    %p391 = scmp.eq.s32.totalorder %s29, 0
    %p392 = por %p390, %p391
    %s393 = ssub.s32 %s23, %s30
    %p394 = scmp.eq.s32.totalorder %s393, 0
    %s396 = sadd.s32 %s395, 1
    %s397 = scalar_select %p394, %s395, %s396
    %p400 = pneg %p394
    %p401 = scmp.eq.s32.totalorder %s23, 1
    %p402 = por %p400, %p401
    %p403 = scmp.ne.s32.totalorder %s395, %s398
    %p404 = scmp.eq.s32.totalorder %s23, 0
    %p405 = por %p403, %p404
    %p406 = scmp.ne.s32.totalorder %s395, %s398
    %p407 = scmp.eq.s32.totalorder %s28, 1
    %p408 = por %p406, %p407
    %p409 = scmp.ne.s32.totalorder %s398, %s399
    %p410 = scmp.eq.s32.totalorder %s28, 0
    %p411 = por %p409, %p410
    %p412 = scmp.ne.s32.totalorder %s398, %s399
    %p413 = scmp.eq.s32.totalorder %s29, 1
    %p414 = por %p412, %p413
    %p416 = scmp.ne.s32.totalorder %s399, %s415
    %p417 = scmp.eq.s32.totalorder %s29, 0
    %p418 = por %p416, %p417
    %p419 = scmp.le.s32.totalorder 1, %s23
    %p420 = scmp.lt.s32.totalorder %s23, 3
    %p421 = pnand %p419, %p420
    %p422 = pneg %p421
    // Predicated region
    $region9: #{_lambda_.1} parent=5 // pred_check
      _
    $region10: #{_lambda_.1} parent=5 // pred_check_branch
      %424 = sbr.rel (%p421) target = $region12
    $region11: #{_lambda_.1} parent=5 // pred_region
      %s425 = ssub.s32 %s23, 1
      // Predicated region
      $region13: #{_lambda_.1} parent=11 // pred_check
        %p426 = pneg %p70
      $region14: #{_lambda_.1} parent=11 // pred_check_branch
        %428 = sbr.rel (%p426) target = $region16
      $region15: #{_lambda_.1} parent=11 // pred_region
        _
      $region16: #{_lambda_.1} parent=11 // pred_fallthru
        _
      // Predicated region
      $region17: #{_lambda_.1} parent=11 // pred_check
        %p429 = pneg %p91
      $region18: #{_lambda_.1} parent=11 // pred_check_branch
        %431 = sbr.rel (%p429) target = $region20
      $region19: #{_lambda_.1} parent=11 // pred_region
        _
      $region20: #{_lambda_.1} parent=11 // pred_fallthru
        _
      // Predicated region
      $region21: #{_lambda_.1} parent=11 // pred_check
        %p432 = pneg %p112
      $region22: #{_lambda_.1} parent=11 // pred_check_branch
        %434 = sbr.rel (%p432) target = $region24
      $region23: #{_lambda_.1} parent=11 // pred_region
        _
      $region24: #{_lambda_.1} parent=11 // pred_fallthru
        _
      // Predicated region
      $region25: #{_lambda_.1} parent=11 // pred_check
        %p435 = pneg %p133
      $region26: #{_lambda_.1} parent=11 // pred_check_branch
        %437 = sbr.rel (%p435) target = $region28
      $region27: #{_lambda_.1} parent=11 // pred_region
        _
      $region28: #{_lambda_.1} parent=11 // pred_fallthru
        _
      // Predicated region
      $region29: #{_lambda_.1} parent=11 // pred_check
        %p438 = pneg %p154
      $region30: #{_lambda_.1} parent=11 // pred_check_branch
        %440 = sbr.rel (%p438) target = $region32
      $region31: #{_lambda_.1} parent=11 // pred_region
        _
      $region32: #{_lambda_.1} parent=11 // pred_fallthru
        _
      // Predicated region
      $region33: #{_lambda_.1} parent=11 // pred_check
        %p441 = pneg %p175
      $region34: #{_lambda_.1} parent=11 // pred_check_branch
        %443 = sbr.rel (%p441) target = $region36
      $region35: #{_lambda_.1} parent=11 // pred_region
        _
      $region36: #{_lambda_.1} parent=11 // pred_fallthru
        _
      // Predicated region
      $region37: #{_lambda_.1} parent=11 // pred_check
        %p444 = pneg %p196
      $region38: #{_lambda_.1} parent=11 // pred_check_branch
        %446 = sbr.rel (%p444) target = $region40
      $region39: #{_lambda_.1} parent=11 // pred_region
        _
      $region40: #{_lambda_.1} parent=11 // pred_fallthru
        _
      // Predicated region
      $region41: #{_lambda_.1} parent=11 // pred_check
        %p447 = pneg %p217
      $region42: #{_lambda_.1} parent=11 // pred_check_branch
        %449 = sbr.rel (%p447) target = $region44
      $region43: #{_lambda_.1} parent=11 // pred_region
        _
      $region44: #{_lambda_.1} parent=11 // pred_fallthru
        _
      // Predicated region
      $region45: #{_lambda_.1} parent=11 // pred_check
        %p450 = pneg %p238
      $region46: #{_lambda_.1} parent=11 // pred_check_branch
        %452 = sbr.rel (%p450) target = $region48
      $region47: #{_lambda_.1} parent=11 // pred_region
        _
      $region48: #{_lambda_.1} parent=11 // pred_fallthru
        _
      // Predicated region
      $region49: #{_lambda_.1} parent=11 // pred_check
        %p453 = pneg %p259
      $region50: #{_lambda_.1} parent=11 // pred_check_branch
        %455 = sbr.rel (%p453) target = $region52
      $region51: #{_lambda_.1} parent=11 // pred_region
        _
      $region52: #{_lambda_.1} parent=11 // pred_fallthru
        _
      // Predicated region
      $region53: #{_lambda_.1} parent=11 // pred_check
        %p456 = pneg %p280
      $region54: #{_lambda_.1} parent=11 // pred_check_branch
        %458 = sbr.rel (%p456) target = $region56
      $region55: #{_lambda_.1} parent=11 // pred_region
        _
      $region56: #{_lambda_.1} parent=11 // pred_fallthru
        _
      // Predicated region
      $region57: #{_lambda_.1} parent=11 // pred_check
        %p459 = pneg %p301
      $region58: #{_lambda_.1} parent=11 // pred_check_branch
        %461 = sbr.rel (%p459) target = $region60
      $region59: #{_lambda_.1} parent=11 // pred_region
        _
      $region60: #{_lambda_.1} parent=11 // pred_fallthru
        _
      // Predicated region
      $region61: #{_lambda_.1} parent=11 // pred_check
        %p462 = pneg %p322
      $region62: #{_lambda_.1} parent=11 // pred_check_branch
        %464 = sbr.rel (%p462) target = $region64
      $region63: #{_lambda_.1} parent=11 // pred_region
        _
      $region64: #{_lambda_.1} parent=11 // pred_fallthru
        _
      // Predicated region
      $region65: #{_lambda_.1} parent=11 // pred_check
        %p465 = pneg %p343
      $region66: #{_lambda_.1} parent=11 // pred_check_branch
        %467 = sbr.rel (%p465) target = $region68
      $region67: #{_lambda_.1} parent=11 // pred_region
        _
      $region68: #{_lambda_.1} parent=11 // pred_fallthru
        _
      // Predicated region
      $region69: #{_lambda_.1} parent=11 // pred_check
        %p468 = pneg %p364
      $region70: #{_lambda_.1} parent=11 // pred_check_branch
        %470 = sbr.rel (%p468) target = $region72
      $region71: #{_lambda_.1} parent=11 // pred_region
        _
      $region72: #{_lambda_.1} parent=11 // pred_fallthru
        _
      // Predicated region
      $region73: #{_lambda_.1} parent=11 // pred_check
        %p471 = pneg %p385
      $region74: #{_lambda_.1} parent=11 // pred_check_branch
        %473 = sbr.rel (%p471) target = $region76
      $region75: #{_lambda_.1} parent=11 // pred_region
        _
      $region76: #{_lambda_.1} parent=11 // pred_fallthru
        _
    $region12: #{_lambda_.1} parent=5 // pred_fallthru
      _
    %p474 = scmp.lt.s32.totalorder %s23, 2
    // Predicated region
    $region77: #{_lambda_.1} parent=5 // pred_check
      %p475 = pneg %p474
    $region78: #{_lambda_.1} parent=5 // pred_check_branch
      %477 = sbr.rel (%p475) target = $region80
    $region79: #{_lambda_.1} parent=5 // pred_region
      // Predicated region
      $region81: #{_lambda_.1} parent=79 // pred_check
        %p478 = pneg %p43
      $region82: #{_lambda_.1} parent=79 // pred_check_branch
        %480 = sbr.rel (%p478) target = $region84
      $region83: #{_lambda_.1} parent=79 // pred_region
        %p481 = scmp.lt.s32.totalorder %s23, 1
        %s482 = scalar_select %p481, %s23, 1
        %s483 = smul.addr %s482, 8
        %s484 = smul.addr %s483, 8
        %s485 = scalar_lea.vmem %s0, %s484
      $region84: #{_lambda_.1} parent=79 // pred_fallthru
        _
    $region80: #{_lambda_.1} parent=5 // pred_fallthru
      _
    %p486 = scmp.le.s32.totalorder 1, %s23
    %p487 = scmp.lt.s32.totalorder %s23, 3
    %p488 = pnand %p486, %p487
    %p489 = pneg %p488
    // Predicated region
    $region85: #{_lambda_.1} parent=5 // pred_check
      _
    $region86: #{_lambda_.1} parent=5 // pred_check_branch
      %491 = sbr.rel (%p488) target = $region88
    $region87: #{_lambda_.1} parent=5 // pred_region
      %s492 = ssub.s32 %s23, 1
      %p493 = scmp.lt.s32.totalorder %s28, 1
      %s494 = scalar_select %p493, %s28, 1
      %s495 = smul.addr %s494, 8
      %s496 = smul.addr %s495, 8
      %s497 = scalar_lea.vmem %s0, %s496
      %p498 = pneg %p49
      %p499 = pneg %p46
      %p500 = pneg %p70
      %p501 = pneg %p67
      %p502 = pneg %p91
      %p503 = pneg %p88
      %p504 = pneg %p112
      %p505 = pneg %p109
      %p506 = pneg %p133
      %p507 = pneg %p130
      %p508 = pneg %p154
      %p509 = pneg %p151
      %p510 = pneg %p175
      %p511 = pneg %p172
      %p512 = pneg %p196
      %p513 = pneg %p193
      %p514 = pneg %p217
      %p515 = pneg %p214
      %p516 = pneg %p238
      %p517 = pneg %p235
      %p518 = pneg %p259
      %p519 = pneg %p256
      %p520 = pneg %p280
      %p521 = pneg %p277
      %p522 = pneg %p301
      %p523 = pneg %p298
      %p524 = pneg %p322
      %p525 = pneg %p319
      %p526 = pneg %p343
      %p527 = pneg %p340
      %p528 = pneg %p364
      %p529 = pneg %p361
      %p530 = pneg %p385
      %p531 = pneg %p382
      %p532 = pneg %p411
      %p533 = pneg %p408
      %p534 = scmp.lt.s32.totalorder %s28, 1
      %s535 = scalar_select %p534, %s28, 1
      %s536 = smul.addr %s535, 16
      %s537 = smul.addr %s536, 8
      %s538 = scalar_lea.vmem %s17, %s537
      %p539 = scmp.lt.s32.totalorder %s28, 1
      %s540 = scalar_select %p539, %s28, 1
      %s541 = smul.addr %s540, 8
      %s542 = smul.addr %s541, 8
      %s543 = scalar_lea.vmem %s0, %s542
      %p544 = scmp.lt.s32.totalorder %s28, 1
      %s545 = scalar_select %p544, %s28, 1
      %s546 = smul.addr %s545, 16
      %s547 = smul.addr %s546, 8
      %s548 = scalar_lea.vmem %s17, %s547
      %vm550 = vcmask 31744
      %551 = vst.msk [vmem:[#allocation2] sm:$0xff] %vm550, 0.0
      %vm552 = vcmask 25600
      %553 = vst.msk [vmem:[#allocation2 + $0x8] sm:$0x3] %vm552, 0.0
      %s554 = scalar_lea.vmem [#allocation2], 144
      %555 = vst.msk [vmem:[%s554] sm:$0xff] %vm550, 0.0
      %556 = vst.msk [vmem:[%s554 + $0x8] sm:$0x3] %vm552, 0.0
      %vm557 = vcmask 24576
      %558 = vst.msk [vmem:[#allocation2] sm:$0x1] %vm557, 0.0
      %559 = vst.msk [vmem:[#allocation2 + $0x10] sm:$0x1] %vm557, 0.0
      %560 = vst.msk [vmem:[#allocation2 + $0x20] sm:$0x1] %vm557, 0.0
      %561 = vst.msk [vmem:[#allocation2 + $0x30] sm:$0x1] %vm557, 0.0
      %562 = vst.msk [vmem:[#allocation2 + $0x40] sm:$0x1] %vm557, 0.0
      %563 = vst.msk [vmem:[#allocation2 + $0x50] sm:$0x1] %vm557, 0.0
      %564 = vst.msk [vmem:[#allocation2 + $0x60] sm:$0x1] %vm557, 0.0
      %565 = vst.msk [vmem:[#allocation2 + $0x70] sm:$0x1] %vm557, 0.0
      %566 = vst.msk [vmem:[#allocation2 + $0x80] sm:$0x1] %vm557, 0.0
      %567 = vst.msk [vmem:[#allocation2 + $0x90] sm:$0x1] %vm557, 0.0
      %568 = vst.msk [vmem:[#allocation2 + $0x9] sm:$0x1] %vm557, 0.0
      %569 = vst.msk [vmem:[#allocation2 + $0x19] sm:$0x1] %vm557, 0.0
      %570 = vst.msk [vmem:[#allocation2 + $0x29] sm:$0x1] %vm557, 0.0
      %571 = vst.msk [vmem:[#allocation2 + $0x39] sm:$0x1] %vm557, 0.0
      %572 = vst.msk [vmem:[#allocation2 + $0x49] sm:$0x1] %vm557, 0.0
      %573 = vst.msk [vmem:[#allocation2 + $0x59] sm:$0x1] %vm557, 0.0
      %574 = vst.msk [vmem:[#allocation2 + $0x69] sm:$0x1] %vm557, 0.0
      %575 = vst.msk [vmem:[#allocation2 + $0x79] sm:$0x1] %vm557, 0.0
      %576 = vst.msk [vmem:[#allocation2 + $0x89] sm:$0x1] %vm557, 0.0
      %577 = vst.msk [vmem:[#allocation2 + $0x99] sm:$0x1] %vm557, 0.0
      %vm578 = vcmask 261120
      %579 = vst.msk [vmem:[#allocation3] sm:$0xff] %vm578, 0.0
      %vm580 = vcmask 254976
      %581 = vst.msk [vmem:[#allocation3 + $0x8] sm:$0x3] %vm580, 0.0
      %s582 = scalar_lea.vmem [#allocation3], 144
      %583 = vst.msk [vmem:[%s582] sm:$0xff] %vm578, 0.0
      %584 = vst.msk [vmem:[%s582 + $0x8] sm:$0x3] %vm580, 0.0
      %vm585 = vcmask 253952
      %586 = vst.msk [vmem:[#allocation3] sm:$0x1] %vm585, 0.0
      %587 = vst.msk [vmem:[#allocation3 + $0x10] sm:$0x1] %vm585, 0.0
      %588 = vst.msk [vmem:[#allocation3 + $0x20] sm:$0x1] %vm585, 0.0
      %589 = vst.msk [vmem:[#allocation3 + $0x30] sm:$0x1] %vm585, 0.0
      %590 = vst.msk [vmem:[#allocation3 + $0x40] sm:$0x1] %vm585, 0.0
      %591 = vst.msk [vmem:[#allocation3 + $0x50] sm:$0x1] %vm585, 0.0
      %592 = vst.msk [vmem:[#allocation3 + $0x60] sm:$0x1] %vm585, 0.0
      %593 = vst.msk [vmem:[#allocation3 + $0x70] sm:$0x1] %vm585, 0.0
      %594 = vst.msk [vmem:[#allocation3 + $0x80] sm:$0x1] %vm585, 0.0
      %595 = vst.msk [vmem:[#allocation3 + $0x90] sm:$0x1] %vm585, 0.0
      %596 = vst.msk [vmem:[#allocation3 + $0x9] sm:$0x1] %vm585, 0.0
      %597 = vst.msk [vmem:[#allocation3 + $0x19] sm:$0x1] %vm585, 0.0
      %598 = vst.msk [vmem:[#allocation3 + $0x29] sm:$0x1] %vm585, 0.0
      %599 = vst.msk [vmem:[#allocation3 + $0x39] sm:$0x1] %vm585, 0.0
      %600 = vst.msk [vmem:[#allocation3 + $0x49] sm:$0x1] %vm585, 0.0
      %601 = vst.msk [vmem:[#allocation3 + $0x59] sm:$0x1] %vm585, 0.0
      %602 = vst.msk [vmem:[#allocation3 + $0x69] sm:$0x1] %vm585, 0.0
      %603 = vst.msk [vmem:[#allocation3 + $0x79] sm:$0x1] %vm585, 0.0
      %604 = vst.msk [vmem:[#allocation3 + $0x89] sm:$0x1] %vm585, 0.0
      %605 = vst.msk [vmem:[#allocation3 + $0x99] sm:$0x1] %vm585, 0.0
      %606 = vst [vmem:[#allocation4] sm:$0xff] 0.0
      %607 = vst [vmem:[#allocation4 + $0x8] sm:$0x3] 0.0
      %s608 = scalar_lea.vmem [#allocation4], 144
      %609 = vst [vmem:[%s608] sm:$0xff] 0.0
      %610 = vst [vmem:[%s608 + $0x8] sm:$0x3] 0.0
      %611 = vst [vmem:[#allocation4] sm:$0x1] 0.0
      %612 = vst [vmem:[#allocation4 + $0x10] sm:$0x1] 0.0
      %613 = vst [vmem:[#allocation4 + $0x20] sm:$0x1] 0.0
      %614 = vst [vmem:[#allocation4 + $0x30] sm:$0x1] 0.0
      %615 = vst [vmem:[#allocation4 + $0x40] sm:$0x1] 0.0
      %616 = vst [vmem:[#allocation4 + $0x50] sm:$0x1] 0.0
      %617 = vst [vmem:[#allocation4 + $0x60] sm:$0x1] 0.0
      %618 = vst [vmem:[#allocation4 + $0x70] sm:$0x1] 0.0
      %619 = vst [vmem:[#allocation4 + $0x80] sm:$0x1] 0.0
      %620 = vst [vmem:[#allocation4 + $0x90] sm:$0x1] 0.0
      %621 = vst [vmem:[#allocation4 + $0x9] sm:$0x1] 0.0
      %622 = vst [vmem:[#allocation4 + $0x19] sm:$0x1] 0.0
      %623 = vst [vmem:[#allocation4 + $0x29] sm:$0x1] 0.0
      %624 = vst [vmem:[#allocation4 + $0x39] sm:$0x1] 0.0
      %625 = vst [vmem:[#allocation4 + $0x49] sm:$0x1] 0.0
      %626 = vst [vmem:[#allocation4 + $0x59] sm:$0x1] 0.0
      %627 = vst [vmem:[#allocation4 + $0x69] sm:$0x1] 0.0
      %628 = vst [vmem:[#allocation4 + $0x79] sm:$0x1] 0.0
      %629 = vst [vmem:[#allocation4 + $0x89] sm:$0x1] 0.0
      %630 = vst [vmem:[#allocation4 + $0x99] sm:$0x1] 0.0
      %631 = vst [vmem:[#allocation5] sm:$0xff] 0.0
      %632 = vst [vmem:[#allocation5 + $0x8] sm:$0xff] 0.0
      %633 = vst [vmem:[#allocation5 + $0x10] sm:$0x3] 0.0
      %634 = vst [vmem:[#allocation5 + $0x18] sm:$0x3] 0.0
      %s635 = scalar_lea.vmem [#allocation5], 288
      %636 = vst [vmem:[%s635] sm:$0xff] 0.0
      %637 = vst [vmem:[%s635 + $0x8] sm:$0xff] 0.0
      %638 = vst [vmem:[%s635 + $0x10] sm:$0x3] 0.0
      %639 = vst [vmem:[%s635 + $0x18] sm:$0x3] 0.0
      %v640 = vlaneseq
      %vm641 = vcmp.ge.s32.totalorder %v640, 0
      %vm642 = vcmp.lt.s32.totalorder %v640, 256
      %vm643 = vmand %vm641, %vm642
      %644 = vst.msk [vmem:[#allocation5] ss:$8 sm:$0x3] %vm643, 0.0
      %645 = vst.msk [vmem:[#allocation5] ss:$8 sm:$0x0] %vm643, 0.0
      %s646 = scalar_lea.vmem [#allocation5], 32
      %647 = vst.msk [vmem:[%s646] ss:$8 sm:$0x3] %vm643, 0.0
      %648 = vst.msk [vmem:[%s646] ss:$8 sm:$0x0] %vm643, 0.0
      %s649 = scalar_lea.vmem [#allocation5], 64
      %650 = vst.msk [vmem:[%s649] ss:$8 sm:$0x3] %vm643, 0.0
      %651 = vst.msk [vmem:[%s649] ss:$8 sm:$0x0] %vm643, 0.0
      %s652 = scalar_lea.vmem [#allocation5], 96
      %653 = vst.msk [vmem:[%s652] ss:$8 sm:$0x3] %vm643, 0.0
      %654 = vst.msk [vmem:[%s652] ss:$8 sm:$0x0] %vm643, 0.0
      %s655 = scalar_lea.vmem [#allocation5], 128
      %656 = vst.msk [vmem:[%s655] ss:$8 sm:$0x3] %vm643, 0.0
      %657 = vst.msk [vmem:[%s655] ss:$8 sm:$0x0] %vm643, 0.0
      %s658 = scalar_lea.vmem [#allocation5], 160
      %659 = vst.msk [vmem:[%s658] ss:$8 sm:$0x3] %vm643, 0.0
      %660 = vst.msk [vmem:[%s658] ss:$8 sm:$0x0] %vm643, 0.0
      %s661 = scalar_lea.vmem [#allocation5], 192
      %662 = vst.msk [vmem:[%s661] ss:$8 sm:$0x3] %vm643, 0.0
      %663 = vst.msk [vmem:[%s661] ss:$8 sm:$0x0] %vm643, 0.0
      %s664 = scalar_lea.vmem [#allocation5], 224
      %665 = vst.msk [vmem:[%s664] ss:$8 sm:$0x3] %vm643, 0.0
      %666 = vst.msk [vmem:[%s664] ss:$8 sm:$0x0] %vm643, 0.0
      %s667 = scalar_lea.vmem [#allocation5], 256
      %668 = vst.msk [vmem:[%s667] ss:$8 sm:$0x3] %vm643, 0.0
      %669 = vst.msk [vmem:[%s667] ss:$8 sm:$0x0] %vm643, 0.0
      %s670 = scalar_lea.vmem [#allocation5], 288
      %671 = vst.msk [vmem:[%s670] ss:$8 sm:$0x3] %vm643, 0.0
      %672 = vst.msk [vmem:[%s670] ss:$8 sm:$0x0] %vm643, 0.0
      %s673 = scalar_lea.vmem [#allocation5], 17
      %674 = vst.msk [vmem:[%s673] ss:$8 sm:$0x3] %vm643, 0.0
      %675 = vst.msk [vmem:[%s673] ss:$8 sm:$0x0] %vm643, 0.0
      %s676 = scalar_lea.vmem [#allocation5], 49
      %677 = vst.msk [vmem:[%s676] ss:$8 sm:$0x3] %vm643, 0.0
      %678 = vst.msk [vmem:[%s676] ss:$8 sm:$0x0] %vm643, 0.0
      %s679 = scalar_lea.vmem [#allocation5], 81
      %680 = vst.msk [vmem:[%s679] ss:$8 sm:$0x3] %vm643, 0.0
      %681 = vst.msk [vmem:[%s679] ss:$8 sm:$0x0] %vm643, 0.0
      %s682 = scalar_lea.vmem [#allocation5], 113
      %683 = vst.msk [vmem:[%s682] ss:$8 sm:$0x3] %vm643, 0.0
      %684 = vst.msk [vmem:[%s682] ss:$8 sm:$0x0] %vm643, 0.0
      %s685 = scalar_lea.vmem [#allocation5], 145
      %686 = vst.msk [vmem:[%s685] ss:$8 sm:$0x3] %vm643, 0.0
      %687 = vst.msk [vmem:[%s685] ss:$8 sm:$0x0] %vm643, 0.0
      %s688 = scalar_lea.vmem [#allocation5], 177
      %689 = vst.msk [vmem:[%s688] ss:$8 sm:$0x3] %vm643, 0.0
      %690 = vst.msk [vmem:[%s688] ss:$8 sm:$0x0] %vm643, 0.0
      %s691 = scalar_lea.vmem [#allocation5], 209
      %692 = vst.msk [vmem:[%s691] ss:$8 sm:$0x3] %vm643, 0.0
      %693 = vst.msk [vmem:[%s691] ss:$8 sm:$0x0] %vm643, 0.0
      %s694 = scalar_lea.vmem [#allocation5], 241
      %695 = vst.msk [vmem:[%s694] ss:$8 sm:$0x3] %vm643, 0.0
      %696 = vst.msk [vmem:[%s694] ss:$8 sm:$0x0] %vm643, 0.0
      %s697 = scalar_lea.vmem [#allocation5], 273
      %698 = vst.msk [vmem:[%s697] ss:$8 sm:$0x3] %vm643, 0.0
      %699 = vst.msk [vmem:[%s697] ss:$8 sm:$0x0] %vm643, 0.0
      %s700 = scalar_lea.vmem [#allocation5], 305
      %701 = vst.msk [vmem:[%s700] ss:$8 sm:$0x3] %vm643, 0.0
      %702 = vst.msk [vmem:[%s700] ss:$8 sm:$0x0] %vm643, 0.0
      %v703 = vld [vmem:[%s543] sm:$0xff]
      %v704 = vld [vmem:[%s543 + $0x8] sm:$0xff]
      %v705 = vld [vmem:[%s543 + $0x10] sm:$0xff]
      %v706 = vld [vmem:[%s543 + $0x18] sm:$0xff]
      %v707 = vld [vmem:[%s543 + $0x20] sm:$0xff]
      %v708 = vld [vmem:[%s543 + $0x28] sm:$0xff]
      %v709 = vld [vmem:[%s543 + $0x30] sm:$0xff]
      %v710 = vld [vmem:[%s543 + $0x38] sm:$0xff]
      %s711 = scalar_lea.vmem [#allocation2], 16
      %712 = vst.msk [vmem:[%s711 + $0x1] sm:$0xff] %vm550, %v703
      %713 = vst.msk [vmem:[%s711 + $0x11] sm:$0xff] %vm550, %v704
      %714 = vst.msk [vmem:[%s711 + $0x21] sm:$0xff] %vm550, %v705
      %715 = vst.msk [vmem:[%s711 + $0x31] sm:$0xff] %vm550, %v706
      %716 = vst.msk [vmem:[%s711 + $0x41] sm:$0xff] %vm550, %v707
      %717 = vst.msk [vmem:[%s711 + $0x51] sm:$0xff] %vm550, %v708
      %718 = vst.msk [vmem:[%s711 + $0x61] sm:$0xff] %vm550, %v709
      %719 = vst.msk [vmem:[%s711 + $0x71] sm:$0xff] %vm550, %v710
      %v720 = vld [vmem:[%s2] sm:$0x1]
      %v722 = vlaneseq
      %v723 = vshrl.u32 %v722, 7
      %v724 = vsub.s32 0, %v723
      %v725 = vrot.slane %v720, %v724
      %v727 = vld [vmem:[#allocation2] sm:$0xff]
      %v728 = vld [vmem:[#allocation2 + $0x10] sm:$0xff]
      %v729 = vld [vmem:[#allocation2 + $0x20] sm:$0xff]
      %v730 = vld [vmem:[#allocation2 + $0x30] sm:$0xff]
      %v731 = vld [vmem:[#allocation2 + $0x40] sm:$0xff]
      %v732 = vld [vmem:[#allocation2 + $0x50] sm:$0xff]
      %v733 = vld [vmem:[#allocation2 + $0x60] sm:$0xff]
      %v734 = vld [vmem:[#allocation2 + $0x70] sm:$0xff]
      %v735 = vpack.c.bf16 %v728, %v727
      %v736 = vpack.c.bf16 %v730, %v729
      %v737 = vpack.c.bf16 %v732, %v731
      %v738 = vpack.c.bf16 %v734, %v733
      %v739 = vld [vmem:[%s1] sm:$0x3]
      %v741 = vsel %vm550, %v735, 0
      %v744 = vsel %vm550, %v736, 0
      %v747 = vsel %vm550, %v737, 0
      %v750 = vsel %vm550, %v738, 0
      %vm752 = vcmask 1041408
      %v754 = vsel %vm752, %v739, 0
      %756 = vmatprep.subr.bf16.mxu0 0
      %757 = vmatpush1.bf16.msra.mxu0 0
      %758 = vmatprep.subr.bf16.mxu0 0
      %759 = vmatpush1.bf16.msra.mxu0 0
      %760 = vmatprep.subr.bf16.mxu0 0
      %761 = vmatpush1.bf16.msra.mxu0 0
      %762 = vmatprep.subr.bf16.mxu0 0
      %763 = vmatpush1.bf16.msra.mxu0 0
      %764 = vmatprep.subr.bf16.mxu0 0
      %765 = vmatpush1.bf16.msra.mxu0 0
      %766 = vmatprep.subr.bf16.mxu0 0
      %767 = vmatpush1.bf16.msra.mxu0 0
      %768 = vmatprep.subr.bf16.mxu0 0
      %769 = vmatpush1.bf16.msra.mxu0 0
      %770 = vmatprep.subr.bf16.mxu0 0
      %771 = vmatpush1.bf16.msra.mxu0 %v754
      %772 = vmatprep.subr.bf16.mxu0 0
      %773 = vmatpush2.bf16.msra.mxu0 0
      %774 = vmatprep.subr.bf16.mxu0 0
      %775 = vmatpush2.bf16.msra.mxu0 0
      %776 = vmatprep.subr.bf16.mxu0 0
      %777 = vmatpush2.bf16.msra.mxu0 0
      %778 = vmatprep.subr.bf16.mxu0 0
      %779 = vmatpush2.bf16.msra.mxu0 0
      %780 = vmatprep.subr.bf16.mxu0 0
      %781 = vmatpush2.bf16.msra.mxu0 0
      %782 = vmatprep.subr.bf16.mxu0 0
      %783 = vmatpush2.bf16.msra.mxu0 0
      %784 = vmatprep.subr.bf16.mxu0 0
      %785 = vmatpush2.bf16.msra.mxu0 0
      %786 = vmatprep.subr.bf16.mxu0 0
      %787 = vmatpush2.bf16.msra.mxu0 0
      %788 = vmatprep.mubr.bf16.mxu0 0
      %789 = vmatmul.mubr.bf16.gmra.mxu0 %v741
      %v790 = vpop.f32.mrf.mxu0
      %v791 = vadd.f32 0.0, %v790
      %v792 = vpop.f32.mrf.mxu0
      %v793 = vpop.f32.mrf.mxu0
      %v794 = vadd.f32 0.0, %v793
      %v795 = vpop.f32.mrf.mxu0
      %796 = vmatprep.mubr.bf16.mxu0 0
      %797 = vmatmul.mubr.bf16.gmra.mxu0 %v744
      %v798 = vpop.f32.mrf.mxu0
      %v799 = vadd.f32 0.0, %v798
      %v800 = vpop.f32.mrf.mxu0
      %v801 = vpop.f32.mrf.mxu0
      %v802 = vadd.f32 0.0, %v801
      %v803 = vpop.f32.mrf.mxu0
      %804 = vmatprep.mubr.bf16.mxu0 0
      %805 = vmatmul.mubr.bf16.gmra.mxu0 %v747
      %v806 = vpop.f32.mrf.mxu0
      %v807 = vadd.f32 0.0, %v806
      %v808 = vpop.f32.mrf.mxu0
      %v809 = vpop.f32.mrf.mxu0
      %v810 = vadd.f32 0.0, %v809
      %v811 = vpop.f32.mrf.mxu0
      %812 = vmatprep.mubr.bf16.mxu0 0
      %813 = vmatmul.mubr.bf16.gmra.mxu0 %v750
      %v814 = vpop.f32.mrf.mxu0
      %v815 = vadd.f32 0.0, %v814
      %v816 = vpop.f32.mrf.mxu0
      %v817 = vpop.f32.mrf.mxu0
      %v818 = vadd.f32 0.0, %v817
      %v819 = vpop.f32.mrf.mxu0
      %820 = vdwg.mxu0
      %v821 = vadd.f32 %v725, %v791
      %v822 = vadd.f32 %v725, %v794
      %v823 = vadd.f32 %v725, %v799
      %v824 = vadd.f32 %v725, %v802
      %v825 = vadd.f32 %v725, %v807
      %v826 = vadd.f32 %v725, %v810
      %v827 = vadd.f32 %v725, %v815
      %v828 = vadd.f32 %v725, %v818
      %v829 = vld [vmem:[#allocation2 + $0x1] sm:$0xff]
      %v830 = vld [vmem:[#allocation2 + $0x11] sm:$0xff]
      %v831 = vld [vmem:[#allocation2 + $0x21] sm:$0xff]
      %v832 = vld [vmem:[#allocation2 + $0x31] sm:$0xff]
      %v833 = vld [vmem:[#allocation2 + $0x41] sm:$0xff]
      %v834 = vld [vmem:[#allocation2 + $0x51] sm:$0xff]
      %v835 = vld [vmem:[#allocation2 + $0x61] sm:$0xff]
      %v836 = vld [vmem:[#allocation2 + $0x71] sm:$0xff]
      %v837 = vpack.c.bf16 %v830, %v829
      %v838 = vpack.c.bf16 %v832, %v831
      %v839 = vpack.c.bf16 %v834, %v833
      %v840 = vpack.c.bf16 %v836, %v835
      %s841 = scalar_lea.vmem %s1, 2
      %v842 = vld [vmem:[%s841] sm:$0x3]
      %v844 = vsel %vm550, %v837, 0
      %v847 = vsel %vm550, %v838, 0
      %v850 = vsel %vm550, %v839, 0
      %v853 = vsel %vm550, %v840, 0
      %v856 = vsel %vm752, %v842, 0
      %858 = vmatprep.subr.bf16.mxu0 0
      %859 = vmatpush1.bf16.msra.mxu0 0
      %860 = vmatprep.subr.bf16.mxu0 0
      %861 = vmatpush1.bf16.msra.mxu0 0
      %862 = vmatprep.subr.bf16.mxu0 0
      %863 = vmatpush1.bf16.msra.mxu0 0
      %864 = vmatprep.subr.bf16.mxu0 0
      %865 = vmatpush1.bf16.msra.mxu0 0
      %866 = vmatprep.subr.bf16.mxu0 0
      %867 = vmatpush1.bf16.msra.mxu0 0
      %868 = vmatprep.subr.bf16.mxu0 0
      %869 = vmatpush1.bf16.msra.mxu0 0
      %870 = vmatprep.subr.bf16.mxu0 0
      %871 = vmatpush1.bf16.msra.mxu0 0
      %872 = vmatprep.subr.bf16.mxu0 0
      %873 = vmatpush1.bf16.msra.mxu0 %v856
      %874 = vmatprep.subr.bf16.mxu0 0
      %875 = vmatpush2.bf16.msra.mxu0 0
      %876 = vmatprep.subr.bf16.mxu0 0
      %877 = vmatpush2.bf16.msra.mxu0 0
      %878 = vmatprep.subr.bf16.mxu0 0
      %879 = vmatpush2.bf16.msra.mxu0 0
      %880 = vmatprep.subr.bf16.mxu0 0
      %881 = vmatpush2.bf16.msra.mxu0 0
      %882 = vmatprep.subr.bf16.mxu0 0
      %883 = vmatpush2.bf16.msra.mxu0 0
      %884 = vmatprep.subr.bf16.mxu0 0
      %885 = vmatpush2.bf16.msra.mxu0 0
      %886 = vmatprep.subr.bf16.mxu0 0
      %887 = vmatpush2.bf16.msra.mxu0 0
      %888 = vmatprep.subr.bf16.mxu0 0
      %889 = vmatpush2.bf16.msra.mxu0 0
      %890 = vmatprep.mubr.bf16.mxu0 0
      %891 = vmatmul.mubr.bf16.gmra.mxu0 %v844
      %v892 = vpop.f32.mrf.mxu0
      %v893 = vadd.f32 0.0, %v892
      %v894 = vpop.f32.mrf.mxu0
      %v895 = vpop.f32.mrf.mxu0
      %v896 = vadd.f32 0.0, %v895
      %v897 = vpop.f32.mrf.mxu0
      %898 = vmatprep.mubr.bf16.mxu0 0
      %899 = vmatmul.mubr.bf16.gmra.mxu0 %v847
      %v900 = vpop.f32.mrf.mxu0
      %v901 = vadd.f32 0.0, %v900
      %v902 = vpop.f32.mrf.mxu0
      %v903 = vpop.f32.mrf.mxu0
      %v904 = vadd.f32 0.0, %v903
      %v905 = vpop.f32.mrf.mxu0
      %906 = vmatprep.mubr.bf16.mxu0 0
      %907 = vmatmul.mubr.bf16.gmra.mxu0 %v850
      %v908 = vpop.f32.mrf.mxu0
      %v909 = vadd.f32 0.0, %v908
      %v910 = vpop.f32.mrf.mxu0
      %v911 = vpop.f32.mrf.mxu0
      %v912 = vadd.f32 0.0, %v911
      %v913 = vpop.f32.mrf.mxu0
      %914 = vmatprep.mubr.bf16.mxu0 0
      %915 = vmatmul.mubr.bf16.gmra.mxu0 %v853
      %v916 = vpop.f32.mrf.mxu0
      %v917 = vadd.f32 0.0, %v916
      %v918 = vpop.f32.mrf.mxu0
      %v919 = vpop.f32.mrf.mxu0
      %v920 = vadd.f32 0.0, %v919
      %v921 = vpop.f32.mrf.mxu0
      %922 = vdwg.mxu0
      %v923 = vadd.f32 %v821, %v893
      %v924 = vadd.f32 %v822, %v896
      %v925 = vadd.f32 %v823, %v901
      %v926 = vadd.f32 %v824, %v904
      %v927 = vadd.f32 %v825, %v909
      %v928 = vadd.f32 %v826, %v912
      %v929 = vadd.f32 %v827, %v917
      %v930 = vadd.f32 %v828, %v920
      %v931 = vld [vmem:[#allocation2 + $0x2] sm:$0xff]
      %v932 = vld [vmem:[#allocation2 + $0x12] sm:$0xff]
      %v933 = vld [vmem:[#allocation2 + $0x22] sm:$0xff]
      %v934 = vld [vmem:[#allocation2 + $0x32] sm:$0xff]
      %v935 = vld [vmem:[#allocation2 + $0x42] sm:$0xff]
      %v936 = vld [vmem:[#allocation2 + $0x52] sm:$0xff]
      %v937 = vld [vmem:[#allocation2 + $0x62] sm:$0xff]
      %v938 = vld [vmem:[#allocation2 + $0x72] sm:$0xff]
      %v939 = vpack.c.bf16 %v932, %v931
      %v940 = vpack.c.bf16 %v934, %v933
      %v941 = vpack.c.bf16 %v936, %v935
      %v942 = vpack.c.bf16 %v938, %v937
      %s943 = scalar_lea.vmem %s1, 4
      %v944 = vld [vmem:[%s943] sm:$0x3]
      %v946 = vsel %vm550, %v939, 0
      %v949 = vsel %vm550, %v940, 0
      %v952 = vsel %vm550, %v941, 0
      %v955 = vsel %vm550, %v942, 0
      %v958 = vsel %vm752, %v944, 0
      %960 = vmatprep.subr.bf16.mxu0 0
      %961 = vmatpush1.bf16.msra.mxu0 0
      %962 = vmatprep.subr.bf16.mxu0 0
      %963 = vmatpush1.bf16.msra.mxu0 0
      %964 = vmatprep.subr.bf16.mxu0 0
      %965 = vmatpush1.bf16.msra.mxu0 0
      %966 = vmatprep.subr.bf16.mxu0 0
      %967 = vmatpush1.bf16.msra.mxu0 0
      %968 = vmatprep.subr.bf16.mxu0 0
      %969 = vmatpush1.bf16.msra.mxu0 0
      %970 = vmatprep.subr.bf16.mxu0 0
      %971 = vmatpush1.bf16.msra.mxu0 0
      %972 = vmatprep.subr.bf16.mxu0 0
      %973 = vmatpush1.bf16.msra.mxu0 0
      %974 = vmatprep.subr.bf16.mxu0 0
      %975 = vmatpush1.bf16.msra.mxu0 %v958
      %976 = vmatprep.subr.bf16.mxu0 0
      %977 = vmatpush2.bf16.msra.mxu0 0
      %978 = vmatprep.subr.bf16.mxu0 0
      %979 = vmatpush2.bf16.msra.mxu0 0
      %980 = vmatprep.subr.bf16.mxu0 0
      %981 = vmatpush2.bf16.msra.mxu0 0
      %982 = vmatprep.subr.bf16.mxu0 0
      %983 = vmatpush2.bf16.msra.mxu0 0
      %984 = vmatprep.subr.bf16.mxu0 0
      %985 = vmatpush2.bf16.msra.mxu0 0
      %986 = vmatprep.subr.bf16.mxu0 0
      %987 = vmatpush2.bf16.msra.mxu0 0
      %988 = vmatprep.subr.bf16.mxu0 0
      %989 = vmatpush2.bf16.msra.mxu0 0
      %990 = vmatprep.subr.bf16.mxu0 0
      %991 = vmatpush2.bf16.msra.mxu0 0
      %992 = vmatprep.mubr.bf16.mxu0 0
      %993 = vmatmul.mubr.bf16.gmra.mxu0 %v946
      %v994 = vpop.f32.mrf.mxu0
      %v995 = vadd.f32 0.0, %v994
      %v996 = vpop.f32.mrf.mxu0
      %v997 = vpop.f32.mrf.mxu0
      %v998 = vadd.f32 0.0, %v997
      %v999 = vpop.f32.mrf.mxu0
      %1000 = vmatprep.mubr.bf16.mxu0 0
      %1001 = vmatmul.mubr.bf16.gmra.mxu0 %v949
      %v1002 = vpop.f32.mrf.mxu0
      %v1003 = vadd.f32 0.0, %v1002
      %v1004 = vpop.f32.mrf.mxu0
      %v1005 = vpop.f32.mrf.mxu0
      %v1006 = vadd.f32 0.0, %v1005
      %v1007 = vpop.f32.mrf.mxu0
      %1008 = vmatprep.mubr.bf16.mxu0 0
      %1009 = vmatmul.mubr.bf16.gmra.mxu0 %v952
      %v1010 = vpop.f32.mrf.mxu0
      %v1011 = vadd.f32 0.0, %v1010
      %v1012 = vpop.f32.mrf.mxu0
      %v1013 = vpop.f32.mrf.mxu0
      %v1014 = vadd.f32 0.0, %v1013
      %v1015 = vpop.f32.mrf.mxu0
      %1016 = vmatprep.mubr.bf16.mxu0 0
      %1017 = vmatmul.mubr.bf16.gmra.mxu0 %v955
      %v1018 = vpop.f32.mrf.mxu0
      %v1019 = vadd.f32 0.0, %v1018
      %v1020 = vpop.f32.mrf.mxu0
      %v1021 = vpop.f32.mrf.mxu0
      %v1022 = vadd.f32 0.0, %v1021
      %v1023 = vpop.f32.mrf.mxu0
      %1024 = vdwg.mxu0
      %v1025 = vadd.f32 %v923, %v995
      %v1026 = vadd.f32 %v924, %v998
      %v1027 = vadd.f32 %v925, %v1003
      %v1028 = vadd.f32 %v926, %v1006
      %v1029 = vadd.f32 %v927, %v1011
      %v1030 = vadd.f32 %v928, %v1014
      %v1031 = vadd.f32 %v929, %v1019
      %v1032 = vadd.f32 %v930, %v1022
      %v1033 = vld [vmem:[%s711] sm:$0xff]
      %v1034 = vld [vmem:[%s711 + $0x10] sm:$0xff]
      %v1035 = vld [vmem:[%s711 + $0x20] sm:$0xff]
      %v1036 = vld [vmem:[%s711 + $0x30] sm:$0xff]
      %v1037 = vld [vmem:[%s711 + $0x40] sm:$0xff]
      %v1038 = vld [vmem:[%s711 + $0x50] sm:$0xff]
      %v1039 = vld [vmem:[%s711 + $0x60] sm:$0xff]
      %v1040 = vld [vmem:[%s711 + $0x70] sm:$0xff]
      %v1041 = vpack.c.bf16 %v1034, %v1033
      %v1042 = vpack.c.bf16 %v1036, %v1035
      %v1043 = vpack.c.bf16 %v1038, %v1037
      %v1044 = vpack.c.bf16 %v1040, %v1039
      %s1045 = scalar_lea.vmem %s1, 6
      %v1046 = vld [vmem:[%s1045] sm:$0x3]
      %v1048 = vsel %vm550, %v1041, 0
      %v1051 = vsel %vm550, %v1042, 0
      %v1054 = vsel %vm550, %v1043, 0
      %v1057 = vsel %vm550, %v1044, 0
      %v1060 = vsel %vm752, %v1046, 0
      %1062 = vmatprep.subr.bf16.mxu0 0
      %1063 = vmatpush1.bf16.msra.mxu0 0
      %1064 = vmatprep.subr.bf16.mxu0 0
      %1065 = vmatpush1.bf16.msra.mxu0 0
      %1066 = vmatprep.subr.bf16.mxu0 0
      %1067 = vmatpush1.bf16.msra.mxu0 0
      %1068 = vmatprep.subr.bf16.mxu0 0
      %1069 = vmatpush1.bf16.msra.mxu0 0
      %1070 = vmatprep.subr.bf16.mxu0 0
      %1071 = vmatpush1.bf16.msra.mxu0 0
      %1072 = vmatprep.subr.bf16.mxu0 0
      %1073 = vmatpush1.bf16.msra.mxu0 0
      %1074 = vmatprep.subr.bf16.mxu0 0
      %1075 = vmatpush1.bf16.msra.mxu0 0
      %1076 = vmatprep.subr.bf16.mxu0 0
      %1077 = vmatpush1.bf16.msra.mxu0 %v1060
      %1078 = vmatprep.subr.bf16.mxu0 0
      %1079 = vmatpush2.bf16.msra.mxu0 0
      %1080 = vmatprep.subr.bf16.mxu0 0
      %1081 = vmatpush2.bf16.msra.mxu0 0
      %1082 = vmatprep.subr.bf16.mxu0 0
      %1083 = vmatpush2.bf16.msra.mxu0 0
      %1084 = vmatprep.subr.bf16.mxu0 0
      %1085 = vmatpush2.bf16.msra.mxu0 0
      %1086 = vmatprep.subr.bf16.mxu0 0
      %1087 = vmatpush2.bf16.msra.mxu0 0
      %1088 = vmatprep.subr.bf16.mxu0 0
      %1089 = vmatpush2.bf16.msra.mxu0 0
      %1090 = vmatprep.subr.bf16.mxu0 0
      %1091 = vmatpush2.bf16.msra.mxu0 0
      %1092 = vmatprep.subr.bf16.mxu0 0
      %1093 = vmatpush2.bf16.msra.mxu0 0
      %1094 = vmatprep.mubr.bf16.mxu0 0
      %1095 = vmatmul.mubr.bf16.gmra.mxu0 %v1048
      %v1096 = vpop.f32.mrf.mxu0
      %v1097 = vadd.f32 0.0, %v1096
      %v1098 = vpop.f32.mrf.mxu0
      %v1099 = vpop.f32.mrf.mxu0
      %v1100 = vadd.f32 0.0, %v1099
      %v1101 = vpop.f32.mrf.mxu0
      %1102 = vmatprep.mubr.bf16.mxu0 0
      %1103 = vmatmul.mubr.bf16.gmra.mxu0 %v1051
      %v1104 = vpop.f32.mrf.mxu0
      %v1105 = vadd.f32 0.0, %v1104
      %v1106 = vpop.f32.mrf.mxu0
      %v1107 = vpop.f32.mrf.mxu0
      %v1108 = vadd.f32 0.0, %v1107
      %v1109 = vpop.f32.mrf.mxu0
      %1110 = vmatprep.mubr.bf16.mxu0 0
      %1111 = vmatmul.mubr.bf16.gmra.mxu0 %v1054
      %v1112 = vpop.f32.mrf.mxu0
      %v1113 = vadd.f32 0.0, %v1112
      %v1114 = vpop.f32.mrf.mxu0
      %v1115 = vpop.f32.mrf.mxu0
      %v1116 = vadd.f32 0.0, %v1115
      %v1117 = vpop.f32.mrf.mxu0
      %1118 = vmatprep.mubr.bf16.mxu0 0
      %1119 = vmatmul.mubr.bf16.gmra.mxu0 %v1057
      %v1120 = vpop.f32.mrf.mxu0
      %v1121 = vadd.f32 0.0, %v1120
      %v1122 = vpop.f32.mrf.mxu0
      %v1123 = vpop.f32.mrf.mxu0
      %v1124 = vadd.f32 0.0, %v1123
      %v1125 = vpop.f32.mrf.mxu0
      %1126 = vdwg.mxu0
      %v1127 = vadd.f32 %v1025, %v1097
      %v1128 = vadd.f32 %v1026, %v1100
      %v1129 = vadd.f32 %v1027, %v1105
      %v1130 = vadd.f32 %v1028, %v1108
      %v1131 = vadd.f32 %v1029, %v1113
      %v1132 = vadd.f32 %v1030, %v1116
      %v1133 = vadd.f32 %v1031, %v1121
      %v1134 = vadd.f32 %v1032, %v1124
      %v1135 = vld [vmem:[%s711 + $0x1] sm:$0xff]
      %v1136 = vld [vmem:[%s711 + $0x11] sm:$0xff]
      %v1137 = vld [vmem:[%s711 + $0x21] sm:$0xff]
      %v1138 = vld [vmem:[%s711 + $0x31] sm:$0xff]
      %v1139 = vld [vmem:[%s711 + $0x41] sm:$0xff]
      %v1140 = vld [vmem:[%s711 + $0x51] sm:$0xff]
      %v1141 = vld [vmem:[%s711 + $0x61] sm:$0xff]
      %v1142 = vld [vmem:[%s711 + $0x71] sm:$0xff]
      %v1143 = vpack.c.bf16 %v1136, %v1135
      %v1144 = vpack.c.bf16 %v1138, %v1137
      %v1145 = vpack.c.bf16 %v1140, %v1139
      %v1146 = vpack.c.bf16 %v1142, %v1141
      %s1147 = scalar_lea.vmem %s1, 8
      %v1148 = vld [vmem:[%s1147] sm:$0x3]
      %v1150 = vsel %vm550, %v1143, 0
      %v1153 = vsel %vm550, %v1144, 0
      %v1156 = vsel %vm550, %v1145, 0
      %v1159 = vsel %vm550, %v1146, 0
      %v1162 = vsel %vm752, %v1148, 0
      %1164 = vmatprep.subr.bf16.mxu0 0
      %1165 = vmatpush1.bf16.msra.mxu0 0
      %1166 = vmatprep.subr.bf16.mxu0 0
      %1167 = vmatpush1.bf16.msra.mxu0 0
      %1168 = vmatprep.subr.bf16.mxu0 0
      %1169 = vmatpush1.bf16.msra.mxu0 0
      %1170 = vmatprep.subr.bf16.mxu0 0
      %1171 = vmatpush1.bf16.msra.mxu0 0
      %1172 = vmatprep.subr.bf16.mxu0 0
      %1173 = vmatpush1.bf16.msra.mxu0 0
      %1174 = vmatprep.subr.bf16.mxu0 0
      %1175 = vmatpush1.bf16.msra.mxu0 0
      %1176 = vmatprep.subr.bf16.mxu0 0
      %1177 = vmatpush1.bf16.msra.mxu0 0
      %1178 = vmatprep.subr.bf16.mxu0 0
      %1179 = vmatpush1.bf16.msra.mxu0 %v1162
      %1180 = vmatprep.subr.bf16.mxu0 0
      %1181 = vmatpush2.bf16.msra.mxu0 0
      %1182 = vmatprep.subr.bf16.mxu0 0
      %1183 = vmatpush2.bf16.msra.mxu0 0
      %1184 = vmatprep.subr.bf16.mxu0 0
      %1185 = vmatpush2.bf16.msra.mxu0 0
      %1186 = vmatprep.subr.bf16.mxu0 0
      %1187 = vmatpush2.bf16.msra.mxu0 0
      %1188 = vmatprep.subr.bf16.mxu0 0
      %1189 = vmatpush2.bf16.msra.mxu0 0
      %1190 = vmatprep.subr.bf16.mxu0 0
      %1191 = vmatpush2.bf16.msra.mxu0 0
      %1192 = vmatprep.subr.bf16.mxu0 0
      %1193 = vmatpush2.bf16.msra.mxu0 0
      %1194 = vmatprep.subr.bf16.mxu0 0
      %1195 = vmatpush2.bf16.msra.mxu0 0
      %1196 = vmatprep.mubr.bf16.mxu0 0
      %1197 = vmatmul.mubr.bf16.gmra.mxu0 %v1150
      %v1198 = vpop.f32.mrf.mxu0
      %v1199 = vadd.f32 0.0, %v1198
      %v1200 = vpop.f32.mrf.mxu0
      %v1201 = vpop.f32.mrf.mxu0
      %v1202 = vadd.f32 0.0, %v1201
      %v1203 = vpop.f32.mrf.mxu0
      %1204 = vmatprep.mubr.bf16.mxu0 0
      %1205 = vmatmul.mubr.bf16.gmra.mxu0 %v1153
      %v1206 = vpop.f32.mrf.mxu0
      %v1207 = vadd.f32 0.0, %v1206
      %v1208 = vpop.f32.mrf.mxu0
      %v1209 = vpop.f32.mrf.mxu0
      %v1210 = vadd.f32 0.0, %v1209
      %v1211 = vpop.f32.mrf.mxu0
      %1212 = vmatprep.mubr.bf16.mxu0 0
      %1213 = vmatmul.mubr.bf16.gmra.mxu0 %v1156
      %v1214 = vpop.f32.mrf.mxu0
      %v1215 = vadd.f32 0.0, %v1214
      %v1216 = vpop.f32.mrf.mxu0
      %v1217 = vpop.f32.mrf.mxu0
      %v1218 = vadd.f32 0.0, %v1217
      %v1219 = vpop.f32.mrf.mxu0
      %1220 = vmatprep.mubr.bf16.mxu0 0
      %1221 = vmatmul.mubr.bf16.gmra.mxu0 %v1159
      %v1222 = vpop.f32.mrf.mxu0
      %v1223 = vadd.f32 0.0, %v1222
      %v1224 = vpop.f32.mrf.mxu0
      %v1225 = vpop.f32.mrf.mxu0
      %v1226 = vadd.f32 0.0, %v1225
      %v1227 = vpop.f32.mrf.mxu0
      %1228 = vdwg.mxu0
      %v1229 = vadd.f32 %v1127, %v1199
      %v1230 = vadd.f32 %v1128, %v1202
      %v1231 = vadd.f32 %v1129, %v1207
      %v1232 = vadd.f32 %v1130, %v1210
      %v1233 = vadd.f32 %v1131, %v1215
      %v1234 = vadd.f32 %v1132, %v1218
      %v1235 = vadd.f32 %v1133, %v1223
      %v1236 = vadd.f32 %v1134, %v1226
      %v1237 = vld [vmem:[%s711 + $0x2] sm:$0xff]
      %v1238 = vld [vmem:[%s711 + $0x12] sm:$0xff]
      %v1239 = vld [vmem:[%s711 + $0x22] sm:$0xff]
      %v1240 = vld [vmem:[%s711 + $0x32] sm:$0xff]
      %v1241 = vld [vmem:[%s711 + $0x42] sm:$0xff]
      %v1242 = vld [vmem:[%s711 + $0x52] sm:$0xff]
      %v1243 = vld [vmem:[%s711 + $0x62] sm:$0xff]
      %v1244 = vld [vmem:[%s711 + $0x72] sm:$0xff]
      %v1245 = vpack.c.bf16 %v1238, %v1237
      %v1246 = vpack.c.bf16 %v1240, %v1239
      %v1247 = vpack.c.bf16 %v1242, %v1241
      %v1248 = vpack.c.bf16 %v1244, %v1243
      %s1249 = scalar_lea.vmem %s1, 10
      %v1250 = vld [vmem:[%s1249] sm:$0x3]
      %v1252 = vsel %vm550, %v1245, 0
      %v1255 = vsel %vm550, %v1246, 0
      %v1258 = vsel %vm550, %v1247, 0
      %v1261 = vsel %vm550, %v1248, 0
      %v1264 = vsel %vm752, %v1250, 0
      %1266 = vmatprep.subr.bf16.mxu0 0
      %1267 = vmatpush1.bf16.msra.mxu0 0
      %1268 = vmatprep.subr.bf16.mxu0 0
      %1269 = vmatpush1.bf16.msra.mxu0 0
      %1270 = vmatprep.subr.bf16.mxu0 0
      %1271 = vmatpush1.bf16.msra.mxu0 0
      %1272 = vmatprep.subr.bf16.mxu0 0
      %1273 = vmatpush1.bf16.msra.mxu0 0
      %1274 = vmatprep.subr.bf16.mxu0 0
      %1275 = vmatpush1.bf16.msra.mxu0 0
      %1276 = vmatprep.subr.bf16.mxu0 0
      %1277 = vmatpush1.bf16.msra.mxu0 0
      %1278 = vmatprep.subr.bf16.mxu0 0
      %1279 = vmatpush1.bf16.msra.mxu0 0
      %1280 = vmatprep.subr.bf16.mxu0 0
      %1281 = vmatpush1.bf16.msra.mxu0 %v1264
      %1282 = vmatprep.subr.bf16.mxu0 0
      %1283 = vmatpush2.bf16.msra.mxu0 0
      %1284 = vmatprep.subr.bf16.mxu0 0
      %1285 = vmatpush2.bf16.msra.mxu0 0
      %1286 = vmatprep.subr.bf16.mxu0 0
      %1287 = vmatpush2.bf16.msra.mxu0 0
      %1288 = vmatprep.subr.bf16.mxu0 0
      %1289 = vmatpush2.bf16.msra.mxu0 0
      %1290 = vmatprep.subr.bf16.mxu0 0
      %1291 = vmatpush2.bf16.msra.mxu0 0
      %1292 = vmatprep.subr.bf16.mxu0 0
      %1293 = vmatpush2.bf16.msra.mxu0 0
      %1294 = vmatprep.subr.bf16.mxu0 0
      %1295 = vmatpush2.bf16.msra.mxu0 0
      %1296 = vmatprep.subr.bf16.mxu0 0
      %1297 = vmatpush2.bf16.msra.mxu0 0
      %1298 = vmatprep.mubr.bf16.mxu0 0
      %1299 = vmatmul.mubr.bf16.gmra.mxu0 %v1252
      %v1300 = vpop.f32.mrf.mxu0
      %v1301 = vadd.f32 0.0, %v1300
      %v1302 = vpop.f32.mrf.mxu0
      %v1303 = vpop.f32.mrf.mxu0
      %v1304 = vadd.f32 0.0, %v1303
      %v1305 = vpop.f32.mrf.mxu0
      %1306 = vmatprep.mubr.bf16.mxu0 0
      %1307 = vmatmul.mubr.bf16.gmra.mxu0 %v1255
      %v1308 = vpop.f32.mrf.mxu0
      %v1309 = vadd.f32 0.0, %v1308
      %v1310 = vpop.f32.mrf.mxu0
      %v1311 = vpop.f32.mrf.mxu0
      %v1312 = vadd.f32 0.0, %v1311
      %v1313 = vpop.f32.mrf.mxu0
      %1314 = vmatprep.mubr.bf16.mxu0 0
      %1315 = vmatmul.mubr.bf16.gmra.mxu0 %v1258
      %v1316 = vpop.f32.mrf.mxu0
      %v1317 = vadd.f32 0.0, %v1316
      %v1318 = vpop.f32.mrf.mxu0
      %v1319 = vpop.f32.mrf.mxu0
      %v1320 = vadd.f32 0.0, %v1319
      %v1321 = vpop.f32.mrf.mxu0
      %1322 = vmatprep.mubr.bf16.mxu0 0
      %1323 = vmatmul.mubr.bf16.gmra.mxu0 %v1261
      %v1324 = vpop.f32.mrf.mxu0
      %v1325 = vadd.f32 0.0, %v1324
      %v1326 = vpop.f32.mrf.mxu0
      %v1327 = vpop.f32.mrf.mxu0
      %v1328 = vadd.f32 0.0, %v1327
      %v1329 = vpop.f32.mrf.mxu0
      %1330 = vdwg.mxu0
      %v1331 = vadd.f32 %v1229, %v1301
      %v1332 = vadd.f32 %v1230, %v1304
      %v1333 = vadd.f32 %v1231, %v1309
      %v1334 = vadd.f32 %v1232, %v1312
      %v1335 = vadd.f32 %v1233, %v1317
      %v1336 = vadd.f32 %v1234, %v1320
      %v1337 = vadd.f32 %v1235, %v1325
      %v1338 = vadd.f32 %v1236, %v1328
      %s1339 = scalar_lea.vmem [#allocation2], 32
      %v1340 = vld [vmem:[%s1339] sm:$0xff]
      %v1341 = vld [vmem:[%s1339 + $0x10] sm:$0xff]
      %v1342 = vld [vmem:[%s1339 + $0x20] sm:$0xff]
      %v1343 = vld [vmem:[%s1339 + $0x30] sm:$0xff]
      %v1344 = vld [vmem:[%s1339 + $0x40] sm:$0xff]
      %v1345 = vld [vmem:[%s1339 + $0x50] sm:$0xff]
      %v1346 = vld [vmem:[%s1339 + $0x60] sm:$0xff]
      %v1347 = vld [vmem:[%s1339 + $0x70] sm:$0xff]
      %v1348 = vpack.c.bf16 %v1341, %v1340
      %v1349 = vpack.c.bf16 %v1343, %v1342
      %v1350 = vpack.c.bf16 %v1345, %v1344
      %v1351 = vpack.c.bf16 %v1347, %v1346
      %s1352 = scalar_lea.vmem %s1, 12
      %v1353 = vld [vmem:[%s1352] sm:$0x3]
      %v1355 = vsel %vm550, %v1348, 0
      %v1358 = vsel %vm550, %v1349, 0
      %v1361 = vsel %vm550, %v1350, 0
      %v1364 = vsel %vm550, %v1351, 0
      %v1367 = vsel %vm752, %v1353, 0
      %1369 = vmatprep.subr.bf16.mxu0 0
      %1370 = vmatpush1.bf16.msra.mxu0 0
      %1371 = vmatprep.subr.bf16.mxu0 0
      %1372 = vmatpush1.bf16.msra.mxu0 0
      %1373 = vmatprep.subr.bf16.mxu0 0
      %1374 = vmatpush1.bf16.msra.mxu0 0
      %1375 = vmatprep.subr.bf16.mxu0 0
      %1376 = vmatpush1.bf16.msra.mxu0 0
      %1377 = vmatprep.subr.bf16.mxu0 0
      %1378 = vmatpush1.bf16.msra.mxu0 0
      %1379 = vmatprep.subr.bf16.mxu0 0
      %1380 = vmatpush1.bf16.msra.mxu0 0
      %1381 = vmatprep.subr.bf16.mxu0 0
      %1382 = vmatpush1.bf16.msra.mxu0 0
      %1383 = vmatprep.subr.bf16.mxu0 0
      %1384 = vmatpush1.bf16.msra.mxu0 %v1367
      %1385 = vmatprep.subr.bf16.mxu0 0
      %1386 = vmatpush2.bf16.msra.mxu0 0
      %1387 = vmatprep.subr.bf16.mxu0 0
      %1388 = vmatpush2.bf16.msra.mxu0 0
      %1389 = vmatprep.subr.bf16.mxu0 0
      %1390 = vmatpush2.bf16.msra.mxu0 0
      %1391 = vmatprep.subr.bf16.mxu0 0
      %1392 = vmatpush2.bf16.msra.mxu0 0
      %1393 = vmatprep.subr.bf16.mxu0 0
      %1394 = vmatpush2.bf16.msra.mxu0 0
      %1395 = vmatprep.subr.bf16.mxu0 0
      %1396 = vmatpush2.bf16.msra.mxu0 0
      %1397 = vmatprep.subr.bf16.mxu0 0
      %1398 = vmatpush2.bf16.msra.mxu0 0
      %1399 = vmatprep.subr.bf16.mxu0 0
      %1400 = vmatpush2.bf16.msra.mxu0 0
      %1401 = vmatprep.mubr.bf16.mxu0 0
      %1402 = vmatmul.mubr.bf16.gmra.mxu0 %v1355
      %v1403 = vpop.f32.mrf.mxu0
      %v1404 = vadd.f32 0.0, %v1403
      %v1405 = vpop.f32.mrf.mxu0
      %v1406 = vpop.f32.mrf.mxu0
      %v1407 = vadd.f32 0.0, %v1406
      %v1408 = vpop.f32.mrf.mxu0
      %1409 = vmatprep.mubr.bf16.mxu0 0
      %1410 = vmatmul.mubr.bf16.gmra.mxu0 %v1358
      %v1411 = vpop.f32.mrf.mxu0
      %v1412 = vadd.f32 0.0, %v1411
      %v1413 = vpop.f32.mrf.mxu0
      %v1414 = vpop.f32.mrf.mxu0
      %v1415 = vadd.f32 0.0, %v1414
      %v1416 = vpop.f32.mrf.mxu0
      %1417 = vmatprep.mubr.bf16.mxu0 0
      %1418 = vmatmul.mubr.bf16.gmra.mxu0 %v1361
      %v1419 = vpop.f32.mrf.mxu0
      %v1420 = vadd.f32 0.0, %v1419
      %v1421 = vpop.f32.mrf.mxu0
      %v1422 = vpop.f32.mrf.mxu0
      %v1423 = vadd.f32 0.0, %v1422
      %v1424 = vpop.f32.mrf.mxu0
      %1425 = vmatprep.mubr.bf16.mxu0 0
      %1426 = vmatmul.mubr.bf16.gmra.mxu0 %v1364
      %v1427 = vpop.f32.mrf.mxu0
      %v1428 = vadd.f32 0.0, %v1427
      %v1429 = vpop.f32.mrf.mxu0
      %v1430 = vpop.f32.mrf.mxu0
      %v1431 = vadd.f32 0.0, %v1430
      %v1432 = vpop.f32.mrf.mxu0
      %1433 = vdwg.mxu0
      %v1434 = vadd.f32 %v1331, %v1404
      %v1435 = vadd.f32 %v1332, %v1407
      %v1436 = vadd.f32 %v1333, %v1412
      %v1437 = vadd.f32 %v1334, %v1415
      %v1438 = vadd.f32 %v1335, %v1420
      %v1439 = vadd.f32 %v1336, %v1423
      %v1440 = vadd.f32 %v1337, %v1428
      %v1441 = vadd.f32 %v1338, %v1431
      %v1442 = vld [vmem:[%s1339 + $0x1] sm:$0xff]
      %v1443 = vld [vmem:[%s1339 + $0x11] sm:$0xff]
      %v1444 = vld [vmem:[%s1339 + $0x21] sm:$0xff]
      %v1445 = vld [vmem:[%s1339 + $0x31] sm:$0xff]
      %v1446 = vld [vmem:[%s1339 + $0x41] sm:$0xff]
      %v1447 = vld [vmem:[%s1339 + $0x51] sm:$0xff]
      %v1448 = vld [vmem:[%s1339 + $0x61] sm:$0xff]
      %v1449 = vld [vmem:[%s1339 + $0x71] sm:$0xff]
      %v1450 = vpack.c.bf16 %v1443, %v1442
      %v1451 = vpack.c.bf16 %v1445, %v1444
      %v1452 = vpack.c.bf16 %v1447, %v1446
      %v1453 = vpack.c.bf16 %v1449, %v1448
      %s1454 = scalar_lea.vmem %s1, 14
      %v1455 = vld [vmem:[%s1454] sm:$0x3]
      %v1457 = vsel %vm550, %v1450, 0
      %v1460 = vsel %vm550, %v1451, 0
      %v1463 = vsel %vm550, %v1452, 0
      %v1466 = vsel %vm550, %v1453, 0
      %v1469 = vsel %vm752, %v1455, 0
      %1471 = vmatprep.subr.bf16.mxu0 0
      %1472 = vmatpush1.bf16.msra.mxu0 0
      %1473 = vmatprep.subr.bf16.mxu0 0
      %1474 = vmatpush1.bf16.msra.mxu0 0
      %1475 = vmatprep.subr.bf16.mxu0 0
      %1476 = vmatpush1.bf16.msra.mxu0 0
      %1477 = vmatprep.subr.bf16.mxu0 0
      %1478 = vmatpush1.bf16.msra.mxu0 0
      %1479 = vmatprep.subr.bf16.mxu0 0
      %1480 = vmatpush1.bf16.msra.mxu0 0
      %1481 = vmatprep.subr.bf16.mxu0 0
      %1482 = vmatpush1.bf16.msra.mxu0 0
      %1483 = vmatprep.subr.bf16.mxu0 0
      %1484 = vmatpush1.bf16.msra.mxu0 0
      %1485 = vmatprep.subr.bf16.mxu0 0
      %1486 = vmatpush1.bf16.msra.mxu0 %v1469
      %1487 = vmatprep.subr.bf16.mxu0 0
      %1488 = vmatpush2.bf16.msra.mxu0 0
      %1489 = vmatprep.subr.bf16.mxu0 0
      %1490 = vmatpush2.bf16.msra.mxu0 0
      %1491 = vmatprep.subr.bf16.mxu0 0
      %1492 = vmatpush2.bf16.msra.mxu0 0
      %1493 = vmatprep.subr.bf16.mxu0 0
      %1494 = vmatpush2.bf16.msra.mxu0 0
      %1495 = vmatprep.subr.bf16.mxu0 0
      %1496 = vmatpush2.bf16.msra.mxu0 0
      %1497 = vmatprep.subr.bf16.mxu0 0
      %1498 = vmatpush2.bf16.msra.mxu0 0
      %1499 = vmatprep.subr.bf16.mxu0 0
      %1500 = vmatpush2.bf16.msra.mxu0 0
      %1501 = vmatprep.subr.bf16.mxu0 0
      %1502 = vmatpush2.bf16.msra.mxu0 0
      %1503 = vmatprep.mubr.bf16.mxu0 0
      %1504 = vmatmul.mubr.bf16.gmra.mxu0 %v1457
      %v1505 = vpop.f32.mrf.mxu0
      %v1506 = vadd.f32 0.0, %v1505
      %v1507 = vpop.f32.mrf.mxu0
      %v1508 = vpop.f32.mrf.mxu0
      %v1509 = vadd.f32 0.0, %v1508
      %v1510 = vpop.f32.mrf.mxu0
      %1511 = vmatprep.mubr.bf16.mxu0 0
      %1512 = vmatmul.mubr.bf16.gmra.mxu0 %v1460
      %v1513 = vpop.f32.mrf.mxu0
      %v1514 = vadd.f32 0.0, %v1513
      %v1515 = vpop.f32.mrf.mxu0
      %v1516 = vpop.f32.mrf.mxu0
      %v1517 = vadd.f32 0.0, %v1516
      %v1518 = vpop.f32.mrf.mxu0
      %1519 = vmatprep.mubr.bf16.mxu0 0
      %1520 = vmatmul.mubr.bf16.gmra.mxu0 %v1463
      %v1521 = vpop.f32.mrf.mxu0
      %v1522 = vadd.f32 0.0, %v1521
      %v1523 = vpop.f32.mrf.mxu0
      %v1524 = vpop.f32.mrf.mxu0
      %v1525 = vadd.f32 0.0, %v1524
      %v1526 = vpop.f32.mrf.mxu0
      %1527 = vmatprep.mubr.bf16.mxu0 0
      %1528 = vmatmul.mubr.bf16.gmra.mxu0 %v1466
      %v1529 = vpop.f32.mrf.mxu0
      %v1530 = vadd.f32 0.0, %v1529
      %v1531 = vpop.f32.mrf.mxu0
      %v1532 = vpop.f32.mrf.mxu0
      %v1533 = vadd.f32 0.0, %v1532
      %v1534 = vpop.f32.mrf.mxu0
      %1535 = vdwg.mxu0
      %v1536 = vadd.f32 %v1434, %v1506
      %v1537 = vadd.f32 %v1435, %v1509
      %v1538 = vadd.f32 %v1436, %v1514
      %v1539 = vadd.f32 %v1437, %v1517
      %v1540 = vadd.f32 %v1438, %v1522
      %v1541 = vadd.f32 %v1439, %v1525
      %v1542 = vadd.f32 %v1440, %v1530
      %v1543 = vadd.f32 %v1441, %v1533
      %v1544 = vld [vmem:[%s1339 + $0x2] sm:$0xff]
      %v1545 = vld [vmem:[%s1339 + $0x12] sm:$0xff]
      %v1546 = vld [vmem:[%s1339 + $0x22] sm:$0xff]
      %v1547 = vld [vmem:[%s1339 + $0x32] sm:$0xff]
      %v1548 = vld [vmem:[%s1339 + $0x42] sm:$0xff]
      %v1549 = vld [vmem:[%s1339 + $0x52] sm:$0xff]
      %v1550 = vld [vmem:[%s1339 + $0x62] sm:$0xff]
      %v1551 = vld [vmem:[%s1339 + $0x72] sm:$0xff]
      %v1552 = vpack.c.bf16 %v1545, %v1544
      %v1553 = vpack.c.bf16 %v1547, %v1546
      %v1554 = vpack.c.bf16 %v1549, %v1548
      %v1555 = vpack.c.bf16 %v1551, %v1550
      %s1556 = scalar_lea.vmem %s1, 16
      %v1557 = vld [vmem:[%s1556] sm:$0x3]
      %v1559 = vsel %vm550, %v1552, 0
      %v1562 = vsel %vm550, %v1553, 0
      %v1565 = vsel %vm550, %v1554, 0
      %v1568 = vsel %vm550, %v1555, 0
      %v1571 = vsel %vm752, %v1557, 0
      %1573 = vmatprep.subr.bf16.mxu0 0
      %1574 = vmatpush1.bf16.msra.mxu0 0
      %1575 = vmatprep.subr.bf16.mxu0 0
      %1576 = vmatpush1.bf16.msra.mxu0 0
      %1577 = vmatprep.subr.bf16.mxu0 0
      %1578 = vmatpush1.bf16.msra.mxu0 0
      %1579 = vmatprep.subr.bf16.mxu0 0
      %1580 = vmatpush1.bf16.msra.mxu0 0
      %1581 = vmatprep.subr.bf16.mxu0 0
      %1582 = vmatpush1.bf16.msra.mxu0 0
      %1583 = vmatprep.subr.bf16.mxu0 0
      %1584 = vmatpush1.bf16.msra.mxu0 0
      %1585 = vmatprep.subr.bf16.mxu0 0
      %1586 = vmatpush1.bf16.msra.mxu0 0
      %1587 = vmatprep.subr.bf16.mxu0 0
      %1588 = vmatpush1.bf16.msra.mxu0 %v1571
      %1589 = vmatprep.subr.bf16.mxu0 0
      %1590 = vmatpush2.bf16.msra.mxu0 0
      %1591 = vmatprep.subr.bf16.mxu0 0
      %1592 = vmatpush2.bf16.msra.mxu0 0
      %1593 = vmatprep.subr.bf16.mxu0 0
      %1594 = vmatpush2.bf16.msra.mxu0 0
      %1595 = vmatprep.subr.bf16.mxu0 0
      %1596 = vmatpush2.bf16.msra.mxu0 0
      %1597 = vmatprep.subr.bf16.mxu0 0
      %1598 = vmatpush2.bf16.msra.mxu0 0
      %1599 = vmatprep.subr.bf16.mxu0 0
      %1600 = vmatpush2.bf16.msra.mxu0 0
      %1601 = vmatprep.subr.bf16.mxu0 0
      %1602 = vmatpush2.bf16.msra.mxu0 0
      %1603 = vmatprep.subr.bf16.mxu0 0
      %1604 = vmatpush2.bf16.msra.mxu0 0
      %1605 = vmatprep.mubr.bf16.mxu0 0
      %1606 = vmatmul.mubr.bf16.gmra.mxu0 %v1559
      %v1607 = vpop.f32.mrf.mxu0
      %v1608 = vadd.f32 0.0, %v1607
      %v1609 = vpop.f32.mrf.mxu0
      %v1610 = vpop.f32.mrf.mxu0
      %v1611 = vadd.f32 0.0, %v1610
      %v1612 = vpop.f32.mrf.mxu0
      %1613 = vmatprep.mubr.bf16.mxu0 0
      %1614 = vmatmul.mubr.bf16.gmra.mxu0 %v1562
      %v1615 = vpop.f32.mrf.mxu0
      %v1616 = vadd.f32 0.0, %v1615
      %v1617 = vpop.f32.mrf.mxu0
      %v1618 = vpop.f32.mrf.mxu0
      %v1619 = vadd.f32 0.0, %v1618
      %v1620 = vpop.f32.mrf.mxu0
      %1621 = vmatprep.mubr.bf16.mxu0 0
      %1622 = vmatmul.mubr.bf16.gmra.mxu0 %v1565
      %v1623 = vpop.f32.mrf.mxu0
      %v1624 = vadd.f32 0.0, %v1623
      %v1625 = vpop.f32.mrf.mxu0
      %v1626 = vpop.f32.mrf.mxu0
      %v1627 = vadd.f32 0.0, %v1626
      %v1628 = vpop.f32.mrf.mxu0
      %1629 = vmatprep.mubr.bf16.mxu0 0
      %1630 = vmatmul.mubr.bf16.gmra.mxu0 %v1568
      %v1631 = vpop.f32.mrf.mxu0
      %v1632 = vadd.f32 0.0, %v1631
      %v1633 = vpop.f32.mrf.mxu0
      %v1634 = vpop.f32.mrf.mxu0
      %v1635 = vadd.f32 0.0, %v1634
      %v1636 = vpop.f32.mrf.mxu0
      %1637 = vdwg.mxu0
      %v1638 = vadd.f32 %v1536, %v1608
      %v1639 = vadd.f32 %v1537, %v1611
      %v1640 = vadd.f32 %v1538, %v1616
      %v1641 = vadd.f32 %v1539, %v1619
      %v1642 = vadd.f32 %v1540, %v1624
      %v1643 = vadd.f32 %v1541, %v1627
      %v1644 = vadd.f32 %v1542, %v1632
      %v1645 = vadd.f32 %v1543, %v1635
      %v1646 = vmax.f32 %v1638, 0.0
      %v1647 = vmax.f32 %v1639, 0.0
      %v1648 = vmax.f32 %v1640, 0.0
      %v1649 = vmax.f32 %v1641, 0.0
      %v1650 = vmax.f32 %v1642, 0.0
      %v1651 = vmax.f32 %v1643, 0.0
      %v1652 = vmax.f32 %v1644, 0.0
      %v1653 = vmax.f32 %v1645, 0.0
      %s1654 = scalar_lea.vmem [#allocation3], 16
      %1655 = vst.msk [vmem:[%s1654 + $0x1] sm:$0xff] %vm578, %v1646
      %1656 = vst.msk [vmem:[%s1654 + $0x11] sm:$0xff] %vm578, %v1647
      %1657 = vst.msk [vmem:[%s1654 + $0x21] sm:$0xff] %vm578, %v1648
      %1658 = vst.msk [vmem:[%s1654 + $0x31] sm:$0xff] %vm578, %v1649
      %1659 = vst.msk [vmem:[%s1654 + $0x41] sm:$0xff] %vm578, %v1650
      %1660 = vst.msk [vmem:[%s1654 + $0x51] sm:$0xff] %vm578, %v1651
      %1661 = vst.msk [vmem:[%s1654 + $0x61] sm:$0xff] %vm578, %v1652
      %1662 = vst.msk [vmem:[%s1654 + $0x71] sm:$0xff] %vm578, %v1653
      %v1663 = vld [vmem:[%s4] sm:$0x1]
      %v1665 = vlaneseq
      %v1666 = vshrl.u32 %v1665, 7
      %v1667 = vsub.s32 0, %v1666
      %v1668 = vrot.slane %v1663, %v1667
      %v1670 = vld [vmem:[#allocation3] sm:$0xff]
      %v1671 = vld [vmem:[#allocation3 + $0x10] sm:$0xff]
      %v1672 = vld [vmem:[#allocation3 + $0x20] sm:$0xff]
      %v1673 = vld [vmem:[#allocation3 + $0x30] sm:$0xff]
      %v1674 = vld [vmem:[#allocation3 + $0x40] sm:$0xff]
      %v1675 = vld [vmem:[#allocation3 + $0x50] sm:$0xff]
      %v1676 = vld [vmem:[#allocation3 + $0x60] sm:$0xff]
      %v1677 = vld [vmem:[#allocation3 + $0x70] sm:$0xff]
      %v1678 = vpack.c.bf16 %v1671, %v1670
      %v1679 = vpack.c.bf16 %v1673, %v1672
      %v1680 = vpack.c.bf16 %v1675, %v1674
      %v1681 = vpack.c.bf16 %v1677, %v1676
      %v1682 = vld [vmem:[%s3] sm:$0xf]
      %v1683 = vld [vmem:[%s3 + $0x4] sm:$0xf]
      %v1684 = vld [vmem:[%s3 + $0x8] sm:$0xf]
      %v1685 = vld [vmem:[%s3 + $0xc] sm:$0xf]
      %v1690 = vunpack.c.l.b16 %v1682
      %v1691 = vunpack.c.l.b16 %v1683
      %v1692 = vunpack.c.l.b16 %v1684
      %v1693 = vunpack.c.l.b16 %v1685
      %v1694 = vpack.c.b16 %v1691, %v1690
      %v1695 = vpack.c.b16 %v1693, %v1692
      %v1699 = vsel %vm578, %v1678, 0
      %v1702 = vsel %vm578, %v1679, 0
      %v1705 = vsel %vm578, %v1680, 0
      %v1708 = vsel %vm578, %v1681, 0
      %1710 = vmatprep.subr.bf16.mxu0 0
      %1711 = vmatpush1.bf16.msra.mxu0 0
      %1712 = vmatprep.subr.bf16.mxu0 0
      %1713 = vmatpush1.bf16.msra.mxu0 0
      %1714 = vmatprep.subr.bf16.mxu0 0
      %1715 = vmatpush1.bf16.msra.mxu0 0
      %1716 = vmatprep.subr.bf16.mxu0 0
      %1717 = vmatpush1.bf16.msra.mxu0 0
      %1718 = vmatprep.subr.bf16.mxu0 0
      %1719 = vmatpush1.bf16.msra.mxu0 0
      %1720 = vmatprep.subr.bf16.mxu0 0
      %1721 = vmatpush1.bf16.msra.mxu0 0
      %1722 = vmatprep.subr.bf16.mxu0 0
      %1723 = vmatpush1.bf16.msra.mxu0 %v1695
      %1724 = vmatprep.subr.bf16.mxu0 0
      %1725 = vmatpush1.bf16.msra.mxu0 %v1694
      %1726 = vmatprep.subr.bf16.mxu0 0
      %1727 = vmatpush2.bf16.msra.mxu0 0
      %1728 = vmatprep.subr.bf16.mxu0 0
      %1729 = vmatpush2.bf16.msra.mxu0 0
      %1730 = vmatprep.subr.bf16.mxu0 0
      %1731 = vmatpush2.bf16.msra.mxu0 0
      %1732 = vmatprep.subr.bf16.mxu0 0
      %1733 = vmatpush2.bf16.msra.mxu0 0
      %1734 = vmatprep.subr.bf16.mxu0 0
      %1735 = vmatpush2.bf16.msra.mxu0 0
      %1736 = vmatprep.subr.bf16.mxu0 0
      %1737 = vmatpush2.bf16.msra.mxu0 0
      %1738 = vmatprep.subr.bf16.mxu0 0
      %1739 = vmatpush2.bf16.msra.mxu0 0
      %1740 = vmatprep.subr.bf16.mxu0 0
      %1741 = vmatpush2.bf16.msra.mxu0 0
      %1742 = vmatprep.mubr.bf16.mxu0 0
      %1743 = vmatmul.mubr.bf16.gmra.mxu0 %v1699
      %v1744 = vpop.f32.mrf.mxu0
      %v1745 = vadd.f32 0.0, %v1744
      %v1746 = vpop.f32.mrf.mxu0
      %v1747 = vpop.f32.mrf.mxu0
      %v1748 = vadd.f32 0.0, %v1747
      %v1749 = vpop.f32.mrf.mxu0
      %1750 = vmatprep.mubr.bf16.mxu0 0
      %1751 = vmatmul.mubr.bf16.gmra.mxu0 %v1702
      %v1752 = vpop.f32.mrf.mxu0
      %v1753 = vadd.f32 0.0, %v1752
      %v1754 = vpop.f32.mrf.mxu0
      %v1755 = vpop.f32.mrf.mxu0
      %v1756 = vadd.f32 0.0, %v1755
      %v1757 = vpop.f32.mrf.mxu0
      %1758 = vmatprep.mubr.bf16.mxu0 0
      %1759 = vmatmul.mubr.bf16.gmra.mxu0 %v1705
      %v1760 = vpop.f32.mrf.mxu0
      %v1761 = vadd.f32 0.0, %v1760
      %v1762 = vpop.f32.mrf.mxu0
      %v1763 = vpop.f32.mrf.mxu0
      %v1764 = vadd.f32 0.0, %v1763
      %v1765 = vpop.f32.mrf.mxu0
      %1766 = vmatprep.mubr.bf16.mxu0 0
      %1767 = vmatmul.mubr.bf16.gmra.mxu0 %v1708
      %v1768 = vpop.f32.mrf.mxu0
      %v1769 = vadd.f32 0.0, %v1768
      %v1770 = vpop.f32.mrf.mxu0
      %v1771 = vpop.f32.mrf.mxu0
      %v1772 = vadd.f32 0.0, %v1771
      %v1773 = vpop.f32.mrf.mxu0
      %1774 = vdwg.mxu0
      %v1775 = vadd.f32 %v1668, %v1745
      %v1776 = vadd.f32 %v1668, %v1748
      %v1777 = vadd.f32 %v1668, %v1753
      %v1778 = vadd.f32 %v1668, %v1756
      %v1779 = vadd.f32 %v1668, %v1761
      %v1780 = vadd.f32 %v1668, %v1764
      %v1781 = vadd.f32 %v1668, %v1769
      %v1782 = vadd.f32 %v1668, %v1772
      %v1783 = vld [vmem:[#allocation3 + $0x1] sm:$0xff]
      %v1784 = vld [vmem:[#allocation3 + $0x11] sm:$0xff]
      %v1785 = vld [vmem:[#allocation3 + $0x21] sm:$0xff]
      %v1786 = vld [vmem:[#allocation3 + $0x31] sm:$0xff]
      %v1787 = vld [vmem:[#allocation3 + $0x41] sm:$0xff]
      %v1788 = vld [vmem:[#allocation3 + $0x51] sm:$0xff]
      %v1789 = vld [vmem:[#allocation3 + $0x61] sm:$0xff]
      %v1790 = vld [vmem:[#allocation3 + $0x71] sm:$0xff]
      %v1791 = vpack.c.bf16 %v1784, %v1783
      %v1792 = vpack.c.bf16 %v1786, %v1785
      %v1793 = vpack.c.bf16 %v1788, %v1787
      %v1794 = vpack.c.bf16 %v1790, %v1789
      %s1795 = scalar_lea.vmem %s3, 16
      %v1796 = vld [vmem:[%s1795] sm:$0xf]
      %v1797 = vld [vmem:[%s1795 + $0x4] sm:$0xf]
      %v1798 = vld [vmem:[%s1795 + $0x8] sm:$0xf]
      %v1799 = vld [vmem:[%s1795 + $0xc] sm:$0xf]
      %v1804 = vunpack.c.l.b16 %v1796
      %v1805 = vunpack.c.l.b16 %v1797
      %v1806 = vunpack.c.l.b16 %v1798
      %v1807 = vunpack.c.l.b16 %v1799
      %v1808 = vpack.c.b16 %v1805, %v1804
      %v1809 = vpack.c.b16 %v1807, %v1806
      %v1813 = vsel %vm578, %v1791, 0
      %v1816 = vsel %vm578, %v1792, 0
      %v1819 = vsel %vm578, %v1793, 0
      %v1822 = vsel %vm578, %v1794, 0
      %1824 = vmatprep.subr.bf16.mxu0 0
      %1825 = vmatpush1.bf16.msra.mxu0 0
      %1826 = vmatprep.subr.bf16.mxu0 0
      %1827 = vmatpush1.bf16.msra.mxu0 0
      %1828 = vmatprep.subr.bf16.mxu0 0
      %1829 = vmatpush1.bf16.msra.mxu0 0
      %1830 = vmatprep.subr.bf16.mxu0 0
      %1831 = vmatpush1.bf16.msra.mxu0 0
      %1832 = vmatprep.subr.bf16.mxu0 0
      %1833 = vmatpush1.bf16.msra.mxu0 0
      %1834 = vmatprep.subr.bf16.mxu0 0
      %1835 = vmatpush1.bf16.msra.mxu0 0
      %1836 = vmatprep.subr.bf16.mxu0 0
      %1837 = vmatpush1.bf16.msra.mxu0 %v1809
      %1838 = vmatprep.subr.bf16.mxu0 0
      %1839 = vmatpush1.bf16.msra.mxu0 %v1808
      %1840 = vmatprep.subr.bf16.mxu0 0
      %1841 = vmatpush2.bf16.msra.mxu0 0
      %1842 = vmatprep.subr.bf16.mxu0 0
      %1843 = vmatpush2.bf16.msra.mxu0 0
      %1844 = vmatprep.subr.bf16.mxu0 0
      %1845 = vmatpush2.bf16.msra.mxu0 0
      %1846 = vmatprep.subr.bf16.mxu0 0
      %1847 = vmatpush2.bf16.msra.mxu0 0
      %1848 = vmatprep.subr.bf16.mxu0 0
      %1849 = vmatpush2.bf16.msra.mxu0 0
      %1850 = vmatprep.subr.bf16.mxu0 0
      %1851 = vmatpush2.bf16.msra.mxu0 0
      %1852 = vmatprep.subr.bf16.mxu0 0
      %1853 = vmatpush2.bf16.msra.mxu0 0
      %1854 = vmatprep.subr.bf16.mxu0 0
      %1855 = vmatpush2.bf16.msra.mxu0 0
      %1856 = vmatprep.mubr.bf16.mxu0 0
      %1857 = vmatmul.mubr.bf16.gmra.mxu0 %v1813
      %v1858 = vpop.f32.mrf.mxu0
      %v1859 = vadd.f32 0.0, %v1858
      %v1860 = vpop.f32.mrf.mxu0
      %v1861 = vpop.f32.mrf.mxu0
      %v1862 = vadd.f32 0.0, %v1861
      %v1863 = vpop.f32.mrf.mxu0
      %1864 = vmatprep.mubr.bf16.mxu0 0
      %1865 = vmatmul.mubr.bf16.gmra.mxu0 %v1816
      %v1866 = vpop.f32.mrf.mxu0
      %v1867 = vadd.f32 0.0, %v1866
      %v1868 = vpop.f32.mrf.mxu0
      %v1869 = vpop.f32.mrf.mxu0
      %v1870 = vadd.f32 0.0, %v1869
      %v1871 = vpop.f32.mrf.mxu0
      %1872 = vmatprep.mubr.bf16.mxu0 0
      %1873 = vmatmul.mubr.bf16.gmra.mxu0 %v1819
      %v1874 = vpop.f32.mrf.mxu0
      %v1875 = vadd.f32 0.0, %v1874
      %v1876 = vpop.f32.mrf.mxu0
      %v1877 = vpop.f32.mrf.mxu0
      %v1878 = vadd.f32 0.0, %v1877
      %v1879 = vpop.f32.mrf.mxu0
      %1880 = vmatprep.mubr.bf16.mxu0 0
      %1881 = vmatmul.mubr.bf16.gmra.mxu0 %v1822
      %v1882 = vpop.f32.mrf.mxu0
      %v1883 = vadd.f32 0.0, %v1882
      %v1884 = vpop.f32.mrf.mxu0
      %v1885 = vpop.f32.mrf.mxu0
      %v1886 = vadd.f32 0.0, %v1885
      %v1887 = vpop.f32.mrf.mxu0
      %1888 = vdwg.mxu0
      %v1889 = vadd.f32 %v1775, %v1859
      %v1890 = vadd.f32 %v1776, %v1862
      %v1891 = vadd.f32 %v1777, %v1867
      %v1892 = vadd.f32 %v1778, %v1870
      %v1893 = vadd.f32 %v1779, %v1875
      %v1894 = vadd.f32 %v1780, %v1878
      %v1895 = vadd.f32 %v1781, %v1883
      %v1896 = vadd.f32 %v1782, %v1886
      %v1897 = vld [vmem:[#allocation3 + $0x2] sm:$0xff]
      %v1898 = vld [vmem:[#allocation3 + $0x12] sm:$0xff]
      %v1899 = vld [vmem:[#allocation3 + $0x22] sm:$0xff]
      %v1900 = vld [vmem:[#allocation3 + $0x32] sm:$0xff]
      %v1901 = vld [vmem:[#allocation3 + $0x42] sm:$0xff]
      %v1902 = vld [vmem:[#allocation3 + $0x52] sm:$0xff]
      %v1903 = vld [vmem:[#allocation3 + $0x62] sm:$0xff]
      %v1904 = vld [vmem:[#allocation3 + $0x72] sm:$0xff]
      %v1905 = vpack.c.bf16 %v1898, %v1897
      %v1906 = vpack.c.bf16 %v1900, %v1899
      %v1907 = vpack.c.bf16 %v1902, %v1901
      %v1908 = vpack.c.bf16 %v1904, %v1903
      %s1909 = scalar_lea.vmem %s3, 32
      %v1910 = vld [vmem:[%s1909] sm:$0xf]
      %v1911 = vld [vmem:[%s1909 + $0x4] sm:$0xf]
      %v1912 = vld [vmem:[%s1909 + $0x8] sm:$0xf]
      %v1913 = vld [vmem:[%s1909 + $0xc] sm:$0xf]
      %v1918 = vunpack.c.l.b16 %v1910
      %v1919 = vunpack.c.l.b16 %v1911
      %v1920 = vunpack.c.l.b16 %v1912
      %v1921 = vunpack.c.l.b16 %v1913
      %v1922 = vpack.c.b16 %v1919, %v1918
      %v1923 = vpack.c.b16 %v1921, %v1920
      %v1927 = vsel %vm578, %v1905, 0
      %v1930 = vsel %vm578, %v1906, 0
      %v1933 = vsel %vm578, %v1907, 0
      %v1936 = vsel %vm578, %v1908, 0
      %1938 = vmatprep.subr.bf16.mxu0 0
      %1939 = vmatpush1.bf16.msra.mxu0 0
      %1940 = vmatprep.subr.bf16.mxu0 0
      %1941 = vmatpush1.bf16.msra.mxu0 0
      %1942 = vmatprep.subr.bf16.mxu0 0
      %1943 = vmatpush1.bf16.msra.mxu0 0
      %1944 = vmatprep.subr.bf16.mxu0 0
      %1945 = vmatpush1.bf16.msra.mxu0 0
      %1946 = vmatprep.subr.bf16.mxu0 0
      %1947 = vmatpush1.bf16.msra.mxu0 0
      %1948 = vmatprep.subr.bf16.mxu0 0
      %1949 = vmatpush1.bf16.msra.mxu0 0
      %1950 = vmatprep.subr.bf16.mxu0 0
      %1951 = vmatpush1.bf16.msra.mxu0 %v1923
      %1952 = vmatprep.subr.bf16.mxu0 0
      %1953 = vmatpush1.bf16.msra.mxu0 %v1922
      %1954 = vmatprep.subr.bf16.mxu0 0
      %1955 = vmatpush2.bf16.msra.mxu0 0
      %1956 = vmatprep.subr.bf16.mxu0 0
      %1957 = vmatpush2.bf16.msra.mxu0 0
      %1958 = vmatprep.subr.bf16.mxu0 0
      %1959 = vmatpush2.bf16.msra.mxu0 0
      %1960 = vmatprep.subr.bf16.mxu0 0
      %1961 = vmatpush2.bf16.msra.mxu0 0
      %1962 = vmatprep.subr.bf16.mxu0 0
      %1963 = vmatpush2.bf16.msra.mxu0 0
      %1964 = vmatprep.subr.bf16.mxu0 0
      %1965 = vmatpush2.bf16.msra.mxu0 0
      %1966 = vmatprep.subr.bf16.mxu0 0
      %1967 = vmatpush2.bf16.msra.mxu0 0
      %1968 = vmatprep.subr.bf16.mxu0 0
      %1969 = vmatpush2.bf16.msra.mxu0 0
      %1970 = vmatprep.mubr.bf16.mxu0 0
      %1971 = vmatmul.mubr.bf16.gmra.mxu0 %v1927
      %v1972 = vpop.f32.mrf.mxu0
      %v1973 = vadd.f32 0.0, %v1972
      %v1974 = vpop.f32.mrf.mxu0
      %v1975 = vpop.f32.mrf.mxu0
      %v1976 = vadd.f32 0.0, %v1975
      %v1977 = vpop.f32.mrf.mxu0
      %1978 = vmatprep.mubr.bf16.mxu0 0
      %1979 = vmatmul.mubr.bf16.gmra.mxu0 %v1930
      %v1980 = vpop.f32.mrf.mxu0
      %v1981 = vadd.f32 0.0, %v1980
      %v1982 = vpop.f32.mrf.mxu0
      %v1983 = vpop.f32.mrf.mxu0
      %v1984 = vadd.f32 0.0, %v1983
      %v1985 = vpop.f32.mrf.mxu0
      %1986 = vmatprep.mubr.bf16.mxu0 0
      %1987 = vmatmul.mubr.bf16.gmra.mxu0 %v1933
      %v1988 = vpop.f32.mrf.mxu0
      %v1989 = vadd.f32 0.0, %v1988
      %v1990 = vpop.f32.mrf.mxu0
      %v1991 = vpop.f32.mrf.mxu0
      %v1992 = vadd.f32 0.0, %v1991
      %v1993 = vpop.f32.mrf.mxu0
      %1994 = vmatprep.mubr.bf16.mxu0 0
      %1995 = vmatmul.mubr.bf16.gmra.mxu0 %v1936
      %v1996 = vpop.f32.mrf.mxu0
      %v1997 = vadd.f32 0.0, %v1996
      %v1998 = vpop.f32.mrf.mxu0
      %v1999 = vpop.f32.mrf.mxu0
      %v2000 = vadd.f32 0.0, %v1999
      %v2001 = vpop.f32.mrf.mxu0
      %2002 = vdwg.mxu0
      %v2003 = vadd.f32 %v1889, %v1973
      %v2004 = vadd.f32 %v1890, %v1976
      %v2005 = vadd.f32 %v1891, %v1981
      %v2006 = vadd.f32 %v1892, %v1984
      %v2007 = vadd.f32 %v1893, %v1989
      %v2008 = vadd.f32 %v1894, %v1992
      %v2009 = vadd.f32 %v1895, %v1997
      %v2010 = vadd.f32 %v1896, %v2000
      %v2011 = vld [vmem:[%s1654] sm:$0xff]
      %v2012 = vld [vmem:[%s1654 + $0x10] sm:$0xff]
      %v2013 = vld [vmem:[%s1654 + $0x20] sm:$0xff]
      %v2014 = vld [vmem:[%s1654 + $0x30] sm:$0xff]
      %v2015 = vld [vmem:[%s1654 + $0x40] sm:$0xff]
      %v2016 = vld [vmem:[%s1654 + $0x50] sm:$0xff]
      %v2017 = vld [vmem:[%s1654 + $0x60] sm:$0xff]
      %v2018 = vld [vmem:[%s1654 + $0x70] sm:$0xff]
      %v2019 = vpack.c.bf16 %v2012, %v2011
      %v2020 = vpack.c.bf16 %v2014, %v2013
      %v2021 = vpack.c.bf16 %v2016, %v2015
      %v2022 = vpack.c.bf16 %v2018, %v2017
      %s2023 = scalar_lea.vmem %s3, 48
      %v2024 = vld [vmem:[%s2023] sm:$0xf]
      %v2025 = vld [vmem:[%s2023 + $0x4] sm:$0xf]
      %v2026 = vld [vmem:[%s2023 + $0x8] sm:$0xf]
      %v2027 = vld [vmem:[%s2023 + $0xc] sm:$0xf]
      %v2032 = vunpack.c.l.b16 %v2024
      %v2033 = vunpack.c.l.b16 %v2025
      %v2034 = vunpack.c.l.b16 %v2026
      %v2035 = vunpack.c.l.b16 %v2027
      %v2036 = vpack.c.b16 %v2033, %v2032
      %v2037 = vpack.c.b16 %v2035, %v2034
      %v2041 = vsel %vm578, %v2019, 0
      %v2044 = vsel %vm578, %v2020, 0
      %v2047 = vsel %vm578, %v2021, 0
      %v2050 = vsel %vm578, %v2022, 0
      %2052 = vmatprep.subr.bf16.mxu0 0
      %2053 = vmatpush1.bf16.msra.mxu0 0
      %2054 = vmatprep.subr.bf16.mxu0 0
      %2055 = vmatpush1.bf16.msra.mxu0 0
      %2056 = vmatprep.subr.bf16.mxu0 0
      %2057 = vmatpush1.bf16.msra.mxu0 0
      %2058 = vmatprep.subr.bf16.mxu0 0
      %2059 = vmatpush1.bf16.msra.mxu0 0
      %2060 = vmatprep.subr.bf16.mxu0 0
      %2061 = vmatpush1.bf16.msra.mxu0 0
      %2062 = vmatprep.subr.bf16.mxu0 0
      %2063 = vmatpush1.bf16.msra.mxu0 0
      %2064 = vmatprep.subr.bf16.mxu0 0
      %2065 = vmatpush1.bf16.msra.mxu0 %v2037
      %2066 = vmatprep.subr.bf16.mxu0 0
      %2067 = vmatpush1.bf16.msra.mxu0 %v2036
      %2068 = vmatprep.subr.bf16.mxu0 0
      %2069 = vmatpush2.bf16.msra.mxu0 0
      %2070 = vmatprep.subr.bf16.mxu0 0
      %2071 = vmatpush2.bf16.msra.mxu0 0
      %2072 = vmatprep.subr.bf16.mxu0 0
      %2073 = vmatpush2.bf16.msra.mxu0 0
      %2074 = vmatprep.subr.bf16.mxu0 0
      %2075 = vmatpush2.bf16.msra.mxu0 0
      %2076 = vmatprep.subr.bf16.mxu0 0
      %2077 = vmatpush2.bf16.msra.mxu0 0
      %2078 = vmatprep.subr.bf16.mxu0 0
      %2079 = vmatpush2.bf16.msra.mxu0 0
      %2080 = vmatprep.subr.bf16.mxu0 0
      %2081 = vmatpush2.bf16.msra.mxu0 0
      %2082 = vmatprep.subr.bf16.mxu0 0
      %2083 = vmatpush2.bf16.msra.mxu0 0
      %2084 = vmatprep.mubr.bf16.mxu0 0
      %2085 = vmatmul.mubr.bf16.gmra.mxu0 %v2041
      %v2086 = vpop.f32.mrf.mxu0
      %v2087 = vadd.f32 0.0, %v2086
      %v2088 = vpop.f32.mrf.mxu0
      %v2089 = vpop.f32.mrf.mxu0
      %v2090 = vadd.f32 0.0, %v2089
      %v2091 = vpop.f32.mrf.mxu0
      %2092 = vmatprep.mubr.bf16.mxu0 0
      %2093 = vmatmul.mubr.bf16.gmra.mxu0 %v2044
      %v2094 = vpop.f32.mrf.mxu0
      %v2095 = vadd.f32 0.0, %v2094
      %v2096 = vpop.f32.mrf.mxu0
      %v2097 = vpop.f32.mrf.mxu0
      %v2098 = vadd.f32 0.0, %v2097
      %v2099 = vpop.f32.mrf.mxu0
      %2100 = vmatprep.mubr.bf16.mxu0 0
      %2101 = vmatmul.mubr.bf16.gmra.mxu0 %v2047
      %v2102 = vpop.f32.mrf.mxu0
      %v2103 = vadd.f32 0.0, %v2102
      %v2104 = vpop.f32.mrf.mxu0
      %v2105 = vpop.f32.mrf.mxu0
      %v2106 = vadd.f32 0.0, %v2105
      %v2107 = vpop.f32.mrf.mxu0
      %2108 = vmatprep.mubr.bf16.mxu0 0
      %2109 = vmatmul.mubr.bf16.gmra.mxu0 %v2050
      %v2110 = vpop.f32.mrf.mxu0
      %v2111 = vadd.f32 0.0, %v2110
      %v2112 = vpop.f32.mrf.mxu0
      %v2113 = vpop.f32.mrf.mxu0
      %v2114 = vadd.f32 0.0, %v2113
      %v2115 = vpop.f32.mrf.mxu0
      %2116 = vdwg.mxu0
      %v2117 = vadd.f32 %v2003, %v2087
      %v2118 = vadd.f32 %v2004, %v2090
      %v2119 = vadd.f32 %v2005, %v2095
      %v2120 = vadd.f32 %v2006, %v2098
      %v2121 = vadd.f32 %v2007, %v2103
      %v2122 = vadd.f32 %v2008, %v2106
      %v2123 = vadd.f32 %v2009, %v2111
      %v2124 = vadd.f32 %v2010, %v2114
      %v2125 = vld [vmem:[%s1654 + $0x1] sm:$0xff]
      %v2126 = vld [vmem:[%s1654 + $0x11] sm:$0xff]
      %v2127 = vld [vmem:[%s1654 + $0x21] sm:$0xff]
      %v2128 = vld [vmem:[%s1654 + $0x31] sm:$0xff]
      %v2129 = vld [vmem:[%s1654 + $0x41] sm:$0xff]
      %v2130 = vld [vmem:[%s1654 + $0x51] sm:$0xff]
      %v2131 = vld [vmem:[%s1654 + $0x61] sm:$0xff]
      %v2132 = vld [vmem:[%s1654 + $0x71] sm:$0xff]
      %v2133 = vpack.c.bf16 %v2126, %v2125
      %v2134 = vpack.c.bf16 %v2128, %v2127
      %v2135 = vpack.c.bf16 %v2130, %v2129
      %v2136 = vpack.c.bf16 %v2132, %v2131
      %s2137 = scalar_lea.vmem %s3, 64
      %v2138 = vld [vmem:[%s2137] sm:$0xf]
      %v2139 = vld [vmem:[%s2137 + $0x4] sm:$0xf]
      %v2140 = vld [vmem:[%s2137 + $0x8] sm:$0xf]
      %v2141 = vld [vmem:[%s2137 + $0xc] sm:$0xf]
      %v2146 = vunpack.c.l.b16 %v2138
      %v2147 = vunpack.c.l.b16 %v2139
      %v2148 = vunpack.c.l.b16 %v2140
      %v2149 = vunpack.c.l.b16 %v2141
      %v2150 = vpack.c.b16 %v2147, %v2146
      %v2151 = vpack.c.b16 %v2149, %v2148
      %v2155 = vsel %vm578, %v2133, 0
      %v2158 = vsel %vm578, %v2134, 0
      %v2161 = vsel %vm578, %v2135, 0
      %v2164 = vsel %vm578, %v2136, 0
      %2166 = vmatprep.subr.bf16.mxu0 0
      %2167 = vmatpush1.bf16.msra.mxu0 0
      %2168 = vmatprep.subr.bf16.mxu0 0
      %2169 = vmatpush1.bf16.msra.mxu0 0
      %2170 = vmatprep.subr.bf16.mxu0 0
      %2171 = vmatpush1.bf16.msra.mxu0 0
      %2172 = vmatprep.subr.bf16.mxu0 0
      %2173 = vmatpush1.bf16.msra.mxu0 0
      %2174 = vmatprep.subr.bf16.mxu0 0
      %2175 = vmatpush1.bf16.msra.mxu0 0
      %2176 = vmatprep.subr.bf16.mxu0 0
      %2177 = vmatpush1.bf16.msra.mxu0 0
      %2178 = vmatprep.subr.bf16.mxu0 0
      %2179 = vmatpush1.bf16.msra.mxu0 %v2151
      %2180 = vmatprep.subr.bf16.mxu0 0
      %2181 = vmatpush1.bf16.msra.mxu0 %v2150
      %2182 = vmatprep.subr.bf16.mxu0 0
      %2183 = vmatpush2.bf16.msra.mxu0 0
      %2184 = vmatprep.subr.bf16.mxu0 0
      %2185 = vmatpush2.bf16.msra.mxu0 0
      %2186 = vmatprep.subr.bf16.mxu0 0
      %2187 = vmatpush2.bf16.msra.mxu0 0
      %2188 = vmatprep.subr.bf16.mxu0 0
      %2189 = vmatpush2.bf16.msra.mxu0 0
      %2190 = vmatprep.subr.bf16.mxu0 0
      %2191 = vmatpush2.bf16.msra.mxu0 0
      %2192 = vmatprep.subr.bf16.mxu0 0
      %2193 = vmatpush2.bf16.msra.mxu0 0
      %2194 = vmatprep.subr.bf16.mxu0 0
      %2195 = vmatpush2.bf16.msra.mxu0 0
      %2196 = vmatprep.subr.bf16.mxu0 0
      %2197 = vmatpush2.bf16.msra.mxu0 0
      %2198 = vmatprep.mubr.bf16.mxu0 0
      %2199 = vmatmul.mubr.bf16.gmra.mxu0 %v2155
      %v2200 = vpop.f32.mrf.mxu0
      %v2201 = vadd.f32 0.0, %v2200
      %v2202 = vpop.f32.mrf.mxu0
      %v2203 = vpop.f32.mrf.mxu0
      %v2204 = vadd.f32 0.0, %v2203
      %v2205 = vpop.f32.mrf.mxu0
      %2206 = vmatprep.mubr.bf16.mxu0 0
      %2207 = vmatmul.mubr.bf16.gmra.mxu0 %v2158
      %v2208 = vpop.f32.mrf.mxu0
      %v2209 = vadd.f32 0.0, %v2208
      %v2210 = vpop.f32.mrf.mxu0
      %v2211 = vpop.f32.mrf.mxu0
      %v2212 = vadd.f32 0.0, %v2211
      %v2213 = vpop.f32.mrf.mxu0
      %2214 = vmatprep.mubr.bf16.mxu0 0
      %2215 = vmatmul.mubr.bf16.gmra.mxu0 %v2161
      %v2216 = vpop.f32.mrf.mxu0
      %v2217 = vadd.f32 0.0, %v2216
      %v2218 = vpop.f32.mrf.mxu0
      %v2219 = vpop.f32.mrf.mxu0
      %v2220 = vadd.f32 0.0, %v2219
      %v2221 = vpop.f32.mrf.mxu0
      %2222 = vmatprep.mubr.bf16.mxu0 0
      %2223 = vmatmul.mubr.bf16.gmra.mxu0 %v2164
      %v2224 = vpop.f32.mrf.mxu0
      %v2225 = vadd.f32 0.0, %v2224
      %v2226 = vpop.f32.mrf.mxu0
      %v2227 = vpop.f32.mrf.mxu0
      %v2228 = vadd.f32 0.0, %v2227
      %v2229 = vpop.f32.mrf.mxu0
      %2230 = vdwg.mxu0
      %v2231 = vadd.f32 %v2117, %v2201
      %v2232 = vadd.f32 %v2118, %v2204
      %v2233 = vadd.f32 %v2119, %v2209
      %v2234 = vadd.f32 %v2120, %v2212
      %v2235 = vadd.f32 %v2121, %v2217
      %v2236 = vadd.f32 %v2122, %v2220
      %v2237 = vadd.f32 %v2123, %v2225
      %v2238 = vadd.f32 %v2124, %v2228
      %v2239 = vld [vmem:[%s1654 + $0x2] sm:$0xff]
      %v2240 = vld [vmem:[%s1654 + $0x12] sm:$0xff]
      %v2241 = vld [vmem:[%s1654 + $0x22] sm:$0xff]
      %v2242 = vld [vmem:[%s1654 + $0x32] sm:$0xff]
      %v2243 = vld [vmem:[%s1654 + $0x42] sm:$0xff]
      %v2244 = vld [vmem:[%s1654 + $0x52] sm:$0xff]
      %v2245 = vld [vmem:[%s1654 + $0x62] sm:$0xff]
      %v2246 = vld [vmem:[%s1654 + $0x72] sm:$0xff]
      %v2247 = vpack.c.bf16 %v2240, %v2239
      %v2248 = vpack.c.bf16 %v2242, %v2241
      %v2249 = vpack.c.bf16 %v2244, %v2243
      %v2250 = vpack.c.bf16 %v2246, %v2245
      %s2251 = scalar_lea.vmem %s3, 80
      %v2252 = vld [vmem:[%s2251] sm:$0xf]
      %v2253 = vld [vmem:[%s2251 + $0x4] sm:$0xf]
      %v2254 = vld [vmem:[%s2251 + $0x8] sm:$0xf]
      %v2255 = vld [vmem:[%s2251 + $0xc] sm:$0xf]
      %v2260 = vunpack.c.l.b16 %v2252
      %v2261 = vunpack.c.l.b16 %v2253
      %v2262 = vunpack.c.l.b16 %v2254
      %v2263 = vunpack.c.l.b16 %v2255
      %v2264 = vpack.c.b16 %v2261, %v2260
      %v2265 = vpack.c.b16 %v2263, %v2262
      %v2269 = vsel %vm578, %v2247, 0
      %v2272 = vsel %vm578, %v2248, 0
      %v2275 = vsel %vm578, %v2249, 0
      %v2278 = vsel %vm578, %v2250, 0
      %2280 = vmatprep.subr.bf16.mxu0 0
      %2281 = vmatpush1.bf16.msra.mxu0 0
      %2282 = vmatprep.subr.bf16.mxu0 0
      %2283 = vmatpush1.bf16.msra.mxu0 0
      %2284 = vmatprep.subr.bf16.mxu0 0
      %2285 = vmatpush1.bf16.msra.mxu0 0
      %2286 = vmatprep.subr.bf16.mxu0 0
      %2287 = vmatpush1.bf16.msra.mxu0 0
      %2288 = vmatprep.subr.bf16.mxu0 0
      %2289 = vmatpush1.bf16.msra.mxu0 0
      %2290 = vmatprep.subr.bf16.mxu0 0
      %2291 = vmatpush1.bf16.msra.mxu0 0
      %2292 = vmatprep.subr.bf16.mxu0 0
      %2293 = vmatpush1.bf16.msra.mxu0 %v2265
      %2294 = vmatprep.subr.bf16.mxu0 0
      %2295 = vmatpush1.bf16.msra.mxu0 %v2264
      %2296 = vmatprep.subr.bf16.mxu0 0
      %2297 = vmatpush2.bf16.msra.mxu0 0
      %2298 = vmatprep.subr.bf16.mxu0 0
      %2299 = vmatpush2.bf16.msra.mxu0 0
      %2300 = vmatprep.subr.bf16.mxu0 0
      %2301 = vmatpush2.bf16.msra.mxu0 0
      %2302 = vmatprep.subr.bf16.mxu0 0
      %2303 = vmatpush2.bf16.msra.mxu0 0
      %2304 = vmatprep.subr.bf16.mxu0 0
      %2305 = vmatpush2.bf16.msra.mxu0 0
      %2306 = vmatprep.subr.bf16.mxu0 0
      %2307 = vmatpush2.bf16.msra.mxu0 0
      %2308 = vmatprep.subr.bf16.mxu0 0
      %2309 = vmatpush2.bf16.msra.mxu0 0
      %2310 = vmatprep.subr.bf16.mxu0 0
      %2311 = vmatpush2.bf16.msra.mxu0 0
      %2312 = vmatprep.mubr.bf16.mxu0 0
      %2313 = vmatmul.mubr.bf16.gmra.mxu0 %v2269
      %v2314 = vpop.f32.mrf.mxu0
      %v2315 = vadd.f32 0.0, %v2314
      %v2316 = vpop.f32.mrf.mxu0
      %v2317 = vpop.f32.mrf.mxu0
      %v2318 = vadd.f32 0.0, %v2317
      %v2319 = vpop.f32.mrf.mxu0
      %2320 = vmatprep.mubr.bf16.mxu0 0
      %2321 = vmatmul.mubr.bf16.gmra.mxu0 %v2272
      %v2322 = vpop.f32.mrf.mxu0
      %v2323 = vadd.f32 0.0, %v2322
      %v2324 = vpop.f32.mrf.mxu0
      %v2325 = vpop.f32.mrf.mxu0
      %v2326 = vadd.f32 0.0, %v2325
      %v2327 = vpop.f32.mrf.mxu0
      %2328 = vmatprep.mubr.bf16.mxu0 0
      %2329 = vmatmul.mubr.bf16.gmra.mxu0 %v2275
      %v2330 = vpop.f32.mrf.mxu0
      %v2331 = vadd.f32 0.0, %v2330
      %v2332 = vpop.f32.mrf.mxu0
      %v2333 = vpop.f32.mrf.mxu0
      %v2334 = vadd.f32 0.0, %v2333
      %v2335 = vpop.f32.mrf.mxu0
      %2336 = vmatprep.mubr.bf16.mxu0 0
      %2337 = vmatmul.mubr.bf16.gmra.mxu0 %v2278
      %v2338 = vpop.f32.mrf.mxu0
      %v2339 = vadd.f32 0.0, %v2338
      %v2340 = vpop.f32.mrf.mxu0
      %v2341 = vpop.f32.mrf.mxu0
      %v2342 = vadd.f32 0.0, %v2341
      %v2343 = vpop.f32.mrf.mxu0
      %2344 = vdwg.mxu0
      %v2345 = vadd.f32 %v2231, %v2315
      %v2346 = vadd.f32 %v2232, %v2318
      %v2347 = vadd.f32 %v2233, %v2323
      %v2348 = vadd.f32 %v2234, %v2326
      %v2349 = vadd.f32 %v2235, %v2331
      %v2350 = vadd.f32 %v2236, %v2334
      %v2351 = vadd.f32 %v2237, %v2339
      %v2352 = vadd.f32 %v2238, %v2342
      %s2353 = scalar_lea.vmem [#allocation3], 32
      %v2354 = vld [vmem:[%s2353] sm:$0xff]
      %v2355 = vld [vmem:[%s2353 + $0x10] sm:$0xff]
      %v2356 = vld [vmem:[%s2353 + $0x20] sm:$0xff]
      %v2357 = vld [vmem:[%s2353 + $0x30] sm:$0xff]
      %v2358 = vld [vmem:[%s2353 + $0x40] sm:$0xff]
      %v2359 = vld [vmem:[%s2353 + $0x50] sm:$0xff]
      %v2360 = vld [vmem:[%s2353 + $0x60] sm:$0xff]
      %v2361 = vld [vmem:[%s2353 + $0x70] sm:$0xff]
      %v2362 = vpack.c.bf16 %v2355, %v2354
      %v2363 = vpack.c.bf16 %v2357, %v2356
      %v2364 = vpack.c.bf16 %v2359, %v2358
      %v2365 = vpack.c.bf16 %v2361, %v2360
      %s2366 = scalar_lea.vmem %s3, 96
      %v2367 = vld [vmem:[%s2366] sm:$0xf]
      %v2368 = vld [vmem:[%s2366 + $0x4] sm:$0xf]
      %v2369 = vld [vmem:[%s2366 + $0x8] sm:$0xf]
      %v2370 = vld [vmem:[%s2366 + $0xc] sm:$0xf]
      %v2375 = vunpack.c.l.b16 %v2367
      %v2376 = vunpack.c.l.b16 %v2368
      %v2377 = vunpack.c.l.b16 %v2369
      %v2378 = vunpack.c.l.b16 %v2370
      %v2379 = vpack.c.b16 %v2376, %v2375
      %v2380 = vpack.c.b16 %v2378, %v2377
      %v2384 = vsel %vm578, %v2362, 0
      %v2387 = vsel %vm578, %v2363, 0
      %v2390 = vsel %vm578, %v2364, 0
      %v2393 = vsel %vm578, %v2365, 0
      %2395 = vmatprep.subr.bf16.mxu0 0
      %2396 = vmatpush1.bf16.msra.mxu0 0
      %2397 = vmatprep.subr.bf16.mxu0 0
      %2398 = vmatpush1.bf16.msra.mxu0 0
      %2399 = vmatprep.subr.bf16.mxu0 0
      %2400 = vmatpush1.bf16.msra.mxu0 0
      %2401 = vmatprep.subr.bf16.mxu0 0
      %2402 = vmatpush1.bf16.msra.mxu0 0
      %2403 = vmatprep.subr.bf16.mxu0 0
      %2404 = vmatpush1.bf16.msra.mxu0 0
      %2405 = vmatprep.subr.bf16.mxu0 0
      %2406 = vmatpush1.bf16.msra.mxu0 0
      %2407 = vmatprep.subr.bf16.mxu0 0
      %2408 = vmatpush1.bf16.msra.mxu0 %v2380
      %2409 = vmatprep.subr.bf16.mxu0 0
      %2410 = vmatpush1.bf16.msra.mxu0 %v2379
      %2411 = vmatprep.subr.bf16.mxu0 0
      %2412 = vmatpush2.bf16.msra.mxu0 0
      %2413 = vmatprep.subr.bf16.mxu0 0
      %2414 = vmatpush2.bf16.msra.mxu0 0
      %2415 = vmatprep.subr.bf16.mxu0 0
      %2416 = vmatpush2.bf16.msra.mxu0 0
      %2417 = vmatprep.subr.bf16.mxu0 0
      %2418 = vmatpush2.bf16.msra.mxu0 0
      %2419 = vmatprep.subr.bf16.mxu0 0
      %2420 = vmatpush2.bf16.msra.mxu0 0
      %2421 = vmatprep.subr.bf16.mxu0 0
      %2422 = vmatpush2.bf16.msra.mxu0 0
      %2423 = vmatprep.subr.bf16.mxu0 0
      %2424 = vmatpush2.bf16.msra.mxu0 0
      %2425 = vmatprep.subr.bf16.mxu0 0
      %2426 = vmatpush2.bf16.msra.mxu0 0
      %2427 = vmatprep.mubr.bf16.mxu0 0
      %2428 = vmatmul.mubr.bf16.gmra.mxu0 %v2384
      %v2429 = vpop.f32.mrf.mxu0
      %v2430 = vadd.f32 0.0, %v2429
      %v2431 = vpop.f32.mrf.mxu0
      %v2432 = vpop.f32.mrf.mxu0
      %v2433 = vadd.f32 0.0, %v2432
      %v2434 = vpop.f32.mrf.mxu0
      %2435 = vmatprep.mubr.bf16.mxu0 0
      %2436 = vmatmul.mubr.bf16.gmra.mxu0 %v2387
      %v2437 = vpop.f32.mrf.mxu0
      %v2438 = vadd.f32 0.0, %v2437
      %v2439 = vpop.f32.mrf.mxu0
      %v2440 = vpop.f32.mrf.mxu0
      %v2441 = vadd.f32 0.0, %v2440
      %v2442 = vpop.f32.mrf.mxu0
      %2443 = vmatprep.mubr.bf16.mxu0 0
      %2444 = vmatmul.mubr.bf16.gmra.mxu0 %v2390
      %v2445 = vpop.f32.mrf.mxu0
      %v2446 = vadd.f32 0.0, %v2445
      %v2447 = vpop.f32.mrf.mxu0
      %v2448 = vpop.f32.mrf.mxu0
      %v2449 = vadd.f32 0.0, %v2448
      %v2450 = vpop.f32.mrf.mxu0
      %2451 = vmatprep.mubr.bf16.mxu0 0
      %2452 = vmatmul.mubr.bf16.gmra.mxu0 %v2393
      %v2453 = vpop.f32.mrf.mxu0
      %v2454 = vadd.f32 0.0, %v2453
      %v2455 = vpop.f32.mrf.mxu0
      %v2456 = vpop.f32.mrf.mxu0
      %v2457 = vadd.f32 0.0, %v2456
      %v2458 = vpop.f32.mrf.mxu0
      %2459 = vdwg.mxu0
      %v2460 = vadd.f32 %v2345, %v2430
      %v2461 = vadd.f32 %v2346, %v2433
      %v2462 = vadd.f32 %v2347, %v2438
      %v2463 = vadd.f32 %v2348, %v2441
      %v2464 = vadd.f32 %v2349, %v2446
      %v2465 = vadd.f32 %v2350, %v2449
      %v2466 = vadd.f32 %v2351, %v2454
      %v2467 = vadd.f32 %v2352, %v2457
      %v2468 = vld [vmem:[%s2353 + $0x1] sm:$0xff]
      %v2469 = vld [vmem:[%s2353 + $0x11] sm:$0xff]
      %v2470 = vld [vmem:[%s2353 + $0x21] sm:$0xff]
      %v2471 = vld [vmem:[%s2353 + $0x31] sm:$0xff]
      %v2472 = vld [vmem:[%s2353 + $0x41] sm:$0xff]
      %v2473 = vld [vmem:[%s2353 + $0x51] sm:$0xff]
      %v2474 = vld [vmem:[%s2353 + $0x61] sm:$0xff]
      %v2475 = vld [vmem:[%s2353 + $0x71] sm:$0xff]
      %v2476 = vpack.c.bf16 %v2469, %v2468
      %v2477 = vpack.c.bf16 %v2471, %v2470
      %v2478 = vpack.c.bf16 %v2473, %v2472
      %v2479 = vpack.c.bf16 %v2475, %v2474
      %s2480 = scalar_lea.vmem %s3, 112
      %v2481 = vld [vmem:[%s2480] sm:$0xf]
      %v2482 = vld [vmem:[%s2480 + $0x4] sm:$0xf]
      %v2483 = vld [vmem:[%s2480 + $0x8] sm:$0xf]
      %v2484 = vld [vmem:[%s2480 + $0xc] sm:$0xf]
      %v2489 = vunpack.c.l.b16 %v2481
      %v2490 = vunpack.c.l.b16 %v2482
      %v2491 = vunpack.c.l.b16 %v2483
      %v2492 = vunpack.c.l.b16 %v2484
      %v2493 = vpack.c.b16 %v2490, %v2489
      %v2494 = vpack.c.b16 %v2492, %v2491
      %v2498 = vsel %vm578, %v2476, 0
      %v2501 = vsel %vm578, %v2477, 0
      %v2504 = vsel %vm578, %v2478, 0
      %v2507 = vsel %vm578, %v2479, 0
      %2509 = vmatprep.subr.bf16.mxu0 0
      %2510 = vmatpush1.bf16.msra.mxu0 0
      %2511 = vmatprep.subr.bf16.mxu0 0
      %2512 = vmatpush1.bf16.msra.mxu0 0
      %2513 = vmatprep.subr.bf16.mxu0 0
      %2514 = vmatpush1.bf16.msra.mxu0 0
      %2515 = vmatprep.subr.bf16.mxu0 0
      %2516 = vmatpush1.bf16.msra.mxu0 0
      %2517 = vmatprep.subr.bf16.mxu0 0
      %2518 = vmatpush1.bf16.msra.mxu0 0
      %2519 = vmatprep.subr.bf16.mxu0 0
      %2520 = vmatpush1.bf16.msra.mxu0 0
      %2521 = vmatprep.subr.bf16.mxu0 0
      %2522 = vmatpush1.bf16.msra.mxu0 %v2494
      %2523 = vmatprep.subr.bf16.mxu0 0
      %2524 = vmatpush1.bf16.msra.mxu0 %v2493
      %2525 = vmatprep.subr.bf16.mxu0 0
      %2526 = vmatpush2.bf16.msra.mxu0 0
      %2527 = vmatprep.subr.bf16.mxu0 0
      %2528 = vmatpush2.bf16.msra.mxu0 0
      %2529 = vmatprep.subr.bf16.mxu0 0
      %2530 = vmatpush2.bf16.msra.mxu0 0
      %2531 = vmatprep.subr.bf16.mxu0 0
      %2532 = vmatpush2.bf16.msra.mxu0 0
      %2533 = vmatprep.subr.bf16.mxu0 0
      %2534 = vmatpush2.bf16.msra.mxu0 0
      %2535 = vmatprep.subr.bf16.mxu0 0
      %2536 = vmatpush2.bf16.msra.mxu0 0
      %2537 = vmatprep.subr.bf16.mxu0 0
      %2538 = vmatpush2.bf16.msra.mxu0 0
      %2539 = vmatprep.subr.bf16.mxu0 0
      %2540 = vmatpush2.bf16.msra.mxu0 0
      %2541 = vmatprep.mubr.bf16.mxu0 0
      %2542 = vmatmul.mubr.bf16.gmra.mxu0 %v2498
      %v2543 = vpop.f32.mrf.mxu0
      %v2544 = vadd.f32 0.0, %v2543
      %v2545 = vpop.f32.mrf.mxu0
      %v2546 = vpop.f32.mrf.mxu0
      %v2547 = vadd.f32 0.0, %v2546
      %v2548 = vpop.f32.mrf.mxu0
      %2549 = vmatprep.mubr.bf16.mxu0 0
      %2550 = vmatmul.mubr.bf16.gmra.mxu0 %v2501
      %v2551 = vpop.f32.mrf.mxu0
      %v2552 = vadd.f32 0.0, %v2551
      %v2553 = vpop.f32.mrf.mxu0
      %v2554 = vpop.f32.mrf.mxu0
      %v2555 = vadd.f32 0.0, %v2554
      %v2556 = vpop.f32.mrf.mxu0
      %2557 = vmatprep.mubr.bf16.mxu0 0
      %2558 = vmatmul.mubr.bf16.gmra.mxu0 %v2504
      %v2559 = vpop.f32.mrf.mxu0
      %v2560 = vadd.f32 0.0, %v2559
      %v2561 = vpop.f32.mrf.mxu0
      %v2562 = vpop.f32.mrf.mxu0
      %v2563 = vadd.f32 0.0, %v2562
      %v2564 = vpop.f32.mrf.mxu0
      %2565 = vmatprep.mubr.bf16.mxu0 0
      %2566 = vmatmul.mubr.bf16.gmra.mxu0 %v2507
      %v2567 = vpop.f32.mrf.mxu0
      %v2568 = vadd.f32 0.0, %v2567
      %v2569 = vpop.f32.mrf.mxu0
      %v2570 = vpop.f32.mrf.mxu0
      %v2571 = vadd.f32 0.0, %v2570
      %v2572 = vpop.f32.mrf.mxu0
      %2573 = vdwg.mxu0
      %v2574 = vadd.f32 %v2460, %v2544
      %v2575 = vadd.f32 %v2461, %v2547
      %v2576 = vadd.f32 %v2462, %v2552
      %v2577 = vadd.f32 %v2463, %v2555
      %v2578 = vadd.f32 %v2464, %v2560
      %v2579 = vadd.f32 %v2465, %v2563
      %v2580 = vadd.f32 %v2466, %v2568
      %v2581 = vadd.f32 %v2467, %v2571
      %v2582 = vld [vmem:[%s2353 + $0x2] sm:$0xff]
      %v2583 = vld [vmem:[%s2353 + $0x12] sm:$0xff]
      %v2584 = vld [vmem:[%s2353 + $0x22] sm:$0xff]
      %v2585 = vld [vmem:[%s2353 + $0x32] sm:$0xff]
      %v2586 = vld [vmem:[%s2353 + $0x42] sm:$0xff]
      %v2587 = vld [vmem:[%s2353 + $0x52] sm:$0xff]
      %v2588 = vld [vmem:[%s2353 + $0x62] sm:$0xff]
      %v2589 = vld [vmem:[%s2353 + $0x72] sm:$0xff]
      %v2590 = vpack.c.bf16 %v2583, %v2582
      %v2591 = vpack.c.bf16 %v2585, %v2584
      %v2592 = vpack.c.bf16 %v2587, %v2586
      %v2593 = vpack.c.bf16 %v2589, %v2588
      %s2594 = scalar_lea.vmem %s3, 128
      %v2595 = vld [vmem:[%s2594] sm:$0xf]
      %v2596 = vld [vmem:[%s2594 + $0x4] sm:$0xf]
      %v2597 = vld [vmem:[%s2594 + $0x8] sm:$0xf]
      %v2598 = vld [vmem:[%s2594 + $0xc] sm:$0xf]
      %v2603 = vunpack.c.l.b16 %v2595
      %v2604 = vunpack.c.l.b16 %v2596
      %v2605 = vunpack.c.l.b16 %v2597
      %v2606 = vunpack.c.l.b16 %v2598
      %v2607 = vpack.c.b16 %v2604, %v2603
      %v2608 = vpack.c.b16 %v2606, %v2605
      %v2612 = vsel %vm578, %v2590, 0
      %v2615 = vsel %vm578, %v2591, 0
      %v2618 = vsel %vm578, %v2592, 0
      %v2621 = vsel %vm578, %v2593, 0
      %2623 = vmatprep.subr.bf16.mxu0 0
      %2624 = vmatpush1.bf16.msra.mxu0 0
      %2625 = vmatprep.subr.bf16.mxu0 0
      %2626 = vmatpush1.bf16.msra.mxu0 0
      %2627 = vmatprep.subr.bf16.mxu0 0
      %2628 = vmatpush1.bf16.msra.mxu0 0
      %2629 = vmatprep.subr.bf16.mxu0 0
      %2630 = vmatpush1.bf16.msra.mxu0 0
      %2631 = vmatprep.subr.bf16.mxu0 0
      %2632 = vmatpush1.bf16.msra.mxu0 0
      %2633 = vmatprep.subr.bf16.mxu0 0
      %2634 = vmatpush1.bf16.msra.mxu0 0
      %2635 = vmatprep.subr.bf16.mxu0 0
      %2636 = vmatpush1.bf16.msra.mxu0 %v2608
      %2637 = vmatprep.subr.bf16.mxu0 0
      %2638 = vmatpush1.bf16.msra.mxu0 %v2607
      %2639 = vmatprep.subr.bf16.mxu0 0
      %2640 = vmatpush2.bf16.msra.mxu0 0
      %2641 = vmatprep.subr.bf16.mxu0 0
      %2642 = vmatpush2.bf16.msra.mxu0 0
      %2643 = vmatprep.subr.bf16.mxu0 0
      %2644 = vmatpush2.bf16.msra.mxu0 0
      %2645 = vmatprep.subr.bf16.mxu0 0
      %2646 = vmatpush2.bf16.msra.mxu0 0
      %2647 = vmatprep.subr.bf16.mxu0 0
      %2648 = vmatpush2.bf16.msra.mxu0 0
      %2649 = vmatprep.subr.bf16.mxu0 0
      %2650 = vmatpush2.bf16.msra.mxu0 0
      %2651 = vmatprep.subr.bf16.mxu0 0
      %2652 = vmatpush2.bf16.msra.mxu0 0
      %2653 = vmatprep.subr.bf16.mxu0 0
      %2654 = vmatpush2.bf16.msra.mxu0 0
      %2655 = vmatprep.mubr.bf16.mxu0 0
      %2656 = vmatmul.mubr.bf16.gmra.mxu0 %v2612
      %v2657 = vpop.f32.mrf.mxu0
      %v2658 = vadd.f32 0.0, %v2657
      %v2659 = vpop.f32.mrf.mxu0
      %v2660 = vpop.f32.mrf.mxu0
      %v2661 = vadd.f32 0.0, %v2660
      %v2662 = vpop.f32.mrf.mxu0
      %2663 = vmatprep.mubr.bf16.mxu0 0
      %2664 = vmatmul.mubr.bf16.gmra.mxu0 %v2615
      %v2665 = vpop.f32.mrf.mxu0
      %v2666 = vadd.f32 0.0, %v2665
      %v2667 = vpop.f32.mrf.mxu0
      %v2668 = vpop.f32.mrf.mxu0
      %v2669 = vadd.f32 0.0, %v2668
      %v2670 = vpop.f32.mrf.mxu0
      %2671 = vmatprep.mubr.bf16.mxu0 0
      %2672 = vmatmul.mubr.bf16.gmra.mxu0 %v2618
      %v2673 = vpop.f32.mrf.mxu0
      %v2674 = vadd.f32 0.0, %v2673
      %v2675 = vpop.f32.mrf.mxu0
      %v2676 = vpop.f32.mrf.mxu0
      %v2677 = vadd.f32 0.0, %v2676
      %v2678 = vpop.f32.mrf.mxu0
      %2679 = vmatprep.mubr.bf16.mxu0 0
      %2680 = vmatmul.mubr.bf16.gmra.mxu0 %v2621
      %v2681 = vpop.f32.mrf.mxu0
      %v2682 = vadd.f32 0.0, %v2681
      %v2683 = vpop.f32.mrf.mxu0
      %v2684 = vpop.f32.mrf.mxu0
      %v2685 = vadd.f32 0.0, %v2684
      %v2686 = vpop.f32.mrf.mxu0
      %2687 = vdwg.mxu0
      %v2688 = vadd.f32 %v2574, %v2658
      %v2689 = vadd.f32 %v2575, %v2661
      %v2690 = vadd.f32 %v2576, %v2666
      %v2691 = vadd.f32 %v2577, %v2669
      %v2692 = vadd.f32 %v2578, %v2674
      %v2693 = vadd.f32 %v2579, %v2677
      %v2694 = vadd.f32 %v2580, %v2682
      %v2695 = vadd.f32 %v2581, %v2685
      %v2696 = vmax.f32 %v2688, 0.0
      %v2697 = vmax.f32 %v2689, 0.0
      %v2698 = vmax.f32 %v2690, 0.0
      %v2699 = vmax.f32 %v2691, 0.0
      %v2700 = vmax.f32 %v2692, 0.0
      %v2701 = vmax.f32 %v2693, 0.0
      %v2702 = vmax.f32 %v2694, 0.0
      %v2703 = vmax.f32 %v2695, 0.0
      %v2704 = vpack.c.bf16 %v2697, %v2696
      %v2705 = vpack.c.bf16 %v2699, %v2698
      %v2706 = vpack.c.bf16 %v2701, %v2700
      %v2707 = vpack.c.bf16 %v2703, %v2702
      %v2708 = vld [vmem:[%s5] sm:$0xf]
      %v2709 = vld [vmem:[%s6] sm:$0x1]
      %v2711 = vlaneseq
      %v2712 = vshrl.u32 %v2711, 7
      %v2713 = vsub.s32 0, %v2712
      %v2714 = vrot.slane %v2709, %v2713
      %vm2716 = vcmask 64512
      %v2718 = vsel %vm2716, %v2704, 0
      %v2721 = vsel %vm2716, %v2705, 0
      %v2724 = vsel %vm2716, %v2706, 0
      %v2727 = vsel %vm2716, %v2707, 0
      %vm2729 = vcmask 1043456
      %v2731 = vsel %vm2729, %v2708, 0
      %2733 = vmatprep.subr.bf16.mxu0 0
      %2734 = vmatpush1.bf16.msra.mxu0 0
      %2735 = vmatprep.subr.bf16.mxu0 0
      %2736 = vmatpush1.bf16.msra.mxu0 0
      %2737 = vmatprep.subr.bf16.mxu0 0
      %2738 = vmatpush1.bf16.msra.mxu0 0
      %2739 = vmatprep.subr.bf16.mxu0 0
      %2740 = vmatpush1.bf16.msra.mxu0 0
      %2741 = vmatprep.subr.bf16.mxu0 0
      %2742 = vmatpush1.bf16.msra.mxu0 0
      %2743 = vmatprep.subr.bf16.mxu0 0
      %2744 = vmatpush1.bf16.msra.mxu0 0
      %2745 = vmatprep.subr.bf16.mxu0 0
      %2746 = vmatpush1.bf16.msra.mxu0 0
      %2747 = vmatprep.subr.bf16.mxu0 0
      %2748 = vmatpush1.bf16.msra.mxu0 %v2731
      %2749 = vmatprep.subr.bf16.mxu0 0
      %2750 = vmatpush2.bf16.msra.mxu0 0
      %2751 = vmatprep.subr.bf16.mxu0 0
      %2752 = vmatpush2.bf16.msra.mxu0 0
      %2753 = vmatprep.subr.bf16.mxu0 0
      %2754 = vmatpush2.bf16.msra.mxu0 0
      %2755 = vmatprep.subr.bf16.mxu0 0
      %2756 = vmatpush2.bf16.msra.mxu0 0
      %2757 = vmatprep.subr.bf16.mxu0 0
      %2758 = vmatpush2.bf16.msra.mxu0 0
      %2759 = vmatprep.subr.bf16.mxu0 0
      %2760 = vmatpush2.bf16.msra.mxu0 0
      %2761 = vmatprep.subr.bf16.mxu0 0
      %2762 = vmatpush2.bf16.msra.mxu0 0
      %2763 = vmatprep.subr.bf16.mxu0 0
      %2764 = vmatpush2.bf16.msra.mxu0 0
      %2765 = vmatprep.mubr.bf16.mxu0 0
      %2766 = vmatmul.mubr.bf16.gmra.mxu0 %v2718
      %v2767 = vpop.f32.mrf.mxu0
      %v2768 = vadd.f32 %v2714, %v2767
      %v2769 = vpop.f32.mrf.mxu0
      %v2770 = vpop.f32.mrf.mxu0
      %v2771 = vadd.f32 %v2714, %v2770
      %v2772 = vpop.f32.mrf.mxu0
      %2773 = vmatprep.mubr.bf16.mxu0 0
      %2774 = vmatmul.mubr.bf16.gmra.mxu0 %v2721
      %v2775 = vpop.f32.mrf.mxu0
      %v2776 = vadd.f32 %v2714, %v2775
      %v2777 = vpop.f32.mrf.mxu0
      %v2778 = vpop.f32.mrf.mxu0
      %v2779 = vadd.f32 %v2714, %v2778
      %v2780 = vpop.f32.mrf.mxu0
      %2781 = vmatprep.mubr.bf16.mxu0 0
      %2782 = vmatmul.mubr.bf16.gmra.mxu0 %v2724
      %v2783 = vpop.f32.mrf.mxu0
      %v2784 = vadd.f32 %v2714, %v2783
      %v2785 = vpop.f32.mrf.mxu0
      %v2786 = vpop.f32.mrf.mxu0
      %v2787 = vadd.f32 %v2714, %v2786
      %v2788 = vpop.f32.mrf.mxu0
      %2789 = vmatprep.mubr.bf16.mxu0 0
      %2790 = vmatmul.mubr.bf16.gmra.mxu0 %v2727
      %v2791 = vpop.f32.mrf.mxu0
      %v2792 = vadd.f32 %v2714, %v2791
      %v2793 = vpop.f32.mrf.mxu0
      %v2794 = vpop.f32.mrf.mxu0
      %v2795 = vadd.f32 %v2714, %v2794
      %v2796 = vpop.f32.mrf.mxu0
      %2797 = vdwg.mxu0
      %v2798 = vadd.f32 %v1638, %v2768
      %v2799 = vadd.f32 %v1639, %v2771
      %v2800 = vadd.f32 %v1640, %v2776
      %v2801 = vadd.f32 %v1641, %v2779
      %v2802 = vadd.f32 %v1642, %v2784
      %v2803 = vadd.f32 %v1643, %v2787
      %v2804 = vadd.f32 %v1644, %v2792
      %v2805 = vadd.f32 %v1645, %v2795
      %v2806 = vmax.f32 %v2798, 0.0
      %v2807 = vmax.f32 %v2799, 0.0
      %v2808 = vmax.f32 %v2800, 0.0
      %v2809 = vmax.f32 %v2801, 0.0
      %v2810 = vmax.f32 %v2802, 0.0
      %v2811 = vmax.f32 %v2803, 0.0
      %v2812 = vmax.f32 %v2804, 0.0
      %v2813 = vmax.f32 %v2805, 0.0
      %2814 = vst.msk [vmem:[%s1654 + $0x1] sm:$0xff] %vm578, %v2806
      %2815 = vst.msk [vmem:[%s1654 + $0x11] sm:$0xff] %vm578, %v2807
      %2816 = vst.msk [vmem:[%s1654 + $0x21] sm:$0xff] %vm578, %v2808
      %2817 = vst.msk [vmem:[%s1654 + $0x31] sm:$0xff] %vm578, %v2809
      %2818 = vst.msk [vmem:[%s1654 + $0x41] sm:$0xff] %vm578, %v2810
      %2819 = vst.msk [vmem:[%s1654 + $0x51] sm:$0xff] %vm578, %v2811
      %2820 = vst.msk [vmem:[%s1654 + $0x61] sm:$0xff] %vm578, %v2812
      %2821 = vst.msk [vmem:[%s1654 + $0x71] sm:$0xff] %vm578, %v2813
      %v2822 = vld [vmem:[%s8] sm:$0x1]
      %v2824 = vlaneseq
      %v2825 = vshrl.u32 %v2824, 7
      %v2826 = vsub.s32 0, %v2825
      %v2827 = vrot.slane %v2822, %v2826
      %v2829 = vld [vmem:[#allocation3] sm:$0xff]
      %v2830 = vld [vmem:[#allocation3 + $0x10] sm:$0xff]
      %v2831 = vld [vmem:[#allocation3 + $0x20] sm:$0xff]
      %v2832 = vld [vmem:[#allocation3 + $0x30] sm:$0xff]
      %v2833 = vld [vmem:[#allocation3 + $0x40] sm:$0xff]
      %v2834 = vld [vmem:[#allocation3 + $0x50] sm:$0xff]
      %v2835 = vld [vmem:[#allocation3 + $0x60] sm:$0xff]
      %v2836 = vld [vmem:[#allocation3 + $0x70] sm:$0xff]
      %v2837 = vpack.c.bf16 %v2830, %v2829
      %v2838 = vpack.c.bf16 %v2832, %v2831
      %v2839 = vpack.c.bf16 %v2834, %v2833
      %v2840 = vpack.c.bf16 %v2836, %v2835
      %v2841 = vld [vmem:[%s7] sm:$0xf]
      %v2842 = vld [vmem:[%s7 + $0x4] sm:$0xf]
      %v2843 = vld [vmem:[%s7 + $0x8] sm:$0xf]
      %v2844 = vld [vmem:[%s7 + $0xc] sm:$0xf]
      %v2849 = vunpack.c.l.b16 %v2841
      %v2850 = vunpack.c.l.b16 %v2842
      %v2851 = vunpack.c.l.b16 %v2843
      %v2852 = vunpack.c.l.b16 %v2844
      %v2853 = vpack.c.b16 %v2850, %v2849
      %v2854 = vpack.c.b16 %v2852, %v2851
      %v2858 = vsel %vm578, %v2837, 0
      %v2861 = vsel %vm578, %v2838, 0
      %v2864 = vsel %vm578, %v2839, 0
      %v2867 = vsel %vm578, %v2840, 0
      %2869 = vmatprep.subr.bf16.mxu0 0
      %2870 = vmatpush1.bf16.msra.mxu0 0
      %2871 = vmatprep.subr.bf16.mxu0 0
      %2872 = vmatpush1.bf16.msra.mxu0 0
      %2873 = vmatprep.subr.bf16.mxu0 0
      %2874 = vmatpush1.bf16.msra.mxu0 0
      %2875 = vmatprep.subr.bf16.mxu0 0
      %2876 = vmatpush1.bf16.msra.mxu0 0
      %2877 = vmatprep.subr.bf16.mxu0 0
      %2878 = vmatpush1.bf16.msra.mxu0 0
      %2879 = vmatprep.subr.bf16.mxu0 0
      %2880 = vmatpush1.bf16.msra.mxu0 0
      %2881 = vmatprep.subr.bf16.mxu0 0
      %2882 = vmatpush1.bf16.msra.mxu0 %v2854
      %2883 = vmatprep.subr.bf16.mxu0 0
      %2884 = vmatpush1.bf16.msra.mxu0 %v2853
      %2885 = vmatprep.subr.bf16.mxu0 0
      %2886 = vmatpush2.bf16.msra.mxu0 0
      %2887 = vmatprep.subr.bf16.mxu0 0
      %2888 = vmatpush2.bf16.msra.mxu0 0
      %2889 = vmatprep.subr.bf16.mxu0 0
      %2890 = vmatpush2.bf16.msra.mxu0 0
      %2891 = vmatprep.subr.bf16.mxu0 0
      %2892 = vmatpush2.bf16.msra.mxu0 0
      %2893 = vmatprep.subr.bf16.mxu0 0
      %2894 = vmatpush2.bf16.msra.mxu0 0
      %2895 = vmatprep.subr.bf16.mxu0 0
      %2896 = vmatpush2.bf16.msra.mxu0 0
      %2897 = vmatprep.subr.bf16.mxu0 0
      %2898 = vmatpush2.bf16.msra.mxu0 0
      %2899 = vmatprep.subr.bf16.mxu0 0
      %2900 = vmatpush2.bf16.msra.mxu0 0
      %2901 = vmatprep.mubr.bf16.mxu0 0
      %2902 = vmatmul.mubr.bf16.gmra.mxu0 %v2858
      %v2903 = vpop.f32.mrf.mxu0
      %v2904 = vadd.f32 0.0, %v2903
      %v2905 = vpop.f32.mrf.mxu0
      %v2906 = vpop.f32.mrf.mxu0
      %v2907 = vadd.f32 0.0, %v2906
      %v2908 = vpop.f32.mrf.mxu0
      %2909 = vmatprep.mubr.bf16.mxu0 0
      %2910 = vmatmul.mubr.bf16.gmra.mxu0 %v2861
      %v2911 = vpop.f32.mrf.mxu0
      %v2912 = vadd.f32 0.0, %v2911
      %v2913 = vpop.f32.mrf.mxu0
      %v2914 = vpop.f32.mrf.mxu0
      %v2915 = vadd.f32 0.0, %v2914
      %v2916 = vpop.f32.mrf.mxu0
      %2917 = vmatprep.mubr.bf16.mxu0 0
      %2918 = vmatmul.mubr.bf16.gmra.mxu0 %v2864
      %v2919 = vpop.f32.mrf.mxu0
      %v2920 = vadd.f32 0.0, %v2919
      %v2921 = vpop.f32.mrf.mxu0
      %v2922 = vpop.f32.mrf.mxu0
      %v2923 = vadd.f32 0.0, %v2922
      %v2924 = vpop.f32.mrf.mxu0
      %2925 = vmatprep.mubr.bf16.mxu0 0
      %2926 = vmatmul.mubr.bf16.gmra.mxu0 %v2867
      %v2927 = vpop.f32.mrf.mxu0
      %v2928 = vadd.f32 0.0, %v2927
      %v2929 = vpop.f32.mrf.mxu0
      %v2930 = vpop.f32.mrf.mxu0
      %v2931 = vadd.f32 0.0, %v2930
      %v2932 = vpop.f32.mrf.mxu0
      %2933 = vdwg.mxu0
      %v2934 = vadd.f32 %v2827, %v2904
      %v2935 = vadd.f32 %v2827, %v2907
      %v2936 = vadd.f32 %v2827, %v2912
      %v2937 = vadd.f32 %v2827, %v2915
      %v2938 = vadd.f32 %v2827, %v2920
      %v2939 = vadd.f32 %v2827, %v2923
      %v2940 = vadd.f32 %v2827, %v2928
      %v2941 = vadd.f32 %v2827, %v2931
      %v2942 = vld [vmem:[#allocation3 + $0x1] sm:$0xff]
      %v2943 = vld [vmem:[#allocation3 + $0x11] sm:$0xff]
      %v2944 = vld [vmem:[#allocation3 + $0x21] sm:$0xff]
      %v2945 = vld [vmem:[#allocation3 + $0x31] sm:$0xff]
      %v2946 = vld [vmem:[#allocation3 + $0x41] sm:$0xff]
      %v2947 = vld [vmem:[#allocation3 + $0x51] sm:$0xff]
      %v2948 = vld [vmem:[#allocation3 + $0x61] sm:$0xff]
      %v2949 = vld [vmem:[#allocation3 + $0x71] sm:$0xff]
      %v2950 = vpack.c.bf16 %v2943, %v2942
      %v2951 = vpack.c.bf16 %v2945, %v2944
      %v2952 = vpack.c.bf16 %v2947, %v2946
      %v2953 = vpack.c.bf16 %v2949, %v2948
      %s2954 = scalar_lea.vmem %s7, 16
      %v2955 = vld [vmem:[%s2954] sm:$0xf]
      %v2956 = vld [vmem:[%s2954 + $0x4] sm:$0xf]
      %v2957 = vld [vmem:[%s2954 + $0x8] sm:$0xf]
      %v2958 = vld [vmem:[%s2954 + $0xc] sm:$0xf]
      %v2963 = vunpack.c.l.b16 %v2955
      %v2964 = vunpack.c.l.b16 %v2956
      %v2965 = vunpack.c.l.b16 %v2957
      %v2966 = vunpack.c.l.b16 %v2958
      %v2967 = vpack.c.b16 %v2964, %v2963
      %v2968 = vpack.c.b16 %v2966, %v2965
      %v2972 = vsel %vm578, %v2950, 0
      %v2975 = vsel %vm578, %v2951, 0
      %v2978 = vsel %vm578, %v2952, 0
      %v2981 = vsel %vm578, %v2953, 0
      %2983 = vmatprep.subr.bf16.mxu0 0
      %2984 = vmatpush1.bf16.msra.mxu0 0
      %2985 = vmatprep.subr.bf16.mxu0 0
      %2986 = vmatpush1.bf16.msra.mxu0 0
      %2987 = vmatprep.subr.bf16.mxu0 0
      %2988 = vmatpush1.bf16.msra.mxu0 0
      %2989 = vmatprep.subr.bf16.mxu0 0
      %2990 = vmatpush1.bf16.msra.mxu0 0
      %2991 = vmatprep.subr.bf16.mxu0 0
      %2992 = vmatpush1.bf16.msra.mxu0 0
      %2993 = vmatprep.subr.bf16.mxu0 0
      %2994 = vmatpush1.bf16.msra.mxu0 0
      %2995 = vmatprep.subr.bf16.mxu0 0
      %2996 = vmatpush1.bf16.msra.mxu0 %v2968
      %2997 = vmatprep.subr.bf16.mxu0 0
      %2998 = vmatpush1.bf16.msra.mxu0 %v2967
      %2999 = vmatprep.subr.bf16.mxu0 0
      %3000 = vmatpush2.bf16.msra.mxu0 0
      %3001 = vmatprep.subr.bf16.mxu0 0
      %3002 = vmatpush2.bf16.msra.mxu0 0
      %3003 = vmatprep.subr.bf16.mxu0 0
      %3004 = vmatpush2.bf16.msra.mxu0 0
      %3005 = vmatprep.subr.bf16.mxu0 0
      %3006 = vmatpush2.bf16.msra.mxu0 0
      %3007 = vmatprep.subr.bf16.mxu0 0
      %3008 = vmatpush2.bf16.msra.mxu0 0
      %3009 = vmatprep.subr.bf16.mxu0 0
      %3010 = vmatpush2.bf16.msra.mxu0 0
      %3011 = vmatprep.subr.bf16.mxu0 0
      %3012 = vmatpush2.bf16.msra.mxu0 0
      %3013 = vmatprep.subr.bf16.mxu0 0
      %3014 = vmatpush2.bf16.msra.mxu0 0
      %3015 = vmatprep.mubr.bf16.mxu0 0
      %3016 = vmatmul.mubr.bf16.gmra.mxu0 %v2972
      %v3017 = vpop.f32.mrf.mxu0
      %v3018 = vadd.f32 0.0, %v3017
      %v3019 = vpop.f32.mrf.mxu0
      %v3020 = vpop.f32.mrf.mxu0
      %v3021 = vadd.f32 0.0, %v3020
      %v3022 = vpop.f32.mrf.mxu0
      %3023 = vmatprep.mubr.bf16.mxu0 0
      %3024 = vmatmul.mubr.bf16.gmra.mxu0 %v2975
      %v3025 = vpop.f32.mrf.mxu0
      %v3026 = vadd.f32 0.0, %v3025
      %v3027 = vpop.f32.mrf.mxu0
      %v3028 = vpop.f32.mrf.mxu0
      %v3029 = vadd.f32 0.0, %v3028
      %v3030 = vpop.f32.mrf.mxu0
      %3031 = vmatprep.mubr.bf16.mxu0 0
      %3032 = vmatmul.mubr.bf16.gmra.mxu0 %v2978
      %v3033 = vpop.f32.mrf.mxu0
      %v3034 = vadd.f32 0.0, %v3033
      %v3035 = vpop.f32.mrf.mxu0
      %v3036 = vpop.f32.mrf.mxu0
      %v3037 = vadd.f32 0.0, %v3036
      %v3038 = vpop.f32.mrf.mxu0
      %3039 = vmatprep.mubr.bf16.mxu0 0
      %3040 = vmatmul.mubr.bf16.gmra.mxu0 %v2981
      %v3041 = vpop.f32.mrf.mxu0
      %v3042 = vadd.f32 0.0, %v3041
      %v3043 = vpop.f32.mrf.mxu0
      %v3044 = vpop.f32.mrf.mxu0
      %v3045 = vadd.f32 0.0, %v3044
      %v3046 = vpop.f32.mrf.mxu0
      %3047 = vdwg.mxu0
      %v3048 = vadd.f32 %v2934, %v3018
      %v3049 = vadd.f32 %v2935, %v3021
      %v3050 = vadd.f32 %v2936, %v3026
      %v3051 = vadd.f32 %v2937, %v3029
      %v3052 = vadd.f32 %v2938, %v3034
      %v3053 = vadd.f32 %v2939, %v3037
      %v3054 = vadd.f32 %v2940, %v3042
      %v3055 = vadd.f32 %v2941, %v3045
      %v3056 = vld [vmem:[#allocation3 + $0x2] sm:$0xff]
      %v3057 = vld [vmem:[#allocation3 + $0x12] sm:$0xff]
      %v3058 = vld [vmem:[#allocation3 + $0x22] sm:$0xff]
      %v3059 = vld [vmem:[#allocation3 + $0x32] sm:$0xff]
      %v3060 = vld [vmem:[#allocation3 + $0x42] sm:$0xff]
      %v3061 = vld [vmem:[#allocation3 + $0x52] sm:$0xff]
      %v3062 = vld [vmem:[#allocation3 + $0x62] sm:$0xff]
      %v3063 = vld [vmem:[#allocation3 + $0x72] sm:$0xff]
      %v3064 = vpack.c.bf16 %v3057, %v3056
      %v3065 = vpack.c.bf16 %v3059, %v3058
      %v3066 = vpack.c.bf16 %v3061, %v3060
      %v3067 = vpack.c.bf16 %v3063, %v3062
      %s3068 = scalar_lea.vmem %s7, 32
      %v3069 = vld [vmem:[%s3068] sm:$0xf]
      %v3070 = vld [vmem:[%s3068 + $0x4] sm:$0xf]
      %v3071 = vld [vmem:[%s3068 + $0x8] sm:$0xf]
      %v3072 = vld [vmem:[%s3068 + $0xc] sm:$0xf]
      %v3077 = vunpack.c.l.b16 %v3069
      %v3078 = vunpack.c.l.b16 %v3070
      %v3079 = vunpack.c.l.b16 %v3071
      %v3080 = vunpack.c.l.b16 %v3072
      %v3081 = vpack.c.b16 %v3078, %v3077
      %v3082 = vpack.c.b16 %v3080, %v3079
      %v3086 = vsel %vm578, %v3064, 0
      %v3089 = vsel %vm578, %v3065, 0
      %v3092 = vsel %vm578, %v3066, 0
      %v3095 = vsel %vm578, %v3067, 0
      %3097 = vmatprep.subr.bf16.mxu0 0
      %3098 = vmatpush1.bf16.msra.mxu0 0
      %3099 = vmatprep.subr.bf16.mxu0 0
      %3100 = vmatpush1.bf16.msra.mxu0 0
      %3101 = vmatprep.subr.bf16.mxu0 0
      %3102 = vmatpush1.bf16.msra.mxu0 0
      %3103 = vmatprep.subr.bf16.mxu0 0
      %3104 = vmatpush1.bf16.msra.mxu0 0
      %3105 = vmatprep.subr.bf16.mxu0 0
      %3106 = vmatpush1.bf16.msra.mxu0 0
      %3107 = vmatprep.subr.bf16.mxu0 0
      %3108 = vmatpush1.bf16.msra.mxu0 0
      %3109 = vmatprep.subr.bf16.mxu0 0
      %3110 = vmatpush1.bf16.msra.mxu0 %v3082
      %3111 = vmatprep.subr.bf16.mxu0 0
      %3112 = vmatpush1.bf16.msra.mxu0 %v3081
      %3113 = vmatprep.subr.bf16.mxu0 0
      %3114 = vmatpush2.bf16.msra.mxu0 0
      %3115 = vmatprep.subr.bf16.mxu0 0
      %3116 = vmatpush2.bf16.msra.mxu0 0
      %3117 = vmatprep.subr.bf16.mxu0 0
      %3118 = vmatpush2.bf16.msra.mxu0 0
      %3119 = vmatprep.subr.bf16.mxu0 0
      %3120 = vmatpush2.bf16.msra.mxu0 0
      %3121 = vmatprep.subr.bf16.mxu0 0
      %3122 = vmatpush2.bf16.msra.mxu0 0
      %3123 = vmatprep.subr.bf16.mxu0 0
      %3124 = vmatpush2.bf16.msra.mxu0 0
      %3125 = vmatprep.subr.bf16.mxu0 0
      %3126 = vmatpush2.bf16.msra.mxu0 0
      %3127 = vmatprep.subr.bf16.mxu0 0
      %3128 = vmatpush2.bf16.msra.mxu0 0
      %3129 = vmatprep.mubr.bf16.mxu0 0
      %3130 = vmatmul.mubr.bf16.gmra.mxu0 %v3086
      %v3131 = vpop.f32.mrf.mxu0
      %v3132 = vadd.f32 0.0, %v3131
      %v3133 = vpop.f32.mrf.mxu0
      %v3134 = vpop.f32.mrf.mxu0
      %v3135 = vadd.f32 0.0, %v3134
      %v3136 = vpop.f32.mrf.mxu0
      %3137 = vmatprep.mubr.bf16.mxu0 0
      %3138 = vmatmul.mubr.bf16.gmra.mxu0 %v3089
      %v3139 = vpop.f32.mrf.mxu0
      %v3140 = vadd.f32 0.0, %v3139
      %v3141 = vpop.f32.mrf.mxu0
      %v3142 = vpop.f32.mrf.mxu0
      %v3143 = vadd.f32 0.0, %v3142
      %v3144 = vpop.f32.mrf.mxu0
      %3145 = vmatprep.mubr.bf16.mxu0 0
      %3146 = vmatmul.mubr.bf16.gmra.mxu0 %v3092
      %v3147 = vpop.f32.mrf.mxu0
      %v3148 = vadd.f32 0.0, %v3147
      %v3149 = vpop.f32.mrf.mxu0
      %v3150 = vpop.f32.mrf.mxu0
      %v3151 = vadd.f32 0.0, %v3150
      %v3152 = vpop.f32.mrf.mxu0
      %3153 = vmatprep.mubr.bf16.mxu0 0
      %3154 = vmatmul.mubr.bf16.gmra.mxu0 %v3095
      %v3155 = vpop.f32.mrf.mxu0
      %v3156 = vadd.f32 0.0, %v3155
      %v3157 = vpop.f32.mrf.mxu0
      %v3158 = vpop.f32.mrf.mxu0
      %v3159 = vadd.f32 0.0, %v3158
      %v3160 = vpop.f32.mrf.mxu0
      %3161 = vdwg.mxu0
      %v3162 = vadd.f32 %v3048, %v3132
      %v3163 = vadd.f32 %v3049, %v3135
      %v3164 = vadd.f32 %v3050, %v3140
      %v3165 = vadd.f32 %v3051, %v3143
      %v3166 = vadd.f32 %v3052, %v3148
      %v3167 = vadd.f32 %v3053, %v3151
      %v3168 = vadd.f32 %v3054, %v3156
      %v3169 = vadd.f32 %v3055, %v3159
      %v3170 = vld [vmem:[%s1654] sm:$0xff]
      %v3171 = vld [vmem:[%s1654 + $0x10] sm:$0xff]
      %v3172 = vld [vmem:[%s1654 + $0x20] sm:$0xff]
      %v3173 = vld [vmem:[%s1654 + $0x30] sm:$0xff]
      %v3174 = vld [vmem:[%s1654 + $0x40] sm:$0xff]
      %v3175 = vld [vmem:[%s1654 + $0x50] sm:$0xff]
      %v3176 = vld [vmem:[%s1654 + $0x60] sm:$0xff]
      %v3177 = vld [vmem:[%s1654 + $0x70] sm:$0xff]
      %v3178 = vpack.c.bf16 %v3171, %v3170
      %v3179 = vpack.c.bf16 %v3173, %v3172
      %v3180 = vpack.c.bf16 %v3175, %v3174
      %v3181 = vpack.c.bf16 %v3177, %v3176
      %s3182 = scalar_lea.vmem %s7, 48
      %v3183 = vld [vmem:[%s3182] sm:$0xf]
      %v3184 = vld [vmem:[%s3182 + $0x4] sm:$0xf]
      %v3185 = vld [vmem:[%s3182 + $0x8] sm:$0xf]
      %v3186 = vld [vmem:[%s3182 + $0xc] sm:$0xf]
      %v3191 = vunpack.c.l.b16 %v3183
      %v3192 = vunpack.c.l.b16 %v3184
      %v3193 = vunpack.c.l.b16 %v3185
      %v3194 = vunpack.c.l.b16 %v3186
      %v3195 = vpack.c.b16 %v3192, %v3191
      %v3196 = vpack.c.b16 %v3194, %v3193
      %v3200 = vsel %vm578, %v3178, 0
      %v3203 = vsel %vm578, %v3179, 0
      %v3206 = vsel %vm578, %v3180, 0
      %v3209 = vsel %vm578, %v3181, 0
      %3211 = vmatprep.subr.bf16.mxu0 0
      %3212 = vmatpush1.bf16.msra.mxu0 0
      %3213 = vmatprep.subr.bf16.mxu0 0
      %3214 = vmatpush1.bf16.msra.mxu0 0
      %3215 = vmatprep.subr.bf16.mxu0 0
      %3216 = vmatpush1.bf16.msra.mxu0 0
      %3217 = vmatprep.subr.bf16.mxu0 0
      %3218 = vmatpush1.bf16.msra.mxu0 0
      %3219 = vmatprep.subr.bf16.mxu0 0
      %3220 = vmatpush1.bf16.msra.mxu0 0
      %3221 = vmatprep.subr.bf16.mxu0 0
      %3222 = vmatpush1.bf16.msra.mxu0 0
      %3223 = vmatprep.subr.bf16.mxu0 0
      %3224 = vmatpush1.bf16.msra.mxu0 %v3196
      %3225 = vmatprep.subr.bf16.mxu0 0
      %3226 = vmatpush1.bf16.msra.mxu0 %v3195
      %3227 = vmatprep.subr.bf16.mxu0 0
      %3228 = vmatpush2.bf16.msra.mxu0 0
      %3229 = vmatprep.subr.bf16.mxu0 0
      %3230 = vmatpush2.bf16.msra.mxu0 0
      %3231 = vmatprep.subr.bf16.mxu0 0
      %3232 = vmatpush2.bf16.msra.mxu0 0
      %3233 = vmatprep.subr.bf16.mxu0 0
      %3234 = vmatpush2.bf16.msra.mxu0 0
      %3235 = vmatprep.subr.bf16.mxu0 0
      %3236 = vmatpush2.bf16.msra.mxu0 0
      %3237 = vmatprep.subr.bf16.mxu0 0
      %3238 = vmatpush2.bf16.msra.mxu0 0
      %3239 = vmatprep.subr.bf16.mxu0 0
      %3240 = vmatpush2.bf16.msra.mxu0 0
      %3241 = vmatprep.subr.bf16.mxu0 0
      %3242 = vmatpush2.bf16.msra.mxu0 0
      %3243 = vmatprep.mubr.bf16.mxu0 0
      %3244 = vmatmul.mubr.bf16.gmra.mxu0 %v3200
      %v3245 = vpop.f32.mrf.mxu0
      %v3246 = vadd.f32 0.0, %v3245
      %v3247 = vpop.f32.mrf.mxu0
      %v3248 = vpop.f32.mrf.mxu0
      %v3249 = vadd.f32 0.0, %v3248
      %v3250 = vpop.f32.mrf.mxu0
      %3251 = vmatprep.mubr.bf16.mxu0 0
      %3252 = vmatmul.mubr.bf16.gmra.mxu0 %v3203
      %v3253 = vpop.f32.mrf.mxu0
      %v3254 = vadd.f32 0.0, %v3253
      %v3255 = vpop.f32.mrf.mxu0
      %v3256 = vpop.f32.mrf.mxu0
      %v3257 = vadd.f32 0.0, %v3256
      %v3258 = vpop.f32.mrf.mxu0
      %3259 = vmatprep.mubr.bf16.mxu0 0
      %3260 = vmatmul.mubr.bf16.gmra.mxu0 %v3206
      %v3261 = vpop.f32.mrf.mxu0
      %v3262 = vadd.f32 0.0, %v3261
      %v3263 = vpop.f32.mrf.mxu0
      %v3264 = vpop.f32.mrf.mxu0
      %v3265 = vadd.f32 0.0, %v3264
      %v3266 = vpop.f32.mrf.mxu0
      %3267 = vmatprep.mubr.bf16.mxu0 0
      %3268 = vmatmul.mubr.bf16.gmra.mxu0 %v3209
      %v3269 = vpop.f32.mrf.mxu0
      %v3270 = vadd.f32 0.0, %v3269
      %v3271 = vpop.f32.mrf.mxu0
      %v3272 = vpop.f32.mrf.mxu0
      %v3273 = vadd.f32 0.0, %v3272
      %v3274 = vpop.f32.mrf.mxu0
      %3275 = vdwg.mxu0
      %v3276 = vadd.f32 %v3162, %v3246
      %v3277 = vadd.f32 %v3163, %v3249
      %v3278 = vadd.f32 %v3164, %v3254
      %v3279 = vadd.f32 %v3165, %v3257
      %v3280 = vadd.f32 %v3166, %v3262
      %v3281 = vadd.f32 %v3167, %v3265
      %v3282 = vadd.f32 %v3168, %v3270
      %v3283 = vadd.f32 %v3169, %v3273
      %v3284 = vld [vmem:[%s1654 + $0x1] sm:$0xff]
      %v3285 = vld [vmem:[%s1654 + $0x11] sm:$0xff]
      %v3286 = vld [vmem:[%s1654 + $0x21] sm:$0xff]
      %v3287 = vld [vmem:[%s1654 + $0x31] sm:$0xff]
      %v3288 = vld [vmem:[%s1654 + $0x41] sm:$0xff]
      %v3289 = vld [vmem:[%s1654 + $0x51] sm:$0xff]
      %v3290 = vld [vmem:[%s1654 + $0x61] sm:$0xff]
      %v3291 = vld [vmem:[%s1654 + $0x71] sm:$0xff]
      %v3292 = vpack.c.bf16 %v3285, %v3284
      %v3293 = vpack.c.bf16 %v3287, %v3286
      %v3294 = vpack.c.bf16 %v3289, %v3288
      %v3295 = vpack.c.bf16 %v3291, %v3290
      %s3296 = scalar_lea.vmem %s7, 64
      %v3297 = vld [vmem:[%s3296] sm:$0xf]
      %v3298 = vld [vmem:[%s3296 + $0x4] sm:$0xf]
      %v3299 = vld [vmem:[%s3296 + $0x8] sm:$0xf]
      %v3300 = vld [vmem:[%s3296 + $0xc] sm:$0xf]
      %v3305 = vunpack.c.l.b16 %v3297
      %v3306 = vunpack.c.l.b16 %v3298
      %v3307 = vunpack.c.l.b16 %v3299
      %v3308 = vunpack.c.l.b16 %v3300
      %v3309 = vpack.c.b16 %v3306, %v3305
      %v3310 = vpack.c.b16 %v3308, %v3307
      %v3314 = vsel %vm578, %v3292, 0
      %v3317 = vsel %vm578, %v3293, 0
      %v3320 = vsel %vm578, %v3294, 0
      %v3323 = vsel %vm578, %v3295, 0
      %3325 = vmatprep.subr.bf16.mxu0 0
      %3326 = vmatpush1.bf16.msra.mxu0 0
      %3327 = vmatprep.subr.bf16.mxu0 0
      %3328 = vmatpush1.bf16.msra.mxu0 0
      %3329 = vmatprep.subr.bf16.mxu0 0
      %3330 = vmatpush1.bf16.msra.mxu0 0
      %3331 = vmatprep.subr.bf16.mxu0 0
      %3332 = vmatpush1.bf16.msra.mxu0 0
      %3333 = vmatprep.subr.bf16.mxu0 0
      %3334 = vmatpush1.bf16.msra.mxu0 0
      %3335 = vmatprep.subr.bf16.mxu0 0
      %3336 = vmatpush1.bf16.msra.mxu0 0
      %3337 = vmatprep.subr.bf16.mxu0 0
      %3338 = vmatpush1.bf16.msra.mxu0 %v3310
      %3339 = vmatprep.subr.bf16.mxu0 0
      %3340 = vmatpush1.bf16.msra.mxu0 %v3309
      %3341 = vmatprep.subr.bf16.mxu0 0
      %3342 = vmatpush2.bf16.msra.mxu0 0
      %3343 = vmatprep.subr.bf16.mxu0 0
      %3344 = vmatpush2.bf16.msra.mxu0 0
      %3345 = vmatprep.subr.bf16.mxu0 0
      %3346 = vmatpush2.bf16.msra.mxu0 0
      %3347 = vmatprep.subr.bf16.mxu0 0
      %3348 = vmatpush2.bf16.msra.mxu0 0
      %3349 = vmatprep.subr.bf16.mxu0 0
      %3350 = vmatpush2.bf16.msra.mxu0 0
      %3351 = vmatprep.subr.bf16.mxu0 0
      %3352 = vmatpush2.bf16.msra.mxu0 0
      %3353 = vmatprep.subr.bf16.mxu0 0
      %3354 = vmatpush2.bf16.msra.mxu0 0
      %3355 = vmatprep.subr.bf16.mxu0 0
      %3356 = vmatpush2.bf16.msra.mxu0 0
      %3357 = vmatprep.mubr.bf16.mxu0 0
      %3358 = vmatmul.mubr.bf16.gmra.mxu0 %v3314
      %v3359 = vpop.f32.mrf.mxu0
      %v3360 = vadd.f32 0.0, %v3359
      %v3361 = vpop.f32.mrf.mxu0
      %v3362 = vpop.f32.mrf.mxu0
      %v3363 = vadd.f32 0.0, %v3362
      %v3364 = vpop.f32.mrf.mxu0
      %3365 = vmatprep.mubr.bf16.mxu0 0
      %3366 = vmatmul.mubr.bf16.gmra.mxu0 %v3317
      %v3367 = vpop.f32.mrf.mxu0
      %v3368 = vadd.f32 0.0, %v3367
      %v3369 = vpop.f32.mrf.mxu0
      %v3370 = vpop.f32.mrf.mxu0
      %v3371 = vadd.f32 0.0, %v3370
      %v3372 = vpop.f32.mrf.mxu0
      %3373 = vmatprep.mubr.bf16.mxu0 0
      %3374 = vmatmul.mubr.bf16.gmra.mxu0 %v3320
      %v3375 = vpop.f32.mrf.mxu0
      %v3376 = vadd.f32 0.0, %v3375
      %v3377 = vpop.f32.mrf.mxu0
      %v3378 = vpop.f32.mrf.mxu0
      %v3379 = vadd.f32 0.0, %v3378
      %v3380 = vpop.f32.mrf.mxu0
      %3381 = vmatprep.mubr.bf16.mxu0 0
      %3382 = vmatmul.mubr.bf16.gmra.mxu0 %v3323
      %v3383 = vpop.f32.mrf.mxu0
      %v3384 = vadd.f32 0.0, %v3383
      %v3385 = vpop.f32.mrf.mxu0
      %v3386 = vpop.f32.mrf.mxu0
      %v3387 = vadd.f32 0.0, %v3386
      %v3388 = vpop.f32.mrf.mxu0
      %3389 = vdwg.mxu0
      %v3390 = vadd.f32 %v3276, %v3360
      %v3391 = vadd.f32 %v3277, %v3363
      %v3392 = vadd.f32 %v3278, %v3368
      %v3393 = vadd.f32 %v3279, %v3371
      %v3394 = vadd.f32 %v3280, %v3376
      %v3395 = vadd.f32 %v3281, %v3379
      %v3396 = vadd.f32 %v3282, %v3384
      %v3397 = vadd.f32 %v3283, %v3387
      %v3398 = vld [vmem:[%s1654 + $0x2] sm:$0xff]
      %v3399 = vld [vmem:[%s1654 + $0x12] sm:$0xff]
      %v3400 = vld [vmem:[%s1654 + $0x22] sm:$0xff]
      %v3401 = vld [vmem:[%s1654 + $0x32] sm:$0xff]
      %v3402 = vld [vmem:[%s1654 + $0x42] sm:$0xff]
      %v3403 = vld [vmem:[%s1654 + $0x52] sm:$0xff]
      %v3404 = vld [vmem:[%s1654 + $0x62] sm:$0xff]
      %v3405 = vld [vmem:[%s1654 + $0x72] sm:$0xff]
      %v3406 = vpack.c.bf16 %v3399, %v3398
      %v3407 = vpack.c.bf16 %v3401, %v3400
      %v3408 = vpack.c.bf16 %v3403, %v3402
      %v3409 = vpack.c.bf16 %v3405, %v3404
      %s3410 = scalar_lea.vmem %s7, 80
      %v3411 = vld [vmem:[%s3410] sm:$0xf]
      %v3412 = vld [vmem:[%s3410 + $0x4] sm:$0xf]
      %v3413 = vld [vmem:[%s3410 + $0x8] sm:$0xf]
      %v3414 = vld [vmem:[%s3410 + $0xc] sm:$0xf]
      %v3419 = vunpack.c.l.b16 %v3411
      %v3420 = vunpack.c.l.b16 %v3412
      %v3421 = vunpack.c.l.b16 %v3413
      %v3422 = vunpack.c.l.b16 %v3414
      %v3423 = vpack.c.b16 %v3420, %v3419
      %v3424 = vpack.c.b16 %v3422, %v3421
      %v3428 = vsel %vm578, %v3406, 0
      %v3431 = vsel %vm578, %v3407, 0
      %v3434 = vsel %vm578, %v3408, 0
      %v3437 = vsel %vm578, %v3409, 0
      %3439 = vmatprep.subr.bf16.mxu0 0
      %3440 = vmatpush1.bf16.msra.mxu0 0
      %3441 = vmatprep.subr.bf16.mxu0 0
      %3442 = vmatpush1.bf16.msra.mxu0 0
      %3443 = vmatprep.subr.bf16.mxu0 0
      %3444 = vmatpush1.bf16.msra.mxu0 0
      %3445 = vmatprep.subr.bf16.mxu0 0
      %3446 = vmatpush1.bf16.msra.mxu0 0
      %3447 = vmatprep.subr.bf16.mxu0 0
      %3448 = vmatpush1.bf16.msra.mxu0 0
      %3449 = vmatprep.subr.bf16.mxu0 0
      %3450 = vmatpush1.bf16.msra.mxu0 0
      %3451 = vmatprep.subr.bf16.mxu0 0
      %3452 = vmatpush1.bf16.msra.mxu0 %v3424
      %3453 = vmatprep.subr.bf16.mxu0 0
      %3454 = vmatpush1.bf16.msra.mxu0 %v3423
      %3455 = vmatprep.subr.bf16.mxu0 0
      %3456 = vmatpush2.bf16.msra.mxu0 0
      %3457 = vmatprep.subr.bf16.mxu0 0
      %3458 = vmatpush2.bf16.msra.mxu0 0
      %3459 = vmatprep.subr.bf16.mxu0 0
      %3460 = vmatpush2.bf16.msra.mxu0 0
      %3461 = vmatprep.subr.bf16.mxu0 0
      %3462 = vmatpush2.bf16.msra.mxu0 0
      %3463 = vmatprep.subr.bf16.mxu0 0
      %3464 = vmatpush2.bf16.msra.mxu0 0
      %3465 = vmatprep.subr.bf16.mxu0 0
      %3466 = vmatpush2.bf16.msra.mxu0 0
      %3467 = vmatprep.subr.bf16.mxu0 0
      %3468 = vmatpush2.bf16.msra.mxu0 0
      %3469 = vmatprep.subr.bf16.mxu0 0
      %3470 = vmatpush2.bf16.msra.mxu0 0
      %3471 = vmatprep.mubr.bf16.mxu0 0
      %3472 = vmatmul.mubr.bf16.gmra.mxu0 %v3428
      %v3473 = vpop.f32.mrf.mxu0
      %v3474 = vadd.f32 0.0, %v3473
      %v3475 = vpop.f32.mrf.mxu0
      %v3476 = vpop.f32.mrf.mxu0
      %v3477 = vadd.f32 0.0, %v3476
      %v3478 = vpop.f32.mrf.mxu0
      %3479 = vmatprep.mubr.bf16.mxu0 0
      %3480 = vmatmul.mubr.bf16.gmra.mxu0 %v3431
      %v3481 = vpop.f32.mrf.mxu0
      %v3482 = vadd.f32 0.0, %v3481
      %v3483 = vpop.f32.mrf.mxu0
      %v3484 = vpop.f32.mrf.mxu0
      %v3485 = vadd.f32 0.0, %v3484
      %v3486 = vpop.f32.mrf.mxu0
      %3487 = vmatprep.mubr.bf16.mxu0 0
      %3488 = vmatmul.mubr.bf16.gmra.mxu0 %v3434
      %v3489 = vpop.f32.mrf.mxu0
      %v3490 = vadd.f32 0.0, %v3489
      %v3491 = vpop.f32.mrf.mxu0
      %v3492 = vpop.f32.mrf.mxu0
      %v3493 = vadd.f32 0.0, %v3492
      %v3494 = vpop.f32.mrf.mxu0
      %3495 = vmatprep.mubr.bf16.mxu0 0
      %3496 = vmatmul.mubr.bf16.gmra.mxu0 %v3437
      %v3497 = vpop.f32.mrf.mxu0
      %v3498 = vadd.f32 0.0, %v3497
      %v3499 = vpop.f32.mrf.mxu0
      %v3500 = vpop.f32.mrf.mxu0
      %v3501 = vadd.f32 0.0, %v3500
      %v3502 = vpop.f32.mrf.mxu0
      %3503 = vdwg.mxu0
      %v3504 = vadd.f32 %v3390, %v3474
      %v3505 = vadd.f32 %v3391, %v3477
      %v3506 = vadd.f32 %v3392, %v3482
      %v3507 = vadd.f32 %v3393, %v3485
      %v3508 = vadd.f32 %v3394, %v3490
      %v3509 = vadd.f32 %v3395, %v3493
      %v3510 = vadd.f32 %v3396, %v3498
      %v3511 = vadd.f32 %v3397, %v3501
      %v3512 = vld [vmem:[%s2353] sm:$0xff]
      %v3513 = vld [vmem:[%s2353 + $0x10] sm:$0xff]
      %v3514 = vld [vmem:[%s2353 + $0x20] sm:$0xff]
      %v3515 = vld [vmem:[%s2353 + $0x30] sm:$0xff]
      %v3516 = vld [vmem:[%s2353 + $0x40] sm:$0xff]
      %v3517 = vld [vmem:[%s2353 + $0x50] sm:$0xff]
      %v3518 = vld [vmem:[%s2353 + $0x60] sm:$0xff]
      %v3519 = vld [vmem:[%s2353 + $0x70] sm:$0xff]
      %v3520 = vpack.c.bf16 %v3513, %v3512
      %v3521 = vpack.c.bf16 %v3515, %v3514
      %v3522 = vpack.c.bf16 %v3517, %v3516
      %v3523 = vpack.c.bf16 %v3519, %v3518
      %s3524 = scalar_lea.vmem %s7, 96
      %v3525 = vld [vmem:[%s3524] sm:$0xf]
      %v3526 = vld [vmem:[%s3524 + $0x4] sm:$0xf]
      %v3527 = vld [vmem:[%s3524 + $0x8] sm:$0xf]
      %v3528 = vld [vmem:[%s3524 + $0xc] sm:$0xf]
      %v3533 = vunpack.c.l.b16 %v3525
      %v3534 = vunpack.c.l.b16 %v3526
      %v3535 = vunpack.c.l.b16 %v3527
      %v3536 = vunpack.c.l.b16 %v3528
      %v3537 = vpack.c.b16 %v3534, %v3533
      %v3538 = vpack.c.b16 %v3536, %v3535
      %v3542 = vsel %vm578, %v3520, 0
      %v3545 = vsel %vm578, %v3521, 0
      %v3548 = vsel %vm578, %v3522, 0
      %v3551 = vsel %vm578, %v3523, 0
      %3553 = vmatprep.subr.bf16.mxu0 0
      %3554 = vmatpush1.bf16.msra.mxu0 0
      %3555 = vmatprep.subr.bf16.mxu0 0
      %3556 = vmatpush1.bf16.msra.mxu0 0
      %3557 = vmatprep.subr.bf16.mxu0 0
      %3558 = vmatpush1.bf16.msra.mxu0 0
      %3559 = vmatprep.subr.bf16.mxu0 0
      %3560 = vmatpush1.bf16.msra.mxu0 0
      %3561 = vmatprep.subr.bf16.mxu0 0
      %3562 = vmatpush1.bf16.msra.mxu0 0
      %3563 = vmatprep.subr.bf16.mxu0 0
      %3564 = vmatpush1.bf16.msra.mxu0 0
      %3565 = vmatprep.subr.bf16.mxu0 0
      %3566 = vmatpush1.bf16.msra.mxu0 %v3538
      %3567 = vmatprep.subr.bf16.mxu0 0
      %3568 = vmatpush1.bf16.msra.mxu0 %v3537
      %3569 = vmatprep.subr.bf16.mxu0 0
      %3570 = vmatpush2.bf16.msra.mxu0 0
      %3571 = vmatprep.subr.bf16.mxu0 0
      %3572 = vmatpush2.bf16.msra.mxu0 0
      %3573 = vmatprep.subr.bf16.mxu0 0
      %3574 = vmatpush2.bf16.msra.mxu0 0
      %3575 = vmatprep.subr.bf16.mxu0 0
      %3576 = vmatpush2.bf16.msra.mxu0 0
      %3577 = vmatprep.subr.bf16.mxu0 0
      %3578 = vmatpush2.bf16.msra.mxu0 0
      %3579 = vmatprep.subr.bf16.mxu0 0
      %3580 = vmatpush2.bf16.msra.mxu0 0
      %3581 = vmatprep.subr.bf16.mxu0 0
      %3582 = vmatpush2.bf16.msra.mxu0 0
      %3583 = vmatprep.subr.bf16.mxu0 0
      %3584 = vmatpush2.bf16.msra.mxu0 0
      %3585 = vmatprep.mubr.bf16.mxu0 0
      %3586 = vmatmul.mubr.bf16.gmra.mxu0 %v3542
      %v3587 = vpop.f32.mrf.mxu0
      %v3588 = vadd.f32 0.0, %v3587
      %v3589 = vpop.f32.mrf.mxu0
      %v3590 = vpop.f32.mrf.mxu0
      %v3591 = vadd.f32 0.0, %v3590
      %v3592 = vpop.f32.mrf.mxu0
      %3593 = vmatprep.mubr.bf16.mxu0 0
      %3594 = vmatmul.mubr.bf16.gmra.mxu0 %v3545
      %v3595 = vpop.f32.mrf.mxu0
      %v3596 = vadd.f32 0.0, %v3595
      %v3597 = vpop.f32.mrf.mxu0
      %v3598 = vpop.f32.mrf.mxu0
      %v3599 = vadd.f32 0.0, %v3598
      %v3600 = vpop.f32.mrf.mxu0
      %3601 = vmatprep.mubr.bf16.mxu0 0
      %3602 = vmatmul.mubr.bf16.gmra.mxu0 %v3548
      %v3603 = vpop.f32.mrf.mxu0
      %v3604 = vadd.f32 0.0, %v3603
      %v3605 = vpop.f32.mrf.mxu0
      %v3606 = vpop.f32.mrf.mxu0
      %v3607 = vadd.f32 0.0, %v3606
      %v3608 = vpop.f32.mrf.mxu0
      %3609 = vmatprep.mubr.bf16.mxu0 0
      %3610 = vmatmul.mubr.bf16.gmra.mxu0 %v3551
      %v3611 = vpop.f32.mrf.mxu0
      %v3612 = vadd.f32 0.0, %v3611
      %v3613 = vpop.f32.mrf.mxu0
      %v3614 = vpop.f32.mrf.mxu0
      %v3615 = vadd.f32 0.0, %v3614
      %v3616 = vpop.f32.mrf.mxu0
      %3617 = vdwg.mxu0
      %v3618 = vadd.f32 %v3504, %v3588
      %v3619 = vadd.f32 %v3505, %v3591
      %v3620 = vadd.f32 %v3506, %v3596
      %v3621 = vadd.f32 %v3507, %v3599
      %v3622 = vadd.f32 %v3508, %v3604
      %v3623 = vadd.f32 %v3509, %v3607
      %v3624 = vadd.f32 %v3510, %v3612
      %v3625 = vadd.f32 %v3511, %v3615
      %v3626 = vld [vmem:[%s2353 + $0x1] sm:$0xff]
      %v3627 = vld [vmem:[%s2353 + $0x11] sm:$0xff]
      %v3628 = vld [vmem:[%s2353 + $0x21] sm:$0xff]
      %v3629 = vld [vmem:[%s2353 + $0x31] sm:$0xff]
      %v3630 = vld [vmem:[%s2353 + $0x41] sm:$0xff]
      %v3631 = vld [vmem:[%s2353 + $0x51] sm:$0xff]
      %v3632 = vld [vmem:[%s2353 + $0x61] sm:$0xff]
      %v3633 = vld [vmem:[%s2353 + $0x71] sm:$0xff]
      %v3634 = vpack.c.bf16 %v3627, %v3626
      %v3635 = vpack.c.bf16 %v3629, %v3628
      %v3636 = vpack.c.bf16 %v3631, %v3630
      %v3637 = vpack.c.bf16 %v3633, %v3632
      %s3638 = scalar_lea.vmem %s7, 112
      %v3639 = vld [vmem:[%s3638] sm:$0xf]
      %v3640 = vld [vmem:[%s3638 + $0x4] sm:$0xf]
      %v3641 = vld [vmem:[%s3638 + $0x8] sm:$0xf]
      %v3642 = vld [vmem:[%s3638 + $0xc] sm:$0xf]
      %v3647 = vunpack.c.l.b16 %v3639
      %v3648 = vunpack.c.l.b16 %v3640
      %v3649 = vunpack.c.l.b16 %v3641
      %v3650 = vunpack.c.l.b16 %v3642
      %v3651 = vpack.c.b16 %v3648, %v3647
      %v3652 = vpack.c.b16 %v3650, %v3649
      %v3656 = vsel %vm578, %v3634, 0
      %v3659 = vsel %vm578, %v3635, 0
      %v3662 = vsel %vm578, %v3636, 0
      %v3665 = vsel %vm578, %v3637, 0
      %3667 = vmatprep.subr.bf16.mxu0 0
      %3668 = vmatpush1.bf16.msra.mxu0 0
      %3669 = vmatprep.subr.bf16.mxu0 0
      %3670 = vmatpush1.bf16.msra.mxu0 0
      %3671 = vmatprep.subr.bf16.mxu0 0
      %3672 = vmatpush1.bf16.msra.mxu0 0
      %3673 = vmatprep.subr.bf16.mxu0 0
      %3674 = vmatpush1.bf16.msra.mxu0 0
      %3675 = vmatprep.subr.bf16.mxu0 0
      %3676 = vmatpush1.bf16.msra.mxu0 0
      %3677 = vmatprep.subr.bf16.mxu0 0
      %3678 = vmatpush1.bf16.msra.mxu0 0
      %3679 = vmatprep.subr.bf16.mxu0 0
      %3680 = vmatpush1.bf16.msra.mxu0 %v3652
      %3681 = vmatprep.subr.bf16.mxu0 0
      %3682 = vmatpush1.bf16.msra.mxu0 %v3651
      %3683 = vmatprep.subr.bf16.mxu0 0
      %3684 = vmatpush2.bf16.msra.mxu0 0
      %3685 = vmatprep.subr.bf16.mxu0 0
      %3686 = vmatpush2.bf16.msra.mxu0 0
      %3687 = vmatprep.subr.bf16.mxu0 0
      %3688 = vmatpush2.bf16.msra.mxu0 0
      %3689 = vmatprep.subr.bf16.mxu0 0
      %3690 = vmatpush2.bf16.msra.mxu0 0
      %3691 = vmatprep.subr.bf16.mxu0 0
      %3692 = vmatpush2.bf16.msra.mxu0 0
      %3693 = vmatprep.subr.bf16.mxu0 0
      %3694 = vmatpush2.bf16.msra.mxu0 0
      %3695 = vmatprep.subr.bf16.mxu0 0
      %3696 = vmatpush2.bf16.msra.mxu0 0
      %3697 = vmatprep.subr.bf16.mxu0 0
      %3698 = vmatpush2.bf16.msra.mxu0 0
      %3699 = vmatprep.mubr.bf16.mxu0 0
      %3700 = vmatmul.mubr.bf16.gmra.mxu0 %v3656
      %v3701 = vpop.f32.mrf.mxu0
      %v3702 = vadd.f32 0.0, %v3701
      %v3703 = vpop.f32.mrf.mxu0
      %v3704 = vpop.f32.mrf.mxu0
      %v3705 = vadd.f32 0.0, %v3704
      %v3706 = vpop.f32.mrf.mxu0
      %3707 = vmatprep.mubr.bf16.mxu0 0
      %3708 = vmatmul.mubr.bf16.gmra.mxu0 %v3659
      %v3709 = vpop.f32.mrf.mxu0
      %v3710 = vadd.f32 0.0, %v3709
      %v3711 = vpop.f32.mrf.mxu0
      %v3712 = vpop.f32.mrf.mxu0
      %v3713 = vadd.f32 0.0, %v3712
      %v3714 = vpop.f32.mrf.mxu0
      %3715 = vmatprep.mubr.bf16.mxu0 0
      %3716 = vmatmul.mubr.bf16.gmra.mxu0 %v3662
      %v3717 = vpop.f32.mrf.mxu0
      %v3718 = vadd.f32 0.0, %v3717
      %v3719 = vpop.f32.mrf.mxu0
      %v3720 = vpop.f32.mrf.mxu0
      %v3721 = vadd.f32 0.0, %v3720
      %v3722 = vpop.f32.mrf.mxu0
      %3723 = vmatprep.mubr.bf16.mxu0 0
      %3724 = vmatmul.mubr.bf16.gmra.mxu0 %v3665
      %v3725 = vpop.f32.mrf.mxu0
      %v3726 = vadd.f32 0.0, %v3725
      %v3727 = vpop.f32.mrf.mxu0
      %v3728 = vpop.f32.mrf.mxu0
      %v3729 = vadd.f32 0.0, %v3728
      %v3730 = vpop.f32.mrf.mxu0
      %3731 = vdwg.mxu0
      %v3732 = vadd.f32 %v3618, %v3702
      %v3733 = vadd.f32 %v3619, %v3705
      %v3734 = vadd.f32 %v3620, %v3710
      %v3735 = vadd.f32 %v3621, %v3713
      %v3736 = vadd.f32 %v3622, %v3718
      %v3737 = vadd.f32 %v3623, %v3721
      %v3738 = vadd.f32 %v3624, %v3726
      %v3739 = vadd.f32 %v3625, %v3729
      %v3740 = vld [vmem:[%s2353 + $0x2] sm:$0xff]
      %v3741 = vld [vmem:[%s2353 + $0x12] sm:$0xff]
      %v3742 = vld [vmem:[%s2353 + $0x22] sm:$0xff]
      %v3743 = vld [vmem:[%s2353 + $0x32] sm:$0xff]
      %v3744 = vld [vmem:[%s2353 + $0x42] sm:$0xff]
      %v3745 = vld [vmem:[%s2353 + $0x52] sm:$0xff]
      %v3746 = vld [vmem:[%s2353 + $0x62] sm:$0xff]
      %v3747 = vld [vmem:[%s2353 + $0x72] sm:$0xff]
      %v3748 = vpack.c.bf16 %v3741, %v3740
      %v3749 = vpack.c.bf16 %v3743, %v3742
      %v3750 = vpack.c.bf16 %v3745, %v3744
      %v3751 = vpack.c.bf16 %v3747, %v3746
      %s3752 = scalar_lea.vmem %s7, 128
      %v3753 = vld [vmem:[%s3752] sm:$0xf]
      %v3754 = vld [vmem:[%s3752 + $0x4] sm:$0xf]
      %v3755 = vld [vmem:[%s3752 + $0x8] sm:$0xf]
      %v3756 = vld [vmem:[%s3752 + $0xc] sm:$0xf]
      %v3761 = vunpack.c.l.b16 %v3753
      %v3762 = vunpack.c.l.b16 %v3754
      %v3763 = vunpack.c.l.b16 %v3755
      %v3764 = vunpack.c.l.b16 %v3756
      %v3765 = vpack.c.b16 %v3762, %v3761
      %v3766 = vpack.c.b16 %v3764, %v3763
      %v3770 = vsel %vm578, %v3748, 0
      %v3773 = vsel %vm578, %v3749, 0
      %v3776 = vsel %vm578, %v3750, 0
      %v3779 = vsel %vm578, %v3751, 0
      %3781 = vmatprep.subr.bf16.mxu0 0
      %3782 = vmatpush1.bf16.msra.mxu0 0
      %3783 = vmatprep.subr.bf16.mxu0 0
      %3784 = vmatpush1.bf16.msra.mxu0 0
      %3785 = vmatprep.subr.bf16.mxu0 0
      %3786 = vmatpush1.bf16.msra.mxu0 0
      %3787 = vmatprep.subr.bf16.mxu0 0
      %3788 = vmatpush1.bf16.msra.mxu0 0
      %3789 = vmatprep.subr.bf16.mxu0 0
      %3790 = vmatpush1.bf16.msra.mxu0 0
      %3791 = vmatprep.subr.bf16.mxu0 0
      %3792 = vmatpush1.bf16.msra.mxu0 0
      %3793 = vmatprep.subr.bf16.mxu0 0
      %3794 = vmatpush1.bf16.msra.mxu0 %v3766
      %3795 = vmatprep.subr.bf16.mxu0 0
      %3796 = vmatpush1.bf16.msra.mxu0 %v3765
      %3797 = vmatprep.subr.bf16.mxu0 0
      %3798 = vmatpush2.bf16.msra.mxu0 0
      %3799 = vmatprep.subr.bf16.mxu0 0
      %3800 = vmatpush2.bf16.msra.mxu0 0
      %3801 = vmatprep.subr.bf16.mxu0 0
      %3802 = vmatpush2.bf16.msra.mxu0 0
      %3803 = vmatprep.subr.bf16.mxu0 0
      %3804 = vmatpush2.bf16.msra.mxu0 0
      %3805 = vmatprep.subr.bf16.mxu0 0
      %3806 = vmatpush2.bf16.msra.mxu0 0
      %3807 = vmatprep.subr.bf16.mxu0 0
      %3808 = vmatpush2.bf16.msra.mxu0 0
      %3809 = vmatprep.subr.bf16.mxu0 0
      %3810 = vmatpush2.bf16.msra.mxu0 0
      %3811 = vmatprep.subr.bf16.mxu0 0
      %3812 = vmatpush2.bf16.msra.mxu0 0
      %3813 = vmatprep.mubr.bf16.mxu0 0
      %3814 = vmatmul.mubr.bf16.gmra.mxu0 %v3770
      %v3815 = vpop.f32.mrf.mxu0
      %v3816 = vadd.f32 0.0, %v3815
      %v3817 = vpop.f32.mrf.mxu0
      %v3818 = vpop.f32.mrf.mxu0
      %v3819 = vadd.f32 0.0, %v3818
      %v3820 = vpop.f32.mrf.mxu0
      %3821 = vmatprep.mubr.bf16.mxu0 0
      %3822 = vmatmul.mubr.bf16.gmra.mxu0 %v3773
      %v3823 = vpop.f32.mrf.mxu0
      %v3824 = vadd.f32 0.0, %v3823
      %v3825 = vpop.f32.mrf.mxu0
      %v3826 = vpop.f32.mrf.mxu0
      %v3827 = vadd.f32 0.0, %v3826
      %v3828 = vpop.f32.mrf.mxu0
      %3829 = vmatprep.mubr.bf16.mxu0 0
      %3830 = vmatmul.mubr.bf16.gmra.mxu0 %v3776
      %v3831 = vpop.f32.mrf.mxu0
      %v3832 = vadd.f32 0.0, %v3831
      %v3833 = vpop.f32.mrf.mxu0
      %v3834 = vpop.f32.mrf.mxu0
      %v3835 = vadd.f32 0.0, %v3834
      %v3836 = vpop.f32.mrf.mxu0
      %3837 = vmatprep.mubr.bf16.mxu0 0
      %3838 = vmatmul.mubr.bf16.gmra.mxu0 %v3779
      %v3839 = vpop.f32.mrf.mxu0
      %v3840 = vadd.f32 0.0, %v3839
      %v3841 = vpop.f32.mrf.mxu0
      %v3842 = vpop.f32.mrf.mxu0
      %v3843 = vadd.f32 0.0, %v3842
      %v3844 = vpop.f32.mrf.mxu0
      %3845 = vdwg.mxu0
      %v3846 = vadd.f32 %v3732, %v3816
      %v3847 = vadd.f32 %v3733, %v3819
      %v3848 = vadd.f32 %v3734, %v3824
      %v3849 = vadd.f32 %v3735, %v3827
      %v3850 = vadd.f32 %v3736, %v3832
      %v3851 = vadd.f32 %v3737, %v3835
      %v3852 = vadd.f32 %v3738, %v3840
      %v3853 = vadd.f32 %v3739, %v3843
      %v3854 = vmax.f32 %v3846, 0.0
      %v3855 = vmax.f32 %v3847, 0.0
      %v3856 = vmax.f32 %v3848, 0.0
      %v3857 = vmax.f32 %v3849, 0.0
      %v3858 = vmax.f32 %v3850, 0.0
      %v3859 = vmax.f32 %v3851, 0.0
      %v3860 = vmax.f32 %v3852, 0.0
      %v3861 = vmax.f32 %v3853, 0.0
      %v3862 = vpack.c.bf16 %v3855, %v3854
      %v3863 = vpack.c.bf16 %v3857, %v3856
      %v3864 = vpack.c.bf16 %v3859, %v3858
      %v3865 = vpack.c.bf16 %v3861, %v3860
      %v3866 = vld [vmem:[%s9] sm:$0xf]
      %v3867 = vld [vmem:[%s10] sm:$0x1]
      %v3869 = vlaneseq
      %v3870 = vshrl.u32 %v3869, 7
      %v3871 = vsub.s32 0, %v3870
      %v3872 = vrot.slane %v3867, %v3871
      %v3875 = vsel %vm2716, %v3862, 0
      %v3878 = vsel %vm2716, %v3863, 0
      %v3881 = vsel %vm2716, %v3864, 0
      %v3884 = vsel %vm2716, %v3865, 0
      %v3887 = vsel %vm2729, %v3866, 0
      %3889 = vmatprep.subr.bf16.mxu0 0
      %3890 = vmatpush1.bf16.msra.mxu0 0
      %3891 = vmatprep.subr.bf16.mxu0 0
      %3892 = vmatpush1.bf16.msra.mxu0 0
      %3893 = vmatprep.subr.bf16.mxu0 0
      %3894 = vmatpush1.bf16.msra.mxu0 0
      %3895 = vmatprep.subr.bf16.mxu0 0
      %3896 = vmatpush1.bf16.msra.mxu0 0
      %3897 = vmatprep.subr.bf16.mxu0 0
      %3898 = vmatpush1.bf16.msra.mxu0 0
      %3899 = vmatprep.subr.bf16.mxu0 0
      %3900 = vmatpush1.bf16.msra.mxu0 0
      %3901 = vmatprep.subr.bf16.mxu0 0
      %3902 = vmatpush1.bf16.msra.mxu0 0
      %3903 = vmatprep.subr.bf16.mxu0 0
      %3904 = vmatpush1.bf16.msra.mxu0 %v3887
      %3905 = vmatprep.subr.bf16.mxu0 0
      %3906 = vmatpush2.bf16.msra.mxu0 0
      %3907 = vmatprep.subr.bf16.mxu0 0
      %3908 = vmatpush2.bf16.msra.mxu0 0
      %3909 = vmatprep.subr.bf16.mxu0 0
      %3910 = vmatpush2.bf16.msra.mxu0 0
      %3911 = vmatprep.subr.bf16.mxu0 0
      %3912 = vmatpush2.bf16.msra.mxu0 0
      %3913 = vmatprep.subr.bf16.mxu0 0
      %3914 = vmatpush2.bf16.msra.mxu0 0
      %3915 = vmatprep.subr.bf16.mxu0 0
      %3916 = vmatpush2.bf16.msra.mxu0 0
      %3917 = vmatprep.subr.bf16.mxu0 0
      %3918 = vmatpush2.bf16.msra.mxu0 0
      %3919 = vmatprep.subr.bf16.mxu0 0
      %3920 = vmatpush2.bf16.msra.mxu0 0
      %3921 = vmatprep.mubr.bf16.mxu0 0
      %3922 = vmatmul.mubr.bf16.gmra.mxu0 %v3875
      %v3923 = vpop.f32.mrf.mxu0
      %v3924 = vadd.f32 %v3872, %v3923
      %v3925 = vpop.f32.mrf.mxu0
      %v3926 = vpop.f32.mrf.mxu0
      %v3927 = vadd.f32 %v3872, %v3926
      %v3928 = vpop.f32.mrf.mxu0
      %3929 = vmatprep.mubr.bf16.mxu0 0
      %3930 = vmatmul.mubr.bf16.gmra.mxu0 %v3878
      %v3931 = vpop.f32.mrf.mxu0
      %v3932 = vadd.f32 %v3872, %v3931
      %v3933 = vpop.f32.mrf.mxu0
      %v3934 = vpop.f32.mrf.mxu0
      %v3935 = vadd.f32 %v3872, %v3934
      %v3936 = vpop.f32.mrf.mxu0
      %3937 = vmatprep.mubr.bf16.mxu0 0
      %3938 = vmatmul.mubr.bf16.gmra.mxu0 %v3881
      %v3939 = vpop.f32.mrf.mxu0
      %v3940 = vadd.f32 %v3872, %v3939
      %v3941 = vpop.f32.mrf.mxu0
      %v3942 = vpop.f32.mrf.mxu0
      %v3943 = vadd.f32 %v3872, %v3942
      %v3944 = vpop.f32.mrf.mxu0
      %3945 = vmatprep.mubr.bf16.mxu0 0
      %3946 = vmatmul.mubr.bf16.gmra.mxu0 %v3884
      %v3947 = vpop.f32.mrf.mxu0
      %v3948 = vadd.f32 %v3872, %v3947
      %v3949 = vpop.f32.mrf.mxu0
      %v3950 = vpop.f32.mrf.mxu0
      %v3951 = vadd.f32 %v3872, %v3950
      %v3952 = vpop.f32.mrf.mxu0
      %3953 = vdwg.mxu0
      %v3954 = vadd.f32 %v2798, %v3924
      %v3955 = vadd.f32 %v2799, %v3927
      %v3956 = vadd.f32 %v2800, %v3932
      %v3957 = vadd.f32 %v2801, %v3935
      %v3958 = vadd.f32 %v2802, %v3940
      %v3959 = vadd.f32 %v2803, %v3943
      %v3960 = vadd.f32 %v2804, %v3948
      %v3961 = vadd.f32 %v2805, %v3951
      %v3962 = vmax.f32 %v3954, 0.0
      %v3963 = vmax.f32 %v3955, 0.0
      %v3964 = vmax.f32 %v3956, 0.0
      %v3965 = vmax.f32 %v3957, 0.0
      %v3966 = vmax.f32 %v3958, 0.0
      %v3967 = vmax.f32 %v3959, 0.0
      %v3968 = vmax.f32 %v3960, 0.0
      %v3969 = vmax.f32 %v3961, 0.0
      %3970 = vst.msk [vmem:[%s1654 + $0x1] sm:$0xff] %vm578, %v3962
      %3971 = vst.msk [vmem:[%s1654 + $0x11] sm:$0xff] %vm578, %v3963
      %3972 = vst.msk [vmem:[%s1654 + $0x21] sm:$0xff] %vm578, %v3964
      %3973 = vst.msk [vmem:[%s1654 + $0x31] sm:$0xff] %vm578, %v3965
      %3974 = vst.msk [vmem:[%s1654 + $0x41] sm:$0xff] %vm578, %v3966
      %3975 = vst.msk [vmem:[%s1654 + $0x51] sm:$0xff] %vm578, %v3967
      %3976 = vst.msk [vmem:[%s1654 + $0x61] sm:$0xff] %vm578, %v3968
      %3977 = vst.msk [vmem:[%s1654 + $0x71] sm:$0xff] %vm578, %v3969
      %v3978 = vld [vmem:[%s12] sm:$0x1]
      %v3980 = vlaneseq
      %v3981 = vshrl.u32 %v3980, 7
      %v3982 = vsub.s32 0, %v3981
      %v3983 = vrot.slane %v3978, %v3982
      %v3985 = vld [vmem:[#allocation3] sm:$0xff]
      %v3986 = vld [vmem:[#allocation3 + $0x10] sm:$0xff]
      %v3987 = vld [vmem:[#allocation3 + $0x20] sm:$0xff]
      %v3988 = vld [vmem:[#allocation3 + $0x30] sm:$0xff]
      %v3989 = vld [vmem:[#allocation3 + $0x40] sm:$0xff]
      %v3990 = vld [vmem:[#allocation3 + $0x50] sm:$0xff]
      %v3991 = vld [vmem:[#allocation3 + $0x60] sm:$0xff]
      %v3992 = vld [vmem:[#allocation3 + $0x70] sm:$0xff]
      %v3993 = vpack.c.bf16 %v3986, %v3985
      %v3994 = vpack.c.bf16 %v3988, %v3987
      %v3995 = vpack.c.bf16 %v3990, %v3989
      %v3996 = vpack.c.bf16 %v3992, %v3991
      %v3997 = vld [vmem:[%s11] sm:$0xf]
      %v3998 = vld [vmem:[%s11 + $0x4] sm:$0xf]
      %v3999 = vld [vmem:[%s11 + $0x8] sm:$0xf]
      %v4000 = vld [vmem:[%s11 + $0xc] sm:$0xf]
      %v4005 = vunpack.c.l.b16 %v3997
      %v4006 = vunpack.c.l.b16 %v3998
      %v4007 = vunpack.c.l.b16 %v3999
      %v4008 = vunpack.c.l.b16 %v4000
      %v4009 = vpack.c.b16 %v4006, %v4005
      %v4010 = vpack.c.b16 %v4008, %v4007
      %v4014 = vsel %vm578, %v3993, 0
      %v4017 = vsel %vm578, %v3994, 0
      %v4020 = vsel %vm578, %v3995, 0
      %v4023 = vsel %vm578, %v3996, 0
      %4025 = vmatprep.subr.bf16.mxu0 0
      %4026 = vmatpush1.bf16.msra.mxu0 0
      %4027 = vmatprep.subr.bf16.mxu0 0
      %4028 = vmatpush1.bf16.msra.mxu0 0
      %4029 = vmatprep.subr.bf16.mxu0 0
      %4030 = vmatpush1.bf16.msra.mxu0 0
      %4031 = vmatprep.subr.bf16.mxu0 0
      %4032 = vmatpush1.bf16.msra.mxu0 0
      %4033 = vmatprep.subr.bf16.mxu0 0
      %4034 = vmatpush1.bf16.msra.mxu0 0
      %4035 = vmatprep.subr.bf16.mxu0 0
      %4036 = vmatpush1.bf16.msra.mxu0 0
      %4037 = vmatprep.subr.bf16.mxu0 0
      %4038 = vmatpush1.bf16.msra.mxu0 %v4010
      %4039 = vmatprep.subr.bf16.mxu0 0
      %4040 = vmatpush1.bf16.msra.mxu0 %v4009
      %4041 = vmatprep.subr.bf16.mxu0 0
      %4042 = vmatpush2.bf16.msra.mxu0 0
      %4043 = vmatprep.subr.bf16.mxu0 0
      %4044 = vmatpush2.bf16.msra.mxu0 0
      %4045 = vmatprep.subr.bf16.mxu0 0
      %4046 = vmatpush2.bf16.msra.mxu0 0
      %4047 = vmatprep.subr.bf16.mxu0 0
      %4048 = vmatpush2.bf16.msra.mxu0 0
      %4049 = vmatprep.subr.bf16.mxu0 0
      %4050 = vmatpush2.bf16.msra.mxu0 0
      %4051 = vmatprep.subr.bf16.mxu0 0
      %4052 = vmatpush2.bf16.msra.mxu0 0
      %4053 = vmatprep.subr.bf16.mxu0 0
      %4054 = vmatpush2.bf16.msra.mxu0 0
      %4055 = vmatprep.subr.bf16.mxu0 0
      %4056 = vmatpush2.bf16.msra.mxu0 0
      %4057 = vmatprep.mubr.bf16.mxu0 0
      %4058 = vmatmul.mubr.bf16.gmra.mxu0 %v4014
      %v4059 = vpop.f32.mrf.mxu0
      %v4060 = vadd.f32 0.0, %v4059
      %v4061 = vpop.f32.mrf.mxu0
      %v4062 = vpop.f32.mrf.mxu0
      %v4063 = vadd.f32 0.0, %v4062
      %v4064 = vpop.f32.mrf.mxu0
      %4065 = vmatprep.mubr.bf16.mxu0 0
      %4066 = vmatmul.mubr.bf16.gmra.mxu0 %v4017
      %v4067 = vpop.f32.mrf.mxu0
      %v4068 = vadd.f32 0.0, %v4067
      %v4069 = vpop.f32.mrf.mxu0
      %v4070 = vpop.f32.mrf.mxu0
      %v4071 = vadd.f32 0.0, %v4070
      %v4072 = vpop.f32.mrf.mxu0
      %4073 = vmatprep.mubr.bf16.mxu0 0
      %4074 = vmatmul.mubr.bf16.gmra.mxu0 %v4020
      %v4075 = vpop.f32.mrf.mxu0
      %v4076 = vadd.f32 0.0, %v4075
      %v4077 = vpop.f32.mrf.mxu0
      %v4078 = vpop.f32.mrf.mxu0
      %v4079 = vadd.f32 0.0, %v4078
      %v4080 = vpop.f32.mrf.mxu0
      %4081 = vmatprep.mubr.bf16.mxu0 0
      %4082 = vmatmul.mubr.bf16.gmra.mxu0 %v4023
      %v4083 = vpop.f32.mrf.mxu0
      %v4084 = vadd.f32 0.0, %v4083
      %v4085 = vpop.f32.mrf.mxu0
      %v4086 = vpop.f32.mrf.mxu0
      %v4087 = vadd.f32 0.0, %v4086
      %v4088 = vpop.f32.mrf.mxu0
      %4089 = vdwg.mxu0
      %v4090 = vadd.f32 %v3983, %v4060
      %v4091 = vadd.f32 %v3983, %v4063
      %v4092 = vadd.f32 %v3983, %v4068
      %v4093 = vadd.f32 %v3983, %v4071
      %v4094 = vadd.f32 %v3983, %v4076
      %v4095 = vadd.f32 %v3983, %v4079
      %v4096 = vadd.f32 %v3983, %v4084
      %v4097 = vadd.f32 %v3983, %v4087
      %v4098 = vld [vmem:[#allocation3 + $0x1] sm:$0xff]
      %v4099 = vld [vmem:[#allocation3 + $0x11] sm:$0xff]
      %v4100 = vld [vmem:[#allocation3 + $0x21] sm:$0xff]
      %v4101 = vld [vmem:[#allocation3 + $0x31] sm:$0xff]
      %v4102 = vld [vmem:[#allocation3 + $0x41] sm:$0xff]
      %v4103 = vld [vmem:[#allocation3 + $0x51] sm:$0xff]
      %v4104 = vld [vmem:[#allocation3 + $0x61] sm:$0xff]
      %v4105 = vld [vmem:[#allocation3 + $0x71] sm:$0xff]
      %v4106 = vpack.c.bf16 %v4099, %v4098
      %v4107 = vpack.c.bf16 %v4101, %v4100
      %v4108 = vpack.c.bf16 %v4103, %v4102
      %v4109 = vpack.c.bf16 %v4105, %v4104
      %s4110 = scalar_lea.vmem %s11, 16
      %v4111 = vld [vmem:[%s4110] sm:$0xf]
      %v4112 = vld [vmem:[%s4110 + $0x4] sm:$0xf]
      %v4113 = vld [vmem:[%s4110 + $0x8] sm:$0xf]
      %v4114 = vld [vmem:[%s4110 + $0xc] sm:$0xf]
      %v4119 = vunpack.c.l.b16 %v4111
      %v4120 = vunpack.c.l.b16 %v4112
      %v4121 = vunpack.c.l.b16 %v4113
      %v4122 = vunpack.c.l.b16 %v4114
      %v4123 = vpack.c.b16 %v4120, %v4119
      %v4124 = vpack.c.b16 %v4122, %v4121
      %v4128 = vsel %vm578, %v4106, 0
      %v4131 = vsel %vm578, %v4107, 0
      %v4134 = vsel %vm578, %v4108, 0
      %v4137 = vsel %vm578, %v4109, 0
      %4139 = vmatprep.subr.bf16.mxu0 0
      %4140 = vmatpush1.bf16.msra.mxu0 0
      %4141 = vmatprep.subr.bf16.mxu0 0
      %4142 = vmatpush1.bf16.msra.mxu0 0
      %4143 = vmatprep.subr.bf16.mxu0 0
      %4144 = vmatpush1.bf16.msra.mxu0 0
      %4145 = vmatprep.subr.bf16.mxu0 0
      %4146 = vmatpush1.bf16.msra.mxu0 0
      %4147 = vmatprep.subr.bf16.mxu0 0
      %4148 = vmatpush1.bf16.msra.mxu0 0
      %4149 = vmatprep.subr.bf16.mxu0 0
      %4150 = vmatpush1.bf16.msra.mxu0 0
      %4151 = vmatprep.subr.bf16.mxu0 0
      %4152 = vmatpush1.bf16.msra.mxu0 %v4124
      %4153 = vmatprep.subr.bf16.mxu0 0
      %4154 = vmatpush1.bf16.msra.mxu0 %v4123
      %4155 = vmatprep.subr.bf16.mxu0 0
      %4156 = vmatpush2.bf16.msra.mxu0 0
      %4157 = vmatprep.subr.bf16.mxu0 0
      %4158 = vmatpush2.bf16.msra.mxu0 0
      %4159 = vmatprep.subr.bf16.mxu0 0
      %4160 = vmatpush2.bf16.msra.mxu0 0
      %4161 = vmatprep.subr.bf16.mxu0 0
      %4162 = vmatpush2.bf16.msra.mxu0 0
      %4163 = vmatprep.subr.bf16.mxu0 0
      %4164 = vmatpush2.bf16.msra.mxu0 0
      %4165 = vmatprep.subr.bf16.mxu0 0
      %4166 = vmatpush2.bf16.msra.mxu0 0
      %4167 = vmatprep.subr.bf16.mxu0 0
      %4168 = vmatpush2.bf16.msra.mxu0 0
      %4169 = vmatprep.subr.bf16.mxu0 0
      %4170 = vmatpush2.bf16.msra.mxu0 0
      %4171 = vmatprep.mubr.bf16.mxu0 0
      %4172 = vmatmul.mubr.bf16.gmra.mxu0 %v4128
      %v4173 = vpop.f32.mrf.mxu0
      %v4174 = vadd.f32 0.0, %v4173
      %v4175 = vpop.f32.mrf.mxu0
      %v4176 = vpop.f32.mrf.mxu0
      %v4177 = vadd.f32 0.0, %v4176
      %v4178 = vpop.f32.mrf.mxu0
      %4179 = vmatprep.mubr.bf16.mxu0 0
      %4180 = vmatmul.mubr.bf16.gmra.mxu0 %v4131
      %v4181 = vpop.f32.mrf.mxu0
      %v4182 = vadd.f32 0.0, %v4181
      %v4183 = vpop.f32.mrf.mxu0
      %v4184 = vpop.f32.mrf.mxu0
      %v4185 = vadd.f32 0.0, %v4184
      %v4186 = vpop.f32.mrf.mxu0
      %4187 = vmatprep.mubr.bf16.mxu0 0
      %4188 = vmatmul.mubr.bf16.gmra.mxu0 %v4134
      %v4189 = vpop.f32.mrf.mxu0
      %v4190 = vadd.f32 0.0, %v4189
      %v4191 = vpop.f32.mrf.mxu0
      %v4192 = vpop.f32.mrf.mxu0
      %v4193 = vadd.f32 0.0, %v4192
      %v4194 = vpop.f32.mrf.mxu0
      %4195 = vmatprep.mubr.bf16.mxu0 0
      %4196 = vmatmul.mubr.bf16.gmra.mxu0 %v4137
      %v4197 = vpop.f32.mrf.mxu0
      %v4198 = vadd.f32 0.0, %v4197
      %v4199 = vpop.f32.mrf.mxu0
      %v4200 = vpop.f32.mrf.mxu0
      %v4201 = vadd.f32 0.0, %v4200
      %v4202 = vpop.f32.mrf.mxu0
      %4203 = vdwg.mxu0
      %v4204 = vadd.f32 %v4090, %v4174
      %v4205 = vadd.f32 %v4091, %v4177
      %v4206 = vadd.f32 %v4092, %v4182
      %v4207 = vadd.f32 %v4093, %v4185
      %v4208 = vadd.f32 %v4094, %v4190
      %v4209 = vadd.f32 %v4095, %v4193
      %v4210 = vadd.f32 %v4096, %v4198
      %v4211 = vadd.f32 %v4097, %v4201
      %v4212 = vld [vmem:[#allocation3 + $0x2] sm:$0xff]
      %v4213 = vld [vmem:[#allocation3 + $0x12] sm:$0xff]
      %v4214 = vld [vmem:[#allocation3 + $0x22] sm:$0xff]
      %v4215 = vld [vmem:[#allocation3 + $0x32] sm:$0xff]
      %v4216 = vld [vmem:[#allocation3 + $0x42] sm:$0xff]
      %v4217 = vld [vmem:[#allocation3 + $0x52] sm:$0xff]
      %v4218 = vld [vmem:[#allocation3 + $0x62] sm:$0xff]
      %v4219 = vld [vmem:[#allocation3 + $0x72] sm:$0xff]
      %v4220 = vpack.c.bf16 %v4213, %v4212
      %v4221 = vpack.c.bf16 %v4215, %v4214
      %v4222 = vpack.c.bf16 %v4217, %v4216
      %v4223 = vpack.c.bf16 %v4219, %v4218
      %s4224 = scalar_lea.vmem %s11, 32
      %v4225 = vld [vmem:[%s4224] sm:$0xf]
      %v4226 = vld [vmem:[%s4224 + $0x4] sm:$0xf]
      %v4227 = vld [vmem:[%s4224 + $0x8] sm:$0xf]
      %v4228 = vld [vmem:[%s4224 + $0xc] sm:$0xf]
      %v4233 = vunpack.c.l.b16 %v4225
      %v4234 = vunpack.c.l.b16 %v4226
      %v4235 = vunpack.c.l.b16 %v4227
      %v4236 = vunpack.c.l.b16 %v4228
      %v4237 = vpack.c.b16 %v4234, %v4233
      %v4238 = vpack.c.b16 %v4236, %v4235
      %v4242 = vsel %vm578, %v4220, 0
      %v4245 = vsel %vm578, %v4221, 0
      %v4248 = vsel %vm578, %v4222, 0
      %v4251 = vsel %vm578, %v4223, 0
      %4253 = vmatprep.subr.bf16.mxu0 0
      %4254 = vmatpush1.bf16.msra.mxu0 0
      %4255 = vmatprep.subr.bf16.mxu0 0
      %4256 = vmatpush1.bf16.msra.mxu0 0
      %4257 = vmatprep.subr.bf16.mxu0 0
      %4258 = vmatpush1.bf16.msra.mxu0 0
      %4259 = vmatprep.subr.bf16.mxu0 0
      %4260 = vmatpush1.bf16.msra.mxu0 0
      %4261 = vmatprep.subr.bf16.mxu0 0
      %4262 = vmatpush1.bf16.msra.mxu0 0
      %4263 = vmatprep.subr.bf16.mxu0 0
      %4264 = vmatpush1.bf16.msra.mxu0 0
      %4265 = vmatprep.subr.bf16.mxu0 0
      %4266 = vmatpush1.bf16.msra.mxu0 %v4238
      %4267 = vmatprep.subr.bf16.mxu0 0
      %4268 = vmatpush1.bf16.msra.mxu0 %v4237
      %4269 = vmatprep.subr.bf16.mxu0 0
      %4270 = vmatpush2.bf16.msra.mxu0 0
      %4271 = vmatprep.subr.bf16.mxu0 0
      %4272 = vmatpush2.bf16.msra.mxu0 0
      %4273 = vmatprep.subr.bf16.mxu0 0
      %4274 = vmatpush2.bf16.msra.mxu0 0
      %4275 = vmatprep.subr.bf16.mxu0 0
      %4276 = vmatpush2.bf16.msra.mxu0 0
      %4277 = vmatprep.subr.bf16.mxu0 0
      %4278 = vmatpush2.bf16.msra.mxu0 0
      %4279 = vmatprep.subr.bf16.mxu0 0
      %4280 = vmatpush2.bf16.msra.mxu0 0
      %4281 = vmatprep.subr.bf16.mxu0 0
      %4282 = vmatpush2.bf16.msra.mxu0 0
      %4283 = vmatprep.subr.bf16.mxu0 0
      %4284 = vmatpush2.bf16.msra.mxu0 0
      %4285 = vmatprep.mubr.bf16.mxu0 0
      %4286 = vmatmul.mubr.bf16.gmra.mxu0 %v4242
      %v4287 = vpop.f32.mrf.mxu0
      %v4288 = vadd.f32 0.0, %v4287
      %v4289 = vpop.f32.mrf.mxu0
      %v4290 = vpop.f32.mrf.mxu0
      %v4291 = vadd.f32 0.0, %v4290
      %v4292 = vpop.f32.mrf.mxu0
      %4293 = vmatprep.mubr.bf16.mxu0 0
      %4294 = vmatmul.mubr.bf16.gmra.mxu0 %v4245
      %v4295 = vpop.f32.mrf.mxu0
      %v4296 = vadd.f32 0.0, %v4295
      %v4297 = vpop.f32.mrf.mxu0
      %v4298 = vpop.f32.mrf.mxu0
      %v4299 = vadd.f32 0.0, %v4298
      %v4300 = vpop.f32.mrf.mxu0
      %4301 = vmatprep.mubr.bf16.mxu0 0
      %4302 = vmatmul.mubr.bf16.gmra.mxu0 %v4248
      %v4303 = vpop.f32.mrf.mxu0
      %v4304 = vadd.f32 0.0, %v4303
      %v4305 = vpop.f32.mrf.mxu0
      %v4306 = vpop.f32.mrf.mxu0
      %v4307 = vadd.f32 0.0, %v4306
      %v4308 = vpop.f32.mrf.mxu0
      %4309 = vmatprep.mubr.bf16.mxu0 0
      %4310 = vmatmul.mubr.bf16.gmra.mxu0 %v4251
      %v4311 = vpop.f32.mrf.mxu0
      %v4312 = vadd.f32 0.0, %v4311
      %v4313 = vpop.f32.mrf.mxu0
      %v4314 = vpop.f32.mrf.mxu0
      %v4315 = vadd.f32 0.0, %v4314
      %v4316 = vpop.f32.mrf.mxu0
      %4317 = vdwg.mxu0
      %v4318 = vadd.f32 %v4204, %v4288
      %v4319 = vadd.f32 %v4205, %v4291
      %v4320 = vadd.f32 %v4206, %v4296
      %v4321 = vadd.f32 %v4207, %v4299
      %v4322 = vadd.f32 %v4208, %v4304
      %v4323 = vadd.f32 %v4209, %v4307
      %v4324 = vadd.f32 %v4210, %v4312
      %v4325 = vadd.f32 %v4211, %v4315
      %v4326 = vld [vmem:[%s1654] sm:$0xff]
      %v4327 = vld [vmem:[%s1654 + $0x10] sm:$0xff]
      %v4328 = vld [vmem:[%s1654 + $0x20] sm:$0xff]
      %v4329 = vld [vmem:[%s1654 + $0x30] sm:$0xff]
      %v4330 = vld [vmem:[%s1654 + $0x40] sm:$0xff]
      %v4331 = vld [vmem:[%s1654 + $0x50] sm:$0xff]
      %v4332 = vld [vmem:[%s1654 + $0x60] sm:$0xff]
      %v4333 = vld [vmem:[%s1654 + $0x70] sm:$0xff]
      %v4334 = vpack.c.bf16 %v4327, %v4326
      %v4335 = vpack.c.bf16 %v4329, %v4328
      %v4336 = vpack.c.bf16 %v4331, %v4330
      %v4337 = vpack.c.bf16 %v4333, %v4332
      %s4338 = scalar_lea.vmem %s11, 48
      %v4339 = vld [vmem:[%s4338] sm:$0xf]
      %v4340 = vld [vmem:[%s4338 + $0x4] sm:$0xf]
      %v4341 = vld [vmem:[%s4338 + $0x8] sm:$0xf]
      %v4342 = vld [vmem:[%s4338 + $0xc] sm:$0xf]
      %v4347 = vunpack.c.l.b16 %v4339
      %v4348 = vunpack.c.l.b16 %v4340
      %v4349 = vunpack.c.l.b16 %v4341
      %v4350 = vunpack.c.l.b16 %v4342
      %v4351 = vpack.c.b16 %v4348, %v4347
      %v4352 = vpack.c.b16 %v4350, %v4349
      %v4356 = vsel %vm578, %v4334, 0
      %v4359 = vsel %vm578, %v4335, 0
      %v4362 = vsel %vm578, %v4336, 0
      %v4365 = vsel %vm578, %v4337, 0
      %4367 = vmatprep.subr.bf16.mxu0 0
      %4368 = vmatpush1.bf16.msra.mxu0 0
      %4369 = vmatprep.subr.bf16.mxu0 0
      %4370 = vmatpush1.bf16.msra.mxu0 0
      %4371 = vmatprep.subr.bf16.mxu0 0
      %4372 = vmatpush1.bf16.msra.mxu0 0
      %4373 = vmatprep.subr.bf16.mxu0 0
      %4374 = vmatpush1.bf16.msra.mxu0 0
      %4375 = vmatprep.subr.bf16.mxu0 0
      %4376 = vmatpush1.bf16.msra.mxu0 0
      %4377 = vmatprep.subr.bf16.mxu0 0
      %4378 = vmatpush1.bf16.msra.mxu0 0
      %4379 = vmatprep.subr.bf16.mxu0 0
      %4380 = vmatpush1.bf16.msra.mxu0 %v4352
      %4381 = vmatprep.subr.bf16.mxu0 0
      %4382 = vmatpush1.bf16.msra.mxu0 %v4351
      %4383 = vmatprep.subr.bf16.mxu0 0
      %4384 = vmatpush2.bf16.msra.mxu0 0
      %4385 = vmatprep.subr.bf16.mxu0 0
      %4386 = vmatpush2.bf16.msra.mxu0 0
      %4387 = vmatprep.subr.bf16.mxu0 0
      %4388 = vmatpush2.bf16.msra.mxu0 0
      %4389 = vmatprep.subr.bf16.mxu0 0
      %4390 = vmatpush2.bf16.msra.mxu0 0
      %4391 = vmatprep.subr.bf16.mxu0 0
      %4392 = vmatpush2.bf16.msra.mxu0 0
      %4393 = vmatprep.subr.bf16.mxu0 0
      %4394 = vmatpush2.bf16.msra.mxu0 0
      %4395 = vmatprep.subr.bf16.mxu0 0
      %4396 = vmatpush2.bf16.msra.mxu0 0
      %4397 = vmatprep.subr.bf16.mxu0 0
      %4398 = vmatpush2.bf16.msra.mxu0 0
      %4399 = vmatprep.mubr.bf16.mxu0 0
      %4400 = vmatmul.mubr.bf16.gmra.mxu0 %v4356
      %v4401 = vpop.f32.mrf.mxu0
      %v4402 = vadd.f32 0.0, %v4401
      %v4403 = vpop.f32.mrf.mxu0
      %v4404 = vpop.f32.mrf.mxu0
      %v4405 = vadd.f32 0.0, %v4404
      %v4406 = vpop.f32.mrf.mxu0
      %4407 = vmatprep.mubr.bf16.mxu0 0
      %4408 = vmatmul.mubr.bf16.gmra.mxu0 %v4359
      %v4409 = vpop.f32.mrf.mxu0
      %v4410 = vadd.f32 0.0, %v4409
      %v4411 = vpop.f32.mrf.mxu0
      %v4412 = vpop.f32.mrf.mxu0
      %v4413 = vadd.f32 0.0, %v4412
      %v4414 = vpop.f32.mrf.mxu0
      %4415 = vmatprep.mubr.bf16.mxu0 0
      %4416 = vmatmul.mubr.bf16.gmra.mxu0 %v4362
      %v4417 = vpop.f32.mrf.mxu0
      %v4418 = vadd.f32 0.0, %v4417
      %v4419 = vpop.f32.mrf.mxu0
      %v4420 = vpop.f32.mrf.mxu0
      %v4421 = vadd.f32 0.0, %v4420
      %v4422 = vpop.f32.mrf.mxu0
      %4423 = vmatprep.mubr.bf16.mxu0 0
      %4424 = vmatmul.mubr.bf16.gmra.mxu0 %v4365
      %v4425 = vpop.f32.mrf.mxu0
      %v4426 = vadd.f32 0.0, %v4425
      %v4427 = vpop.f32.mrf.mxu0
      %v4428 = vpop.f32.mrf.mxu0
      %v4429 = vadd.f32 0.0, %v4428
      %v4430 = vpop.f32.mrf.mxu0
      %4431 = vdwg.mxu0
      %v4432 = vadd.f32 %v4318, %v4402
      %v4433 = vadd.f32 %v4319, %v4405
      %v4434 = vadd.f32 %v4320, %v4410
      %v4435 = vadd.f32 %v4321, %v4413
      %v4436 = vadd.f32 %v4322, %v4418
      %v4437 = vadd.f32 %v4323, %v4421
      %v4438 = vadd.f32 %v4324, %v4426
      %v4439 = vadd.f32 %v4325, %v4429
      %v4440 = vld [vmem:[%s1654 + $0x1] sm:$0xff]
      %v4441 = vld [vmem:[%s1654 + $0x11] sm:$0xff]
      %v4442 = vld [vmem:[%s1654 + $0x21] sm:$0xff]
      %v4443 = vld [vmem:[%s1654 + $0x31] sm:$0xff]
      %v4444 = vld [vmem:[%s1654 + $0x41] sm:$0xff]
      %v4445 = vld [vmem:[%s1654 + $0x51] sm:$0xff]
      %v4446 = vld [vmem:[%s1654 + $0x61] sm:$0xff]
      %v4447 = vld [vmem:[%s1654 + $0x71] sm:$0xff]
      %v4448 = vpack.c.bf16 %v4441, %v4440
      %v4449 = vpack.c.bf16 %v4443, %v4442
      %v4450 = vpack.c.bf16 %v4445, %v4444
      %v4451 = vpack.c.bf16 %v4447, %v4446
      %s4452 = scalar_lea.vmem %s11, 64
      %v4453 = vld [vmem:[%s4452] sm:$0xf]
      %v4454 = vld [vmem:[%s4452 + $0x4] sm:$0xf]
      %v4455 = vld [vmem:[%s4452 + $0x8] sm:$0xf]
      %v4456 = vld [vmem:[%s4452 + $0xc] sm:$0xf]
      %v4461 = vunpack.c.l.b16 %v4453
      %v4462 = vunpack.c.l.b16 %v4454
      %v4463 = vunpack.c.l.b16 %v4455
      %v4464 = vunpack.c.l.b16 %v4456
      %v4465 = vpack.c.b16 %v4462, %v4461
      %v4466 = vpack.c.b16 %v4464, %v4463
      %v4470 = vsel %vm578, %v4448, 0
      %v4473 = vsel %vm578, %v4449, 0
      %v4476 = vsel %vm578, %v4450, 0
      %v4479 = vsel %vm578, %v4451, 0
      %4481 = vmatprep.subr.bf16.mxu0 0
      %4482 = vmatpush1.bf16.msra.mxu0 0
      %4483 = vmatprep.subr.bf16.mxu0 0
      %4484 = vmatpush1.bf16.msra.mxu0 0
      %4485 = vmatprep.subr.bf16.mxu0 0
      %4486 = vmatpush1.bf16.msra.mxu0 0
      %4487 = vmatprep.subr.bf16.mxu0 0
      %4488 = vmatpush1.bf16.msra.mxu0 0
      %4489 = vmatprep.subr.bf16.mxu0 0
      %4490 = vmatpush1.bf16.msra.mxu0 0
      %4491 = vmatprep.subr.bf16.mxu0 0
      %4492 = vmatpush1.bf16.msra.mxu0 0
      %4493 = vmatprep.subr.bf16.mxu0 0
      %4494 = vmatpush1.bf16.msra.mxu0 %v4466
      %4495 = vmatprep.subr.bf16.mxu0 0
      %4496 = vmatpush1.bf16.msra.mxu0 %v4465
      %4497 = vmatprep.subr.bf16.mxu0 0
      %4498 = vmatpush2.bf16.msra.mxu0 0
      %4499 = vmatprep.subr.bf16.mxu0 0
      %4500 = vmatpush2.bf16.msra.mxu0 0
      %4501 = vmatprep.subr.bf16.mxu0 0
      %4502 = vmatpush2.bf16.msra.mxu0 0
      %4503 = vmatprep.subr.bf16.mxu0 0
      %4504 = vmatpush2.bf16.msra.mxu0 0
      %4505 = vmatprep.subr.bf16.mxu0 0
      %4506 = vmatpush2.bf16.msra.mxu0 0
      %4507 = vmatprep.subr.bf16.mxu0 0
      %4508 = vmatpush2.bf16.msra.mxu0 0
      %4509 = vmatprep.subr.bf16.mxu0 0
      %4510 = vmatpush2.bf16.msra.mxu0 0
      %4511 = vmatprep.subr.bf16.mxu0 0
      %4512 = vmatpush2.bf16.msra.mxu0 0
      %4513 = vmatprep.mubr.bf16.mxu0 0
      %4514 = vmatmul.mubr.bf16.gmra.mxu0 %v4470
      %v4515 = vpop.f32.mrf.mxu0
      %v4516 = vadd.f32 0.0, %v4515
      %v4517 = vpop.f32.mrf.mxu0
      %v4518 = vpop.f32.mrf.mxu0
      %v4519 = vadd.f32 0.0, %v4518
      %v4520 = vpop.f32.mrf.mxu0
      %4521 = vmatprep.mubr.bf16.mxu0 0
      %4522 = vmatmul.mubr.bf16.gmra.mxu0 %v4473
      %v4523 = vpop.f32.mrf.mxu0
      %v4524 = vadd.f32 0.0, %v4523
      %v4525 = vpop.f32.mrf.mxu0
      %v4526 = vpop.f32.mrf.mxu0
      %v4527 = vadd.f32 0.0, %v4526
      %v4528 = vpop.f32.mrf.mxu0
      %4529 = vmatprep.mubr.bf16.mxu0 0
      %4530 = vmatmul.mubr.bf16.gmra.mxu0 %v4476
      %v4531 = vpop.f32.mrf.mxu0
      %v4532 = vadd.f32 0.0, %v4531
      %v4533 = vpop.f32.mrf.mxu0
      %v4534 = vpop.f32.mrf.mxu0
      %v4535 = vadd.f32 0.0, %v4534
      %v4536 = vpop.f32.mrf.mxu0
      %4537 = vmatprep.mubr.bf16.mxu0 0
      %4538 = vmatmul.mubr.bf16.gmra.mxu0 %v4479
      %v4539 = vpop.f32.mrf.mxu0
      %v4540 = vadd.f32 0.0, %v4539
      %v4541 = vpop.f32.mrf.mxu0
      %v4542 = vpop.f32.mrf.mxu0
      %v4543 = vadd.f32 0.0, %v4542
      %v4544 = vpop.f32.mrf.mxu0
      %4545 = vdwg.mxu0
      %v4546 = vadd.f32 %v4432, %v4516
      %v4547 = vadd.f32 %v4433, %v4519
      %v4548 = vadd.f32 %v4434, %v4524
      %v4549 = vadd.f32 %v4435, %v4527
      %v4550 = vadd.f32 %v4436, %v4532
      %v4551 = vadd.f32 %v4437, %v4535
      %v4552 = vadd.f32 %v4438, %v4540
      %v4553 = vadd.f32 %v4439, %v4543
      %v4554 = vld [vmem:[%s1654 + $0x2] sm:$0xff]
      %v4555 = vld [vmem:[%s1654 + $0x12] sm:$0xff]
      %v4556 = vld [vmem:[%s1654 + $0x22] sm:$0xff]
      %v4557 = vld [vmem:[%s1654 + $0x32] sm:$0xff]
      %v4558 = vld [vmem:[%s1654 + $0x42] sm:$0xff]
      %v4559 = vld [vmem:[%s1654 + $0x52] sm:$0xff]
      %v4560 = vld [vmem:[%s1654 + $0x62] sm:$0xff]
      %v4561 = vld [vmem:[%s1654 + $0x72] sm:$0xff]
      %v4562 = vpack.c.bf16 %v4555, %v4554
      %v4563 = vpack.c.bf16 %v4557, %v4556
      %v4564 = vpack.c.bf16 %v4559, %v4558
      %v4565 = vpack.c.bf16 %v4561, %v4560
      %s4566 = scalar_lea.vmem %s11, 80
      %v4567 = vld [vmem:[%s4566] sm:$0xf]
      %v4568 = vld [vmem:[%s4566 + $0x4] sm:$0xf]
      %v4569 = vld [vmem:[%s4566 + $0x8] sm:$0xf]
      %v4570 = vld [vmem:[%s4566 + $0xc] sm:$0xf]
      %v4575 = vunpack.c.l.b16 %v4567
      %v4576 = vunpack.c.l.b16 %v4568
      %v4577 = vunpack.c.l.b16 %v4569
      %v4578 = vunpack.c.l.b16 %v4570
      %v4579 = vpack.c.b16 %v4576, %v4575
      %v4580 = vpack.c.b16 %v4578, %v4577
      %v4584 = vsel %vm578, %v4562, 0
      %v4587 = vsel %vm578, %v4563, 0
      %v4590 = vsel %vm578, %v4564, 0
      %v4593 = vsel %vm578, %v4565, 0
      %4595 = vmatprep.subr.bf16.mxu0 0
      %4596 = vmatpush1.bf16.msra.mxu0 0
      %4597 = vmatprep.subr.bf16.mxu0 0
      %4598 = vmatpush1.bf16.msra.mxu0 0
      %4599 = vmatprep.subr.bf16.mxu0 0
      %4600 = vmatpush1.bf16.msra.mxu0 0
      %4601 = vmatprep.subr.bf16.mxu0 0
      %4602 = vmatpush1.bf16.msra.mxu0 0
      %4603 = vmatprep.subr.bf16.mxu0 0
      %4604 = vmatpush1.bf16.msra.mxu0 0
      %4605 = vmatprep.subr.bf16.mxu0 0
      %4606 = vmatpush1.bf16.msra.mxu0 0
      %4607 = vmatprep.subr.bf16.mxu0 0
      %4608 = vmatpush1.bf16.msra.mxu0 %v4580
      %4609 = vmatprep.subr.bf16.mxu0 0
      %4610 = vmatpush1.bf16.msra.mxu0 %v4579
      %4611 = vmatprep.subr.bf16.mxu0 0
      %4612 = vmatpush2.bf16.msra.mxu0 0
      %4613 = vmatprep.subr.bf16.mxu0 0
      %4614 = vmatpush2.bf16.msra.mxu0 0
      %4615 = vmatprep.subr.bf16.mxu0 0
      %4616 = vmatpush2.bf16.msra.mxu0 0
      %4617 = vmatprep.subr.bf16.mxu0 0
      %4618 = vmatpush2.bf16.msra.mxu0 0
      %4619 = vmatprep.subr.bf16.mxu0 0
      %4620 = vmatpush2.bf16.msra.mxu0 0
      %4621 = vmatprep.subr.bf16.mxu0 0
      %4622 = vmatpush2.bf16.msra.mxu0 0
      %4623 = vmatprep.subr.bf16.mxu0 0
      %4624 = vmatpush2.bf16.msra.mxu0 0
      %4625 = vmatprep.subr.bf16.mxu0 0
      %4626 = vmatpush2.bf16.msra.mxu0 0
      %4627 = vmatprep.mubr.bf16.mxu0 0
      %4628 = vmatmul.mubr.bf16.gmra.mxu0 %v4584
      %v4629 = vpop.f32.mrf.mxu0
      %v4630 = vadd.f32 0.0, %v4629
      %v4631 = vpop.f32.mrf.mxu0
      %v4632 = vpop.f32.mrf.mxu0
      %v4633 = vadd.f32 0.0, %v4632
      %v4634 = vpop.f32.mrf.mxu0
      %4635 = vmatprep.mubr.bf16.mxu0 0
      %4636 = vmatmul.mubr.bf16.gmra.mxu0 %v4587
      %v4637 = vpop.f32.mrf.mxu0
      %v4638 = vadd.f32 0.0, %v4637
      %v4639 = vpop.f32.mrf.mxu0
      %v4640 = vpop.f32.mrf.mxu0
      %v4641 = vadd.f32 0.0, %v4640
      %v4642 = vpop.f32.mrf.mxu0
      %4643 = vmatprep.mubr.bf16.mxu0 0
      %4644 = vmatmul.mubr.bf16.gmra.mxu0 %v4590
      %v4645 = vpop.f32.mrf.mxu0
      %v4646 = vadd.f32 0.0, %v4645
      %v4647 = vpop.f32.mrf.mxu0
      %v4648 = vpop.f32.mrf.mxu0
      %v4649 = vadd.f32 0.0, %v4648
      %v4650 = vpop.f32.mrf.mxu0
      %4651 = vmatprep.mubr.bf16.mxu0 0
      %4652 = vmatmul.mubr.bf16.gmra.mxu0 %v4593
      %v4653 = vpop.f32.mrf.mxu0
      %v4654 = vadd.f32 0.0, %v4653
      %v4655 = vpop.f32.mrf.mxu0
      %v4656 = vpop.f32.mrf.mxu0
      %v4657 = vadd.f32 0.0, %v4656
      %v4658 = vpop.f32.mrf.mxu0
      %4659 = vdwg.mxu0
      %v4660 = vadd.f32 %v4546, %v4630
      %v4661 = vadd.f32 %v4547, %v4633
      %v4662 = vadd.f32 %v4548, %v4638
      %v4663 = vadd.f32 %v4549, %v4641
      %v4664 = vadd.f32 %v4550, %v4646
      %v4665 = vadd.f32 %v4551, %v4649
      %v4666 = vadd.f32 %v4552, %v4654
      %v4667 = vadd.f32 %v4553, %v4657
      %v4668 = vld [vmem:[%s2353] sm:$0xff]
      %v4669 = vld [vmem:[%s2353 + $0x10] sm:$0xff]
      %v4670 = vld [vmem:[%s2353 + $0x20] sm:$0xff]
      %v4671 = vld [vmem:[%s2353 + $0x30] sm:$0xff]
      %v4672 = vld [vmem:[%s2353 + $0x40] sm:$0xff]
      %v4673 = vld [vmem:[%s2353 + $0x50] sm:$0xff]
      %v4674 = vld [vmem:[%s2353 + $0x60] sm:$0xff]
      %v4675 = vld [vmem:[%s2353 + $0x70] sm:$0xff]
      %v4676 = vpack.c.bf16 %v4669, %v4668
      %v4677 = vpack.c.bf16 %v4671, %v4670
      %v4678 = vpack.c.bf16 %v4673, %v4672
      %v4679 = vpack.c.bf16 %v4675, %v4674
      %s4680 = scalar_lea.vmem %s11, 96
      %v4681 = vld [vmem:[%s4680] sm:$0xf]
      %v4682 = vld [vmem:[%s4680 + $0x4] sm:$0xf]
      %v4683 = vld [vmem:[%s4680 + $0x8] sm:$0xf]
      %v4684 = vld [vmem:[%s4680 + $0xc] sm:$0xf]
      %v4689 = vunpack.c.l.b16 %v4681
      %v4690 = vunpack.c.l.b16 %v4682
      %v4691 = vunpack.c.l.b16 %v4683
      %v4692 = vunpack.c.l.b16 %v4684
      %v4693 = vpack.c.b16 %v4690, %v4689
      %v4694 = vpack.c.b16 %v4692, %v4691
      %v4698 = vsel %vm578, %v4676, 0
      %v4701 = vsel %vm578, %v4677, 0
      %v4704 = vsel %vm578, %v4678, 0
      %v4707 = vsel %vm578, %v4679, 0
      %4709 = vmatprep.subr.bf16.mxu0 0
      %4710 = vmatpush1.bf16.msra.mxu0 0
      %4711 = vmatprep.subr.bf16.mxu0 0
      %4712 = vmatpush1.bf16.msra.mxu0 0
      %4713 = vmatprep.subr.bf16.mxu0 0
      %4714 = vmatpush1.bf16.msra.mxu0 0
      %4715 = vmatprep.subr.bf16.mxu0 0
      %4716 = vmatpush1.bf16.msra.mxu0 0
      %4717 = vmatprep.subr.bf16.mxu0 0
      %4718 = vmatpush1.bf16.msra.mxu0 0
      %4719 = vmatprep.subr.bf16.mxu0 0
      %4720 = vmatpush1.bf16.msra.mxu0 0
      %4721 = vmatprep.subr.bf16.mxu0 0
      %4722 = vmatpush1.bf16.msra.mxu0 %v4694
      %4723 = vmatprep.subr.bf16.mxu0 0
      %4724 = vmatpush1.bf16.msra.mxu0 %v4693
      %4725 = vmatprep.subr.bf16.mxu0 0
      %4726 = vmatpush2.bf16.msra.mxu0 0
      %4727 = vmatprep.subr.bf16.mxu0 0
      %4728 = vmatpush2.bf16.msra.mxu0 0
      %4729 = vmatprep.subr.bf16.mxu0 0
      %4730 = vmatpush2.bf16.msra.mxu0 0
      %4731 = vmatprep.subr.bf16.mxu0 0
      %4732 = vmatpush2.bf16.msra.mxu0 0
      %4733 = vmatprep.subr.bf16.mxu0 0
      %4734 = vmatpush2.bf16.msra.mxu0 0
      %4735 = vmatprep.subr.bf16.mxu0 0
      %4736 = vmatpush2.bf16.msra.mxu0 0
      %4737 = vmatprep.subr.bf16.mxu0 0
      %4738 = vmatpush2.bf16.msra.mxu0 0
      %4739 = vmatprep.subr.bf16.mxu0 0
      %4740 = vmatpush2.bf16.msra.mxu0 0
      %4741 = vmatprep.mubr.bf16.mxu0 0
      %4742 = vmatmul.mubr.bf16.gmra.mxu0 %v4698
      %v4743 = vpop.f32.mrf.mxu0
      %v4744 = vadd.f32 0.0, %v4743
      %v4745 = vpop.f32.mrf.mxu0
      %v4746 = vpop.f32.mrf.mxu0
      %v4747 = vadd.f32 0.0, %v4746
      %v4748 = vpop.f32.mrf.mxu0
      %4749 = vmatprep.mubr.bf16.mxu0 0
      %4750 = vmatmul.mubr.bf16.gmra.mxu0 %v4701
      %v4751 = vpop.f32.mrf.mxu0
      %v4752 = vadd.f32 0.0, %v4751
      %v4753 = vpop.f32.mrf.mxu0
      %v4754 = vpop.f32.mrf.mxu0
      %v4755 = vadd.f32 0.0, %v4754
      %v4756 = vpop.f32.mrf.mxu0
      %4757 = vmatprep.mubr.bf16.mxu0 0
      %4758 = vmatmul.mubr.bf16.gmra.mxu0 %v4704
      %v4759 = vpop.f32.mrf.mxu0
      %v4760 = vadd.f32 0.0, %v4759
      %v4761 = vpop.f32.mrf.mxu0
      %v4762 = vpop.f32.mrf.mxu0
      %v4763 = vadd.f32 0.0, %v4762
      %v4764 = vpop.f32.mrf.mxu0
      %4765 = vmatprep.mubr.bf16.mxu0 0
      %4766 = vmatmul.mubr.bf16.gmra.mxu0 %v4707
      %v4767 = vpop.f32.mrf.mxu0
      %v4768 = vadd.f32 0.0, %v4767
      %v4769 = vpop.f32.mrf.mxu0
      %v4770 = vpop.f32.mrf.mxu0
      %v4771 = vadd.f32 0.0, %v4770
      %v4772 = vpop.f32.mrf.mxu0
      %4773 = vdwg.mxu0
      %v4774 = vadd.f32 %v4660, %v4744
      %v4775 = vadd.f32 %v4661, %v4747
      %v4776 = vadd.f32 %v4662, %v4752
      %v4777 = vadd.f32 %v4663, %v4755
      %v4778 = vadd.f32 %v4664, %v4760
      %v4779 = vadd.f32 %v4665, %v4763
      %v4780 = vadd.f32 %v4666, %v4768
      %v4781 = vadd.f32 %v4667, %v4771
      %v4782 = vld [vmem:[%s2353 + $0x1] sm:$0xff]
      %v4783 = vld [vmem:[%s2353 + $0x11] sm:$0xff]
      %v4784 = vld [vmem:[%s2353 + $0x21] sm:$0xff]
      %v4785 = vld [vmem:[%s2353 + $0x31] sm:$0xff]
      %v4786 = vld [vmem:[%s2353 + $0x41] sm:$0xff]
      %v4787 = vld [vmem:[%s2353 + $0x51] sm:$0xff]
      %v4788 = vld [vmem:[%s2353 + $0x61] sm:$0xff]
      %v4789 = vld [vmem:[%s2353 + $0x71] sm:$0xff]
      %v4790 = vpack.c.bf16 %v4783, %v4782
      %v4791 = vpack.c.bf16 %v4785, %v4784
      %v4792 = vpack.c.bf16 %v4787, %v4786
      %v4793 = vpack.c.bf16 %v4789, %v4788
      %s4794 = scalar_lea.vmem %s11, 112
      %v4795 = vld [vmem:[%s4794] sm:$0xf]
      %v4796 = vld [vmem:[%s4794 + $0x4] sm:$0xf]
      %v4797 = vld [vmem:[%s4794 + $0x8] sm:$0xf]
      %v4798 = vld [vmem:[%s4794 + $0xc] sm:$0xf]
      %v4803 = vunpack.c.l.b16 %v4795
      %v4804 = vunpack.c.l.b16 %v4796
      %v4805 = vunpack.c.l.b16 %v4797
      %v4806 = vunpack.c.l.b16 %v4798
      %v4807 = vpack.c.b16 %v4804, %v4803
      %v4808 = vpack.c.b16 %v4806, %v4805
      %v4812 = vsel %vm578, %v4790, 0
      %v4815 = vsel %vm578, %v4791, 0
      %v4818 = vsel %vm578, %v4792, 0
      %v4821 = vsel %vm578, %v4793, 0
      %4823 = vmatprep.subr.bf16.mxu0 0
      %4824 = vmatpush1.bf16.msra.mxu0 0
      %4825 = vmatprep.subr.bf16.mxu0 0
      %4826 = vmatpush1.bf16.msra.mxu0 0
      %4827 = vmatprep.subr.bf16.mxu0 0
      %4828 = vmatpush1.bf16.msra.mxu0 0
      %4829 = vmatprep.subr.bf16.mxu0 0
      %4830 = vmatpush1.bf16.msra.mxu0 0
      %4831 = vmatprep.subr.bf16.mxu0 0
      %4832 = vmatpush1.bf16.msra.mxu0 0
      %4833 = vmatprep.subr.bf16.mxu0 0
      %4834 = vmatpush1.bf16.msra.mxu0 0
      %4835 = vmatprep.subr.bf16.mxu0 0
      %4836 = vmatpush1.bf16.msra.mxu0 %v4808
      %4837 = vmatprep.subr.bf16.mxu0 0
      %4838 = vmatpush1.bf16.msra.mxu0 %v4807
      %4839 = vmatprep.subr.bf16.mxu0 0
      %4840 = vmatpush2.bf16.msra.mxu0 0
      %4841 = vmatprep.subr.bf16.mxu0 0
      %4842 = vmatpush2.bf16.msra.mxu0 0
      %4843 = vmatprep.subr.bf16.mxu0 0
      %4844 = vmatpush2.bf16.msra.mxu0 0
      %4845 = vmatprep.subr.bf16.mxu0 0
      %4846 = vmatpush2.bf16.msra.mxu0 0
      %4847 = vmatprep.subr.bf16.mxu0 0
      %4848 = vmatpush2.bf16.msra.mxu0 0
      %4849 = vmatprep.subr.bf16.mxu0 0
      %4850 = vmatpush2.bf16.msra.mxu0 0
      %4851 = vmatprep.subr.bf16.mxu0 0
      %4852 = vmatpush2.bf16.msra.mxu0 0
      %4853 = vmatprep.subr.bf16.mxu0 0
      %4854 = vmatpush2.bf16.msra.mxu0 0
      %4855 = vmatprep.mubr.bf16.mxu0 0
      %4856 = vmatmul.mubr.bf16.gmra.mxu0 %v4812
      %v4857 = vpop.f32.mrf.mxu0
      %v4858 = vadd.f32 0.0, %v4857
      %v4859 = vpop.f32.mrf.mxu0
      %v4860 = vpop.f32.mrf.mxu0
      %v4861 = vadd.f32 0.0, %v4860
      %v4862 = vpop.f32.mrf.mxu0
      %4863 = vmatprep.mubr.bf16.mxu0 0
      %4864 = vmatmul.mubr.bf16.gmra.mxu0 %v4815
      %v4865 = vpop.f32.mrf.mxu0
      %v4866 = vadd.f32 0.0, %v4865
      %v4867 = vpop.f32.mrf.mxu0
      %v4868 = vpop.f32.mrf.mxu0
      %v4869 = vadd.f32 0.0, %v4868
      %v4870 = vpop.f32.mrf.mxu0
      %4871 = vmatprep.mubr.bf16.mxu0 0
      %4872 = vmatmul.mubr.bf16.gmra.mxu0 %v4818
      %v4873 = vpop.f32.mrf.mxu0
      %v4874 = vadd.f32 0.0, %v4873
      %v4875 = vpop.f32.mrf.mxu0
      %v4876 = vpop.f32.mrf.mxu0
      %v4877 = vadd.f32 0.0, %v4876
      %v4878 = vpop.f32.mrf.mxu0
      %4879 = vmatprep.mubr.bf16.mxu0 0
      %4880 = vmatmul.mubr.bf16.gmra.mxu0 %v4821
      %v4881 = vpop.f32.mrf.mxu0
      %v4882 = vadd.f32 0.0, %v4881
      %v4883 = vpop.f32.mrf.mxu0
      %v4884 = vpop.f32.mrf.mxu0
      %v4885 = vadd.f32 0.0, %v4884
      %v4886 = vpop.f32.mrf.mxu0
      %4887 = vdwg.mxu0
      %v4888 = vadd.f32 %v4774, %v4858
      %v4889 = vadd.f32 %v4775, %v4861
      %v4890 = vadd.f32 %v4776, %v4866
      %v4891 = vadd.f32 %v4777, %v4869
      %v4892 = vadd.f32 %v4778, %v4874
      %v4893 = vadd.f32 %v4779, %v4877
      %v4894 = vadd.f32 %v4780, %v4882
      %v4895 = vadd.f32 %v4781, %v4885
      %v4896 = vld [vmem:[%s2353 + $0x2] sm:$0xff]
      %v4897 = vld [vmem:[%s2353 + $0x12] sm:$0xff]
      %v4898 = vld [vmem:[%s2353 + $0x22] sm:$0xff]
      %v4899 = vld [vmem:[%s2353 + $0x32] sm:$0xff]
      %v4900 = vld [vmem:[%s2353 + $0x42] sm:$0xff]
      %v4901 = vld [vmem:[%s2353 + $0x52] sm:$0xff]
      %v4902 = vld [vmem:[%s2353 + $0x62] sm:$0xff]
      %v4903 = vld [vmem:[%s2353 + $0x72] sm:$0xff]
      %v4904 = vpack.c.bf16 %v4897, %v4896
      %v4905 = vpack.c.bf16 %v4899, %v4898
      %v4906 = vpack.c.bf16 %v4901, %v4900
      %v4907 = vpack.c.bf16 %v4903, %v4902
      %s4908 = scalar_lea.vmem %s11, 128
      %v4909 = vld [vmem:[%s4908] sm:$0xf]
      %v4910 = vld [vmem:[%s4908 + $0x4] sm:$0xf]
      %v4911 = vld [vmem:[%s4908 + $0x8] sm:$0xf]
      %v4912 = vld [vmem:[%s4908 + $0xc] sm:$0xf]
      %v4917 = vunpack.c.l.b16 %v4909
      %v4918 = vunpack.c.l.b16 %v4910
      %v4919 = vunpack.c.l.b16 %v4911
      %v4920 = vunpack.c.l.b16 %v4912
      %v4921 = vpack.c.b16 %v4918, %v4917
      %v4922 = vpack.c.b16 %v4920, %v4919
      %v4926 = vsel %vm578, %v4904, 0
      %v4929 = vsel %vm578, %v4905, 0
      %v4932 = vsel %vm578, %v4906, 0
      %v4935 = vsel %vm578, %v4907, 0
      %4937 = vmatprep.subr.bf16.mxu0 0
      %4938 = vmatpush1.bf16.msra.mxu0 0
      %4939 = vmatprep.subr.bf16.mxu0 0
      %4940 = vmatpush1.bf16.msra.mxu0 0
      %4941 = vmatprep.subr.bf16.mxu0 0
      %4942 = vmatpush1.bf16.msra.mxu0 0
      %4943 = vmatprep.subr.bf16.mxu0 0
      %4944 = vmatpush1.bf16.msra.mxu0 0
      %4945 = vmatprep.subr.bf16.mxu0 0
      %4946 = vmatpush1.bf16.msra.mxu0 0
      %4947 = vmatprep.subr.bf16.mxu0 0
      %4948 = vmatpush1.bf16.msra.mxu0 0
      %4949 = vmatprep.subr.bf16.mxu0 0
      %4950 = vmatpush1.bf16.msra.mxu0 %v4922
      %4951 = vmatprep.subr.bf16.mxu0 0
      %4952 = vmatpush1.bf16.msra.mxu0 %v4921
      %4953 = vmatprep.subr.bf16.mxu0 0
      %4954 = vmatpush2.bf16.msra.mxu0 0
      %4955 = vmatprep.subr.bf16.mxu0 0
      %4956 = vmatpush2.bf16.msra.mxu0 0
      %4957 = vmatprep.subr.bf16.mxu0 0
      %4958 = vmatpush2.bf16.msra.mxu0 0
      %4959 = vmatprep.subr.bf16.mxu0 0
      %4960 = vmatpush2.bf16.msra.mxu0 0
      %4961 = vmatprep.subr.bf16.mxu0 0
      %4962 = vmatpush2.bf16.msra.mxu0 0
      %4963 = vmatprep.subr.bf16.mxu0 0
      %4964 = vmatpush2.bf16.msra.mxu0 0
      %4965 = vmatprep.subr.bf16.mxu0 0
      %4966 = vmatpush2.bf16.msra.mxu0 0
      %4967 = vmatprep.subr.bf16.mxu0 0
      %4968 = vmatpush2.bf16.msra.mxu0 0
      %4969 = vmatprep.mubr.bf16.mxu0 0
      %4970 = vmatmul.mubr.bf16.gmra.mxu0 %v4926
      %v4971 = vpop.f32.mrf.mxu0
      %v4972 = vadd.f32 0.0, %v4971
      %v4973 = vpop.f32.mrf.mxu0
      %v4974 = vpop.f32.mrf.mxu0
      %v4975 = vadd.f32 0.0, %v4974
      %v4976 = vpop.f32.mrf.mxu0
      %4977 = vmatprep.mubr.bf16.mxu0 0
      %4978 = vmatmul.mubr.bf16.gmra.mxu0 %v4929
      %v4979 = vpop.f32.mrf.mxu0
      %v4980 = vadd.f32 0.0, %v4979
      %v4981 = vpop.f32.mrf.mxu0
      %v4982 = vpop.f32.mrf.mxu0
      %v4983 = vadd.f32 0.0, %v4982
      %v4984 = vpop.f32.mrf.mxu0
      %4985 = vmatprep.mubr.bf16.mxu0 0
      %4986 = vmatmul.mubr.bf16.gmra.mxu0 %v4932
      %v4987 = vpop.f32.mrf.mxu0
      %v4988 = vadd.f32 0.0, %v4987
      %v4989 = vpop.f32.mrf.mxu0
      %v4990 = vpop.f32.mrf.mxu0
      %v4991 = vadd.f32 0.0, %v4990
      %v4992 = vpop.f32.mrf.mxu0
      %4993 = vmatprep.mubr.bf16.mxu0 0
      %4994 = vmatmul.mubr.bf16.gmra.mxu0 %v4935
      %v4995 = vpop.f32.mrf.mxu0
      %v4996 = vadd.f32 0.0, %v4995
      %v4997 = vpop.f32.mrf.mxu0
      %v4998 = vpop.f32.mrf.mxu0
      %v4999 = vadd.f32 0.0, %v4998
      %v5000 = vpop.f32.mrf.mxu0
      %5001 = vdwg.mxu0
      %v5002 = vadd.f32 %v4888, %v4972
      %v5003 = vadd.f32 %v4889, %v4975
      %v5004 = vadd.f32 %v4890, %v4980
      %v5005 = vadd.f32 %v4891, %v4983
      %v5006 = vadd.f32 %v4892, %v4988
      %v5007 = vadd.f32 %v4893, %v4991
      %v5008 = vadd.f32 %v4894, %v4996
      %v5009 = vadd.f32 %v4895, %v4999
      %s5010 = scalar_lea.vmem [#allocation4], 16
      %5011 = vst [vmem:[%s5010 + $0x1] sm:$0xff] %v5002
      %5012 = vst [vmem:[%s5010 + $0x11] sm:$0xff] %v5003
      %5013 = vst [vmem:[%s5010 + $0x21] sm:$0xff] %v5004
      %5014 = vst [vmem:[%s5010 + $0x31] sm:$0xff] %v5005
      %5015 = vst [vmem:[%s5010 + $0x41] sm:$0xff] %v5006
      %5016 = vst [vmem:[%s5010 + $0x51] sm:$0xff] %v5007
      %5017 = vst [vmem:[%s5010 + $0x61] sm:$0xff] %v5008
      %5018 = vst [vmem:[%s5010 + $0x71] sm:$0xff] %v5009
      %v5019 = vld [vmem:[%s14] sm:$0x3]
      %v5021 = vlaneseq
      %v5022 = vshrl.u32 %v5021, 7
      %v5023 = vsub.s32 0, %v5022
      %v5024 = vrot.slane %v5019, %v5023
      %v5025 = vlaneseq
      %v5026 = vshrl.u32 %v5025, 7
      %v5027 = vsub.s32 1, %v5026
      %v5028 = vrot.slane %v5019, %v5027
      %v5031 = vld [vmem:[#allocation4] sm:$0xff]
      %v5032 = vld [vmem:[#allocation4 + $0x10] sm:$0xff]
      %v5033 = vld [vmem:[#allocation4 + $0x20] sm:$0xff]
      %v5034 = vld [vmem:[#allocation4 + $0x30] sm:$0xff]
      %v5035 = vld [vmem:[#allocation4 + $0x40] sm:$0xff]
      %v5036 = vld [vmem:[#allocation4 + $0x50] sm:$0xff]
      %v5037 = vld [vmem:[#allocation4 + $0x60] sm:$0xff]
      %v5038 = vld [vmem:[#allocation4 + $0x70] sm:$0xff]
      %v5039 = vpack.c.bf16 %v5032, %v5031
      %v5040 = vpack.c.bf16 %v5034, %v5033
      %v5041 = vpack.c.bf16 %v5036, %v5035
      %v5042 = vpack.c.bf16 %v5038, %v5037
      %v5043 = vld [vmem:[%s13] sm:$0xff]
      %v5044 = vld [vmem:[%s13 + $0x8] sm:$0xff]
      %v5045 = vld [vmem:[%s13 + $0x10] sm:$0xff]
      %v5046 = vld [vmem:[%s13 + $0x18] sm:$0xff]
      %v5047 = vld [vmem:[%s13 + $0x20] sm:$0xff]
      %v5048 = vld [vmem:[%s13 + $0x28] sm:$0xff]
      %v5049 = vld [vmem:[%s13 + $0x30] sm:$0xff]
      %v5050 = vld [vmem:[%s13 + $0x38] sm:$0xff]
      %v5051 = vld [vmem:[%s13 + $0x40] sm:$0xff]
      %v5052 = vld [vmem:[%s13 + $0x48] sm:$0xff]
      %v5053 = vld [vmem:[%s13 + $0x50] sm:$0xff]
      %v5054 = vld [vmem:[%s13 + $0x58] sm:$0xff]
      %v5055 = vld [vmem:[%s13 + $0x60] sm:$0xff]
      %v5056 = vld [vmem:[%s13 + $0x68] sm:$0xff]
      %v5057 = vld [vmem:[%s13 + $0x70] sm:$0xff]
      %v5058 = vld [vmem:[%s13 + $0x78] sm:$0xff]
      %v5075 = vunpack.c.l.b16 %v5043
      %v5076 = vunpack.c.h.b16 %v5043
      %v5077 = vunpack.c.l.b16 %v5044
      %v5078 = vunpack.c.h.b16 %v5044
      %v5079 = vunpack.c.l.b16 %v5045
      %v5080 = vunpack.c.h.b16 %v5045
      %v5081 = vunpack.c.l.b16 %v5046
      %v5082 = vunpack.c.h.b16 %v5046
      %v5083 = vunpack.c.l.b16 %v5047
      %v5084 = vunpack.c.h.b16 %v5047
      %v5085 = vunpack.c.l.b16 %v5048
      %v5086 = vunpack.c.h.b16 %v5048
      %v5087 = vunpack.c.l.b16 %v5049
      %v5088 = vunpack.c.h.b16 %v5049
      %v5089 = vunpack.c.l.b16 %v5050
      %v5090 = vunpack.c.h.b16 %v5050
      %v5091 = vunpack.c.l.b16 %v5051
      %v5092 = vunpack.c.h.b16 %v5051
      %v5093 = vunpack.c.l.b16 %v5052
      %v5094 = vunpack.c.h.b16 %v5052
      %v5095 = vunpack.c.l.b16 %v5053
      %v5096 = vunpack.c.h.b16 %v5053
      %v5097 = vunpack.c.l.b16 %v5054
      %v5098 = vunpack.c.h.b16 %v5054
      %v5099 = vunpack.c.l.b16 %v5055
      %v5100 = vunpack.c.h.b16 %v5055
      %v5101 = vunpack.c.l.b16 %v5056
      %v5102 = vunpack.c.h.b16 %v5056
      %v5103 = vunpack.c.l.b16 %v5057
      %v5104 = vunpack.c.h.b16 %v5057
      %v5105 = vunpack.c.l.b16 %v5058
      %v5106 = vunpack.c.h.b16 %v5058
      %v5107 = vpack.c.b16 %v5077, %v5075
      %v5108 = vpack.c.b16 %v5078, %v5076
      %v5109 = vpack.c.b16 %v5081, %v5079
      %v5110 = vpack.c.b16 %v5082, %v5080
      %v5111 = vpack.c.b16 %v5085, %v5083
      %v5112 = vpack.c.b16 %v5086, %v5084
      %v5113 = vpack.c.b16 %v5089, %v5087
      %v5114 = vpack.c.b16 %v5090, %v5088
      %v5115 = vpack.c.b16 %v5093, %v5091
      %v5116 = vpack.c.b16 %v5094, %v5092
      %v5117 = vpack.c.b16 %v5097, %v5095
      %v5118 = vpack.c.b16 %v5098, %v5096
      %v5119 = vpack.c.b16 %v5101, %v5099
      %v5120 = vpack.c.b16 %v5102, %v5100
      %v5121 = vpack.c.b16 %v5105, %v5103
      %v5122 = vpack.c.b16 %v5106, %v5104
      %5139 = vmatprep.subr.bf16.mxu0 %v5122
      %5140 = vmatpush1.bf16.msra.mxu0 %v5121
      %5141 = vmatprep.subr.bf16.mxu0 %v5120
      %5142 = vmatpush1.bf16.msra.mxu0 %v5119
      %5143 = vmatprep.subr.bf16.mxu0 %v5118
      %5144 = vmatpush1.bf16.msra.mxu0 %v5117
      %5145 = vmatprep.subr.bf16.mxu0 %v5116
      %5146 = vmatpush1.bf16.msra.mxu0 %v5115
      %5147 = vmatprep.subr.bf16.mxu0 %v5114
      %5148 = vmatpush1.bf16.msra.mxu0 %v5113
      %5149 = vmatprep.subr.bf16.mxu0 %v5112
      %5150 = vmatpush1.bf16.msra.mxu0 %v5111
      %5151 = vmatprep.subr.bf16.mxu0 %v5110
      %5152 = vmatpush1.bf16.msra.mxu0 %v5109
      %5153 = vmatprep.subr.bf16.mxu0 %v5108
      %5154 = vmatpush1.bf16.msra.mxu0 %v5107
      %5155 = vmatprep.subr.bf16.mxu0 0
      %5156 = vmatpush2.bf16.msra.mxu0 0
      %5157 = vmatprep.subr.bf16.mxu0 0
      %5158 = vmatpush2.bf16.msra.mxu0 0
      %5159 = vmatprep.subr.bf16.mxu0 0
      %5160 = vmatpush2.bf16.msra.mxu0 0
      %5161 = vmatprep.subr.bf16.mxu0 0
      %5162 = vmatpush2.bf16.msra.mxu0 0
      %5163 = vmatprep.subr.bf16.mxu0 0
      %5164 = vmatpush2.bf16.msra.mxu0 0
      %5165 = vmatprep.subr.bf16.mxu0 0
      %5166 = vmatpush2.bf16.msra.mxu0 0
      %5167 = vmatprep.subr.bf16.mxu0 0
      %5168 = vmatpush2.bf16.msra.mxu0 0
      %5169 = vmatprep.subr.bf16.mxu0 0
      %5170 = vmatpush2.bf16.msra.mxu0 0
      %5171 = vmatprep.mubr.bf16.mxu0 0
      %5172 = vmatmul.mubr.bf16.gmra.mxu0 %v5039
      %v5173 = vpop.f32.mrf.mxu0
      %v5174 = vadd.f32 0.0, %v5173
      %v5175 = vpop.f32.mrf.mxu0
      %v5176 = vadd.f32 0.0, %v5175
      %v5177 = vpop.f32.mrf.mxu0
      %v5178 = vadd.f32 0.0, %v5177
      %v5179 = vpop.f32.mrf.mxu0
      %v5180 = vadd.f32 0.0, %v5179
      %5181 = vmatprep.mubr.bf16.mxu0 0
      %5182 = vmatmul.mubr.bf16.gmra.mxu0 %v5040
      %v5183 = vpop.f32.mrf.mxu0
      %v5184 = vadd.f32 0.0, %v5183
      %v5185 = vpop.f32.mrf.mxu0
      %v5186 = vadd.f32 0.0, %v5185
      %v5187 = vpop.f32.mrf.mxu0
      %v5188 = vadd.f32 0.0, %v5187
      %v5189 = vpop.f32.mrf.mxu0
      %v5190 = vadd.f32 0.0, %v5189
      %5191 = vmatprep.mubr.bf16.mxu0 0
      %5192 = vmatmul.mubr.bf16.gmra.mxu0 %v5041
      %v5193 = vpop.f32.mrf.mxu0
      %v5194 = vadd.f32 0.0, %v5193
      %v5195 = vpop.f32.mrf.mxu0
      %v5196 = vadd.f32 0.0, %v5195
      %v5197 = vpop.f32.mrf.mxu0
      %v5198 = vadd.f32 0.0, %v5197
      %v5199 = vpop.f32.mrf.mxu0
      %v5200 = vadd.f32 0.0, %v5199
      %5201 = vmatprep.mubr.bf16.mxu0 0
      %5202 = vmatmul.mubr.bf16.gmra.mxu0 %v5042
      %v5203 = vpop.f32.mrf.mxu0
      %v5204 = vadd.f32 0.0, %v5203
      %v5205 = vpop.f32.mrf.mxu0
      %v5206 = vadd.f32 0.0, %v5205
      %v5207 = vpop.f32.mrf.mxu0
      %v5208 = vadd.f32 0.0, %v5207
      %v5209 = vpop.f32.mrf.mxu0
      %v5210 = vadd.f32 0.0, %v5209
      %5211 = vdwg.mxu0
      %v5212 = vadd.f32 %v5024, %v5174
      %v5213 = vadd.f32 %v5028, %v5176
      %v5214 = vadd.f32 %v5024, %v5178
      %v5215 = vadd.f32 %v5028, %v5180
      %v5216 = vadd.f32 %v5024, %v5184
      %v5217 = vadd.f32 %v5028, %v5186
      %v5218 = vadd.f32 %v5024, %v5188
      %v5219 = vadd.f32 %v5028, %v5190
      %v5220 = vadd.f32 %v5024, %v5194
      %v5221 = vadd.f32 %v5028, %v5196
      %v5222 = vadd.f32 %v5024, %v5198
      %v5223 = vadd.f32 %v5028, %v5200
      %v5224 = vadd.f32 %v5024, %v5204
      %v5225 = vadd.f32 %v5028, %v5206
      %v5226 = vadd.f32 %v5024, %v5208
      %v5227 = vadd.f32 %v5028, %v5210
      %v5228 = vld [vmem:[#allocation4 + $0x1] sm:$0xff]
      %v5229 = vld [vmem:[#allocation4 + $0x11] sm:$0xff]
      %v5230 = vld [vmem:[#allocation4 + $0x21] sm:$0xff]
      %v5231 = vld [vmem:[#allocation4 + $0x31] sm:$0xff]
      %v5232 = vld [vmem:[#allocation4 + $0x41] sm:$0xff]
      %v5233 = vld [vmem:[#allocation4 + $0x51] sm:$0xff]
      %v5234 = vld [vmem:[#allocation4 + $0x61] sm:$0xff]
      %v5235 = vld [vmem:[#allocation4 + $0x71] sm:$0xff]
      %v5236 = vpack.c.bf16 %v5229, %v5228
      %v5237 = vpack.c.bf16 %v5231, %v5230
      %v5238 = vpack.c.bf16 %v5233, %v5232
      %v5239 = vpack.c.bf16 %v5235, %v5234
      %s5240 = scalar_lea.vmem %s13, 128
      %v5241 = vld [vmem:[%s5240] sm:$0xff]
      %v5242 = vld [vmem:[%s5240 + $0x8] sm:$0xff]
      %v5243 = vld [vmem:[%s5240 + $0x10] sm:$0xff]
      %v5244 = vld [vmem:[%s5240 + $0x18] sm:$0xff]
      %v5245 = vld [vmem:[%s5240 + $0x20] sm:$0xff]
      %v5246 = vld [vmem:[%s5240 + $0x28] sm:$0xff]
      %v5247 = vld [vmem:[%s5240 + $0x30] sm:$0xff]
      %v5248 = vld [vmem:[%s5240 + $0x38] sm:$0xff]
      %v5249 = vld [vmem:[%s5240 + $0x40] sm:$0xff]
      %v5250 = vld [vmem:[%s5240 + $0x48] sm:$0xff]
      %v5251 = vld [vmem:[%s5240 + $0x50] sm:$0xff]
      %v5252 = vld [vmem:[%s5240 + $0x58] sm:$0xff]
      %v5253 = vld [vmem:[%s5240 + $0x60] sm:$0xff]
      %v5254 = vld [vmem:[%s5240 + $0x68] sm:$0xff]
      %v5255 = vld [vmem:[%s5240 + $0x70] sm:$0xff]
      %v5256 = vld [vmem:[%s5240 + $0x78] sm:$0xff]
      %v5273 = vunpack.c.l.b16 %v5241
      %v5274 = vunpack.c.h.b16 %v5241
      %v5275 = vunpack.c.l.b16 %v5242
      %v5276 = vunpack.c.h.b16 %v5242
      %v5277 = vunpack.c.l.b16 %v5243
      %v5278 = vunpack.c.h.b16 %v5243
      %v5279 = vunpack.c.l.b16 %v5244
      %v5280 = vunpack.c.h.b16 %v5244
      %v5281 = vunpack.c.l.b16 %v5245
      %v5282 = vunpack.c.h.b16 %v5245
      %v5283 = vunpack.c.l.b16 %v5246
      %v5284 = vunpack.c.h.b16 %v5246
      %v5285 = vunpack.c.l.b16 %v5247
      %v5286 = vunpack.c.h.b16 %v5247
      %v5287 = vunpack.c.l.b16 %v5248
      %v5288 = vunpack.c.h.b16 %v5248
      %v5289 = vunpack.c.l.b16 %v5249
      %v5290 = vunpack.c.h.b16 %v5249
      %v5291 = vunpack.c.l.b16 %v5250
      %v5292 = vunpack.c.h.b16 %v5250
      %v5293 = vunpack.c.l.b16 %v5251
      %v5294 = vunpack.c.h.b16 %v5251
      %v5295 = vunpack.c.l.b16 %v5252
      %v5296 = vunpack.c.h.b16 %v5252
      %v5297 = vunpack.c.l.b16 %v5253
      %v5298 = vunpack.c.h.b16 %v5253
      %v5299 = vunpack.c.l.b16 %v5254
      %v5300 = vunpack.c.h.b16 %v5254
      %v5301 = vunpack.c.l.b16 %v5255
      %v5302 = vunpack.c.h.b16 %v5255
      %v5303 = vunpack.c.l.b16 %v5256
      %v5304 = vunpack.c.h.b16 %v5256
      %v5305 = vpack.c.b16 %v5275, %v5273
      %v5306 = vpack.c.b16 %v5276, %v5274
      %v5307 = vpack.c.b16 %v5279, %v5277
      %v5308 = vpack.c.b16 %v5280, %v5278
      %v5309 = vpack.c.b16 %v5283, %v5281
      %v5310 = vpack.c.b16 %v5284, %v5282
      %v5311 = vpack.c.b16 %v5287, %v5285
      %v5312 = vpack.c.b16 %v5288, %v5286
      %v5313 = vpack.c.b16 %v5291, %v5289
      %v5314 = vpack.c.b16 %v5292, %v5290
      %v5315 = vpack.c.b16 %v5295, %v5293
      %v5316 = vpack.c.b16 %v5296, %v5294
      %v5317 = vpack.c.b16 %v5299, %v5297
      %v5318 = vpack.c.b16 %v5300, %v5298
      %v5319 = vpack.c.b16 %v5303, %v5301
      %v5320 = vpack.c.b16 %v5304, %v5302
      %5337 = vmatprep.subr.bf16.mxu0 %v5320
      %5338 = vmatpush1.bf16.msra.mxu0 %v5319
      %5339 = vmatprep.subr.bf16.mxu0 %v5318
      %5340 = vmatpush1.bf16.msra.mxu0 %v5317
      %5341 = vmatprep.subr.bf16.mxu0 %v5316
      %5342 = vmatpush1.bf16.msra.mxu0 %v5315
      %5343 = vmatprep.subr.bf16.mxu0 %v5314
      %5344 = vmatpush1.bf16.msra.mxu0 %v5313
      %5345 = vmatprep.subr.bf16.mxu0 %v5312
      %5346 = vmatpush1.bf16.msra.mxu0 %v5311
      %5347 = vmatprep.subr.bf16.mxu0 %v5310
      %5348 = vmatpush1.bf16.msra.mxu0 %v5309
      %5349 = vmatprep.subr.bf16.mxu0 %v5308
      %5350 = vmatpush1.bf16.msra.mxu0 %v5307
      %5351 = vmatprep.subr.bf16.mxu0 %v5306
      %5352 = vmatpush1.bf16.msra.mxu0 %v5305
      %5353 = vmatprep.subr.bf16.mxu0 0
      %5354 = vmatpush2.bf16.msra.mxu0 0
      %5355 = vmatprep.subr.bf16.mxu0 0
      %5356 = vmatpush2.bf16.msra.mxu0 0
      %5357 = vmatprep.subr.bf16.mxu0 0
      %5358 = vmatpush2.bf16.msra.mxu0 0
      %5359 = vmatprep.subr.bf16.mxu0 0
      %5360 = vmatpush2.bf16.msra.mxu0 0
      %5361 = vmatprep.subr.bf16.mxu0 0
      %5362 = vmatpush2.bf16.msra.mxu0 0
      %5363 = vmatprep.subr.bf16.mxu0 0
      %5364 = vmatpush2.bf16.msra.mxu0 0
      %5365 = vmatprep.subr.bf16.mxu0 0
      %5366 = vmatpush2.bf16.msra.mxu0 0
      %5367 = vmatprep.subr.bf16.mxu0 0
      %5368 = vmatpush2.bf16.msra.mxu0 0
      %5369 = vmatprep.mubr.bf16.mxu0 0
      %5370 = vmatmul.mubr.bf16.gmra.mxu0 %v5236
      %v5371 = vpop.f32.mrf.mxu0
      %v5372 = vadd.f32 0.0, %v5371
      %v5373 = vpop.f32.mrf.mxu0
      %v5374 = vadd.f32 0.0, %v5373
      %v5375 = vpop.f32.mrf.mxu0
      %v5376 = vadd.f32 0.0, %v5375
      %v5377 = vpop.f32.mrf.mxu0
      %v5378 = vadd.f32 0.0, %v5377
      %5379 = vmatprep.mubr.bf16.mxu0 0
      %5380 = vmatmul.mubr.bf16.gmra.mxu0 %v5237
      %v5381 = vpop.f32.mrf.mxu0
      %v5382 = vadd.f32 0.0, %v5381
      %v5383 = vpop.f32.mrf.mxu0
      %v5384 = vadd.f32 0.0, %v5383
      %v5385 = vpop.f32.mrf.mxu0
      %v5386 = vadd.f32 0.0, %v5385
      %v5387 = vpop.f32.mrf.mxu0
      %v5388 = vadd.f32 0.0, %v5387
      %5389 = vmatprep.mubr.bf16.mxu0 0
      %5390 = vmatmul.mubr.bf16.gmra.mxu0 %v5238
      %v5391 = vpop.f32.mrf.mxu0
      %v5392 = vadd.f32 0.0, %v5391
      %v5393 = vpop.f32.mrf.mxu0
      %v5394 = vadd.f32 0.0, %v5393
      %v5395 = vpop.f32.mrf.mxu0
      %v5396 = vadd.f32 0.0, %v5395
      %v5397 = vpop.f32.mrf.mxu0
      %v5398 = vadd.f32 0.0, %v5397
      %5399 = vmatprep.mubr.bf16.mxu0 0
      %5400 = vmatmul.mubr.bf16.gmra.mxu0 %v5239
      %v5401 = vpop.f32.mrf.mxu0
      %v5402 = vadd.f32 0.0, %v5401
      %v5403 = vpop.f32.mrf.mxu0
      %v5404 = vadd.f32 0.0, %v5403
      %v5405 = vpop.f32.mrf.mxu0
      %v5406 = vadd.f32 0.0, %v5405
      %v5407 = vpop.f32.mrf.mxu0
      %v5408 = vadd.f32 0.0, %v5407
      %5409 = vdwg.mxu0
      %v5410 = vadd.f32 %v5212, %v5372
      %v5411 = vadd.f32 %v5213, %v5374
      %v5412 = vadd.f32 %v5214, %v5376
      %v5413 = vadd.f32 %v5215, %v5378
      %v5414 = vadd.f32 %v5216, %v5382
      %v5415 = vadd.f32 %v5217, %v5384
      %v5416 = vadd.f32 %v5218, %v5386
      %v5417 = vadd.f32 %v5219, %v5388
      %v5418 = vadd.f32 %v5220, %v5392
      %v5419 = vadd.f32 %v5221, %v5394
      %v5420 = vadd.f32 %v5222, %v5396
      %v5421 = vadd.f32 %v5223, %v5398
      %v5422 = vadd.f32 %v5224, %v5402
      %v5423 = vadd.f32 %v5225, %v5404
      %v5424 = vadd.f32 %v5226, %v5406
      %v5425 = vadd.f32 %v5227, %v5408
      %v5426 = vld [vmem:[#allocation4 + $0x2] sm:$0xff]
      %v5427 = vld [vmem:[#allocation4 + $0x12] sm:$0xff]
      %v5428 = vld [vmem:[#allocation4 + $0x22] sm:$0xff]
      %v5429 = vld [vmem:[#allocation4 + $0x32] sm:$0xff]
      %v5430 = vld [vmem:[#allocation4 + $0x42] sm:$0xff]
      %v5431 = vld [vmem:[#allocation4 + $0x52] sm:$0xff]
      %v5432 = vld [vmem:[#allocation4 + $0x62] sm:$0xff]
      %v5433 = vld [vmem:[#allocation4 + $0x72] sm:$0xff]
      %v5434 = vpack.c.bf16 %v5427, %v5426
      %v5435 = vpack.c.bf16 %v5429, %v5428
      %v5436 = vpack.c.bf16 %v5431, %v5430
      %v5437 = vpack.c.bf16 %v5433, %v5432
      %s5438 = scalar_lea.vmem %s13, 256
      %v5439 = vld [vmem:[%s5438] sm:$0xff]
      %v5440 = vld [vmem:[%s5438 + $0x8] sm:$0xff]
      %v5441 = vld [vmem:[%s5438 + $0x10] sm:$0xff]
      %v5442 = vld [vmem:[%s5438 + $0x18] sm:$0xff]
      %v5443 = vld [vmem:[%s5438 + $0x20] sm:$0xff]
      %v5444 = vld [vmem:[%s5438 + $0x28] sm:$0xff]
      %v5445 = vld [vmem:[%s5438 + $0x30] sm:$0xff]
      %v5446 = vld [vmem:[%s5438 + $0x38] sm:$0xff]
      %v5447 = vld [vmem:[%s5438 + $0x40] sm:$0xff]
      %v5448 = vld [vmem:[%s5438 + $0x48] sm:$0xff]
      %v5449 = vld [vmem:[%s5438 + $0x50] sm:$0xff]
      %v5450 = vld [vmem:[%s5438 + $0x58] sm:$0xff]
      %v5451 = vld [vmem:[%s5438 + $0x60] sm:$0xff]
      %v5452 = vld [vmem:[%s5438 + $0x68] sm:$0xff]
      %v5453 = vld [vmem:[%s5438 + $0x70] sm:$0xff]
      %v5454 = vld [vmem:[%s5438 + $0x78] sm:$0xff]
      %v5471 = vunpack.c.l.b16 %v5439
      %v5472 = vunpack.c.h.b16 %v5439
      %v5473 = vunpack.c.l.b16 %v5440
      %v5474 = vunpack.c.h.b16 %v5440
      %v5475 = vunpack.c.l.b16 %v5441
      %v5476 = vunpack.c.h.b16 %v5441
      %v5477 = vunpack.c.l.b16 %v5442
      %v5478 = vunpack.c.h.b16 %v5442
      %v5479 = vunpack.c.l.b16 %v5443
      %v5480 = vunpack.c.h.b16 %v5443
      %v5481 = vunpack.c.l.b16 %v5444
      %v5482 = vunpack.c.h.b16 %v5444
      %v5483 = vunpack.c.l.b16 %v5445
      %v5484 = vunpack.c.h.b16 %v5445
      %v5485 = vunpack.c.l.b16 %v5446
      %v5486 = vunpack.c.h.b16 %v5446
      %v5487 = vunpack.c.l.b16 %v5447
      %v5488 = vunpack.c.h.b16 %v5447
      %v5489 = vunpack.c.l.b16 %v5448
      %v5490 = vunpack.c.h.b16 %v5448
      %v5491 = vunpack.c.l.b16 %v5449
      %v5492 = vunpack.c.h.b16 %v5449
      %v5493 = vunpack.c.l.b16 %v5450
      %v5494 = vunpack.c.h.b16 %v5450
      %v5495 = vunpack.c.l.b16 %v5451
      %v5496 = vunpack.c.h.b16 %v5451
      %v5497 = vunpack.c.l.b16 %v5452
      %v5498 = vunpack.c.h.b16 %v5452
      %v5499 = vunpack.c.l.b16 %v5453
      %v5500 = vunpack.c.h.b16 %v5453
      %v5501 = vunpack.c.l.b16 %v5454
      %v5502 = vunpack.c.h.b16 %v5454
      %v5503 = vpack.c.b16 %v5473, %v5471
      %v5504 = vpack.c.b16 %v5474, %v5472
      %v5505 = vpack.c.b16 %v5477, %v5475
      %v5506 = vpack.c.b16 %v5478, %v5476
      %v5507 = vpack.c.b16 %v5481, %v5479
      %v5508 = vpack.c.b16 %v5482, %v5480
      %v5509 = vpack.c.b16 %v5485, %v5483
      %v5510 = vpack.c.b16 %v5486, %v5484
      %v5511 = vpack.c.b16 %v5489, %v5487
      %v5512 = vpack.c.b16 %v5490, %v5488
      %v5513 = vpack.c.b16 %v5493, %v5491
      %v5514 = vpack.c.b16 %v5494, %v5492
      %v5515 = vpack.c.b16 %v5497, %v5495
      %v5516 = vpack.c.b16 %v5498, %v5496
      %v5517 = vpack.c.b16 %v5501, %v5499
      %v5518 = vpack.c.b16 %v5502, %v5500
      %5535 = vmatprep.subr.bf16.mxu0 %v5518
      %5536 = vmatpush1.bf16.msra.mxu0 %v5517
      %5537 = vmatprep.subr.bf16.mxu0 %v5516
      %5538 = vmatpush1.bf16.msra.mxu0 %v5515
      %5539 = vmatprep.subr.bf16.mxu0 %v5514
      %5540 = vmatpush1.bf16.msra.mxu0 %v5513
      %5541 = vmatprep.subr.bf16.mxu0 %v5512
      %5542 = vmatpush1.bf16.msra.mxu0 %v5511
      %5543 = vmatprep.subr.bf16.mxu0 %v5510
      %5544 = vmatpush1.bf16.msra.mxu0 %v5509
      %5545 = vmatprep.subr.bf16.mxu0 %v5508
      %5546 = vmatpush1.bf16.msra.mxu0 %v5507
      %5547 = vmatprep.subr.bf16.mxu0 %v5506
      %5548 = vmatpush1.bf16.msra.mxu0 %v5505
      %5549 = vmatprep.subr.bf16.mxu0 %v5504
      %5550 = vmatpush1.bf16.msra.mxu0 %v5503
      %5551 = vmatprep.subr.bf16.mxu0 0
      %5552 = vmatpush2.bf16.msra.mxu0 0
      %5553 = vmatprep.subr.bf16.mxu0 0
      %5554 = vmatpush2.bf16.msra.mxu0 0
      %5555 = vmatprep.subr.bf16.mxu0 0
      %5556 = vmatpush2.bf16.msra.mxu0 0
      %5557 = vmatprep.subr.bf16.mxu0 0
      %5558 = vmatpush2.bf16.msra.mxu0 0
      %5559 = vmatprep.subr.bf16.mxu0 0
      %5560 = vmatpush2.bf16.msra.mxu0 0
      %5561 = vmatprep.subr.bf16.mxu0 0
      %5562 = vmatpush2.bf16.msra.mxu0 0
      %5563 = vmatprep.subr.bf16.mxu0 0
      %5564 = vmatpush2.bf16.msra.mxu0 0
      %5565 = vmatprep.subr.bf16.mxu0 0
      %5566 = vmatpush2.bf16.msra.mxu0 0
      %5567 = vmatprep.mubr.bf16.mxu0 0
      %5568 = vmatmul.mubr.bf16.gmra.mxu0 %v5434
      %v5569 = vpop.f32.mrf.mxu0
      %v5570 = vadd.f32 0.0, %v5569
      %v5571 = vpop.f32.mrf.mxu0
      %v5572 = vadd.f32 0.0, %v5571
      %v5573 = vpop.f32.mrf.mxu0
      %v5574 = vadd.f32 0.0, %v5573
      %v5575 = vpop.f32.mrf.mxu0
      %v5576 = vadd.f32 0.0, %v5575
      %5577 = vmatprep.mubr.bf16.mxu0 0
      %5578 = vmatmul.mubr.bf16.gmra.mxu0 %v5435
      %v5579 = vpop.f32.mrf.mxu0
      %v5580 = vadd.f32 0.0, %v5579
      %v5581 = vpop.f32.mrf.mxu0
      %v5582 = vadd.f32 0.0, %v5581
      %v5583 = vpop.f32.mrf.mxu0
      %v5584 = vadd.f32 0.0, %v5583
      %v5585 = vpop.f32.mrf.mxu0
      %v5586 = vadd.f32 0.0, %v5585
      %5587 = vmatprep.mubr.bf16.mxu0 0
      %5588 = vmatmul.mubr.bf16.gmra.mxu0 %v5436
      %v5589 = vpop.f32.mrf.mxu0
      %v5590 = vadd.f32 0.0, %v5589
      %v5591 = vpop.f32.mrf.mxu0
      %v5592 = vadd.f32 0.0, %v5591
      %v5593 = vpop.f32.mrf.mxu0
      %v5594 = vadd.f32 0.0, %v5593
      %v5595 = vpop.f32.mrf.mxu0
      %v5596 = vadd.f32 0.0, %v5595
      %5597 = vmatprep.mubr.bf16.mxu0 0
      %5598 = vmatmul.mubr.bf16.gmra.mxu0 %v5437
      %v5599 = vpop.f32.mrf.mxu0
      %v5600 = vadd.f32 0.0, %v5599
      %v5601 = vpop.f32.mrf.mxu0
      %v5602 = vadd.f32 0.0, %v5601
      %v5603 = vpop.f32.mrf.mxu0
      %v5604 = vadd.f32 0.0, %v5603
      %v5605 = vpop.f32.mrf.mxu0
      %v5606 = vadd.f32 0.0, %v5605
      %5607 = vdwg.mxu0
      %v5608 = vadd.f32 %v5410, %v5570
      %v5609 = vadd.f32 %v5411, %v5572
      %v5610 = vadd.f32 %v5412, %v5574
      %v5611 = vadd.f32 %v5413, %v5576
      %v5612 = vadd.f32 %v5414, %v5580
      %v5613 = vadd.f32 %v5415, %v5582
      %v5614 = vadd.f32 %v5416, %v5584
      %v5615 = vadd.f32 %v5417, %v5586
      %v5616 = vadd.f32 %v5418, %v5590
      %v5617 = vadd.f32 %v5419, %v5592
      %v5618 = vadd.f32 %v5420, %v5594
      %v5619 = vadd.f32 %v5421, %v5596
      %v5620 = vadd.f32 %v5422, %v5600
      %v5621 = vadd.f32 %v5423, %v5602
      %v5622 = vadd.f32 %v5424, %v5604
      %v5623 = vadd.f32 %v5425, %v5606
      %v5624 = vld [vmem:[%s5010] sm:$0xff]
      %v5625 = vld [vmem:[%s5010 + $0x10] sm:$0xff]
      %v5626 = vld [vmem:[%s5010 + $0x20] sm:$0xff]
      %v5627 = vld [vmem:[%s5010 + $0x30] sm:$0xff]
      %v5628 = vld [vmem:[%s5010 + $0x40] sm:$0xff]
      %v5629 = vld [vmem:[%s5010 + $0x50] sm:$0xff]
      %v5630 = vld [vmem:[%s5010 + $0x60] sm:$0xff]
      %v5631 = vld [vmem:[%s5010 + $0x70] sm:$0xff]
      %v5632 = vpack.c.bf16 %v5625, %v5624
      %v5633 = vpack.c.bf16 %v5627, %v5626
      %v5634 = vpack.c.bf16 %v5629, %v5628
      %v5635 = vpack.c.bf16 %v5631, %v5630
      %s5636 = scalar_lea.vmem %s13, 384
      %v5637 = vld [vmem:[%s5636] sm:$0xff]
      %v5638 = vld [vmem:[%s5636 + $0x8] sm:$0xff]
      %v5639 = vld [vmem:[%s5636 + $0x10] sm:$0xff]
      %v5640 = vld [vmem:[%s5636 + $0x18] sm:$0xff]
      %v5641 = vld [vmem:[%s5636 + $0x20] sm:$0xff]
      %v5642 = vld [vmem:[%s5636 + $0x28] sm:$0xff]
      %v5643 = vld [vmem:[%s5636 + $0x30] sm:$0xff]
      %v5644 = vld [vmem:[%s5636 + $0x38] sm:$0xff]
      %v5645 = vld [vmem:[%s5636 + $0x40] sm:$0xff]
      %v5646 = vld [vmem:[%s5636 + $0x48] sm:$0xff]
      %v5647 = vld [vmem:[%s5636 + $0x50] sm:$0xff]
      %v5648 = vld [vmem:[%s5636 + $0x58] sm:$0xff]
      %v5649 = vld [vmem:[%s5636 + $0x60] sm:$0xff]
      %v5650 = vld [vmem:[%s5636 + $0x68] sm:$0xff]
      %v5651 = vld [vmem:[%s5636 + $0x70] sm:$0xff]
      %v5652 = vld [vmem:[%s5636 + $0x78] sm:$0xff]
      %v5669 = vunpack.c.l.b16 %v5637
      %v5670 = vunpack.c.h.b16 %v5637
      %v5671 = vunpack.c.l.b16 %v5638
      %v5672 = vunpack.c.h.b16 %v5638
      %v5673 = vunpack.c.l.b16 %v5639
      %v5674 = vunpack.c.h.b16 %v5639
      %v5675 = vunpack.c.l.b16 %v5640
      %v5676 = vunpack.c.h.b16 %v5640
      %v5677 = vunpack.c.l.b16 %v5641
      %v5678 = vunpack.c.h.b16 %v5641
      %v5679 = vunpack.c.l.b16 %v5642
      %v5680 = vunpack.c.h.b16 %v5642
      %v5681 = vunpack.c.l.b16 %v5643
      %v5682 = vunpack.c.h.b16 %v5643
      %v5683 = vunpack.c.l.b16 %v5644
      %v5684 = vunpack.c.h.b16 %v5644
      %v5685 = vunpack.c.l.b16 %v5645
      %v5686 = vunpack.c.h.b16 %v5645
      %v5687 = vunpack.c.l.b16 %v5646
      %v5688 = vunpack.c.h.b16 %v5646
      %v5689 = vunpack.c.l.b16 %v5647
      %v5690 = vunpack.c.h.b16 %v5647
      %v5691 = vunpack.c.l.b16 %v5648
      %v5692 = vunpack.c.h.b16 %v5648
      %v5693 = vunpack.c.l.b16 %v5649
      %v5694 = vunpack.c.h.b16 %v5649
      %v5695 = vunpack.c.l.b16 %v5650
      %v5696 = vunpack.c.h.b16 %v5650
      %v5697 = vunpack.c.l.b16 %v5651
      %v5698 = vunpack.c.h.b16 %v5651
      %v5699 = vunpack.c.l.b16 %v5652
      %v5700 = vunpack.c.h.b16 %v5652
      %v5701 = vpack.c.b16 %v5671, %v5669
      %v5702 = vpack.c.b16 %v5672, %v5670
      %v5703 = vpack.c.b16 %v5675, %v5673
      %v5704 = vpack.c.b16 %v5676, %v5674
      %v5705 = vpack.c.b16 %v5679, %v5677
      %v5706 = vpack.c.b16 %v5680, %v5678
      %v5707 = vpack.c.b16 %v5683, %v5681
      %v5708 = vpack.c.b16 %v5684, %v5682
      %v5709 = vpack.c.b16 %v5687, %v5685
      %v5710 = vpack.c.b16 %v5688, %v5686
      %v5711 = vpack.c.b16 %v5691, %v5689
      %v5712 = vpack.c.b16 %v5692, %v5690
      %v5713 = vpack.c.b16 %v5695, %v5693
      %v5714 = vpack.c.b16 %v5696, %v5694
      %v5715 = vpack.c.b16 %v5699, %v5697
      %v5716 = vpack.c.b16 %v5700, %v5698
      %5733 = vmatprep.subr.bf16.mxu0 %v5716
      %5734 = vmatpush1.bf16.msra.mxu0 %v5715
      %5735 = vmatprep.subr.bf16.mxu0 %v5714
      %5736 = vmatpush1.bf16.msra.mxu0 %v5713
      %5737 = vmatprep.subr.bf16.mxu0 %v5712
      %5738 = vmatpush1.bf16.msra.mxu0 %v5711
      %5739 = vmatprep.subr.bf16.mxu0 %v5710
      %5740 = vmatpush1.bf16.msra.mxu0 %v5709
      %5741 = vmatprep.subr.bf16.mxu0 %v5708
      %5742 = vmatpush1.bf16.msra.mxu0 %v5707
      %5743 = vmatprep.subr.bf16.mxu0 %v5706
      %5744 = vmatpush1.bf16.msra.mxu0 %v5705
      %5745 = vmatprep.subr.bf16.mxu0 %v5704
      %5746 = vmatpush1.bf16.msra.mxu0 %v5703
      %5747 = vmatprep.subr.bf16.mxu0 %v5702
      %5748 = vmatpush1.bf16.msra.mxu0 %v5701
      %5749 = vmatprep.subr.bf16.mxu0 0
      %5750 = vmatpush2.bf16.msra.mxu0 0
      %5751 = vmatprep.subr.bf16.mxu0 0
      %5752 = vmatpush2.bf16.msra.mxu0 0
      %5753 = vmatprep.subr.bf16.mxu0 0
      %5754 = vmatpush2.bf16.msra.mxu0 0
      %5755 = vmatprep.subr.bf16.mxu0 0
      %5756 = vmatpush2.bf16.msra.mxu0 0
      %5757 = vmatprep.subr.bf16.mxu0 0
      %5758 = vmatpush2.bf16.msra.mxu0 0
      %5759 = vmatprep.subr.bf16.mxu0 0
      %5760 = vmatpush2.bf16.msra.mxu0 0
      %5761 = vmatprep.subr.bf16.mxu0 0
      %5762 = vmatpush2.bf16.msra.mxu0 0
      %5763 = vmatprep.subr.bf16.mxu0 0
      %5764 = vmatpush2.bf16.msra.mxu0 0
      %5765 = vmatprep.mubr.bf16.mxu0 0
      %5766 = vmatmul.mubr.bf16.gmra.mxu0 %v5632
      %v5767 = vpop.f32.mrf.mxu0
      %v5768 = vadd.f32 0.0, %v5767
      %v5769 = vpop.f32.mrf.mxu0
      %v5770 = vadd.f32 0.0, %v5769
      %v5771 = vpop.f32.mrf.mxu0
      %v5772 = vadd.f32 0.0, %v5771
      %v5773 = vpop.f32.mrf.mxu0
      %v5774 = vadd.f32 0.0, %v5773
      %5775 = vmatprep.mubr.bf16.mxu0 0
      %5776 = vmatmul.mubr.bf16.gmra.mxu0 %v5633
      %v5777 = vpop.f32.mrf.mxu0
      %v5778 = vadd.f32 0.0, %v5777
      %v5779 = vpop.f32.mrf.mxu0
      %v5780 = vadd.f32 0.0, %v5779
      %v5781 = vpop.f32.mrf.mxu0
      %v5782 = vadd.f32 0.0, %v5781
      %v5783 = vpop.f32.mrf.mxu0
      %v5784 = vadd.f32 0.0, %v5783
      %5785 = vmatprep.mubr.bf16.mxu0 0
      %5786 = vmatmul.mubr.bf16.gmra.mxu0 %v5634
      %v5787 = vpop.f32.mrf.mxu0
      %v5788 = vadd.f32 0.0, %v5787
      %v5789 = vpop.f32.mrf.mxu0
      %v5790 = vadd.f32 0.0, %v5789
      %v5791 = vpop.f32.mrf.mxu0
      %v5792 = vadd.f32 0.0, %v5791
      %v5793 = vpop.f32.mrf.mxu0
      %v5794 = vadd.f32 0.0, %v5793
      %5795 = vmatprep.mubr.bf16.mxu0 0
      %5796 = vmatmul.mubr.bf16.gmra.mxu0 %v5635
      %v5797 = vpop.f32.mrf.mxu0
      %v5798 = vadd.f32 0.0, %v5797
      %v5799 = vpop.f32.mrf.mxu0
      %v5800 = vadd.f32 0.0, %v5799
      %v5801 = vpop.f32.mrf.mxu0
      %v5802 = vadd.f32 0.0, %v5801
      %v5803 = vpop.f32.mrf.mxu0
      %v5804 = vadd.f32 0.0, %v5803
      %5805 = vdwg.mxu0
      %v5806 = vadd.f32 %v5608, %v5768
      %v5807 = vadd.f32 %v5609, %v5770
      %v5808 = vadd.f32 %v5610, %v5772
      %v5809 = vadd.f32 %v5611, %v5774
      %v5810 = vadd.f32 %v5612, %v5778
      %v5811 = vadd.f32 %v5613, %v5780
      %v5812 = vadd.f32 %v5614, %v5782
      %v5813 = vadd.f32 %v5615, %v5784
      %v5814 = vadd.f32 %v5616, %v5788
      %v5815 = vadd.f32 %v5617, %v5790
      %v5816 = vadd.f32 %v5618, %v5792
      %v5817 = vadd.f32 %v5619, %v5794
      %v5818 = vadd.f32 %v5620, %v5798
      %v5819 = vadd.f32 %v5621, %v5800
      %v5820 = vadd.f32 %v5622, %v5802
      %v5821 = vadd.f32 %v5623, %v5804
      %v5822 = vld [vmem:[%s5010 + $0x1] sm:$0xff]
      %v5823 = vld [vmem:[%s5010 + $0x11] sm:$0xff]
      %v5824 = vld [vmem:[%s5010 + $0x21] sm:$0xff]
      %v5825 = vld [vmem:[%s5010 + $0x31] sm:$0xff]
      %v5826 = vld [vmem:[%s5010 + $0x41] sm:$0xff]
      %v5827 = vld [vmem:[%s5010 + $0x51] sm:$0xff]
      %v5828 = vld [vmem:[%s5010 + $0x61] sm:$0xff]
      %v5829 = vld [vmem:[%s5010 + $0x71] sm:$0xff]
      %v5830 = vpack.c.bf16 %v5823, %v5822
      %v5831 = vpack.c.bf16 %v5825, %v5824
      %v5832 = vpack.c.bf16 %v5827, %v5826
      %v5833 = vpack.c.bf16 %v5829, %v5828
      %s5834 = scalar_lea.vmem %s13, 512
      %v5835 = vld [vmem:[%s5834] sm:$0xff]
      %v5836 = vld [vmem:[%s5834 + $0x8] sm:$0xff]
      %v5837 = vld [vmem:[%s5834 + $0x10] sm:$0xff]
      %v5838 = vld [vmem:[%s5834 + $0x18] sm:$0xff]
      %v5839 = vld [vmem:[%s5834 + $0x20] sm:$0xff]
      %v5840 = vld [vmem:[%s5834 + $0x28] sm:$0xff]
      %v5841 = vld [vmem:[%s5834 + $0x30] sm:$0xff]
      %v5842 = vld [vmem:[%s5834 + $0x38] sm:$0xff]
      %v5843 = vld [vmem:[%s5834 + $0x40] sm:$0xff]
      %v5844 = vld [vmem:[%s5834 + $0x48] sm:$0xff]
      %v5845 = vld [vmem:[%s5834 + $0x50] sm:$0xff]
      %v5846 = vld [vmem:[%s5834 + $0x58] sm:$0xff]
      %v5847 = vld [vmem:[%s5834 + $0x60] sm:$0xff]
      %v5848 = vld [vmem:[%s5834 + $0x68] sm:$0xff]
      %v5849 = vld [vmem:[%s5834 + $0x70] sm:$0xff]
      %v5850 = vld [vmem:[%s5834 + $0x78] sm:$0xff]
      %v5867 = vunpack.c.l.b16 %v5835
      %v5868 = vunpack.c.h.b16 %v5835
      %v5869 = vunpack.c.l.b16 %v5836
      %v5870 = vunpack.c.h.b16 %v5836
      %v5871 = vunpack.c.l.b16 %v5837
      %v5872 = vunpack.c.h.b16 %v5837
      %v5873 = vunpack.c.l.b16 %v5838
      %v5874 = vunpack.c.h.b16 %v5838
      %v5875 = vunpack.c.l.b16 %v5839
      %v5876 = vunpack.c.h.b16 %v5839
      %v5877 = vunpack.c.l.b16 %v5840
      %v5878 = vunpack.c.h.b16 %v5840
      %v5879 = vunpack.c.l.b16 %v5841
      %v5880 = vunpack.c.h.b16 %v5841
      %v5881 = vunpack.c.l.b16 %v5842
      %v5882 = vunpack.c.h.b16 %v5842
      %v5883 = vunpack.c.l.b16 %v5843
      %v5884 = vunpack.c.h.b16 %v5843
      %v5885 = vunpack.c.l.b16 %v5844
      %v5886 = vunpack.c.h.b16 %v5844
      %v5887 = vunpack.c.l.b16 %v5845
      %v5888 = vunpack.c.h.b16 %v5845
      %v5889 = vunpack.c.l.b16 %v5846
      %v5890 = vunpack.c.h.b16 %v5846
      %v5891 = vunpack.c.l.b16 %v5847
      %v5892 = vunpack.c.h.b16 %v5847
      %v5893 = vunpack.c.l.b16 %v5848
      %v5894 = vunpack.c.h.b16 %v5848
      %v5895 = vunpack.c.l.b16 %v5849
      %v5896 = vunpack.c.h.b16 %v5849
      %v5897 = vunpack.c.l.b16 %v5850
      %v5898 = vunpack.c.h.b16 %v5850
      %v5899 = vpack.c.b16 %v5869, %v5867
      %v5900 = vpack.c.b16 %v5870, %v5868
      %v5901 = vpack.c.b16 %v5873, %v5871
      %v5902 = vpack.c.b16 %v5874, %v5872
      %v5903 = vpack.c.b16 %v5877, %v5875
      %v5904 = vpack.c.b16 %v5878, %v5876
      %v5905 = vpack.c.b16 %v5881, %v5879
      %v5906 = vpack.c.b16 %v5882, %v5880
      %v5907 = vpack.c.b16 %v5885, %v5883
      %v5908 = vpack.c.b16 %v5886, %v5884
      %v5909 = vpack.c.b16 %v5889, %v5887
      %v5910 = vpack.c.b16 %v5890, %v5888
      %v5911 = vpack.c.b16 %v5893, %v5891
      %v5912 = vpack.c.b16 %v5894, %v5892
      %v5913 = vpack.c.b16 %v5897, %v5895
      %v5914 = vpack.c.b16 %v5898, %v5896
      %5931 = vmatprep.subr.bf16.mxu0 %v5914
      %5932 = vmatpush1.bf16.msra.mxu0 %v5913
      %5933 = vmatprep.subr.bf16.mxu0 %v5912
      %5934 = vmatpush1.bf16.msra.mxu0 %v5911
      %5935 = vmatprep.subr.bf16.mxu0 %v5910
      %5936 = vmatpush1.bf16.msra.mxu0 %v5909
      %5937 = vmatprep.subr.bf16.mxu0 %v5908
      %5938 = vmatpush1.bf16.msra.mxu0 %v5907
      %5939 = vmatprep.subr.bf16.mxu0 %v5906
      %5940 = vmatpush1.bf16.msra.mxu0 %v5905
      %5941 = vmatprep.subr.bf16.mxu0 %v5904
      %5942 = vmatpush1.bf16.msra.mxu0 %v5903
      %5943 = vmatprep.subr.bf16.mxu0 %v5902
      %5944 = vmatpush1.bf16.msra.mxu0 %v5901
      %5945 = vmatprep.subr.bf16.mxu0 %v5900
      %5946 = vmatpush1.bf16.msra.mxu0 %v5899
      %5947 = vmatprep.subr.bf16.mxu0 0
      %5948 = vmatpush2.bf16.msra.mxu0 0
      %5949 = vmatprep.subr.bf16.mxu0 0
      %5950 = vmatpush2.bf16.msra.mxu0 0
      %5951 = vmatprep.subr.bf16.mxu0 0
      %5952 = vmatpush2.bf16.msra.mxu0 0
      %5953 = vmatprep.subr.bf16.mxu0 0
      %5954 = vmatpush2.bf16.msra.mxu0 0
      %5955 = vmatprep.subr.bf16.mxu0 0
      %5956 = vmatpush2.bf16.msra.mxu0 0
      %5957 = vmatprep.subr.bf16.mxu0 0
      %5958 = vmatpush2.bf16.msra.mxu0 0
      %5959 = vmatprep.subr.bf16.mxu0 0
      %5960 = vmatpush2.bf16.msra.mxu0 0
      %5961 = vmatprep.subr.bf16.mxu0 0
      %5962 = vmatpush2.bf16.msra.mxu0 0
      %5963 = vmatprep.mubr.bf16.mxu0 0
      %5964 = vmatmul.mubr.bf16.gmra.mxu0 %v5830
      %v5965 = vpop.f32.mrf.mxu0
      %v5966 = vadd.f32 0.0, %v5965
      %v5967 = vpop.f32.mrf.mxu0
      %v5968 = vadd.f32 0.0, %v5967
      %v5969 = vpop.f32.mrf.mxu0
      %v5970 = vadd.f32 0.0, %v5969
      %v5971 = vpop.f32.mrf.mxu0
      %v5972 = vadd.f32 0.0, %v5971
      %5973 = vmatprep.mubr.bf16.mxu0 0
      %5974 = vmatmul.mubr.bf16.gmra.mxu0 %v5831
      %v5975 = vpop.f32.mrf.mxu0
      %v5976 = vadd.f32 0.0, %v5975
      %v5977 = vpop.f32.mrf.mxu0
      %v5978 = vadd.f32 0.0, %v5977
      %v5979 = vpop.f32.mrf.mxu0
      %v5980 = vadd.f32 0.0, %v5979
      %v5981 = vpop.f32.mrf.mxu0
      %v5982 = vadd.f32 0.0, %v5981
      %5983 = vmatprep.mubr.bf16.mxu0 0
      %5984 = vmatmul.mubr.bf16.gmra.mxu0 %v5832
      %v5985 = vpop.f32.mrf.mxu0
      %v5986 = vadd.f32 0.0, %v5985
      %v5987 = vpop.f32.mrf.mxu0
      %v5988 = vadd.f32 0.0, %v5987
      %v5989 = vpop.f32.mrf.mxu0
      %v5990 = vadd.f32 0.0, %v5989
      %v5991 = vpop.f32.mrf.mxu0
      %v5992 = vadd.f32 0.0, %v5991
      %5993 = vmatprep.mubr.bf16.mxu0 0
      %5994 = vmatmul.mubr.bf16.gmra.mxu0 %v5833
      %v5995 = vpop.f32.mrf.mxu0
      %v5996 = vadd.f32 0.0, %v5995
      %v5997 = vpop.f32.mrf.mxu0
      %v5998 = vadd.f32 0.0, %v5997
      %v5999 = vpop.f32.mrf.mxu0
      %v6000 = vadd.f32 0.0, %v5999
      %v6001 = vpop.f32.mrf.mxu0
      %v6002 = vadd.f32 0.0, %v6001
      %6003 = vdwg.mxu0
      %v6004 = vadd.f32 %v5806, %v5966
      %v6005 = vadd.f32 %v5807, %v5968
      %v6006 = vadd.f32 %v5808, %v5970
      %v6007 = vadd.f32 %v5809, %v5972
      %v6008 = vadd.f32 %v5810, %v5976
      %v6009 = vadd.f32 %v5811, %v5978
      %v6010 = vadd.f32 %v5812, %v5980
      %v6011 = vadd.f32 %v5813, %v5982
      %v6012 = vadd.f32 %v5814, %v5986
      %v6013 = vadd.f32 %v5815, %v5988
      %v6014 = vadd.f32 %v5816, %v5990
      %v6015 = vadd.f32 %v5817, %v5992
      %v6016 = vadd.f32 %v5818, %v5996
      %v6017 = vadd.f32 %v5819, %v5998
      %v6018 = vadd.f32 %v5820, %v6000
      %v6019 = vadd.f32 %v5821, %v6002
      %v6020 = vld [vmem:[%s5010 + $0x2] sm:$0xff]
      %v6021 = vld [vmem:[%s5010 + $0x12] sm:$0xff]
      %v6022 = vld [vmem:[%s5010 + $0x22] sm:$0xff]
      %v6023 = vld [vmem:[%s5010 + $0x32] sm:$0xff]
      %v6024 = vld [vmem:[%s5010 + $0x42] sm:$0xff]
      %v6025 = vld [vmem:[%s5010 + $0x52] sm:$0xff]
      %v6026 = vld [vmem:[%s5010 + $0x62] sm:$0xff]
      %v6027 = vld [vmem:[%s5010 + $0x72] sm:$0xff]
      %v6028 = vpack.c.bf16 %v6021, %v6020
      %v6029 = vpack.c.bf16 %v6023, %v6022
      %v6030 = vpack.c.bf16 %v6025, %v6024
      %v6031 = vpack.c.bf16 %v6027, %v6026
      %s6032 = scalar_lea.vmem %s13, 640
      %v6033 = vld [vmem:[%s6032] sm:$0xff]
      %v6034 = vld [vmem:[%s6032 + $0x8] sm:$0xff]
      %v6035 = vld [vmem:[%s6032 + $0x10] sm:$0xff]
      %v6036 = vld [vmem:[%s6032 + $0x18] sm:$0xff]
      %v6037 = vld [vmem:[%s6032 + $0x20] sm:$0xff]
      %v6038 = vld [vmem:[%s6032 + $0x28] sm:$0xff]
      %v6039 = vld [vmem:[%s6032 + $0x30] sm:$0xff]
      %v6040 = vld [vmem:[%s6032 + $0x38] sm:$0xff]
      %v6041 = vld [vmem:[%s6032 + $0x40] sm:$0xff]
      %v6042 = vld [vmem:[%s6032 + $0x48] sm:$0xff]
      %v6043 = vld [vmem:[%s6032 + $0x50] sm:$0xff]
      %v6044 = vld [vmem:[%s6032 + $0x58] sm:$0xff]
      %v6045 = vld [vmem:[%s6032 + $0x60] sm:$0xff]
      %v6046 = vld [vmem:[%s6032 + $0x68] sm:$0xff]
      %v6047 = vld [vmem:[%s6032 + $0x70] sm:$0xff]
      %v6048 = vld [vmem:[%s6032 + $0x78] sm:$0xff]
      %v6065 = vunpack.c.l.b16 %v6033
      %v6066 = vunpack.c.h.b16 %v6033
      %v6067 = vunpack.c.l.b16 %v6034
      %v6068 = vunpack.c.h.b16 %v6034
      %v6069 = vunpack.c.l.b16 %v6035
      %v6070 = vunpack.c.h.b16 %v6035
      %v6071 = vunpack.c.l.b16 %v6036
      %v6072 = vunpack.c.h.b16 %v6036
      %v6073 = vunpack.c.l.b16 %v6037
      %v6074 = vunpack.c.h.b16 %v6037
      %v6075 = vunpack.c.l.b16 %v6038
      %v6076 = vunpack.c.h.b16 %v6038
      %v6077 = vunpack.c.l.b16 %v6039
      %v6078 = vunpack.c.h.b16 %v6039
      %v6079 = vunpack.c.l.b16 %v6040
      %v6080 = vunpack.c.h.b16 %v6040
      %v6081 = vunpack.c.l.b16 %v6041
      %v6082 = vunpack.c.h.b16 %v6041
      %v6083 = vunpack.c.l.b16 %v6042
      %v6084 = vunpack.c.h.b16 %v6042
      %v6085 = vunpack.c.l.b16 %v6043
      %v6086 = vunpack.c.h.b16 %v6043
      %v6087 = vunpack.c.l.b16 %v6044
      %v6088 = vunpack.c.h.b16 %v6044
      %v6089 = vunpack.c.l.b16 %v6045
      %v6090 = vunpack.c.h.b16 %v6045
      %v6091 = vunpack.c.l.b16 %v6046
      %v6092 = vunpack.c.h.b16 %v6046
      %v6093 = vunpack.c.l.b16 %v6047
      %v6094 = vunpack.c.h.b16 %v6047
      %v6095 = vunpack.c.l.b16 %v6048
      %v6096 = vunpack.c.h.b16 %v6048
      %v6097 = vpack.c.b16 %v6067, %v6065
      %v6098 = vpack.c.b16 %v6068, %v6066
      %v6099 = vpack.c.b16 %v6071, %v6069
      %v6100 = vpack.c.b16 %v6072, %v6070
      %v6101 = vpack.c.b16 %v6075, %v6073
      %v6102 = vpack.c.b16 %v6076, %v6074
      %v6103 = vpack.c.b16 %v6079, %v6077
      %v6104 = vpack.c.b16 %v6080, %v6078
      %v6105 = vpack.c.b16 %v6083, %v6081
      %v6106 = vpack.c.b16 %v6084, %v6082
      %v6107 = vpack.c.b16 %v6087, %v6085
      %v6108 = vpack.c.b16 %v6088, %v6086
      %v6109 = vpack.c.b16 %v6091, %v6089
      %v6110 = vpack.c.b16 %v6092, %v6090
      %v6111 = vpack.c.b16 %v6095, %v6093
      %v6112 = vpack.c.b16 %v6096, %v6094
      %6129 = vmatprep.subr.bf16.mxu0 %v6112
      %6130 = vmatpush1.bf16.msra.mxu0 %v6111
      %6131 = vmatprep.subr.bf16.mxu0 %v6110
      %6132 = vmatpush1.bf16.msra.mxu0 %v6109
      %6133 = vmatprep.subr.bf16.mxu0 %v6108
      %6134 = vmatpush1.bf16.msra.mxu0 %v6107
      %6135 = vmatprep.subr.bf16.mxu0 %v6106
      %6136 = vmatpush1.bf16.msra.mxu0 %v6105
      %6137 = vmatprep.subr.bf16.mxu0 %v6104
      %6138 = vmatpush1.bf16.msra.mxu0 %v6103
      %6139 = vmatprep.subr.bf16.mxu0 %v6102
      %6140 = vmatpush1.bf16.msra.mxu0 %v6101
      %6141 = vmatprep.subr.bf16.mxu0 %v6100
      %6142 = vmatpush1.bf16.msra.mxu0 %v6099
      %6143 = vmatprep.subr.bf16.mxu0 %v6098
      %6144 = vmatpush1.bf16.msra.mxu0 %v6097
      %6145 = vmatprep.subr.bf16.mxu0 0
      %6146 = vmatpush2.bf16.msra.mxu0 0
      %6147 = vmatprep.subr.bf16.mxu0 0
      %6148 = vmatpush2.bf16.msra.mxu0 0
      %6149 = vmatprep.subr.bf16.mxu0 0
      %6150 = vmatpush2.bf16.msra.mxu0 0
      %6151 = vmatprep.subr.bf16.mxu0 0
      %6152 = vmatpush2.bf16.msra.mxu0 0
      %6153 = vmatprep.subr.bf16.mxu0 0
      %6154 = vmatpush2.bf16.msra.mxu0 0
      %6155 = vmatprep.subr.bf16.mxu0 0
      %6156 = vmatpush2.bf16.msra.mxu0 0
      %6157 = vmatprep.subr.bf16.mxu0 0
      %6158 = vmatpush2.bf16.msra.mxu0 0
      %6159 = vmatprep.subr.bf16.mxu0 0
      %6160 = vmatpush2.bf16.msra.mxu0 0
      %6161 = vmatprep.mubr.bf16.mxu0 0
      %6162 = vmatmul.mubr.bf16.gmra.mxu0 %v6028
      %v6163 = vpop.f32.mrf.mxu0
      %v6164 = vadd.f32 0.0, %v6163
      %v6165 = vpop.f32.mrf.mxu0
      %v6166 = vadd.f32 0.0, %v6165
      %v6167 = vpop.f32.mrf.mxu0
      %v6168 = vadd.f32 0.0, %v6167
      %v6169 = vpop.f32.mrf.mxu0
      %v6170 = vadd.f32 0.0, %v6169
      %6171 = vmatprep.mubr.bf16.mxu0 0
      %6172 = vmatmul.mubr.bf16.gmra.mxu0 %v6029
      %v6173 = vpop.f32.mrf.mxu0
      %v6174 = vadd.f32 0.0, %v6173
      %v6175 = vpop.f32.mrf.mxu0
      %v6176 = vadd.f32 0.0, %v6175
      %v6177 = vpop.f32.mrf.mxu0
      %v6178 = vadd.f32 0.0, %v6177
      %v6179 = vpop.f32.mrf.mxu0
      %v6180 = vadd.f32 0.0, %v6179
      %6181 = vmatprep.mubr.bf16.mxu0 0
      %6182 = vmatmul.mubr.bf16.gmra.mxu0 %v6030
      %v6183 = vpop.f32.mrf.mxu0
      %v6184 = vadd.f32 0.0, %v6183
      %v6185 = vpop.f32.mrf.mxu0
      %v6186 = vadd.f32 0.0, %v6185
      %v6187 = vpop.f32.mrf.mxu0
      %v6188 = vadd.f32 0.0, %v6187
      %v6189 = vpop.f32.mrf.mxu0
      %v6190 = vadd.f32 0.0, %v6189
      %6191 = vmatprep.mubr.bf16.mxu0 0
      %6192 = vmatmul.mubr.bf16.gmra.mxu0 %v6031
      %v6193 = vpop.f32.mrf.mxu0
      %v6194 = vadd.f32 0.0, %v6193
      %v6195 = vpop.f32.mrf.mxu0
      %v6196 = vadd.f32 0.0, %v6195
      %v6197 = vpop.f32.mrf.mxu0
      %v6198 = vadd.f32 0.0, %v6197
      %v6199 = vpop.f32.mrf.mxu0
      %v6200 = vadd.f32 0.0, %v6199
      %6201 = vdwg.mxu0
      %v6202 = vadd.f32 %v6004, %v6164
      %v6203 = vadd.f32 %v6005, %v6166
      %v6204 = vadd.f32 %v6006, %v6168
      %v6205 = vadd.f32 %v6007, %v6170
      %v6206 = vadd.f32 %v6008, %v6174
      %v6207 = vadd.f32 %v6009, %v6176
      %v6208 = vadd.f32 %v6010, %v6178
      %v6209 = vadd.f32 %v6011, %v6180
      %v6210 = vadd.f32 %v6012, %v6184
      %v6211 = vadd.f32 %v6013, %v6186
      %v6212 = vadd.f32 %v6014, %v6188
      %v6213 = vadd.f32 %v6015, %v6190
      %v6214 = vadd.f32 %v6016, %v6194
      %v6215 = vadd.f32 %v6017, %v6196
      %v6216 = vadd.f32 %v6018, %v6198
      %v6217 = vadd.f32 %v6019, %v6200
      %s6218 = scalar_lea.vmem [#allocation4], 32
      %v6219 = vld [vmem:[%s6218] sm:$0xff]
      %v6220 = vld [vmem:[%s6218 + $0x10] sm:$0xff]
      %v6221 = vld [vmem:[%s6218 + $0x20] sm:$0xff]
      %v6222 = vld [vmem:[%s6218 + $0x30] sm:$0xff]
      %v6223 = vld [vmem:[%s6218 + $0x40] sm:$0xff]
      %v6224 = vld [vmem:[%s6218 + $0x50] sm:$0xff]
      %v6225 = vld [vmem:[%s6218 + $0x60] sm:$0xff]
      %v6226 = vld [vmem:[%s6218 + $0x70] sm:$0xff]
      %v6227 = vpack.c.bf16 %v6220, %v6219
      %v6228 = vpack.c.bf16 %v6222, %v6221
      %v6229 = vpack.c.bf16 %v6224, %v6223
      %v6230 = vpack.c.bf16 %v6226, %v6225
      %s6231 = scalar_lea.vmem %s13, 768
      %v6232 = vld [vmem:[%s6231] sm:$0xff]
      %v6233 = vld [vmem:[%s6231 + $0x8] sm:$0xff]
      %v6234 = vld [vmem:[%s6231 + $0x10] sm:$0xff]
      %v6235 = vld [vmem:[%s6231 + $0x18] sm:$0xff]
      %v6236 = vld [vmem:[%s6231 + $0x20] sm:$0xff]
      %v6237 = vld [vmem:[%s6231 + $0x28] sm:$0xff]
      %v6238 = vld [vmem:[%s6231 + $0x30] sm:$0xff]
      %v6239 = vld [vmem:[%s6231 + $0x38] sm:$0xff]
      %v6240 = vld [vmem:[%s6231 + $0x40] sm:$0xff]
      %v6241 = vld [vmem:[%s6231 + $0x48] sm:$0xff]
      %v6242 = vld [vmem:[%s6231 + $0x50] sm:$0xff]
      %v6243 = vld [vmem:[%s6231 + $0x58] sm:$0xff]
      %v6244 = vld [vmem:[%s6231 + $0x60] sm:$0xff]
      %v6245 = vld [vmem:[%s6231 + $0x68] sm:$0xff]
      %v6246 = vld [vmem:[%s6231 + $0x70] sm:$0xff]
      %v6247 = vld [vmem:[%s6231 + $0x78] sm:$0xff]
      %v6264 = vunpack.c.l.b16 %v6232
      %v6265 = vunpack.c.h.b16 %v6232
      %v6266 = vunpack.c.l.b16 %v6233
      %v6267 = vunpack.c.h.b16 %v6233
      %v6268 = vunpack.c.l.b16 %v6234
      %v6269 = vunpack.c.h.b16 %v6234
      %v6270 = vunpack.c.l.b16 %v6235
      %v6271 = vunpack.c.h.b16 %v6235
      %v6272 = vunpack.c.l.b16 %v6236
      %v6273 = vunpack.c.h.b16 %v6236
      %v6274 = vunpack.c.l.b16 %v6237
      %v6275 = vunpack.c.h.b16 %v6237
      %v6276 = vunpack.c.l.b16 %v6238
      %v6277 = vunpack.c.h.b16 %v6238
      %v6278 = vunpack.c.l.b16 %v6239
      %v6279 = vunpack.c.h.b16 %v6239
      %v6280 = vunpack.c.l.b16 %v6240
      %v6281 = vunpack.c.h.b16 %v6240
      %v6282 = vunpack.c.l.b16 %v6241
      %v6283 = vunpack.c.h.b16 %v6241
      %v6284 = vunpack.c.l.b16 %v6242
      %v6285 = vunpack.c.h.b16 %v6242
      %v6286 = vunpack.c.l.b16 %v6243
      %v6287 = vunpack.c.h.b16 %v6243
      %v6288 = vunpack.c.l.b16 %v6244
      %v6289 = vunpack.c.h.b16 %v6244
      %v6290 = vunpack.c.l.b16 %v6245
      %v6291 = vunpack.c.h.b16 %v6245
      %v6292 = vunpack.c.l.b16 %v6246
      %v6293 = vunpack.c.h.b16 %v6246
      %v6294 = vunpack.c.l.b16 %v6247
      %v6295 = vunpack.c.h.b16 %v6247
      %v6296 = vpack.c.b16 %v6266, %v6264
      %v6297 = vpack.c.b16 %v6267, %v6265
      %v6298 = vpack.c.b16 %v6270, %v6268
      %v6299 = vpack.c.b16 %v6271, %v6269
      %v6300 = vpack.c.b16 %v6274, %v6272
      %v6301 = vpack.c.b16 %v6275, %v6273
      %v6302 = vpack.c.b16 %v6278, %v6276
      %v6303 = vpack.c.b16 %v6279, %v6277
      %v6304 = vpack.c.b16 %v6282, %v6280
      %v6305 = vpack.c.b16 %v6283, %v6281
      %v6306 = vpack.c.b16 %v6286, %v6284
      %v6307 = vpack.c.b16 %v6287, %v6285
      %v6308 = vpack.c.b16 %v6290, %v6288
      %v6309 = vpack.c.b16 %v6291, %v6289
      %v6310 = vpack.c.b16 %v6294, %v6292
      %v6311 = vpack.c.b16 %v6295, %v6293
      %6328 = vmatprep.subr.bf16.mxu0 %v6311
      %6329 = vmatpush1.bf16.msra.mxu0 %v6310
      %6330 = vmatprep.subr.bf16.mxu0 %v6309
      %6331 = vmatpush1.bf16.msra.mxu0 %v6308
      %6332 = vmatprep.subr.bf16.mxu0 %v6307
      %6333 = vmatpush1.bf16.msra.mxu0 %v6306
      %6334 = vmatprep.subr.bf16.mxu0 %v6305
      %6335 = vmatpush1.bf16.msra.mxu0 %v6304
      %6336 = vmatprep.subr.bf16.mxu0 %v6303
      %6337 = vmatpush1.bf16.msra.mxu0 %v6302
      %6338 = vmatprep.subr.bf16.mxu0 %v6301
      %6339 = vmatpush1.bf16.msra.mxu0 %v6300
      %6340 = vmatprep.subr.bf16.mxu0 %v6299
      %6341 = vmatpush1.bf16.msra.mxu0 %v6298
      %6342 = vmatprep.subr.bf16.mxu0 %v6297
      %6343 = vmatpush1.bf16.msra.mxu0 %v6296
      %6344 = vmatprep.subr.bf16.mxu0 0
      %6345 = vmatpush2.bf16.msra.mxu0 0
      %6346 = vmatprep.subr.bf16.mxu0 0
      %6347 = vmatpush2.bf16.msra.mxu0 0
      %6348 = vmatprep.subr.bf16.mxu0 0
      %6349 = vmatpush2.bf16.msra.mxu0 0
      %6350 = vmatprep.subr.bf16.mxu0 0
      %6351 = vmatpush2.bf16.msra.mxu0 0
      %6352 = vmatprep.subr.bf16.mxu0 0
      %6353 = vmatpush2.bf16.msra.mxu0 0
      %6354 = vmatprep.subr.bf16.mxu0 0
      %6355 = vmatpush2.bf16.msra.mxu0 0
      %6356 = vmatprep.subr.bf16.mxu0 0
      %6357 = vmatpush2.bf16.msra.mxu0 0
      %6358 = vmatprep.subr.bf16.mxu0 0
      %6359 = vmatpush2.bf16.msra.mxu0 0
      %6360 = vmatprep.mubr.bf16.mxu0 0
      %6361 = vmatmul.mubr.bf16.gmra.mxu0 %v6227
      %v6362 = vpop.f32.mrf.mxu0
      %v6363 = vadd.f32 0.0, %v6362
      %v6364 = vpop.f32.mrf.mxu0
      %v6365 = vadd.f32 0.0, %v6364
      %v6366 = vpop.f32.mrf.mxu0
      %v6367 = vadd.f32 0.0, %v6366
      %v6368 = vpop.f32.mrf.mxu0
      %v6369 = vadd.f32 0.0, %v6368
      %6370 = vmatprep.mubr.bf16.mxu0 0
      %6371 = vmatmul.mubr.bf16.gmra.mxu0 %v6228
      %v6372 = vpop.f32.mrf.mxu0
      %v6373 = vadd.f32 0.0, %v6372
      %v6374 = vpop.f32.mrf.mxu0
      %v6375 = vadd.f32 0.0, %v6374
      %v6376 = vpop.f32.mrf.mxu0
      %v6377 = vadd.f32 0.0, %v6376
      %v6378 = vpop.f32.mrf.mxu0
      %v6379 = vadd.f32 0.0, %v6378
      %6380 = vmatprep.mubr.bf16.mxu0 0
      %6381 = vmatmul.mubr.bf16.gmra.mxu0 %v6229
      %v6382 = vpop.f32.mrf.mxu0
      %v6383 = vadd.f32 0.0, %v6382
      %v6384 = vpop.f32.mrf.mxu0
      %v6385 = vadd.f32 0.0, %v6384
      %v6386 = vpop.f32.mrf.mxu0
      %v6387 = vadd.f32 0.0, %v6386
      %v6388 = vpop.f32.mrf.mxu0
      %v6389 = vadd.f32 0.0, %v6388
      %6390 = vmatprep.mubr.bf16.mxu0 0
      %6391 = vmatmul.mubr.bf16.gmra.mxu0 %v6230
      %v6392 = vpop.f32.mrf.mxu0
      %v6393 = vadd.f32 0.0, %v6392
      %v6394 = vpop.f32.mrf.mxu0
      %v6395 = vadd.f32 0.0, %v6394
      %v6396 = vpop.f32.mrf.mxu0
      %v6397 = vadd.f32 0.0, %v6396
      %v6398 = vpop.f32.mrf.mxu0
      %v6399 = vadd.f32 0.0, %v6398
      %6400 = vdwg.mxu0
      %v6401 = vadd.f32 %v6202, %v6363
      %v6402 = vadd.f32 %v6203, %v6365
      %v6403 = vadd.f32 %v6204, %v6367
      %v6404 = vadd.f32 %v6205, %v6369
      %v6405 = vadd.f32 %v6206, %v6373
      %v6406 = vadd.f32 %v6207, %v6375
      %v6407 = vadd.f32 %v6208, %v6377
      %v6408 = vadd.f32 %v6209, %v6379
      %v6409 = vadd.f32 %v6210, %v6383
      %v6410 = vadd.f32 %v6211, %v6385
      %v6411 = vadd.f32 %v6212, %v6387
      %v6412 = vadd.f32 %v6213, %v6389
      %v6413 = vadd.f32 %v6214, %v6393
      %v6414 = vadd.f32 %v6215, %v6395
      %v6415 = vadd.f32 %v6216, %v6397
      %v6416 = vadd.f32 %v6217, %v6399
      %v6417 = vld [vmem:[%s6218 + $0x1] sm:$0xff]
      %v6418 = vld [vmem:[%s6218 + $0x11] sm:$0xff]
      %v6419 = vld [vmem:[%s6218 + $0x21] sm:$0xff]
      %v6420 = vld [vmem:[%s6218 + $0x31] sm:$0xff]
      %v6421 = vld [vmem:[%s6218 + $0x41] sm:$0xff]
      %v6422 = vld [vmem:[%s6218 + $0x51] sm:$0xff]
      %v6423 = vld [vmem:[%s6218 + $0x61] sm:$0xff]
      %v6424 = vld [vmem:[%s6218 + $0x71] sm:$0xff]
      %v6425 = vpack.c.bf16 %v6418, %v6417
      %v6426 = vpack.c.bf16 %v6420, %v6419
      %v6427 = vpack.c.bf16 %v6422, %v6421
      %v6428 = vpack.c.bf16 %v6424, %v6423
      %s6429 = scalar_lea.vmem %s13, 896
      %v6430 = vld [vmem:[%s6429] sm:$0xff]
      %v6431 = vld [vmem:[%s6429 + $0x8] sm:$0xff]
      %v6432 = vld [vmem:[%s6429 + $0x10] sm:$0xff]
      %v6433 = vld [vmem:[%s6429 + $0x18] sm:$0xff]
      %v6434 = vld [vmem:[%s6429 + $0x20] sm:$0xff]
      %v6435 = vld [vmem:[%s6429 + $0x28] sm:$0xff]
      %v6436 = vld [vmem:[%s6429 + $0x30] sm:$0xff]
      %v6437 = vld [vmem:[%s6429 + $0x38] sm:$0xff]
      %v6438 = vld [vmem:[%s6429 + $0x40] sm:$0xff]
      %v6439 = vld [vmem:[%s6429 + $0x48] sm:$0xff]
      %v6440 = vld [vmem:[%s6429 + $0x50] sm:$0xff]
      %v6441 = vld [vmem:[%s6429 + $0x58] sm:$0xff]
      %v6442 = vld [vmem:[%s6429 + $0x60] sm:$0xff]
      %v6443 = vld [vmem:[%s6429 + $0x68] sm:$0xff]
      %v6444 = vld [vmem:[%s6429 + $0x70] sm:$0xff]
      %v6445 = vld [vmem:[%s6429 + $0x78] sm:$0xff]
      %v6462 = vunpack.c.l.b16 %v6430
      %v6463 = vunpack.c.h.b16 %v6430
      %v6464 = vunpack.c.l.b16 %v6431
      %v6465 = vunpack.c.h.b16 %v6431
      %v6466 = vunpack.c.l.b16 %v6432
      %v6467 = vunpack.c.h.b16 %v6432
      %v6468 = vunpack.c.l.b16 %v6433
      %v6469 = vunpack.c.h.b16 %v6433
      %v6470 = vunpack.c.l.b16 %v6434
      %v6471 = vunpack.c.h.b16 %v6434
      %v6472 = vunpack.c.l.b16 %v6435
      %v6473 = vunpack.c.h.b16 %v6435
      %v6474 = vunpack.c.l.b16 %v6436
      %v6475 = vunpack.c.h.b16 %v6436
      %v6476 = vunpack.c.l.b16 %v6437
      %v6477 = vunpack.c.h.b16 %v6437
      %v6478 = vunpack.c.l.b16 %v6438
      %v6479 = vunpack.c.h.b16 %v6438
      %v6480 = vunpack.c.l.b16 %v6439
      %v6481 = vunpack.c.h.b16 %v6439
      %v6482 = vunpack.c.l.b16 %v6440
      %v6483 = vunpack.c.h.b16 %v6440
      %v6484 = vunpack.c.l.b16 %v6441
      %v6485 = vunpack.c.h.b16 %v6441
      %v6486 = vunpack.c.l.b16 %v6442
      %v6487 = vunpack.c.h.b16 %v6442
      %v6488 = vunpack.c.l.b16 %v6443
      %v6489 = vunpack.c.h.b16 %v6443
      %v6490 = vunpack.c.l.b16 %v6444
      %v6491 = vunpack.c.h.b16 %v6444
      %v6492 = vunpack.c.l.b16 %v6445
      %v6493 = vunpack.c.h.b16 %v6445
      %v6494 = vpack.c.b16 %v6464, %v6462
      %v6495 = vpack.c.b16 %v6465, %v6463
      %v6496 = vpack.c.b16 %v6468, %v6466
      %v6497 = vpack.c.b16 %v6469, %v6467
      %v6498 = vpack.c.b16 %v6472, %v6470
      %v6499 = vpack.c.b16 %v6473, %v6471
      %v6500 = vpack.c.b16 %v6476, %v6474
      %v6501 = vpack.c.b16 %v6477, %v6475
      %v6502 = vpack.c.b16 %v6480, %v6478
      %v6503 = vpack.c.b16 %v6481, %v6479
      %v6504 = vpack.c.b16 %v6484, %v6482
      %v6505 = vpack.c.b16 %v6485, %v6483
      %v6506 = vpack.c.b16 %v6488, %v6486
      %v6507 = vpack.c.b16 %v6489, %v6487
      %v6508 = vpack.c.b16 %v6492, %v6490
      %v6509 = vpack.c.b16 %v6493, %v6491
      %6526 = vmatprep.subr.bf16.mxu0 %v6509
      %6527 = vmatpush1.bf16.msra.mxu0 %v6508
      %6528 = vmatprep.subr.bf16.mxu0 %v6507
      %6529 = vmatpush1.bf16.msra.mxu0 %v6506
      %6530 = vmatprep.subr.bf16.mxu0 %v6505
      %6531 = vmatpush1.bf16.msra.mxu0 %v6504
      %6532 = vmatprep.subr.bf16.mxu0 %v6503
      %6533 = vmatpush1.bf16.msra.mxu0 %v6502
      %6534 = vmatprep.subr.bf16.mxu0 %v6501
      %6535 = vmatpush1.bf16.msra.mxu0 %v6500
      %6536 = vmatprep.subr.bf16.mxu0 %v6499
      %6537 = vmatpush1.bf16.msra.mxu0 %v6498
      %6538 = vmatprep.subr.bf16.mxu0 %v6497
      %6539 = vmatpush1.bf16.msra.mxu0 %v6496
      %6540 = vmatprep.subr.bf16.mxu0 %v6495
      %6541 = vmatpush1.bf16.msra.mxu0 %v6494
      %6542 = vmatprep.subr.bf16.mxu0 0
      %6543 = vmatpush2.bf16.msra.mxu0 0
      %6544 = vmatprep.subr.bf16.mxu0 0
      %6545 = vmatpush2.bf16.msra.mxu0 0
      %6546 = vmatprep.subr.bf16.mxu0 0
      %6547 = vmatpush2.bf16.msra.mxu0 0
      %6548 = vmatprep.subr.bf16.mxu0 0
      %6549 = vmatpush2.bf16.msra.mxu0 0
      %6550 = vmatprep.subr.bf16.mxu0 0
      %6551 = vmatpush2.bf16.msra.mxu0 0
      %6552 = vmatprep.subr.bf16.mxu0 0
      %6553 = vmatpush2.bf16.msra.mxu0 0
      %6554 = vmatprep.subr.bf16.mxu0 0
      %6555 = vmatpush2.bf16.msra.mxu0 0
      %6556 = vmatprep.subr.bf16.mxu0 0
      %6557 = vmatpush2.bf16.msra.mxu0 0
      %6558 = vmatprep.mubr.bf16.mxu0 0
      %6559 = vmatmul.mubr.bf16.gmra.mxu0 %v6425
      %v6560 = vpop.f32.mrf.mxu0
      %v6561 = vadd.f32 0.0, %v6560
      %v6562 = vpop.f32.mrf.mxu0
      %v6563 = vadd.f32 0.0, %v6562
      %v6564 = vpop.f32.mrf.mxu0
      %v6565 = vadd.f32 0.0, %v6564
      %v6566 = vpop.f32.mrf.mxu0
      %v6567 = vadd.f32 0.0, %v6566
      %6568 = vmatprep.mubr.bf16.mxu0 0
      %6569 = vmatmul.mubr.bf16.gmra.mxu0 %v6426
      %v6570 = vpop.f32.mrf.mxu0
      %v6571 = vadd.f32 0.0, %v6570
      %v6572 = vpop.f32.mrf.mxu0
      %v6573 = vadd.f32 0.0, %v6572
      %v6574 = vpop.f32.mrf.mxu0
      %v6575 = vadd.f32 0.0, %v6574
      %v6576 = vpop.f32.mrf.mxu0
      %v6577 = vadd.f32 0.0, %v6576
      %6578 = vmatprep.mubr.bf16.mxu0 0
      %6579 = vmatmul.mubr.bf16.gmra.mxu0 %v6427
      %v6580 = vpop.f32.mrf.mxu0
      %v6581 = vadd.f32 0.0, %v6580
      %v6582 = vpop.f32.mrf.mxu0
      %v6583 = vadd.f32 0.0, %v6582
      %v6584 = vpop.f32.mrf.mxu0
      %v6585 = vadd.f32 0.0, %v6584
      %v6586 = vpop.f32.mrf.mxu0
      %v6587 = vadd.f32 0.0, %v6586
      %6588 = vmatprep.mubr.bf16.mxu0 0
      %6589 = vmatmul.mubr.bf16.gmra.mxu0 %v6428
      %v6590 = vpop.f32.mrf.mxu0
      %v6591 = vadd.f32 0.0, %v6590
      %v6592 = vpop.f32.mrf.mxu0
      %v6593 = vadd.f32 0.0, %v6592
      %v6594 = vpop.f32.mrf.mxu0
      %v6595 = vadd.f32 0.0, %v6594
      %v6596 = vpop.f32.mrf.mxu0
      %v6597 = vadd.f32 0.0, %v6596
      %6598 = vdwg.mxu0
      %v6599 = vadd.f32 %v6401, %v6561
      %v6600 = vadd.f32 %v6402, %v6563
      %v6601 = vadd.f32 %v6403, %v6565
      %v6602 = vadd.f32 %v6404, %v6567
      %v6603 = vadd.f32 %v6405, %v6571
      %v6604 = vadd.f32 %v6406, %v6573
      %v6605 = vadd.f32 %v6407, %v6575
      %v6606 = vadd.f32 %v6408, %v6577
      %v6607 = vadd.f32 %v6409, %v6581
      %v6608 = vadd.f32 %v6410, %v6583
      %v6609 = vadd.f32 %v6411, %v6585
      %v6610 = vadd.f32 %v6412, %v6587
      %v6611 = vadd.f32 %v6413, %v6591
      %v6612 = vadd.f32 %v6414, %v6593
      %v6613 = vadd.f32 %v6415, %v6595
      %v6614 = vadd.f32 %v6416, %v6597
      %v6615 = vld [vmem:[%s6218 + $0x2] sm:$0xff]
      %v6616 = vld [vmem:[%s6218 + $0x12] sm:$0xff]
      %v6617 = vld [vmem:[%s6218 + $0x22] sm:$0xff]
      %v6618 = vld [vmem:[%s6218 + $0x32] sm:$0xff]
      %v6619 = vld [vmem:[%s6218 + $0x42] sm:$0xff]
      %v6620 = vld [vmem:[%s6218 + $0x52] sm:$0xff]
      %v6621 = vld [vmem:[%s6218 + $0x62] sm:$0xff]
      %v6622 = vld [vmem:[%s6218 + $0x72] sm:$0xff]
      %v6623 = vpack.c.bf16 %v6616, %v6615
      %v6624 = vpack.c.bf16 %v6618, %v6617
      %v6625 = vpack.c.bf16 %v6620, %v6619
      %v6626 = vpack.c.bf16 %v6622, %v6621
      %s6627 = scalar_lea.vmem %s13, 1024
      %v6628 = vld [vmem:[%s6627] sm:$0xff]
      %v6629 = vld [vmem:[%s6627 + $0x8] sm:$0xff]
      %v6630 = vld [vmem:[%s6627 + $0x10] sm:$0xff]
      %v6631 = vld [vmem:[%s6627 + $0x18] sm:$0xff]
      %v6632 = vld [vmem:[%s6627 + $0x20] sm:$0xff]
      %v6633 = vld [vmem:[%s6627 + $0x28] sm:$0xff]
      %v6634 = vld [vmem:[%s6627 + $0x30] sm:$0xff]
      %v6635 = vld [vmem:[%s6627 + $0x38] sm:$0xff]
      %v6636 = vld [vmem:[%s6627 + $0x40] sm:$0xff]
      %v6637 = vld [vmem:[%s6627 + $0x48] sm:$0xff]
      %v6638 = vld [vmem:[%s6627 + $0x50] sm:$0xff]
      %v6639 = vld [vmem:[%s6627 + $0x58] sm:$0xff]
      %v6640 = vld [vmem:[%s6627 + $0x60] sm:$0xff]
      %v6641 = vld [vmem:[%s6627 + $0x68] sm:$0xff]
      %v6642 = vld [vmem:[%s6627 + $0x70] sm:$0xff]
      %v6643 = vld [vmem:[%s6627 + $0x78] sm:$0xff]
      %v6660 = vunpack.c.l.b16 %v6628
      %v6661 = vunpack.c.h.b16 %v6628
      %v6662 = vunpack.c.l.b16 %v6629
      %v6663 = vunpack.c.h.b16 %v6629
      %v6664 = vunpack.c.l.b16 %v6630
      %v6665 = vunpack.c.h.b16 %v6630
      %v6666 = vunpack.c.l.b16 %v6631
      %v6667 = vunpack.c.h.b16 %v6631
      %v6668 = vunpack.c.l.b16 %v6632
      %v6669 = vunpack.c.h.b16 %v6632
      %v6670 = vunpack.c.l.b16 %v6633
      %v6671 = vunpack.c.h.b16 %v6633
      %v6672 = vunpack.c.l.b16 %v6634
      %v6673 = vunpack.c.h.b16 %v6634
      %v6674 = vunpack.c.l.b16 %v6635
      %v6675 = vunpack.c.h.b16 %v6635
      %v6676 = vunpack.c.l.b16 %v6636
      %v6677 = vunpack.c.h.b16 %v6636
      %v6678 = vunpack.c.l.b16 %v6637
      %v6679 = vunpack.c.h.b16 %v6637
      %v6680 = vunpack.c.l.b16 %v6638
      %v6681 = vunpack.c.h.b16 %v6638
      %v6682 = vunpack.c.l.b16 %v6639
      %v6683 = vunpack.c.h.b16 %v6639
      %v6684 = vunpack.c.l.b16 %v6640
      %v6685 = vunpack.c.h.b16 %v6640
      %v6686 = vunpack.c.l.b16 %v6641
      %v6687 = vunpack.c.h.b16 %v6641
      %v6688 = vunpack.c.l.b16 %v6642
      %v6689 = vunpack.c.h.b16 %v6642
      %v6690 = vunpack.c.l.b16 %v6643
      %v6691 = vunpack.c.h.b16 %v6643
      %v6692 = vpack.c.b16 %v6662, %v6660
      %v6693 = vpack.c.b16 %v6663, %v6661
      %v6694 = vpack.c.b16 %v6666, %v6664
      %v6695 = vpack.c.b16 %v6667, %v6665
      %v6696 = vpack.c.b16 %v6670, %v6668
      %v6697 = vpack.c.b16 %v6671, %v6669
      %v6698 = vpack.c.b16 %v6674, %v6672
      %v6699 = vpack.c.b16 %v6675, %v6673
      %v6700 = vpack.c.b16 %v6678, %v6676
      %v6701 = vpack.c.b16 %v6679, %v6677
      %v6702 = vpack.c.b16 %v6682, %v6680
      %v6703 = vpack.c.b16 %v6683, %v6681
      %v6704 = vpack.c.b16 %v6686, %v6684
      %v6705 = vpack.c.b16 %v6687, %v6685
      %v6706 = vpack.c.b16 %v6690, %v6688
      %v6707 = vpack.c.b16 %v6691, %v6689
      %6724 = vmatprep.subr.bf16.mxu0 %v6707
      %6725 = vmatpush1.bf16.msra.mxu0 %v6706
      %6726 = vmatprep.subr.bf16.mxu0 %v6705
      %6727 = vmatpush1.bf16.msra.mxu0 %v6704
      %6728 = vmatprep.subr.bf16.mxu0 %v6703
      %6729 = vmatpush1.bf16.msra.mxu0 %v6702
      %6730 = vmatprep.subr.bf16.mxu0 %v6701
      %6731 = vmatpush1.bf16.msra.mxu0 %v6700
      %6732 = vmatprep.subr.bf16.mxu0 %v6699
      %6733 = vmatpush1.bf16.msra.mxu0 %v6698
      %6734 = vmatprep.subr.bf16.mxu0 %v6697
      %6735 = vmatpush1.bf16.msra.mxu0 %v6696
      %6736 = vmatprep.subr.bf16.mxu0 %v6695
      %6737 = vmatpush1.bf16.msra.mxu0 %v6694
      %6738 = vmatprep.subr.bf16.mxu0 %v6693
      %6739 = vmatpush1.bf16.msra.mxu0 %v6692
      %6740 = vmatprep.subr.bf16.mxu0 0
      %6741 = vmatpush2.bf16.msra.mxu0 0
      %6742 = vmatprep.subr.bf16.mxu0 0
      %6743 = vmatpush2.bf16.msra.mxu0 0
      %6744 = vmatprep.subr.bf16.mxu0 0
      %6745 = vmatpush2.bf16.msra.mxu0 0
      %6746 = vmatprep.subr.bf16.mxu0 0
      %6747 = vmatpush2.bf16.msra.mxu0 0
      %6748 = vmatprep.subr.bf16.mxu0 0
      %6749 = vmatpush2.bf16.msra.mxu0 0
      %6750 = vmatprep.subr.bf16.mxu0 0
      %6751 = vmatpush2.bf16.msra.mxu0 0
      %6752 = vmatprep.subr.bf16.mxu0 0
      %6753 = vmatpush2.bf16.msra.mxu0 0
      %6754 = vmatprep.subr.bf16.mxu0 0
      %6755 = vmatpush2.bf16.msra.mxu0 0
      %6756 = vmatprep.mubr.bf16.mxu0 0
      %6757 = vmatmul.mubr.bf16.gmra.mxu0 %v6623
      %v6758 = vpop.f32.mrf.mxu0
      %v6759 = vadd.f32 0.0, %v6758
      %v6760 = vpop.f32.mrf.mxu0
      %v6761 = vadd.f32 0.0, %v6760
      %v6762 = vpop.f32.mrf.mxu0
      %v6763 = vadd.f32 0.0, %v6762
      %v6764 = vpop.f32.mrf.mxu0
      %v6765 = vadd.f32 0.0, %v6764
      %6766 = vmatprep.mubr.bf16.mxu0 0
      %6767 = vmatmul.mubr.bf16.gmra.mxu0 %v6624
      %v6768 = vpop.f32.mrf.mxu0
      %v6769 = vadd.f32 0.0, %v6768
      %v6770 = vpop.f32.mrf.mxu0
      %v6771 = vadd.f32 0.0, %v6770
      %v6772 = vpop.f32.mrf.mxu0
      %v6773 = vadd.f32 0.0, %v6772
      %v6774 = vpop.f32.mrf.mxu0
      %v6775 = vadd.f32 0.0, %v6774
      %6776 = vmatprep.mubr.bf16.mxu0 0
      %6777 = vmatmul.mubr.bf16.gmra.mxu0 %v6625
      %v6778 = vpop.f32.mrf.mxu0
      %v6779 = vadd.f32 0.0, %v6778
      %v6780 = vpop.f32.mrf.mxu0
      %v6781 = vadd.f32 0.0, %v6780
      %v6782 = vpop.f32.mrf.mxu0
      %v6783 = vadd.f32 0.0, %v6782
      %v6784 = vpop.f32.mrf.mxu0
      %v6785 = vadd.f32 0.0, %v6784
      %6786 = vmatprep.mubr.bf16.mxu0 0
      %6787 = vmatmul.mubr.bf16.gmra.mxu0 %v6626
      %v6788 = vpop.f32.mrf.mxu0
      %v6789 = vadd.f32 0.0, %v6788
      %v6790 = vpop.f32.mrf.mxu0
      %v6791 = vadd.f32 0.0, %v6790
      %v6792 = vpop.f32.mrf.mxu0
      %v6793 = vadd.f32 0.0, %v6792
      %v6794 = vpop.f32.mrf.mxu0
      %v6795 = vadd.f32 0.0, %v6794
      %6796 = vdwg.mxu0
      %v6797 = vadd.f32 %v6599, %v6759
      %v6798 = vadd.f32 %v6600, %v6761
      %v6799 = vadd.f32 %v6601, %v6763
      %v6800 = vadd.f32 %v6602, %v6765
      %v6801 = vadd.f32 %v6603, %v6769
      %v6802 = vadd.f32 %v6604, %v6771
      %v6803 = vadd.f32 %v6605, %v6773
      %v6804 = vadd.f32 %v6606, %v6775
      %v6805 = vadd.f32 %v6607, %v6779
      %v6806 = vadd.f32 %v6608, %v6781
      %v6807 = vadd.f32 %v6609, %v6783
      %v6808 = vadd.f32 %v6610, %v6785
      %v6809 = vadd.f32 %v6611, %v6789
      %v6810 = vadd.f32 %v6612, %v6791
      %v6811 = vadd.f32 %v6613, %v6793
      %v6812 = vadd.f32 %v6614, %v6795
      %v6813 = vmax.f32 %v6797, 0.0
      %v6814 = vmax.f32 %v6798, 0.0
      %v6815 = vmax.f32 %v6799, 0.0
      %v6816 = vmax.f32 %v6800, 0.0
      %v6817 = vmax.f32 %v6801, 0.0
      %v6818 = vmax.f32 %v6802, 0.0
      %v6819 = vmax.f32 %v6803, 0.0
      %v6820 = vmax.f32 %v6804, 0.0
      %v6821 = vmax.f32 %v6805, 0.0
      %v6822 = vmax.f32 %v6806, 0.0
      %v6823 = vmax.f32 %v6807, 0.0
      %v6824 = vmax.f32 %v6808, 0.0
      %v6825 = vmax.f32 %v6809, 0.0
      %v6826 = vmax.f32 %v6810, 0.0
      %v6827 = vmax.f32 %v6811, 0.0
      %v6828 = vmax.f32 %v6812, 0.0
      %v6845 = vrot.slane %v6813, 7
      %v6846 = vrot.slane %v6814, 7
      %v6847 = vrot.slane %v6815, 7
      %v6848 = vrot.slane %v6816, 7
      %v6849 = vrot.slane %v6817, 7
      %v6850 = vrot.slane %v6818, 7
      %v6851 = vrot.slane %v6819, 7
      %v6852 = vrot.slane %v6820, 7
      %v6853 = vrot.slane %v6821, 7
      %v6854 = vrot.slane %v6822, 7
      %v6855 = vrot.slane %v6823, 7
      %v6856 = vrot.slane %v6824, 7
      %v6857 = vrot.slane %v6825, 7
      %v6858 = vrot.slane %v6826, 7
      %v6859 = vrot.slane %v6827, 7
      %v6860 = vrot.slane %v6828, 7
      %s6877 = scalar_lea.vmem [#allocation5], 32
      %6878 = vst [vmem:[%s6877] sm:$0xfe] %v6845
      %6879 = vst [vmem:[%s6877 + $0x8] sm:$0xfe] %v6846
      %6880 = vst [vmem:[%s6877 + $0x10] sm:$0x1] %v6845
      %6881 = vst [vmem:[%s6877 + $0x18] sm:$0x1] %v6846
      %6882 = vst [vmem:[%s6877 + $0x20] sm:$0xfe] %v6847
      %6883 = vst [vmem:[%s6877 + $0x28] sm:$0xfe] %v6848
      %6884 = vst [vmem:[%s6877 + $0x30] sm:$0x1] %v6847
      %6885 = vst [vmem:[%s6877 + $0x38] sm:$0x1] %v6848
      %6886 = vst [vmem:[%s6877 + $0x40] sm:$0xfe] %v6849
      %6887 = vst [vmem:[%s6877 + $0x48] sm:$0xfe] %v6850
      %6888 = vst [vmem:[%s6877 + $0x50] sm:$0x1] %v6849
      %6889 = vst [vmem:[%s6877 + $0x58] sm:$0x1] %v6850
      %6890 = vst [vmem:[%s6877 + $0x60] sm:$0xfe] %v6851
      %6891 = vst [vmem:[%s6877 + $0x68] sm:$0xfe] %v6852
      %6892 = vst [vmem:[%s6877 + $0x70] sm:$0x1] %v6851
      %6893 = vst [vmem:[%s6877 + $0x78] sm:$0x1] %v6852
      %6894 = vst [vmem:[%s6877 + $0x80] sm:$0xfe] %v6853
      %6895 = vst [vmem:[%s6877 + $0x88] sm:$0xfe] %v6854
      %6896 = vst [vmem:[%s6877 + $0x90] sm:$0x1] %v6853
      %6897 = vst [vmem:[%s6877 + $0x98] sm:$0x1] %v6854
      %6898 = vst [vmem:[%s6877 + $0xa0] sm:$0xfe] %v6855
      %6899 = vst [vmem:[%s6877 + $0xa8] sm:$0xfe] %v6856
      %6900 = vst [vmem:[%s6877 + $0xb0] sm:$0x1] %v6855
      %6901 = vst [vmem:[%s6877 + $0xb8] sm:$0x1] %v6856
      %6902 = vst [vmem:[%s6877 + $0xc0] sm:$0xfe] %v6857
      %6903 = vst [vmem:[%s6877 + $0xc8] sm:$0xfe] %v6858
      %6904 = vst [vmem:[%s6877 + $0xd0] sm:$0x1] %v6857
      %6905 = vst [vmem:[%s6877 + $0xd8] sm:$0x1] %v6858
      %6906 = vst [vmem:[%s6877 + $0xe0] sm:$0xfe] %v6859
      %6907 = vst [vmem:[%s6877 + $0xe8] sm:$0xfe] %v6860
      %6908 = vst [vmem:[%s6877 + $0xf0] sm:$0x1] %v6859
      %6909 = vst [vmem:[%s6877 + $0xf8] sm:$0x1] %v6860
      %v6910 = vld [vmem:[%s16] sm:$0x3]
      %v6912 = vlaneseq
      %v6913 = vshrl.u32 %v6912, 7
      %v6914 = vsub.s32 0, %v6913
      %v6915 = vrot.slane %v6910, %v6914
      %v6916 = vlaneseq
      %v6917 = vshrl.u32 %v6916, 7
      %v6918 = vsub.s32 1, %v6917
      %v6919 = vrot.slane %v6910, %v6918
      %v6922 = vld [vmem:[#allocation5] sm:$0xff]
      %v6923 = vld [vmem:[#allocation5 + $0x8] sm:$0xff]
      %v6924 = vld [vmem:[#allocation5 + $0x20] sm:$0xff]
      %v6925 = vld [vmem:[#allocation5 + $0x28] sm:$0xff]
      %v6926 = vld [vmem:[#allocation5 + $0x40] sm:$0xff]
      %v6927 = vld [vmem:[#allocation5 + $0x48] sm:$0xff]
      %v6928 = vld [vmem:[#allocation5 + $0x60] sm:$0xff]
      %v6929 = vld [vmem:[#allocation5 + $0x68] sm:$0xff]
      %v6930 = vld [vmem:[#allocation5 + $0x80] sm:$0xff]
      %v6931 = vld [vmem:[#allocation5 + $0x88] sm:$0xff]
      %v6932 = vld [vmem:[#allocation5 + $0xa0] sm:$0xff]
      %v6933 = vld [vmem:[#allocation5 + $0xa8] sm:$0xff]
      %v6934 = vld [vmem:[#allocation5 + $0xc0] sm:$0xff]
      %v6935 = vld [vmem:[#allocation5 + $0xc8] sm:$0xff]
      %v6936 = vld [vmem:[#allocation5 + $0xe0] sm:$0xff]
      %v6937 = vld [vmem:[#allocation5 + $0xe8] sm:$0xff]
      %v6938 = vpack.c.bf16 %v6924, %v6922
      %v6939 = vpack.c.bf16 %v6925, %v6923
      %v6940 = vpack.c.bf16 %v6928, %v6926
      %v6941 = vpack.c.bf16 %v6929, %v6927
      %v6942 = vpack.c.bf16 %v6932, %v6930
      %v6943 = vpack.c.bf16 %v6933, %v6931
      %v6944 = vpack.c.bf16 %v6936, %v6934
      %v6945 = vpack.c.bf16 %v6937, %v6935
      %v6946 = vld [vmem:[%s15] sm:$0xff]
      %v6947 = vld [vmem:[%s15 + $0x8] sm:$0xff]
      %v6948 = vld [vmem:[%s15 + $0x10] sm:$0xff]
      %v6949 = vld [vmem:[%s15 + $0x18] sm:$0xff]
      %v6950 = vld [vmem:[%s15 + $0x20] sm:$0xff]
      %v6951 = vld [vmem:[%s15 + $0x28] sm:$0xff]
      %v6952 = vld [vmem:[%s15 + $0x30] sm:$0xff]
      %v6953 = vld [vmem:[%s15 + $0x38] sm:$0xff]
      %v6954 = vld [vmem:[%s15 + $0x40] sm:$0xff]
      %v6955 = vld [vmem:[%s15 + $0x48] sm:$0xff]
      %v6956 = vld [vmem:[%s15 + $0x50] sm:$0xff]
      %v6957 = vld [vmem:[%s15 + $0x58] sm:$0xff]
      %v6958 = vld [vmem:[%s15 + $0x60] sm:$0xff]
      %v6959 = vld [vmem:[%s15 + $0x68] sm:$0xff]
      %v6960 = vld [vmem:[%s15 + $0x70] sm:$0xff]
      %v6961 = vld [vmem:[%s15 + $0x78] sm:$0xff]
      %v6962 = vld [vmem:[%s15 + $0x80] sm:$0xff]
      %v6963 = vld [vmem:[%s15 + $0x88] sm:$0xff]
      %v6964 = vld [vmem:[%s15 + $0x90] sm:$0xff]
      %v6965 = vld [vmem:[%s15 + $0x98] sm:$0xff]
      %v6966 = vld [vmem:[%s15 + $0xa0] sm:$0xff]
      %v6967 = vld [vmem:[%s15 + $0xa8] sm:$0xff]
      %v6968 = vld [vmem:[%s15 + $0xb0] sm:$0xff]
      %v6969 = vld [vmem:[%s15 + $0xb8] sm:$0xff]
      %v6970 = vld [vmem:[%s15 + $0xc0] sm:$0xff]
      %v6971 = vld [vmem:[%s15 + $0xc8] sm:$0xff]
      %v6972 = vld [vmem:[%s15 + $0xd0] sm:$0xff]
      %v6973 = vld [vmem:[%s15 + $0xd8] sm:$0xff]
      %v6974 = vld [vmem:[%s15 + $0xe0] sm:$0xff]
      %v6975 = vld [vmem:[%s15 + $0xe8] sm:$0xff]
      %v6976 = vld [vmem:[%s15 + $0xf0] sm:$0xff]
      %v6977 = vld [vmem:[%s15 + $0xf8] sm:$0xff]
      %v7010 = vunpack.c.l.b16 %v6946
      %v7011 = vunpack.c.h.b16 %v6946
      %v7012 = vunpack.c.l.b16 %v6947
      %v7013 = vunpack.c.h.b16 %v6947
      %v7014 = vunpack.c.l.b16 %v6948
      %v7015 = vunpack.c.h.b16 %v6948
      %v7016 = vunpack.c.l.b16 %v6949
      %v7017 = vunpack.c.h.b16 %v6949
      %v7018 = vunpack.c.l.b16 %v6950
      %v7019 = vunpack.c.h.b16 %v6950
      %v7020 = vunpack.c.l.b16 %v6951
      %v7021 = vunpack.c.h.b16 %v6951
      %v7022 = vunpack.c.l.b16 %v6952
      %v7023 = vunpack.c.h.b16 %v6952
      %v7024 = vunpack.c.l.b16 %v6953
      %v7025 = vunpack.c.h.b16 %v6953
      %v7026 = vunpack.c.l.b16 %v6954
      %v7027 = vunpack.c.h.b16 %v6954
      %v7028 = vunpack.c.l.b16 %v6955
      %v7029 = vunpack.c.h.b16 %v6955
      %v7030 = vunpack.c.l.b16 %v6956
      %v7031 = vunpack.c.h.b16 %v6956
      %v7032 = vunpack.c.l.b16 %v6957
      %v7033 = vunpack.c.h.b16 %v6957
      %v7034 = vunpack.c.l.b16 %v6958
      %v7035 = vunpack.c.h.b16 %v6958
      %v7036 = vunpack.c.l.b16 %v6959
      %v7037 = vunpack.c.h.b16 %v6959
      %v7038 = vunpack.c.l.b16 %v6960
      %v7039 = vunpack.c.h.b16 %v6960
      %v7040 = vunpack.c.l.b16 %v6961
      %v7041 = vunpack.c.h.b16 %v6961
      %v7042 = vunpack.c.l.b16 %v6962
      %v7043 = vunpack.c.h.b16 %v6962
      %v7044 = vunpack.c.l.b16 %v6963
      %v7045 = vunpack.c.h.b16 %v6963
      %v7046 = vunpack.c.l.b16 %v6964
      %v7047 = vunpack.c.h.b16 %v6964
      %v7048 = vunpack.c.l.b16 %v6965
      %v7049 = vunpack.c.h.b16 %v6965
      %v7050 = vunpack.c.l.b16 %v6966
      %v7051 = vunpack.c.h.b16 %v6966
      %v7052 = vunpack.c.l.b16 %v6967
      %v7053 = vunpack.c.h.b16 %v6967
      %v7054 = vunpack.c.l.b16 %v6968
      %v7055 = vunpack.c.h.b16 %v6968
      %v7056 = vunpack.c.l.b16 %v6969
      %v7057 = vunpack.c.h.b16 %v6969
      %v7058 = vunpack.c.l.b16 %v6970
      %v7059 = vunpack.c.h.b16 %v6970
      %v7060 = vunpack.c.l.b16 %v6971
      %v7061 = vunpack.c.h.b16 %v6971
      %v7062 = vunpack.c.l.b16 %v6972
      %v7063 = vunpack.c.h.b16 %v6972
      %v7064 = vunpack.c.l.b16 %v6973
      %v7065 = vunpack.c.h.b16 %v6973
      %v7066 = vunpack.c.l.b16 %v6974
      %v7067 = vunpack.c.h.b16 %v6974
      %v7068 = vunpack.c.l.b16 %v6975
      %v7069 = vunpack.c.h.b16 %v6975
      %v7070 = vunpack.c.l.b16 %v6976
      %v7071 = vunpack.c.h.b16 %v6976
      %v7072 = vunpack.c.l.b16 %v6977
      %v7073 = vunpack.c.h.b16 %v6977
      %v7074 = vpack.c.b16 %v7012, %v7010
      %v7075 = vpack.c.b16 %v7013, %v7011
      %v7076 = vpack.c.b16 %v7016, %v7014
      %v7077 = vpack.c.b16 %v7017, %v7015
      %v7078 = vpack.c.b16 %v7020, %v7018
      %v7079 = vpack.c.b16 %v7021, %v7019
      %v7080 = vpack.c.b16 %v7024, %v7022
      %v7081 = vpack.c.b16 %v7025, %v7023
      %v7082 = vpack.c.b16 %v7028, %v7026
      %v7083 = vpack.c.b16 %v7029, %v7027
      %v7084 = vpack.c.b16 %v7032, %v7030
      %v7085 = vpack.c.b16 %v7033, %v7031
      %v7086 = vpack.c.b16 %v7036, %v7034
      %v7087 = vpack.c.b16 %v7037, %v7035
      %v7088 = vpack.c.b16 %v7040, %v7038
      %v7089 = vpack.c.b16 %v7041, %v7039
      %v7090 = vpack.c.b16 %v7044, %v7042
      %v7091 = vpack.c.b16 %v7045, %v7043
      %v7092 = vpack.c.b16 %v7048, %v7046
      %v7093 = vpack.c.b16 %v7049, %v7047
      %v7094 = vpack.c.b16 %v7052, %v7050
      %v7095 = vpack.c.b16 %v7053, %v7051
      %v7096 = vpack.c.b16 %v7056, %v7054
      %v7097 = vpack.c.b16 %v7057, %v7055
      %v7098 = vpack.c.b16 %v7060, %v7058
      %v7099 = vpack.c.b16 %v7061, %v7059
      %v7100 = vpack.c.b16 %v7064, %v7062
      %v7101 = vpack.c.b16 %v7065, %v7063
      %v7102 = vpack.c.b16 %v7068, %v7066
      %v7103 = vpack.c.b16 %v7069, %v7067
      %v7104 = vpack.c.b16 %v7072, %v7070
      %v7105 = vpack.c.b16 %v7073, %v7071
      %7138 = vmatprep.subr.bf16.mxu0 %v7089
      %7139 = vmatpush1.bf16.msra.mxu0 %v7088
      %7140 = vmatprep.subr.bf16.mxu0 %v7087
      %7141 = vmatpush1.bf16.msra.mxu0 %v7086
      %7142 = vmatprep.subr.bf16.mxu0 %v7085
      %7143 = vmatpush1.bf16.msra.mxu0 %v7084
      %7144 = vmatprep.subr.bf16.mxu0 %v7083
      %7145 = vmatpush1.bf16.msra.mxu0 %v7082
      %7146 = vmatprep.subr.bf16.mxu0 %v7081
      %7147 = vmatpush1.bf16.msra.mxu0 %v7080
      %7148 = vmatprep.subr.bf16.mxu0 %v7079
      %7149 = vmatpush1.bf16.msra.mxu0 %v7078
      %7150 = vmatprep.subr.bf16.mxu0 %v7077
      %7151 = vmatpush1.bf16.msra.mxu0 %v7076
      %7152 = vmatprep.subr.bf16.mxu0 %v7075
      %7153 = vmatpush1.bf16.msra.mxu0 %v7074
      %7154 = vmatprep.subr.bf16.mxu0 %v7105
      %7155 = vmatpush2.bf16.msra.mxu0 %v7104
      %7156 = vmatprep.subr.bf16.mxu0 %v7103
      %7157 = vmatpush2.bf16.msra.mxu0 %v7102
      %7158 = vmatprep.subr.bf16.mxu0 %v7101
      %7159 = vmatpush2.bf16.msra.mxu0 %v7100
      %7160 = vmatprep.subr.bf16.mxu0 %v7099
      %7161 = vmatpush2.bf16.msra.mxu0 %v7098
      %7162 = vmatprep.subr.bf16.mxu0 %v7097
      %7163 = vmatpush2.bf16.msra.mxu0 %v7096
      %7164 = vmatprep.subr.bf16.mxu0 %v7095
      %7165 = vmatpush2.bf16.msra.mxu0 %v7094
      %7166 = vmatprep.subr.bf16.mxu0 %v7093
      %7167 = vmatpush2.bf16.msra.mxu0 %v7092
      %7168 = vmatprep.subr.bf16.mxu0 %v7091
      %7169 = vmatpush2.bf16.msra.mxu0 %v7090
      %7170 = vmatprep.mubr.bf16.mxu0 %v6939
      %7171 = vmatmul.mubr.bf16.gmra.mxu0 %v6938
      %v7172 = vpop.f32.mrf.mxu0
      %v7173 = vadd.f32 0.0, %v7172
      %v7174 = vpop.f32.mrf.mxu0
      %v7175 = vadd.f32 0.0, %v7174
      %v7176 = vpop.f32.mrf.mxu0
      %v7177 = vadd.f32 0.0, %v7176
      %v7178 = vpop.f32.mrf.mxu0
      %v7179 = vadd.f32 0.0, %v7178
      %7180 = vmatprep.mubr.bf16.mxu0 %v6941
      %7181 = vmatmul.mubr.bf16.gmra.mxu0 %v6940
      %v7182 = vpop.f32.mrf.mxu0
      %v7183 = vadd.f32 0.0, %v7182
      %v7184 = vpop.f32.mrf.mxu0
      %v7185 = vadd.f32 0.0, %v7184
      %v7186 = vpop.f32.mrf.mxu0
      %v7187 = vadd.f32 0.0, %v7186
      %v7188 = vpop.f32.mrf.mxu0
      %v7189 = vadd.f32 0.0, %v7188
      %7190 = vmatprep.mubr.bf16.mxu0 %v6943
      %7191 = vmatmul.mubr.bf16.gmra.mxu0 %v6942
      %v7192 = vpop.f32.mrf.mxu0
      %v7193 = vadd.f32 0.0, %v7192
      %v7194 = vpop.f32.mrf.mxu0
      %v7195 = vadd.f32 0.0, %v7194
      %v7196 = vpop.f32.mrf.mxu0
      %v7197 = vadd.f32 0.0, %v7196
      %v7198 = vpop.f32.mrf.mxu0
      %v7199 = vadd.f32 0.0, %v7198
      %7200 = vmatprep.mubr.bf16.mxu0 %v6945
      %7201 = vmatmul.mubr.bf16.gmra.mxu0 %v6944
      %v7202 = vpop.f32.mrf.mxu0
      %v7203 = vadd.f32 0.0, %v7202
      %v7204 = vpop.f32.mrf.mxu0
      %v7205 = vadd.f32 0.0, %v7204
      %v7206 = vpop.f32.mrf.mxu0
      %v7207 = vadd.f32 0.0, %v7206
      %v7208 = vpop.f32.mrf.mxu0
      %v7209 = vadd.f32 0.0, %v7208
      %7210 = vdwg.mxu0
      %v7211 = vadd.f32 %v6915, %v7173
      %v7212 = vadd.f32 %v6919, %v7175
      %v7213 = vadd.f32 %v6915, %v7177
      %v7214 = vadd.f32 %v6919, %v7179
      %v7215 = vadd.f32 %v6915, %v7183
      %v7216 = vadd.f32 %v6919, %v7185
      %v7217 = vadd.f32 %v6915, %v7187
      %v7218 = vadd.f32 %v6919, %v7189
      %v7219 = vadd.f32 %v6915, %v7193
      %v7220 = vadd.f32 %v6919, %v7195
      %v7221 = vadd.f32 %v6915, %v7197
      %v7222 = vadd.f32 %v6919, %v7199
      %v7223 = vadd.f32 %v6915, %v7203
      %v7224 = vadd.f32 %v6919, %v7205
      %v7225 = vadd.f32 %v6915, %v7207
      %v7226 = vadd.f32 %v6919, %v7209
      %v7227 = vld [vmem:[#allocation5] sm:$0xfe]
      %v7228 = vld [vmem:[#allocation5 + $0x8] sm:$0xfe]
      %v7229 = vld [vmem:[#allocation5 + $0x10] sm:$0x1]
      %v7230 = vld [vmem:[#allocation5 + $0x18] sm:$0x1]
      %v7231 = vld [vmem:[#allocation5 + $0x20] sm:$0xfe]
      %v7232 = vld [vmem:[#allocation5 + $0x28] sm:$0xfe]
      %v7233 = vld [vmem:[#allocation5 + $0x30] sm:$0x1]
      %v7234 = vld [vmem:[#allocation5 + $0x38] sm:$0x1]
      %v7235 = vld [vmem:[#allocation5 + $0x40] sm:$0xfe]
      %v7236 = vld [vmem:[#allocation5 + $0x48] sm:$0xfe]
      %v7237 = vld [vmem:[#allocation5 + $0x50] sm:$0x1]
      %v7238 = vld [vmem:[#allocation5 + $0x58] sm:$0x1]
      %v7239 = vld [vmem:[#allocation5 + $0x60] sm:$0xfe]
      %v7240 = vld [vmem:[#allocation5 + $0x68] sm:$0xfe]
      %v7241 = vld [vmem:[#allocation5 + $0x70] sm:$0x1]
      %v7242 = vld [vmem:[#allocation5 + $0x78] sm:$0x1]
      %v7243 = vld [vmem:[#allocation5 + $0x80] sm:$0xfe]
      %v7244 = vld [vmem:[#allocation5 + $0x88] sm:$0xfe]
      %v7245 = vld [vmem:[#allocation5 + $0x90] sm:$0x1]
      %v7246 = vld [vmem:[#allocation5 + $0x98] sm:$0x1]
      %v7247 = vld [vmem:[#allocation5 + $0xa0] sm:$0xfe]
      %v7248 = vld [vmem:[#allocation5 + $0xa8] sm:$0xfe]
      %v7249 = vld [vmem:[#allocation5 + $0xb0] sm:$0x1]
      %v7250 = vld [vmem:[#allocation5 + $0xb8] sm:$0x1]
      %v7251 = vld [vmem:[#allocation5 + $0xc0] sm:$0xfe]
      %v7252 = vld [vmem:[#allocation5 + $0xc8] sm:$0xfe]
      %v7253 = vld [vmem:[#allocation5 + $0xd0] sm:$0x1]
      %v7254 = vld [vmem:[#allocation5 + $0xd8] sm:$0x1]
      %v7255 = vld [vmem:[#allocation5 + $0xe0] sm:$0xfe]
      %v7256 = vld [vmem:[#allocation5 + $0xe8] sm:$0xfe]
      %v7257 = vld [vmem:[#allocation5 + $0xf0] sm:$0x1]
      %v7258 = vld [vmem:[#allocation5 + $0xf8] sm:$0x1]
      %vm7291 = vcmask 1046528
      %v7292 = vrot.slane %v7227, 1
      %v7293 = vrot.slane %v7229, 1
      %v7294 = vsel %vm7291, %v7292, %v7293
      %v7295 = vrot.slane %v7228, 1
      %v7296 = vrot.slane %v7230, 1
      %v7297 = vsel %vm7291, %v7295, %v7296
      %v7298 = vrot.slane %v7231, 1
      %v7299 = vrot.slane %v7233, 1
      %v7300 = vsel %vm7291, %v7298, %v7299
      %v7301 = vrot.slane %v7232, 1
      %v7302 = vrot.slane %v7234, 1
      %v7303 = vsel %vm7291, %v7301, %v7302
      %v7304 = vrot.slane %v7235, 1
      %v7305 = vrot.slane %v7237, 1
      %v7306 = vsel %vm7291, %v7304, %v7305
      %v7307 = vrot.slane %v7236, 1
      %v7308 = vrot.slane %v7238, 1
      %v7309 = vsel %vm7291, %v7307, %v7308
      %v7310 = vrot.slane %v7239, 1
      %v7311 = vrot.slane %v7241, 1
      %v7312 = vsel %vm7291, %v7310, %v7311
      %v7313 = vrot.slane %v7240, 1
      %v7314 = vrot.slane %v7242, 1
      %v7315 = vsel %vm7291, %v7313, %v7314
      %v7316 = vrot.slane %v7243, 1
      %v7317 = vrot.slane %v7245, 1
      %v7318 = vsel %vm7291, %v7316, %v7317
      %v7319 = vrot.slane %v7244, 1
      %v7320 = vrot.slane %v7246, 1
      %v7321 = vsel %vm7291, %v7319, %v7320
      %v7322 = vrot.slane %v7247, 1
      %v7323 = vrot.slane %v7249, 1
      %v7324 = vsel %vm7291, %v7322, %v7323
      %v7325 = vrot.slane %v7248, 1
      %v7326 = vrot.slane %v7250, 1
      %v7327 = vsel %vm7291, %v7325, %v7326
      %v7328 = vrot.slane %v7251, 1
      %v7329 = vrot.slane %v7253, 1
      %v7330 = vsel %vm7291, %v7328, %v7329
      %v7331 = vrot.slane %v7252, 1
      %v7332 = vrot.slane %v7254, 1
      %v7333 = vsel %vm7291, %v7331, %v7332
      %v7334 = vrot.slane %v7255, 1
      %v7335 = vrot.slane %v7257, 1
      %v7336 = vsel %vm7291, %v7334, %v7335
      %v7337 = vrot.slane %v7256, 1
      %v7338 = vrot.slane %v7258, 1
      %v7339 = vsel %vm7291, %v7337, %v7338
      %v7356 = vpack.c.bf16 %v7300, %v7294
      %v7357 = vpack.c.bf16 %v7303, %v7297
      %v7358 = vpack.c.bf16 %v7312, %v7306
      %v7359 = vpack.c.bf16 %v7315, %v7309
      %v7360 = vpack.c.bf16 %v7324, %v7318
      %v7361 = vpack.c.bf16 %v7327, %v7321
      %v7362 = vpack.c.bf16 %v7336, %v7330
      %v7363 = vpack.c.bf16 %v7339, %v7333
      %s7364 = scalar_lea.vmem %s15, 256
      %v7365 = vld [vmem:[%s7364] sm:$0xff]
      %v7366 = vld [vmem:[%s7364 + $0x8] sm:$0xff]
      %v7367 = vld [vmem:[%s7364 + $0x10] sm:$0xff]
      %v7368 = vld [vmem:[%s7364 + $0x18] sm:$0xff]
      %v7369 = vld [vmem:[%s7364 + $0x20] sm:$0xff]
      %v7370 = vld [vmem:[%s7364 + $0x28] sm:$0xff]
      %v7371 = vld [vmem:[%s7364 + $0x30] sm:$0xff]
      %v7372 = vld [vmem:[%s7364 + $0x38] sm:$0xff]
      %v7373 = vld [vmem:[%s7364 + $0x40] sm:$0xff]
      %v7374 = vld [vmem:[%s7364 + $0x48] sm:$0xff]
      %v7375 = vld [vmem:[%s7364 + $0x50] sm:$0xff]
      %v7376 = vld [vmem:[%s7364 + $0x58] sm:$0xff]
      %v7377 = vld [vmem:[%s7364 + $0x60] sm:$0xff]
      %v7378 = vld [vmem:[%s7364 + $0x68] sm:$0xff]
      %v7379 = vld [vmem:[%s7364 + $0x70] sm:$0xff]
      %v7380 = vld [vmem:[%s7364 + $0x78] sm:$0xff]
      %v7381 = vld [vmem:[%s7364 + $0x80] sm:$0xff]
      %v7382 = vld [vmem:[%s7364 + $0x88] sm:$0xff]
      %v7383 = vld [vmem:[%s7364 + $0x90] sm:$0xff]
      %v7384 = vld [vmem:[%s7364 + $0x98] sm:$0xff]
      %v7385 = vld [vmem:[%s7364 + $0xa0] sm:$0xff]
      %v7386 = vld [vmem:[%s7364 + $0xa8] sm:$0xff]
      %v7387 = vld [vmem:[%s7364 + $0xb0] sm:$0xff]
      %v7388 = vld [vmem:[%s7364 + $0xb8] sm:$0xff]
      %v7389 = vld [vmem:[%s7364 + $0xc0] sm:$0xff]
      %v7390 = vld [vmem:[%s7364 + $0xc8] sm:$0xff]
      %v7391 = vld [vmem:[%s7364 + $0xd0] sm:$0xff]
      %v7392 = vld [vmem:[%s7364 + $0xd8] sm:$0xff]
      %v7393 = vld [vmem:[%s7364 + $0xe0] sm:$0xff]
      %v7394 = vld [vmem:[%s7364 + $0xe8] sm:$0xff]
      %v7395 = vld [vmem:[%s7364 + $0xf0] sm:$0xff]
      %v7396 = vld [vmem:[%s7364 + $0xf8] sm:$0xff]
      %v7429 = vunpack.c.l.b16 %v7365
      %v7430 = vunpack.c.h.b16 %v7365
      %v7431 = vunpack.c.l.b16 %v7366
      %v7432 = vunpack.c.h.b16 %v7366
      %v7433 = vunpack.c.l.b16 %v7367
      %v7434 = vunpack.c.h.b16 %v7367
      %v7435 = vunpack.c.l.b16 %v7368
      %v7436 = vunpack.c.h.b16 %v7368
      %v7437 = vunpack.c.l.b16 %v7369
      %v7438 = vunpack.c.h.b16 %v7369
      %v7439 = vunpack.c.l.b16 %v7370
      %v7440 = vunpack.c.h.b16 %v7370
      %v7441 = vunpack.c.l.b16 %v7371
      %v7442 = vunpack.c.h.b16 %v7371
      %v7443 = vunpack.c.l.b16 %v7372
      %v7444 = vunpack.c.h.b16 %v7372
      %v7445 = vunpack.c.l.b16 %v7373
      %v7446 = vunpack.c.h.b16 %v7373
      %v7447 = vunpack.c.l.b16 %v7374
      %v7448 = vunpack.c.h.b16 %v7374
      %v7449 = vunpack.c.l.b16 %v7375
      %v7450 = vunpack.c.h.b16 %v7375
      %v7451 = vunpack.c.l.b16 %v7376
      %v7452 = vunpack.c.h.b16 %v7376
      %v7453 = vunpack.c.l.b16 %v7377
      %v7454 = vunpack.c.h.b16 %v7377
      %v7455 = vunpack.c.l.b16 %v7378
      %v7456 = vunpack.c.h.b16 %v7378
      %v7457 = vunpack.c.l.b16 %v7379
      %v7458 = vunpack.c.h.b16 %v7379
      %v7459 = vunpack.c.l.b16 %v7380
      %v7460 = vunpack.c.h.b16 %v7380
      %v7461 = vunpack.c.l.b16 %v7381
      %v7462 = vunpack.c.h.b16 %v7381
      %v7463 = vunpack.c.l.b16 %v7382
      %v7464 = vunpack.c.h.b16 %v7382
      %v7465 = vunpack.c.l.b16 %v7383
      %v7466 = vunpack.c.h.b16 %v7383
      %v7467 = vunpack.c.l.b16 %v7384
      %v7468 = vunpack.c.h.b16 %v7384
      %v7469 = vunpack.c.l.b16 %v7385
      %v7470 = vunpack.c.h.b16 %v7385
      %v7471 = vunpack.c.l.b16 %v7386
      %v7472 = vunpack.c.h.b16 %v7386
      %v7473 = vunpack.c.l.b16 %v7387
      %v7474 = vunpack.c.h.b16 %v7387
      %v7475 = vunpack.c.l.b16 %v7388
      %v7476 = vunpack.c.h.b16 %v7388
      %v7477 = vunpack.c.l.b16 %v7389
      %v7478 = vunpack.c.h.b16 %v7389
      %v7479 = vunpack.c.l.b16 %v7390
      %v7480 = vunpack.c.h.b16 %v7390
      %v7481 = vunpack.c.l.b16 %v7391
      %v7482 = vunpack.c.h.b16 %v7391
      %v7483 = vunpack.c.l.b16 %v7392
      %v7484 = vunpack.c.h.b16 %v7392
      %v7485 = vunpack.c.l.b16 %v7393
      %v7486 = vunpack.c.h.b16 %v7393
      %v7487 = vunpack.c.l.b16 %v7394
      %v7488 = vunpack.c.h.b16 %v7394
      %v7489 = vunpack.c.l.b16 %v7395
      %v7490 = vunpack.c.h.b16 %v7395
      %v7491 = vunpack.c.l.b16 %v7396
      %v7492 = vunpack.c.h.b16 %v7396
      %v7493 = vpack.c.b16 %v7431, %v7429
      %v7494 = vpack.c.b16 %v7432, %v7430
      %v7495 = vpack.c.b16 %v7435, %v7433
      %v7496 = vpack.c.b16 %v7436, %v7434
      %v7497 = vpack.c.b16 %v7439, %v7437
      %v7498 = vpack.c.b16 %v7440, %v7438
      %v7499 = vpack.c.b16 %v7443, %v7441
      %v7500 = vpack.c.b16 %v7444, %v7442
      %v7501 = vpack.c.b16 %v7447, %v7445
      %v7502 = vpack.c.b16 %v7448, %v7446
      %v7503 = vpack.c.b16 %v7451, %v7449
      %v7504 = vpack.c.b16 %v7452, %v7450
      %v7505 = vpack.c.b16 %v7455, %v7453
      %v7506 = vpack.c.b16 %v7456, %v7454
      %v7507 = vpack.c.b16 %v7459, %v7457
      %v7508 = vpack.c.b16 %v7460, %v7458
      %v7509 = vpack.c.b16 %v7463, %v7461
      %v7510 = vpack.c.b16 %v7464, %v7462
      %v7511 = vpack.c.b16 %v7467, %v7465
      %v7512 = vpack.c.b16 %v7468, %v7466
      %v7513 = vpack.c.b16 %v7471, %v7469
      %v7514 = vpack.c.b16 %v7472, %v7470
      %v7515 = vpack.c.b16 %v7475, %v7473
      %v7516 = vpack.c.b16 %v7476, %v7474
      %v7517 = vpack.c.b16 %v7479, %v7477
      %v7518 = vpack.c.b16 %v7480, %v7478
      %v7519 = vpack.c.b16 %v7483, %v7481
      %v7520 = vpack.c.b16 %v7484, %v7482
      %v7521 = vpack.c.b16 %v7487, %v7485
      %v7522 = vpack.c.b16 %v7488, %v7486
      %v7523 = vpack.c.b16 %v7491, %v7489
      %v7524 = vpack.c.b16 %v7492, %v7490
      %7557 = vmatprep.subr.bf16.mxu0 %v7508
      %7558 = vmatpush1.bf16.msra.mxu0 %v7507
      %7559 = vmatprep.subr.bf16.mxu0 %v7506
      %7560 = vmatpush1.bf16.msra.mxu0 %v7505
      %7561 = vmatprep.subr.bf16.mxu0 %v7504
      %7562 = vmatpush1.bf16.msra.mxu0 %v7503
      %7563 = vmatprep.subr.bf16.mxu0 %v7502
      %7564 = vmatpush1.bf16.msra.mxu0 %v7501
      %7565 = vmatprep.subr.bf16.mxu0 %v7500
      %7566 = vmatpush1.bf16.msra.mxu0 %v7499
      %7567 = vmatprep.subr.bf16.mxu0 %v7498
      %7568 = vmatpush1.bf16.msra.mxu0 %v7497
      %7569 = vmatprep.subr.bf16.mxu0 %v7496
      %7570 = vmatpush1.bf16.msra.mxu0 %v7495
      %7571 = vmatprep.subr.bf16.mxu0 %v7494
      %7572 = vmatpush1.bf16.msra.mxu0 %v7493
      %7573 = vmatprep.subr.bf16.mxu0 %v7524
      %7574 = vmatpush2.bf16.msra.mxu0 %v7523
      %7575 = vmatprep.subr.bf16.mxu0 %v7522
      %7576 = vmatpush2.bf16.msra.mxu0 %v7521
      %7577 = vmatprep.subr.bf16.mxu0 %v7520
      %7578 = vmatpush2.bf16.msra.mxu0 %v7519
      %7579 = vmatprep.subr.bf16.mxu0 %v7518
      %7580 = vmatpush2.bf16.msra.mxu0 %v7517
      %7581 = vmatprep.subr.bf16.mxu0 %v7516
      %7582 = vmatpush2.bf16.msra.mxu0 %v7515
      %7583 = vmatprep.subr.bf16.mxu0 %v7514
      %7584 = vmatpush2.bf16.msra.mxu0 %v7513
      %7585 = vmatprep.subr.bf16.mxu0 %v7512
      %7586 = vmatpush2.bf16.msra.mxu0 %v7511
      %7587 = vmatprep.subr.bf16.mxu0 %v7510
      %7588 = vmatpush2.bf16.msra.mxu0 %v7509
      %7589 = vmatprep.mubr.bf16.mxu0 %v7357
      %7590 = vmatmul.mubr.bf16.gmra.mxu0 %v7356
      %v7591 = vpop.f32.mrf.mxu0
      %v7592 = vadd.f32 0.0, %v7591
      %v7593 = vpop.f32.mrf.mxu0
      %v7594 = vadd.f32 0.0, %v7593
      %v7595 = vpop.f32.mrf.mxu0
      %v7596 = vadd.f32 0.0, %v7595
      %v7597 = vpop.f32.mrf.mxu0
      %v7598 = vadd.f32 0.0, %v7597
      %7599 = vmatprep.mubr.bf16.mxu0 %v7359
      %7600 = vmatmul.mubr.bf16.gmra.mxu0 %v7358
      %v7601 = vpop.f32.mrf.mxu0
      %v7602 = vadd.f32 0.0, %v7601
      %v7603 = vpop.f32.mrf.mxu0
      %v7604 = vadd.f32 0.0, %v7603
      %v7605 = vpop.f32.mrf.mxu0
      %v7606 = vadd.f32 0.0, %v7605
      %v7607 = vpop.f32.mrf.mxu0
      %v7608 = vadd.f32 0.0, %v7607
      %7609 = vmatprep.mubr.bf16.mxu0 %v7361
      %7610 = vmatmul.mubr.bf16.gmra.mxu0 %v7360
      %v7611 = vpop.f32.mrf.mxu0
      %v7612 = vadd.f32 0.0, %v7611
      %v7613 = vpop.f32.mrf.mxu0
      %v7614 = vadd.f32 0.0, %v7613
      %v7615 = vpop.f32.mrf.mxu0
      %v7616 = vadd.f32 0.0, %v7615
      %v7617 = vpop.f32.mrf.mxu0
      %v7618 = vadd.f32 0.0, %v7617
      %7619 = vmatprep.mubr.bf16.mxu0 %v7363
      %7620 = vmatmul.mubr.bf16.gmra.mxu0 %v7362
      %v7621 = vpop.f32.mrf.mxu0
      %v7622 = vadd.f32 0.0, %v7621
      %v7623 = vpop.f32.mrf.mxu0
      %v7624 = vadd.f32 0.0, %v7623
      %v7625 = vpop.f32.mrf.mxu0
      %v7626 = vadd.f32 0.0, %v7625
      %v7627 = vpop.f32.mrf.mxu0
      %v7628 = vadd.f32 0.0, %v7627
      %7629 = vdwg.mxu0
      %v7630 = vadd.f32 %v7211, %v7592
      %v7631 = vadd.f32 %v7212, %v7594
      %v7632 = vadd.f32 %v7213, %v7596
      %v7633 = vadd.f32 %v7214, %v7598
      %v7634 = vadd.f32 %v7215, %v7602
      %v7635 = vadd.f32 %v7216, %v7604
      %v7636 = vadd.f32 %v7217, %v7606
      %v7637 = vadd.f32 %v7218, %v7608
      %v7638 = vadd.f32 %v7219, %v7612
      %v7639 = vadd.f32 %v7220, %v7614
      %v7640 = vadd.f32 %v7221, %v7616
      %v7641 = vadd.f32 %v7222, %v7618
      %v7642 = vadd.f32 %v7223, %v7622
      %v7643 = vadd.f32 %v7224, %v7624
      %v7644 = vadd.f32 %v7225, %v7626
      %v7645 = vadd.f32 %v7226, %v7628
      %v7646 = vld [vmem:[#allocation5] sm:$0xfc]
      %v7647 = vld [vmem:[#allocation5 + $0x8] sm:$0xfc]
      %v7648 = vld [vmem:[#allocation5 + $0x10] sm:$0x3]
      %v7649 = vld [vmem:[#allocation5 + $0x18] sm:$0x3]
      %v7650 = vld [vmem:[#allocation5 + $0x20] sm:$0xfc]
      %v7651 = vld [vmem:[#allocation5 + $0x28] sm:$0xfc]
      %v7652 = vld [vmem:[#allocation5 + $0x30] sm:$0x3]
      %v7653 = vld [vmem:[#allocation5 + $0x38] sm:$0x3]
      %v7654 = vld [vmem:[#allocation5 + $0x40] sm:$0xfc]
      %v7655 = vld [vmem:[#allocation5 + $0x48] sm:$0xfc]
      %v7656 = vld [vmem:[#allocation5 + $0x50] sm:$0x3]
      %v7657 = vld [vmem:[#allocation5 + $0x58] sm:$0x3]
      %v7658 = vld [vmem:[#allocation5 + $0x60] sm:$0xfc]
      %v7659 = vld [vmem:[#allocation5 + $0x68] sm:$0xfc]
      %v7660 = vld [vmem:[#allocation5 + $0x70] sm:$0x3]
      %v7661 = vld [vmem:[#allocation5 + $0x78] sm:$0x3]
      %v7662 = vld [vmem:[#allocation5 + $0x80] sm:$0xfc]
      %v7663 = vld [vmem:[#allocation5 + $0x88] sm:$0xfc]
      %v7664 = vld [vmem:[#allocation5 + $0x90] sm:$0x3]
      %v7665 = vld [vmem:[#allocation5 + $0x98] sm:$0x3]
      %v7666 = vld [vmem:[#allocation5 + $0xa0] sm:$0xfc]
      %v7667 = vld [vmem:[#allocation5 + $0xa8] sm:$0xfc]
      %v7668 = vld [vmem:[#allocation5 + $0xb0] sm:$0x3]
      %v7669 = vld [vmem:[#allocation5 + $0xb8] sm:$0x3]
      %v7670 = vld [vmem:[#allocation5 + $0xc0] sm:$0xfc]
      %v7671 = vld [vmem:[#allocation5 + $0xc8] sm:$0xfc]
      %v7672 = vld [vmem:[#allocation5 + $0xd0] sm:$0x3]
      %v7673 = vld [vmem:[#allocation5 + $0xd8] sm:$0x3]
      %v7674 = vld [vmem:[#allocation5 + $0xe0] sm:$0xfc]
      %v7675 = vld [vmem:[#allocation5 + $0xe8] sm:$0xfc]
      %v7676 = vld [vmem:[#allocation5 + $0xf0] sm:$0x3]
      %v7677 = vld [vmem:[#allocation5 + $0xf8] sm:$0x3]
      %vm7710 = vcmask 1045504
      %v7711 = vrot.slane %v7646, 2
      %v7712 = vrot.slane %v7648, 2
      %v7713 = vsel %vm7710, %v7711, %v7712
      %v7714 = vrot.slane %v7647, 2
      %v7715 = vrot.slane %v7649, 2
      %v7716 = vsel %vm7710, %v7714, %v7715
      %v7717 = vrot.slane %v7650, 2
      %v7718 = vrot.slane %v7652, 2
      %v7719 = vsel %vm7710, %v7717, %v7718
      %v7720 = vrot.slane %v7651, 2
      %v7721 = vrot.slane %v7653, 2
      %v7722 = vsel %vm7710, %v7720, %v7721
      %v7723 = vrot.slane %v7654, 2
      %v7724 = vrot.slane %v7656, 2
      %v7725 = vsel %vm7710, %v7723, %v7724
      %v7726 = vrot.slane %v7655, 2
      %v7727 = vrot.slane %v7657, 2
      %v7728 = vsel %vm7710, %v7726, %v7727
      %v7729 = vrot.slane %v7658, 2
      %v7730 = vrot.slane %v7660, 2
      %v7731 = vsel %vm7710, %v7729, %v7730
      %v7732 = vrot.slane %v7659, 2
      %v7733 = vrot.slane %v7661, 2
      %v7734 = vsel %vm7710, %v7732, %v7733
      %v7735 = vrot.slane %v7662, 2
      %v7736 = vrot.slane %v7664, 2
      %v7737 = vsel %vm7710, %v7735, %v7736
      %v7738 = vrot.slane %v7663, 2
      %v7739 = vrot.slane %v7665, 2
      %v7740 = vsel %vm7710, %v7738, %v7739
      %v7741 = vrot.slane %v7666, 2
      %v7742 = vrot.slane %v7668, 2
      %v7743 = vsel %vm7710, %v7741, %v7742
      %v7744 = vrot.slane %v7667, 2
      %v7745 = vrot.slane %v7669, 2
      %v7746 = vsel %vm7710, %v7744, %v7745
      %v7747 = vrot.slane %v7670, 2
      %v7748 = vrot.slane %v7672, 2
      %v7749 = vsel %vm7710, %v7747, %v7748
      %v7750 = vrot.slane %v7671, 2
      %v7751 = vrot.slane %v7673, 2
      %v7752 = vsel %vm7710, %v7750, %v7751
      %v7753 = vrot.slane %v7674, 2
      %v7754 = vrot.slane %v7676, 2
      %v7755 = vsel %vm7710, %v7753, %v7754
      %v7756 = vrot.slane %v7675, 2
      %v7757 = vrot.slane %v7677, 2
      %v7758 = vsel %vm7710, %v7756, %v7757
      %v7775 = vpack.c.bf16 %v7719, %v7713
      %v7776 = vpack.c.bf16 %v7722, %v7716
      %v7777 = vpack.c.bf16 %v7731, %v7725
      %v7778 = vpack.c.bf16 %v7734, %v7728
      %v7779 = vpack.c.bf16 %v7743, %v7737
      %v7780 = vpack.c.bf16 %v7746, %v7740
      %v7781 = vpack.c.bf16 %v7755, %v7749
      %v7782 = vpack.c.bf16 %v7758, %v7752
      %s7783 = scalar_lea.vmem %s15, 512
      %v7784 = vld [vmem:[%s7783] sm:$0xff]
      %v7785 = vld [vmem:[%s7783 + $0x8] sm:$0xff]
      %v7786 = vld [vmem:[%s7783 + $0x10] sm:$0xff]
      %v7787 = vld [vmem:[%s7783 + $0x18] sm:$0xff]
      %v7788 = vld [vmem:[%s7783 + $0x20] sm:$0xff]
      %v7789 = vld [vmem:[%s7783 + $0x28] sm:$0xff]
      %v7790 = vld [vmem:[%s7783 + $0x30] sm:$0xff]
      %v7791 = vld [vmem:[%s7783 + $0x38] sm:$0xff]
      %v7792 = vld [vmem:[%s7783 + $0x40] sm:$0xff]
      %v7793 = vld [vmem:[%s7783 + $0x48] sm:$0xff]
      %v7794 = vld [vmem:[%s7783 + $0x50] sm:$0xff]
      %v7795 = vld [vmem:[%s7783 + $0x58] sm:$0xff]
      %v7796 = vld [vmem:[%s7783 + $0x60] sm:$0xff]
      %v7797 = vld [vmem:[%s7783 + $0x68] sm:$0xff]
      %v7798 = vld [vmem:[%s7783 + $0x70] sm:$0xff]
      %v7799 = vld [vmem:[%s7783 + $0x78] sm:$0xff]
      %v7800 = vld [vmem:[%s7783 + $0x80] sm:$0xff]
      %v7801 = vld [vmem:[%s7783 + $0x88] sm:$0xff]
      %v7802 = vld [vmem:[%s7783 + $0x90] sm:$0xff]
      %v7803 = vld [vmem:[%s7783 + $0x98] sm:$0xff]
      %v7804 = vld [vmem:[%s7783 + $0xa0] sm:$0xff]
      %v7805 = vld [vmem:[%s7783 + $0xa8] sm:$0xff]
      %v7806 = vld [vmem:[%s7783 + $0xb0] sm:$0xff]
      %v7807 = vld [vmem:[%s7783 + $0xb8] sm:$0xff]
      %v7808 = vld [vmem:[%s7783 + $0xc0] sm:$0xff]
      %v7809 = vld [vmem:[%s7783 + $0xc8] sm:$0xff]
      %v7810 = vld [vmem:[%s7783 + $0xd0] sm:$0xff]
      %v7811 = vld [vmem:[%s7783 + $0xd8] sm:$0xff]
      %v7812 = vld [vmem:[%s7783 + $0xe0] sm:$0xff]
      %v7813 = vld [vmem:[%s7783 + $0xe8] sm:$0xff]
      %v7814 = vld [vmem:[%s7783 + $0xf0] sm:$0xff]
      %v7815 = vld [vmem:[%s7783 + $0xf8] sm:$0xff]
      %v7848 = vunpack.c.l.b16 %v7784
      %v7849 = vunpack.c.h.b16 %v7784
      %v7850 = vunpack.c.l.b16 %v7785
      %v7851 = vunpack.c.h.b16 %v7785
      %v7852 = vunpack.c.l.b16 %v7786
      %v7853 = vunpack.c.h.b16 %v7786
      %v7854 = vunpack.c.l.b16 %v7787
      %v7855 = vunpack.c.h.b16 %v7787
      %v7856 = vunpack.c.l.b16 %v7788
      %v7857 = vunpack.c.h.b16 %v7788
      %v7858 = vunpack.c.l.b16 %v7789
      %v7859 = vunpack.c.h.b16 %v7789
      %v7860 = vunpack.c.l.b16 %v7790
      %v7861 = vunpack.c.h.b16 %v7790
      %v7862 = vunpack.c.l.b16 %v7791
      %v7863 = vunpack.c.h.b16 %v7791
      %v7864 = vunpack.c.l.b16 %v7792
      %v7865 = vunpack.c.h.b16 %v7792
      %v7866 = vunpack.c.l.b16 %v7793
      %v7867 = vunpack.c.h.b16 %v7793
      %v7868 = vunpack.c.l.b16 %v7794
      %v7869 = vunpack.c.h.b16 %v7794
      %v7870 = vunpack.c.l.b16 %v7795
      %v7871 = vunpack.c.h.b16 %v7795
      %v7872 = vunpack.c.l.b16 %v7796
      %v7873 = vunpack.c.h.b16 %v7796
      %v7874 = vunpack.c.l.b16 %v7797
      %v7875 = vunpack.c.h.b16 %v7797
      %v7876 = vunpack.c.l.b16 %v7798
      %v7877 = vunpack.c.h.b16 %v7798
      %v7878 = vunpack.c.l.b16 %v7799
      %v7879 = vunpack.c.h.b16 %v7799
      %v7880 = vunpack.c.l.b16 %v7800
      %v7881 = vunpack.c.h.b16 %v7800
      %v7882 = vunpack.c.l.b16 %v7801
      %v7883 = vunpack.c.h.b16 %v7801
      %v7884 = vunpack.c.l.b16 %v7802
      %v7885 = vunpack.c.h.b16 %v7802
      %v7886 = vunpack.c.l.b16 %v7803
      %v7887 = vunpack.c.h.b16 %v7803
      %v7888 = vunpack.c.l.b16 %v7804
      %v7889 = vunpack.c.h.b16 %v7804
      %v7890 = vunpack.c.l.b16 %v7805
      %v7891 = vunpack.c.h.b16 %v7805
      %v7892 = vunpack.c.l.b16 %v7806
      %v7893 = vunpack.c.h.b16 %v7806
      %v7894 = vunpack.c.l.b16 %v7807
      %v7895 = vunpack.c.h.b16 %v7807
      %v7896 = vunpack.c.l.b16 %v7808
      %v7897 = vunpack.c.h.b16 %v7808
      %v7898 = vunpack.c.l.b16 %v7809
      %v7899 = vunpack.c.h.b16 %v7809
      %v7900 = vunpack.c.l.b16 %v7810
      %v7901 = vunpack.c.h.b16 %v7810
      %v7902 = vunpack.c.l.b16 %v7811
      %v7903 = vunpack.c.h.b16 %v7811
      %v7904 = vunpack.c.l.b16 %v7812
      %v7905 = vunpack.c.h.b16 %v7812
      %v7906 = vunpack.c.l.b16 %v7813
      %v7907 = vunpack.c.h.b16 %v7813
      %v7908 = vunpack.c.l.b16 %v7814
      %v7909 = vunpack.c.h.b16 %v7814
      %v7910 = vunpack.c.l.b16 %v7815
      %v7911 = vunpack.c.h.b16 %v7815
      %v7912 = vpack.c.b16 %v7850, %v7848
      %v7913 = vpack.c.b16 %v7851, %v7849
      %v7914 = vpack.c.b16 %v7854, %v7852
      %v7915 = vpack.c.b16 %v7855, %v7853
      %v7916 = vpack.c.b16 %v7858, %v7856
      %v7917 = vpack.c.b16 %v7859, %v7857
      %v7918 = vpack.c.b16 %v7862, %v7860
      %v7919 = vpack.c.b16 %v7863, %v7861
      %v7920 = vpack.c.b16 %v7866, %v7864
      %v7921 = vpack.c.b16 %v7867, %v7865
      %v7922 = vpack.c.b16 %v7870, %v7868
      %v7923 = vpack.c.b16 %v7871, %v7869
      %v7924 = vpack.c.b16 %v7874, %v7872
      %v7925 = vpack.c.b16 %v7875, %v7873
      %v7926 = vpack.c.b16 %v7878, %v7876
      %v7927 = vpack.c.b16 %v7879, %v7877
      %v7928 = vpack.c.b16 %v7882, %v7880
      %v7929 = vpack.c.b16 %v7883, %v7881
      %v7930 = vpack.c.b16 %v7886, %v7884
      %v7931 = vpack.c.b16 %v7887, %v7885
      %v7932 = vpack.c.b16 %v7890, %v7888
      %v7933 = vpack.c.b16 %v7891, %v7889
      %v7934 = vpack.c.b16 %v7894, %v7892
      %v7935 = vpack.c.b16 %v7895, %v7893
      %v7936 = vpack.c.b16 %v7898, %v7896
      %v7937 = vpack.c.b16 %v7899, %v7897
      %v7938 = vpack.c.b16 %v7902, %v7900
      %v7939 = vpack.c.b16 %v7903, %v7901
      %v7940 = vpack.c.b16 %v7906, %v7904
      %v7941 = vpack.c.b16 %v7907, %v7905
      %v7942 = vpack.c.b16 %v7910, %v7908
      %v7943 = vpack.c.b16 %v7911, %v7909
      %7976 = vmatprep.subr.bf16.mxu0 %v7927
      %7977 = vmatpush1.bf16.msra.mxu0 %v7926
      %7978 = vmatprep.subr.bf16.mxu0 %v7925
      %7979 = vmatpush1.bf16.msra.mxu0 %v7924
      %7980 = vmatprep.subr.bf16.mxu0 %v7923
      %7981 = vmatpush1.bf16.msra.mxu0 %v7922
      %7982 = vmatprep.subr.bf16.mxu0 %v7921
      %7983 = vmatpush1.bf16.msra.mxu0 %v7920
      %7984 = vmatprep.subr.bf16.mxu0 %v7919
      %7985 = vmatpush1.bf16.msra.mxu0 %v7918
      %7986 = vmatprep.subr.bf16.mxu0 %v7917
      %7987 = vmatpush1.bf16.msra.mxu0 %v7916
      %7988 = vmatprep.subr.bf16.mxu0 %v7915
      %7989 = vmatpush1.bf16.msra.mxu0 %v7914
      %7990 = vmatprep.subr.bf16.mxu0 %v7913
      %7991 = vmatpush1.bf16.msra.mxu0 %v7912
      %7992 = vmatprep.subr.bf16.mxu0 %v7943
      %7993 = vmatpush2.bf16.msra.mxu0 %v7942
      %7994 = vmatprep.subr.bf16.mxu0 %v7941
      %7995 = vmatpush2.bf16.msra.mxu0 %v7940
      %7996 = vmatprep.subr.bf16.mxu0 %v7939
      %7997 = vmatpush2.bf16.msra.mxu0 %v7938
      %7998 = vmatprep.subr.bf16.mxu0 %v7937
      %7999 = vmatpush2.bf16.msra.mxu0 %v7936
      %8000 = vmatprep.subr.bf16.mxu0 %v7935
      %8001 = vmatpush2.bf16.msra.mxu0 %v7934
      %8002 = vmatprep.subr.bf16.mxu0 %v7933
      %8003 = vmatpush2.bf16.msra.mxu0 %v7932
      %8004 = vmatprep.subr.bf16.mxu0 %v7931
      %8005 = vmatpush2.bf16.msra.mxu0 %v7930
      %8006 = vmatprep.subr.bf16.mxu0 %v7929
      %8007 = vmatpush2.bf16.msra.mxu0 %v7928
      %8008 = vmatprep.mubr.bf16.mxu0 %v7776
      %8009 = vmatmul.mubr.bf16.gmra.mxu0 %v7775
      %v8010 = vpop.f32.mrf.mxu0
      %v8011 = vadd.f32 0.0, %v8010
      %v8012 = vpop.f32.mrf.mxu0
      %v8013 = vadd.f32 0.0, %v8012
      %v8014 = vpop.f32.mrf.mxu0
      %v8015 = vadd.f32 0.0, %v8014
      %v8016 = vpop.f32.mrf.mxu0
      %v8017 = vadd.f32 0.0, %v8016
      %8018 = vmatprep.mubr.bf16.mxu0 %v7778
      %8019 = vmatmul.mubr.bf16.gmra.mxu0 %v7777
      %v8020 = vpop.f32.mrf.mxu0
      %v8021 = vadd.f32 0.0, %v8020
      %v8022 = vpop.f32.mrf.mxu0
      %v8023 = vadd.f32 0.0, %v8022
      %v8024 = vpop.f32.mrf.mxu0
      %v8025 = vadd.f32 0.0, %v8024
      %v8026 = vpop.f32.mrf.mxu0
      %v8027 = vadd.f32 0.0, %v8026
      %8028 = vmatprep.mubr.bf16.mxu0 %v7780
      %8029 = vmatmul.mubr.bf16.gmra.mxu0 %v7779
      %v8030 = vpop.f32.mrf.mxu0
      %v8031 = vadd.f32 0.0, %v8030
      %v8032 = vpop.f32.mrf.mxu0
      %v8033 = vadd.f32 0.0, %v8032
      %v8034 = vpop.f32.mrf.mxu0
      %v8035 = vadd.f32 0.0, %v8034
      %v8036 = vpop.f32.mrf.mxu0
      %v8037 = vadd.f32 0.0, %v8036
      %8038 = vmatprep.mubr.bf16.mxu0 %v7782
      %8039 = vmatmul.mubr.bf16.gmra.mxu0 %v7781
      %v8040 = vpop.f32.mrf.mxu0
      %v8041 = vadd.f32 0.0, %v8040
      %v8042 = vpop.f32.mrf.mxu0
      %v8043 = vadd.f32 0.0, %v8042
      %v8044 = vpop.f32.mrf.mxu0
      %v8045 = vadd.f32 0.0, %v8044
      %v8046 = vpop.f32.mrf.mxu0
      %v8047 = vadd.f32 0.0, %v8046
      %8048 = vdwg.mxu0
      %v8049 = vadd.f32 %v7630, %v8011
      %v8050 = vadd.f32 %v7631, %v8013
      %v8051 = vadd.f32 %v7632, %v8015
      %v8052 = vadd.f32 %v7633, %v8017
      %v8053 = vadd.f32 %v7634, %v8021
      %v8054 = vadd.f32 %v7635, %v8023
      %v8055 = vadd.f32 %v7636, %v8025
      %v8056 = vadd.f32 %v7637, %v8027
      %v8057 = vadd.f32 %v7638, %v8031
      %v8058 = vadd.f32 %v7639, %v8033
      %v8059 = vadd.f32 %v7640, %v8035
      %v8060 = vadd.f32 %v7641, %v8037
      %v8061 = vadd.f32 %v7642, %v8041
      %v8062 = vadd.f32 %v7643, %v8043
      %v8063 = vadd.f32 %v7644, %v8045
      %v8064 = vadd.f32 %v7645, %v8047
      %v8065 = vld [vmem:[%s6877] sm:$0xff]
      %v8066 = vld [vmem:[%s6877 + $0x8] sm:$0xff]
      %v8067 = vld [vmem:[%s6877 + $0x20] sm:$0xff]
      %v8068 = vld [vmem:[%s6877 + $0x28] sm:$0xff]
      %v8069 = vld [vmem:[%s6877 + $0x40] sm:$0xff]
      %v8070 = vld [vmem:[%s6877 + $0x48] sm:$0xff]
      %v8071 = vld [vmem:[%s6877 + $0x60] sm:$0xff]
      %v8072 = vld [vmem:[%s6877 + $0x68] sm:$0xff]
      %v8073 = vld [vmem:[%s6877 + $0x80] sm:$0xff]
      %v8074 = vld [vmem:[%s6877 + $0x88] sm:$0xff]
      %v8075 = vld [vmem:[%s6877 + $0xa0] sm:$0xff]
      %v8076 = vld [vmem:[%s6877 + $0xa8] sm:$0xff]
      %v8077 = vld [vmem:[%s6877 + $0xc0] sm:$0xff]
      %v8078 = vld [vmem:[%s6877 + $0xc8] sm:$0xff]
      %v8079 = vld [vmem:[%s6877 + $0xe0] sm:$0xff]
      %v8080 = vld [vmem:[%s6877 + $0xe8] sm:$0xff]
      %v8081 = vpack.c.bf16 %v8067, %v8065
      %v8082 = vpack.c.bf16 %v8068, %v8066
      %v8083 = vpack.c.bf16 %v8071, %v8069
      %v8084 = vpack.c.bf16 %v8072, %v8070
      %v8085 = vpack.c.bf16 %v8075, %v8073
      %v8086 = vpack.c.bf16 %v8076, %v8074
      %v8087 = vpack.c.bf16 %v8079, %v8077
      %v8088 = vpack.c.bf16 %v8080, %v8078
      %s8089 = scalar_lea.vmem %s15, 768
      %v8090 = vld [vmem:[%s8089] sm:$0xff]
      %v8091 = vld [vmem:[%s8089 + $0x8] sm:$0xff]
      %v8092 = vld [vmem:[%s8089 + $0x10] sm:$0xff]
      %v8093 = vld [vmem:[%s8089 + $0x18] sm:$0xff]
      %v8094 = vld [vmem:[%s8089 + $0x20] sm:$0xff]
      %v8095 = vld [vmem:[%s8089 + $0x28] sm:$0xff]
      %v8096 = vld [vmem:[%s8089 + $0x30] sm:$0xff]
      %v8097 = vld [vmem:[%s8089 + $0x38] sm:$0xff]
      %v8098 = vld [vmem:[%s8089 + $0x40] sm:$0xff]
      %v8099 = vld [vmem:[%s8089 + $0x48] sm:$0xff]
      %v8100 = vld [vmem:[%s8089 + $0x50] sm:$0xff]
      %v8101 = vld [vmem:[%s8089 + $0x58] sm:$0xff]
      %v8102 = vld [vmem:[%s8089 + $0x60] sm:$0xff]
      %v8103 = vld [vmem:[%s8089 + $0x68] sm:$0xff]
      %v8104 = vld [vmem:[%s8089 + $0x70] sm:$0xff]
      %v8105 = vld [vmem:[%s8089 + $0x78] sm:$0xff]
      %v8106 = vld [vmem:[%s8089 + $0x80] sm:$0xff]
      %v8107 = vld [vmem:[%s8089 + $0x88] sm:$0xff]
      %v8108 = vld [vmem:[%s8089 + $0x90] sm:$0xff]
      %v8109 = vld [vmem:[%s8089 + $0x98] sm:$0xff]
      %v8110 = vld [vmem:[%s8089 + $0xa0] sm:$0xff]
      %v8111 = vld [vmem:[%s8089 + $0xa8] sm:$0xff]
      %v8112 = vld [vmem:[%s8089 + $0xb0] sm:$0xff]
      %v8113 = vld [vmem:[%s8089 + $0xb8] sm:$0xff]
      %v8114 = vld [vmem:[%s8089 + $0xc0] sm:$0xff]
      %v8115 = vld [vmem:[%s8089 + $0xc8] sm:$0xff]
      %v8116 = vld [vmem:[%s8089 + $0xd0] sm:$0xff]
      %v8117 = vld [vmem:[%s8089 + $0xd8] sm:$0xff]
      %v8118 = vld [vmem:[%s8089 + $0xe0] sm:$0xff]
      %v8119 = vld [vmem:[%s8089 + $0xe8] sm:$0xff]
      %v8120 = vld [vmem:[%s8089 + $0xf0] sm:$0xff]
      %v8121 = vld [vmem:[%s8089 + $0xf8] sm:$0xff]
      %v8154 = vunpack.c.l.b16 %v8090
      %v8155 = vunpack.c.h.b16 %v8090
      %v8156 = vunpack.c.l.b16 %v8091
      %v8157 = vunpack.c.h.b16 %v8091
      %v8158 = vunpack.c.l.b16 %v8092
      %v8159 = vunpack.c.h.b16 %v8092
      %v8160 = vunpack.c.l.b16 %v8093
      %v8161 = vunpack.c.h.b16 %v8093
      %v8162 = vunpack.c.l.b16 %v8094
      %v8163 = vunpack.c.h.b16 %v8094
      %v8164 = vunpack.c.l.b16 %v8095
      %v8165 = vunpack.c.h.b16 %v8095
      %v8166 = vunpack.c.l.b16 %v8096
      %v8167 = vunpack.c.h.b16 %v8096
      %v8168 = vunpack.c.l.b16 %v8097
      %v8169 = vunpack.c.h.b16 %v8097
      %v8170 = vunpack.c.l.b16 %v8098
      %v8171 = vunpack.c.h.b16 %v8098
      %v8172 = vunpack.c.l.b16 %v8099
      %v8173 = vunpack.c.h.b16 %v8099
      %v8174 = vunpack.c.l.b16 %v8100
      %v8175 = vunpack.c.h.b16 %v8100
      %v8176 = vunpack.c.l.b16 %v8101
      %v8177 = vunpack.c.h.b16 %v8101
      %v8178 = vunpack.c.l.b16 %v8102
      %v8179 = vunpack.c.h.b16 %v8102
      %v8180 = vunpack.c.l.b16 %v8103
      %v8181 = vunpack.c.h.b16 %v8103
      %v8182 = vunpack.c.l.b16 %v8104
      %v8183 = vunpack.c.h.b16 %v8104
      %v8184 = vunpack.c.l.b16 %v8105
      %v8185 = vunpack.c.h.b16 %v8105
      %v8186 = vunpack.c.l.b16 %v8106
      %v8187 = vunpack.c.h.b16 %v8106
      %v8188 = vunpack.c.l.b16 %v8107
      %v8189 = vunpack.c.h.b16 %v8107
      %v8190 = vunpack.c.l.b16 %v8108
      %v8191 = vunpack.c.h.b16 %v8108
      %v8192 = vunpack.c.l.b16 %v8109
      %v8193 = vunpack.c.h.b16 %v8109
      %v8194 = vunpack.c.l.b16 %v8110
      %v8195 = vunpack.c.h.b16 %v8110
      %v8196 = vunpack.c.l.b16 %v8111
      %v8197 = vunpack.c.h.b16 %v8111
      %v8198 = vunpack.c.l.b16 %v8112
      %v8199 = vunpack.c.h.b16 %v8112
      %v8200 = vunpack.c.l.b16 %v8113
      %v8201 = vunpack.c.h.b16 %v8113
      %v8202 = vunpack.c.l.b16 %v8114
      %v8203 = vunpack.c.h.b16 %v8114
      %v8204 = vunpack.c.l.b16 %v8115
      %v8205 = vunpack.c.h.b16 %v8115
      %v8206 = vunpack.c.l.b16 %v8116
      %v8207 = vunpack.c.h.b16 %v8116
      %v8208 = vunpack.c.l.b16 %v8117
      %v8209 = vunpack.c.h.b16 %v8117
      %v8210 = vunpack.c.l.b16 %v8118
      %v8211 = vunpack.c.h.b16 %v8118
      %v8212 = vunpack.c.l.b16 %v8119
      %v8213 = vunpack.c.h.b16 %v8119
      %v8214 = vunpack.c.l.b16 %v8120
      %v8215 = vunpack.c.h.b16 %v8120
      %v8216 = vunpack.c.l.b16 %v8121
      %v8217 = vunpack.c.h.b16 %v8121
      %v8218 = vpack.c.b16 %v8156, %v8154
      %v8219 = vpack.c.b16 %v8157, %v8155
      %v8220 = vpack.c.b16 %v8160, %v8158
      %v8221 = vpack.c.b16 %v8161, %v8159
      %v8222 = vpack.c.b16 %v8164, %v8162
      %v8223 = vpack.c.b16 %v8165, %v8163
      %v8224 = vpack.c.b16 %v8168, %v8166
      %v8225 = vpack.c.b16 %v8169, %v8167
      %v8226 = vpack.c.b16 %v8172, %v8170
      %v8227 = vpack.c.b16 %v8173, %v8171
      %v8228 = vpack.c.b16 %v8176, %v8174
      %v8229 = vpack.c.b16 %v8177, %v8175
      %v8230 = vpack.c.b16 %v8180, %v8178
      %v8231 = vpack.c.b16 %v8181, %v8179
      %v8232 = vpack.c.b16 %v8184, %v8182
      %v8233 = vpack.c.b16 %v8185, %v8183
      %v8234 = vpack.c.b16 %v8188, %v8186
      %v8235 = vpack.c.b16 %v8189, %v8187
      %v8236 = vpack.c.b16 %v8192, %v8190
      %v8237 = vpack.c.b16 %v8193, %v8191
      %v8238 = vpack.c.b16 %v8196, %v8194
      %v8239 = vpack.c.b16 %v8197, %v8195
      %v8240 = vpack.c.b16 %v8200, %v8198
      %v8241 = vpack.c.b16 %v8201, %v8199
      %v8242 = vpack.c.b16 %v8204, %v8202
      %v8243 = vpack.c.b16 %v8205, %v8203
      %v8244 = vpack.c.b16 %v8208, %v8206
      %v8245 = vpack.c.b16 %v8209, %v8207
      %v8246 = vpack.c.b16 %v8212, %v8210
      %v8247 = vpack.c.b16 %v8213, %v8211
      %v8248 = vpack.c.b16 %v8216, %v8214
      %v8249 = vpack.c.b16 %v8217, %v8215
      %8282 = vmatprep.subr.bf16.mxu0 %v8233
      %8283 = vmatpush1.bf16.msra.mxu0 %v8232
      %8284 = vmatprep.subr.bf16.mxu0 %v8231
      %8285 = vmatpush1.bf16.msra.mxu0 %v8230
      %8286 = vmatprep.subr.bf16.mxu0 %v8229
      %8287 = vmatpush1.bf16.msra.mxu0 %v8228
      %8288 = vmatprep.subr.bf16.mxu0 %v8227
      %8289 = vmatpush1.bf16.msra.mxu0 %v8226
      %8290 = vmatprep.subr.bf16.mxu0 %v8225
      %8291 = vmatpush1.bf16.msra.mxu0 %v8224
      %8292 = vmatprep.subr.bf16.mxu0 %v8223
      %8293 = vmatpush1.bf16.msra.mxu0 %v8222
      %8294 = vmatprep.subr.bf16.mxu0 %v8221
      %8295 = vmatpush1.bf16.msra.mxu0 %v8220
      %8296 = vmatprep.subr.bf16.mxu0 %v8219
      %8297 = vmatpush1.bf16.msra.mxu0 %v8218
      %8298 = vmatprep.subr.bf16.mxu0 %v8249
      %8299 = vmatpush2.bf16.msra.mxu0 %v8248
      %8300 = vmatprep.subr.bf16.mxu0 %v8247
      %8301 = vmatpush2.bf16.msra.mxu0 %v8246
      %8302 = vmatprep.subr.bf16.mxu0 %v8245
      %8303 = vmatpush2.bf16.msra.mxu0 %v8244
      %8304 = vmatprep.subr.bf16.mxu0 %v8243
      %8305 = vmatpush2.bf16.msra.mxu0 %v8242
      %8306 = vmatprep.subr.bf16.mxu0 %v8241
      %8307 = vmatpush2.bf16.msra.mxu0 %v8240
      %8308 = vmatprep.subr.bf16.mxu0 %v8239
      %8309 = vmatpush2.bf16.msra.mxu0 %v8238
      %8310 = vmatprep.subr.bf16.mxu0 %v8237
      %8311 = vmatpush2.bf16.msra.mxu0 %v8236
      %8312 = vmatprep.subr.bf16.mxu0 %v8235
      %8313 = vmatpush2.bf16.msra.mxu0 %v8234
      %8314 = vmatprep.mubr.bf16.mxu0 %v8082
      %8315 = vmatmul.mubr.bf16.gmra.mxu0 %v8081
      %v8316 = vpop.f32.mrf.mxu0
      %v8317 = vadd.f32 0.0, %v8316
      %v8318 = vpop.f32.mrf.mxu0
      %v8319 = vadd.f32 0.0, %v8318
      %v8320 = vpop.f32.mrf.mxu0
      %v8321 = vadd.f32 0.0, %v8320
      %v8322 = vpop.f32.mrf.mxu0
      %v8323 = vadd.f32 0.0, %v8322
      %8324 = vmatprep.mubr.bf16.mxu0 %v8084
      %8325 = vmatmul.mubr.bf16.gmra.mxu0 %v8083
      %v8326 = vpop.f32.mrf.mxu0
      %v8327 = vadd.f32 0.0, %v8326
      %v8328 = vpop.f32.mrf.mxu0
      %v8329 = vadd.f32 0.0, %v8328
      %v8330 = vpop.f32.mrf.mxu0
      %v8331 = vadd.f32 0.0, %v8330
      %v8332 = vpop.f32.mrf.mxu0
      %v8333 = vadd.f32 0.0, %v8332
      %8334 = vmatprep.mubr.bf16.mxu0 %v8086
      %8335 = vmatmul.mubr.bf16.gmra.mxu0 %v8085
      %v8336 = vpop.f32.mrf.mxu0
      %v8337 = vadd.f32 0.0, %v8336
      %v8338 = vpop.f32.mrf.mxu0
      %v8339 = vadd.f32 0.0, %v8338
      %v8340 = vpop.f32.mrf.mxu0
      %v8341 = vadd.f32 0.0, %v8340
      %v8342 = vpop.f32.mrf.mxu0
      %v8343 = vadd.f32 0.0, %v8342
      %8344 = vmatprep.mubr.bf16.mxu0 %v8088
      %8345 = vmatmul.mubr.bf16.gmra.mxu0 %v8087
      %v8346 = vpop.f32.mrf.mxu0
      %v8347 = vadd.f32 0.0, %v8346
      %v8348 = vpop.f32.mrf.mxu0
      %v8349 = vadd.f32 0.0, %v8348
      %v8350 = vpop.f32.mrf.mxu0
      %v8351 = vadd.f32 0.0, %v8350
      %v8352 = vpop.f32.mrf.mxu0
      %v8353 = vadd.f32 0.0, %v8352
      %8354 = vdwg.mxu0
      %v8355 = vadd.f32 %v8049, %v8317
      %v8356 = vadd.f32 %v8050, %v8319
      %v8357 = vadd.f32 %v8051, %v8321
      %v8358 = vadd.f32 %v8052, %v8323
      %v8359 = vadd.f32 %v8053, %v8327
      %v8360 = vadd.f32 %v8054, %v8329
      %v8361 = vadd.f32 %v8055, %v8331
      %v8362 = vadd.f32 %v8056, %v8333
      %v8363 = vadd.f32 %v8057, %v8337
      %v8364 = vadd.f32 %v8058, %v8339
      %v8365 = vadd.f32 %v8059, %v8341
      %v8366 = vadd.f32 %v8060, %v8343
      %v8367 = vadd.f32 %v8061, %v8347
      %v8368 = vadd.f32 %v8062, %v8349
      %v8369 = vadd.f32 %v8063, %v8351
      %v8370 = vadd.f32 %v8064, %v8353
      %v8371 = vld [vmem:[%s6877] sm:$0xfe]
      %v8372 = vld [vmem:[%s6877 + $0x8] sm:$0xfe]
      %v8373 = vld [vmem:[%s6877 + $0x10] sm:$0x1]
      %v8374 = vld [vmem:[%s6877 + $0x18] sm:$0x1]
      %v8375 = vld [vmem:[%s6877 + $0x20] sm:$0xfe]
      %v8376 = vld [vmem:[%s6877 + $0x28] sm:$0xfe]
      %v8377 = vld [vmem:[%s6877 + $0x30] sm:$0x1]
      %v8378 = vld [vmem:[%s6877 + $0x38] sm:$0x1]
      %v8379 = vld [vmem:[%s6877 + $0x40] sm:$0xfe]
      %v8380 = vld [vmem:[%s6877 + $0x48] sm:$0xfe]
      %v8381 = vld [vmem:[%s6877 + $0x50] sm:$0x1]
      %v8382 = vld [vmem:[%s6877 + $0x58] sm:$0x1]
      %v8383 = vld [vmem:[%s6877 + $0x60] sm:$0xfe]
      %v8384 = vld [vmem:[%s6877 + $0x68] sm:$0xfe]
      %v8385 = vld [vmem:[%s6877 + $0x70] sm:$0x1]
      %v8386 = vld [vmem:[%s6877 + $0x78] sm:$0x1]
      %v8387 = vld [vmem:[%s6877 + $0x80] sm:$0xfe]
      %v8388 = vld [vmem:[%s6877 + $0x88] sm:$0xfe]
      %v8389 = vld [vmem:[%s6877 + $0x90] sm:$0x1]
      %v8390 = vld [vmem:[%s6877 + $0x98] sm:$0x1]
      %v8391 = vld [vmem:[%s6877 + $0xa0] sm:$0xfe]
      %v8392 = vld [vmem:[%s6877 + $0xa8] sm:$0xfe]
      %v8393 = vld [vmem:[%s6877 + $0xb0] sm:$0x1]
      %v8394 = vld [vmem:[%s6877 + $0xb8] sm:$0x1]
      %v8395 = vld [vmem:[%s6877 + $0xc0] sm:$0xfe]
      %v8396 = vld [vmem:[%s6877 + $0xc8] sm:$0xfe]
      %v8397 = vld [vmem:[%s6877 + $0xd0] sm:$0x1]
      %v8398 = vld [vmem:[%s6877 + $0xd8] sm:$0x1]
      %v8399 = vld [vmem:[%s6877 + $0xe0] sm:$0xfe]
      %v8400 = vld [vmem:[%s6877 + $0xe8] sm:$0xfe]
      %v8401 = vld [vmem:[%s6877 + $0xf0] sm:$0x1]
      %v8402 = vld [vmem:[%s6877 + $0xf8] sm:$0x1]
      %v8435 = vrot.slane %v8371, 1
      %v8436 = vrot.slane %v8373, 1
      %v8437 = vsel %vm7291, %v8435, %v8436
      %v8438 = vrot.slane %v8372, 1
      %v8439 = vrot.slane %v8374, 1
      %v8440 = vsel %vm7291, %v8438, %v8439
      %v8441 = vrot.slane %v8375, 1
      %v8442 = vrot.slane %v8377, 1
      %v8443 = vsel %vm7291, %v8441, %v8442
      %v8444 = vrot.slane %v8376, 1
      %v8445 = vrot.slane %v8378, 1
      %v8446 = vsel %vm7291, %v8444, %v8445
      %v8447 = vrot.slane %v8379, 1
      %v8448 = vrot.slane %v8381, 1
      %v8449 = vsel %vm7291, %v8447, %v8448
      %v8450 = vrot.slane %v8380, 1
      %v8451 = vrot.slane %v8382, 1
      %v8452 = vsel %vm7291, %v8450, %v8451
      %v8453 = vrot.slane %v8383, 1
      %v8454 = vrot.slane %v8385, 1
      %v8455 = vsel %vm7291, %v8453, %v8454
      %v8456 = vrot.slane %v8384, 1
      %v8457 = vrot.slane %v8386, 1
      %v8458 = vsel %vm7291, %v8456, %v8457
      %v8459 = vrot.slane %v8387, 1
      %v8460 = vrot.slane %v8389, 1
      %v8461 = vsel %vm7291, %v8459, %v8460
      %v8462 = vrot.slane %v8388, 1
      %v8463 = vrot.slane %v8390, 1
      %v8464 = vsel %vm7291, %v8462, %v8463
      %v8465 = vrot.slane %v8391, 1
      %v8466 = vrot.slane %v8393, 1
      %v8467 = vsel %vm7291, %v8465, %v8466
      %v8468 = vrot.slane %v8392, 1
      %v8469 = vrot.slane %v8394, 1
      %v8470 = vsel %vm7291, %v8468, %v8469
      %v8471 = vrot.slane %v8395, 1
      %v8472 = vrot.slane %v8397, 1
      %v8473 = vsel %vm7291, %v8471, %v8472
      %v8474 = vrot.slane %v8396, 1
      %v8475 = vrot.slane %v8398, 1
      %v8476 = vsel %vm7291, %v8474, %v8475
      %v8477 = vrot.slane %v8399, 1
      %v8478 = vrot.slane %v8401, 1
      %v8479 = vsel %vm7291, %v8477, %v8478
      %v8480 = vrot.slane %v8400, 1
      %v8481 = vrot.slane %v8402, 1
      %v8482 = vsel %vm7291, %v8480, %v8481
      %v8499 = vpack.c.bf16 %v8443, %v8437
      %v8500 = vpack.c.bf16 %v8446, %v8440
      %v8501 = vpack.c.bf16 %v8455, %v8449
      %v8502 = vpack.c.bf16 %v8458, %v8452
      %v8503 = vpack.c.bf16 %v8467, %v8461
      %v8504 = vpack.c.bf16 %v8470, %v8464
      %v8505 = vpack.c.bf16 %v8479, %v8473
      %v8506 = vpack.c.bf16 %v8482, %v8476
      %s8507 = scalar_lea.vmem %s15, 1024
      %v8508 = vld [vmem:[%s8507] sm:$0xff]
      %v8509 = vld [vmem:[%s8507 + $0x8] sm:$0xff]
      %v8510 = vld [vmem:[%s8507 + $0x10] sm:$0xff]
      %v8511 = vld [vmem:[%s8507 + $0x18] sm:$0xff]
      %v8512 = vld [vmem:[%s8507 + $0x20] sm:$0xff]
      %v8513 = vld [vmem:[%s8507 + $0x28] sm:$0xff]
      %v8514 = vld [vmem:[%s8507 + $0x30] sm:$0xff]
      %v8515 = vld [vmem:[%s8507 + $0x38] sm:$0xff]
      %v8516 = vld [vmem:[%s8507 + $0x40] sm:$0xff]
      %v8517 = vld [vmem:[%s8507 + $0x48] sm:$0xff]
      %v8518 = vld [vmem:[%s8507 + $0x50] sm:$0xff]
      %v8519 = vld [vmem:[%s8507 + $0x58] sm:$0xff]
      %v8520 = vld [vmem:[%s8507 + $0x60] sm:$0xff]
      %v8521 = vld [vmem:[%s8507 + $0x68] sm:$0xff]
      %v8522 = vld [vmem:[%s8507 + $0x70] sm:$0xff]
      %v8523 = vld [vmem:[%s8507 + $0x78] sm:$0xff]
      %v8524 = vld [vmem:[%s8507 + $0x80] sm:$0xff]
      %v8525 = vld [vmem:[%s8507 + $0x88] sm:$0xff]
      %v8526 = vld [vmem:[%s8507 + $0x90] sm:$0xff]
      %v8527 = vld [vmem:[%s8507 + $0x98] sm:$0xff]
      %v8528 = vld [vmem:[%s8507 + $0xa0] sm:$0xff]
      %v8529 = vld [vmem:[%s8507 + $0xa8] sm:$0xff]
      %v8530 = vld [vmem:[%s8507 + $0xb0] sm:$0xff]
      %v8531 = vld [vmem:[%s8507 + $0xb8] sm:$0xff]
      %v8532 = vld [vmem:[%s8507 + $0xc0] sm:$0xff]
      %v8533 = vld [vmem:[%s8507 + $0xc8] sm:$0xff]
      %v8534 = vld [vmem:[%s8507 + $0xd0] sm:$0xff]
      %v8535 = vld [vmem:[%s8507 + $0xd8] sm:$0xff]
      %v8536 = vld [vmem:[%s8507 + $0xe0] sm:$0xff]
      %v8537 = vld [vmem:[%s8507 + $0xe8] sm:$0xff]
      %v8538 = vld [vmem:[%s8507 + $0xf0] sm:$0xff]
      %v8539 = vld [vmem:[%s8507 + $0xf8] sm:$0xff]
      %v8572 = vunpack.c.l.b16 %v8508
      %v8573 = vunpack.c.h.b16 %v8508
      %v8574 = vunpack.c.l.b16 %v8509
      %v8575 = vunpack.c.h.b16 %v8509
      %v8576 = vunpack.c.l.b16 %v8510
      %v8577 = vunpack.c.h.b16 %v8510
      %v8578 = vunpack.c.l.b16 %v8511
      %v8579 = vunpack.c.h.b16 %v8511
      %v8580 = vunpack.c.l.b16 %v8512
      %v8581 = vunpack.c.h.b16 %v8512
      %v8582 = vunpack.c.l.b16 %v8513
      %v8583 = vunpack.c.h.b16 %v8513
      %v8584 = vunpack.c.l.b16 %v8514
      %v8585 = vunpack.c.h.b16 %v8514
      %v8586 = vunpack.c.l.b16 %v8515
      %v8587 = vunpack.c.h.b16 %v8515
      %v8588 = vunpack.c.l.b16 %v8516
      %v8589 = vunpack.c.h.b16 %v8516
      %v8590 = vunpack.c.l.b16 %v8517
      %v8591 = vunpack.c.h.b16 %v8517
      %v8592 = vunpack.c.l.b16 %v8518
      %v8593 = vunpack.c.h.b16 %v8518
      %v8594 = vunpack.c.l.b16 %v8519
      %v8595 = vunpack.c.h.b16 %v8519
      %v8596 = vunpack.c.l.b16 %v8520
      %v8597 = vunpack.c.h.b16 %v8520
      %v8598 = vunpack.c.l.b16 %v8521
      %v8599 = vunpack.c.h.b16 %v8521
      %v8600 = vunpack.c.l.b16 %v8522
      %v8601 = vunpack.c.h.b16 %v8522
      %v8602 = vunpack.c.l.b16 %v8523
      %v8603 = vunpack.c.h.b16 %v8523
      %v8604 = vunpack.c.l.b16 %v8524
      %v8605 = vunpack.c.h.b16 %v8524
      %v8606 = vunpack.c.l.b16 %v8525
      %v8607 = vunpack.c.h.b16 %v8525
      %v8608 = vunpack.c.l.b16 %v8526
      %v8609 = vunpack.c.h.b16 %v8526
      %v8610 = vunpack.c.l.b16 %v8527
      %v8611 = vunpack.c.h.b16 %v8527
      %v8612 = vunpack.c.l.b16 %v8528
      %v8613 = vunpack.c.h.b16 %v8528
      %v8614 = vunpack.c.l.b16 %v8529
      %v8615 = vunpack.c.h.b16 %v8529
      %v8616 = vunpack.c.l.b16 %v8530
      %v8617 = vunpack.c.h.b16 %v8530
      %v8618 = vunpack.c.l.b16 %v8531
      %v8619 = vunpack.c.h.b16 %v8531
      %v8620 = vunpack.c.l.b16 %v8532
      %v8621 = vunpack.c.h.b16 %v8532
      %v8622 = vunpack.c.l.b16 %v8533
      %v8623 = vunpack.c.h.b16 %v8533
      %v8624 = vunpack.c.l.b16 %v8534
      %v8625 = vunpack.c.h.b16 %v8534
      %v8626 = vunpack.c.l.b16 %v8535
      %v8627 = vunpack.c.h.b16 %v8535
      %v8628 = vunpack.c.l.b16 %v8536
      %v8629 = vunpack.c.h.b16 %v8536
      %v8630 = vunpack.c.l.b16 %v8537
      %v8631 = vunpack.c.h.b16 %v8537
      %v8632 = vunpack.c.l.b16 %v8538
      %v8633 = vunpack.c.h.b16 %v8538
      %v8634 = vunpack.c.l.b16 %v8539
      %v8635 = vunpack.c.h.b16 %v8539
      %v8636 = vpack.c.b16 %v8574, %v8572
      %v8637 = vpack.c.b16 %v8575, %v8573
      %v8638 = vpack.c.b16 %v8578, %v8576
      %v8639 = vpack.c.b16 %v8579, %v8577
      %v8640 = vpack.c.b16 %v8582, %v8580
      %v8641 = vpack.c.b16 %v8583, %v8581
      %v8642 = vpack.c.b16 %v8586, %v8584
      %v8643 = vpack.c.b16 %v8587, %v8585
      %v8644 = vpack.c.b16 %v8590, %v8588
      %v8645 = vpack.c.b16 %v8591, %v8589
      %v8646 = vpack.c.b16 %v8594, %v8592
      %v8647 = vpack.c.b16 %v8595, %v8593
      %v8648 = vpack.c.b16 %v8598, %v8596
      %v8649 = vpack.c.b16 %v8599, %v8597
      %v8650 = vpack.c.b16 %v8602, %v8600
      %v8651 = vpack.c.b16 %v8603, %v8601
      %v8652 = vpack.c.b16 %v8606, %v8604
      %v8653 = vpack.c.b16 %v8607, %v8605
      %v8654 = vpack.c.b16 %v8610, %v8608
      %v8655 = vpack.c.b16 %v8611, %v8609
      %v8656 = vpack.c.b16 %v8614, %v8612
      %v8657 = vpack.c.b16 %v8615, %v8613
      %v8658 = vpack.c.b16 %v8618, %v8616
      %v8659 = vpack.c.b16 %v8619, %v8617
      %v8660 = vpack.c.b16 %v8622, %v8620
      %v8661 = vpack.c.b16 %v8623, %v8621
      %v8662 = vpack.c.b16 %v8626, %v8624
      %v8663 = vpack.c.b16 %v8627, %v8625
      %v8664 = vpack.c.b16 %v8630, %v8628
      %v8665 = vpack.c.b16 %v8631, %v8629
      %v8666 = vpack.c.b16 %v8634, %v8632
      %v8667 = vpack.c.b16 %v8635, %v8633
      %8700 = vmatprep.subr.bf16.mxu0 %v8651
      %8701 = vmatpush1.bf16.msra.mxu0 %v8650
      %8702 = vmatprep.subr.bf16.mxu0 %v8649
      %8703 = vmatpush1.bf16.msra.mxu0 %v8648
      %8704 = vmatprep.subr.bf16.mxu0 %v8647
      %8705 = vmatpush1.bf16.msra.mxu0 %v8646
      %8706 = vmatprep.subr.bf16.mxu0 %v8645
      %8707 = vmatpush1.bf16.msra.mxu0 %v8644
      %8708 = vmatprep.subr.bf16.mxu0 %v8643
      %8709 = vmatpush1.bf16.msra.mxu0 %v8642
      %8710 = vmatprep.subr.bf16.mxu0 %v8641
      %8711 = vmatpush1.bf16.msra.mxu0 %v8640
      %8712 = vmatprep.subr.bf16.mxu0 %v8639
      %8713 = vmatpush1.bf16.msra.mxu0 %v8638
      %8714 = vmatprep.subr.bf16.mxu0 %v8637
      %8715 = vmatpush1.bf16.msra.mxu0 %v8636
      %8716 = vmatprep.subr.bf16.mxu0 %v8667
      %8717 = vmatpush2.bf16.msra.mxu0 %v8666
      %8718 = vmatprep.subr.bf16.mxu0 %v8665
      %8719 = vmatpush2.bf16.msra.mxu0 %v8664
      %8720 = vmatprep.subr.bf16.mxu0 %v8663
      %8721 = vmatpush2.bf16.msra.mxu0 %v8662
      %8722 = vmatprep.subr.bf16.mxu0 %v8661
      %8723 = vmatpush2.bf16.msra.mxu0 %v8660
      %8724 = vmatprep.subr.bf16.mxu0 %v8659
      %8725 = vmatpush2.bf16.msra.mxu0 %v8658
      %8726 = vmatprep.subr.bf16.mxu0 %v8657
      %8727 = vmatpush2.bf16.msra.mxu0 %v8656
      %8728 = vmatprep.subr.bf16.mxu0 %v8655
      %8729 = vmatpush2.bf16.msra.mxu0 %v8654
      %8730 = vmatprep.subr.bf16.mxu0 %v8653
      %8731 = vmatpush2.bf16.msra.mxu0 %v8652
      %8732 = vmatprep.mubr.bf16.mxu0 %v8500
      %8733 = vmatmul.mubr.bf16.gmra.mxu0 %v8499
      %v8734 = vpop.f32.mrf.mxu0
      %v8735 = vadd.f32 0.0, %v8734
      %v8736 = vpop.f32.mrf.mxu0
      %v8737 = vadd.f32 0.0, %v8736
      %v8738 = vpop.f32.mrf.mxu0
      %v8739 = vadd.f32 0.0, %v8738
      %v8740 = vpop.f32.mrf.mxu0
      %v8741 = vadd.f32 0.0, %v8740
      %8742 = vmatprep.mubr.bf16.mxu0 %v8502
      %8743 = vmatmul.mubr.bf16.gmra.mxu0 %v8501
      %v8744 = vpop.f32.mrf.mxu0
      %v8745 = vadd.f32 0.0, %v8744
      %v8746 = vpop.f32.mrf.mxu0
      %v8747 = vadd.f32 0.0, %v8746
      %v8748 = vpop.f32.mrf.mxu0
      %v8749 = vadd.f32 0.0, %v8748
      %v8750 = vpop.f32.mrf.mxu0
      %v8751 = vadd.f32 0.0, %v8750
      %8752 = vmatprep.mubr.bf16.mxu0 %v8504
      %8753 = vmatmul.mubr.bf16.gmra.mxu0 %v8503
      %v8754 = vpop.f32.mrf.mxu0
      %v8755 = vadd.f32 0.0, %v8754
      %v8756 = vpop.f32.mrf.mxu0
      %v8757 = vadd.f32 0.0, %v8756
      %v8758 = vpop.f32.mrf.mxu0
      %v8759 = vadd.f32 0.0, %v8758
      %v8760 = vpop.f32.mrf.mxu0
      %v8761 = vadd.f32 0.0, %v8760
      %8762 = vmatprep.mubr.bf16.mxu0 %v8506
      %8763 = vmatmul.mubr.bf16.gmra.mxu0 %v8505
      %v8764 = vpop.f32.mrf.mxu0
      %v8765 = vadd.f32 0.0, %v8764
      %v8766 = vpop.f32.mrf.mxu0
      %v8767 = vadd.f32 0.0, %v8766
      %v8768 = vpop.f32.mrf.mxu0
      %v8769 = vadd.f32 0.0, %v8768
      %v8770 = vpop.f32.mrf.mxu0
      %v8771 = vadd.f32 0.0, %v8770
      %8772 = vdwg.mxu0
      %v8773 = vadd.f32 %v8355, %v8735
      %v8774 = vadd.f32 %v8356, %v8737
      %v8775 = vadd.f32 %v8357, %v8739
      %v8776 = vadd.f32 %v8358, %v8741
      %v8777 = vadd.f32 %v8359, %v8745
      %v8778 = vadd.f32 %v8360, %v8747
      %v8779 = vadd.f32 %v8361, %v8749
      %v8780 = vadd.f32 %v8362, %v8751
      %v8781 = vadd.f32 %v8363, %v8755
      %v8782 = vadd.f32 %v8364, %v8757
      %v8783 = vadd.f32 %v8365, %v8759
      %v8784 = vadd.f32 %v8366, %v8761
      %v8785 = vadd.f32 %v8367, %v8765
      %v8786 = vadd.f32 %v8368, %v8767
      %v8787 = vadd.f32 %v8369, %v8769
      %v8788 = vadd.f32 %v8370, %v8771
      %v8789 = vld [vmem:[%s6877] sm:$0xfc]
      %v8790 = vld [vmem:[%s6877 + $0x8] sm:$0xfc]
      %v8791 = vld [vmem:[%s6877 + $0x10] sm:$0x3]
      %v8792 = vld [vmem:[%s6877 + $0x18] sm:$0x3]
      %v8793 = vld [vmem:[%s6877 + $0x20] sm:$0xfc]
      %v8794 = vld [vmem:[%s6877 + $0x28] sm:$0xfc]
      %v8795 = vld [vmem:[%s6877 + $0x30] sm:$0x3]
      %v8796 = vld [vmem:[%s6877 + $0x38] sm:$0x3]
      %v8797 = vld [vmem:[%s6877 + $0x40] sm:$0xfc]
      %v8798 = vld [vmem:[%s6877 + $0x48] sm:$0xfc]
      %v8799 = vld [vmem:[%s6877 + $0x50] sm:$0x3]
      %v8800 = vld [vmem:[%s6877 + $0x58] sm:$0x3]
      %v8801 = vld [vmem:[%s6877 + $0x60] sm:$0xfc]
      %v8802 = vld [vmem:[%s6877 + $0x68] sm:$0xfc]
      %v8803 = vld [vmem:[%s6877 + $0x70] sm:$0x3]
      %v8804 = vld [vmem:[%s6877 + $0x78] sm:$0x3]
      %v8805 = vld [vmem:[%s6877 + $0x80] sm:$0xfc]
      %v8806 = vld [vmem:[%s6877 + $0x88] sm:$0xfc]
      %v8807 = vld [vmem:[%s6877 + $0x90] sm:$0x3]
      %v8808 = vld [vmem:[%s6877 + $0x98] sm:$0x3]
      %v8809 = vld [vmem:[%s6877 + $0xa0] sm:$0xfc]
      %v8810 = vld [vmem:[%s6877 + $0xa8] sm:$0xfc]
      %v8811 = vld [vmem:[%s6877 + $0xb0] sm:$0x3]
      %v8812 = vld [vmem:[%s6877 + $0xb8] sm:$0x3]
      %v8813 = vld [vmem:[%s6877 + $0xc0] sm:$0xfc]
      %v8814 = vld [vmem:[%s6877 + $0xc8] sm:$0xfc]
      %v8815 = vld [vmem:[%s6877 + $0xd0] sm:$0x3]
      %v8816 = vld [vmem:[%s6877 + $0xd8] sm:$0x3]
      %v8817 = vld [vmem:[%s6877 + $0xe0] sm:$0xfc]
      %v8818 = vld [vmem:[%s6877 + $0xe8] sm:$0xfc]
      %v8819 = vld [vmem:[%s6877 + $0xf0] sm:$0x3]
      %v8820 = vld [vmem:[%s6877 + $0xf8] sm:$0x3]
      %v8853 = vrot.slane %v8789, 2
      %v8854 = vrot.slane %v8791, 2
      %v8855 = vsel %vm7710, %v8853, %v8854
      %v8856 = vrot.slane %v8790, 2
      %v8857 = vrot.slane %v8792, 2
      %v8858 = vsel %vm7710, %v8856, %v8857
      %v8859 = vrot.slane %v8793, 2
      %v8860 = vrot.slane %v8795, 2
      %v8861 = vsel %vm7710, %v8859, %v8860
      %v8862 = vrot.slane %v8794, 2
      %v8863 = vrot.slane %v8796, 2
      %v8864 = vsel %vm7710, %v8862, %v8863
      %v8865 = vrot.slane %v8797, 2
      %v8866 = vrot.slane %v8799, 2
      %v8867 = vsel %vm7710, %v8865, %v8866
      %v8868 = vrot.slane %v8798, 2
      %v8869 = vrot.slane %v8800, 2
      %v8870 = vsel %vm7710, %v8868, %v8869
      %v8871 = vrot.slane %v8801, 2
      %v8872 = vrot.slane %v8803, 2
      %v8873 = vsel %vm7710, %v8871, %v8872
      %v8874 = vrot.slane %v8802, 2
      %v8875 = vrot.slane %v8804, 2
      %v8876 = vsel %vm7710, %v8874, %v8875
      %v8877 = vrot.slane %v8805, 2
      %v8878 = vrot.slane %v8807, 2
      %v8879 = vsel %vm7710, %v8877, %v8878
      %v8880 = vrot.slane %v8806, 2
      %v8881 = vrot.slane %v8808, 2
      %v8882 = vsel %vm7710, %v8880, %v8881
      %v8883 = vrot.slane %v8809, 2
      %v8884 = vrot.slane %v8811, 2
      %v8885 = vsel %vm7710, %v8883, %v8884
      %v8886 = vrot.slane %v8810, 2
      %v8887 = vrot.slane %v8812, 2
      %v8888 = vsel %vm7710, %v8886, %v8887
      %v8889 = vrot.slane %v8813, 2
      %v8890 = vrot.slane %v8815, 2
      %v8891 = vsel %vm7710, %v8889, %v8890
      %v8892 = vrot.slane %v8814, 2
      %v8893 = vrot.slane %v8816, 2
      %v8894 = vsel %vm7710, %v8892, %v8893
      %v8895 = vrot.slane %v8817, 2
      %v8896 = vrot.slane %v8819, 2
      %v8897 = vsel %vm7710, %v8895, %v8896
      %v8898 = vrot.slane %v8818, 2
      %v8899 = vrot.slane %v8820, 2
      %v8900 = vsel %vm7710, %v8898, %v8899
      %v8917 = vpack.c.bf16 %v8861, %v8855
      %v8918 = vpack.c.bf16 %v8864, %v8858
      %v8919 = vpack.c.bf16 %v8873, %v8867
      %v8920 = vpack.c.bf16 %v8876, %v8870
      %v8921 = vpack.c.bf16 %v8885, %v8879
      %v8922 = vpack.c.bf16 %v8888, %v8882
      %v8923 = vpack.c.bf16 %v8897, %v8891
      %v8924 = vpack.c.bf16 %v8900, %v8894
      %s8925 = scalar_lea.vmem %s15, 1280
      %v8926 = vld [vmem:[%s8925] sm:$0xff]
      %v8927 = vld [vmem:[%s8925 + $0x8] sm:$0xff]
      %v8928 = vld [vmem:[%s8925 + $0x10] sm:$0xff]
      %v8929 = vld [vmem:[%s8925 + $0x18] sm:$0xff]
      %v8930 = vld [vmem:[%s8925 + $0x20] sm:$0xff]
      %v8931 = vld [vmem:[%s8925 + $0x28] sm:$0xff]
      %v8932 = vld [vmem:[%s8925 + $0x30] sm:$0xff]
      %v8933 = vld [vmem:[%s8925 + $0x38] sm:$0xff]
      %v8934 = vld [vmem:[%s8925 + $0x40] sm:$0xff]
      %v8935 = vld [vmem:[%s8925 + $0x48] sm:$0xff]
      %v8936 = vld [vmem:[%s8925 + $0x50] sm:$0xff]
      %v8937 = vld [vmem:[%s8925 + $0x58] sm:$0xff]
      %v8938 = vld [vmem:[%s8925 + $0x60] sm:$0xff]
      %v8939 = vld [vmem:[%s8925 + $0x68] sm:$0xff]
      %v8940 = vld [vmem:[%s8925 + $0x70] sm:$0xff]
      %v8941 = vld [vmem:[%s8925 + $0x78] sm:$0xff]
      %v8942 = vld [vmem:[%s8925 + $0x80] sm:$0xff]
      %v8943 = vld [vmem:[%s8925 + $0x88] sm:$0xff]
      %v8944 = vld [vmem:[%s8925 + $0x90] sm:$0xff]
      %v8945 = vld [vmem:[%s8925 + $0x98] sm:$0xff]
      %v8946 = vld [vmem:[%s8925 + $0xa0] sm:$0xff]
      %v8947 = vld [vmem:[%s8925 + $0xa8] sm:$0xff]
      %v8948 = vld [vmem:[%s8925 + $0xb0] sm:$0xff]
      %v8949 = vld [vmem:[%s8925 + $0xb8] sm:$0xff]
      %v8950 = vld [vmem:[%s8925 + $0xc0] sm:$0xff]
      %v8951 = vld [vmem:[%s8925 + $0xc8] sm:$0xff]
      %v8952 = vld [vmem:[%s8925 + $0xd0] sm:$0xff]
      %v8953 = vld [vmem:[%s8925 + $0xd8] sm:$0xff]
      %v8954 = vld [vmem:[%s8925 + $0xe0] sm:$0xff]
      %v8955 = vld [vmem:[%s8925 + $0xe8] sm:$0xff]
      %v8956 = vld [vmem:[%s8925 + $0xf0] sm:$0xff]
      %v8957 = vld [vmem:[%s8925 + $0xf8] sm:$0xff]
      %v8990 = vunpack.c.l.b16 %v8926
      %v8991 = vunpack.c.h.b16 %v8926
      %v8992 = vunpack.c.l.b16 %v8927
      %v8993 = vunpack.c.h.b16 %v8927
      %v8994 = vunpack.c.l.b16 %v8928
      %v8995 = vunpack.c.h.b16 %v8928
      %v8996 = vunpack.c.l.b16 %v8929
      %v8997 = vunpack.c.h.b16 %v8929
      %v8998 = vunpack.c.l.b16 %v8930
      %v8999 = vunpack.c.h.b16 %v8930
      %v9000 = vunpack.c.l.b16 %v8931
      %v9001 = vunpack.c.h.b16 %v8931
      %v9002 = vunpack.c.l.b16 %v8932
      %v9003 = vunpack.c.h.b16 %v8932
      %v9004 = vunpack.c.l.b16 %v8933
      %v9005 = vunpack.c.h.b16 %v8933
      %v9006 = vunpack.c.l.b16 %v8934
      %v9007 = vunpack.c.h.b16 %v8934
      %v9008 = vunpack.c.l.b16 %v8935
      %v9009 = vunpack.c.h.b16 %v8935
      %v9010 = vunpack.c.l.b16 %v8936
      %v9011 = vunpack.c.h.b16 %v8936
      %v9012 = vunpack.c.l.b16 %v8937
      %v9013 = vunpack.c.h.b16 %v8937
      %v9014 = vunpack.c.l.b16 %v8938
      %v9015 = vunpack.c.h.b16 %v8938
      %v9016 = vunpack.c.l.b16 %v8939
      %v9017 = vunpack.c.h.b16 %v8939
      %v9018 = vunpack.c.l.b16 %v8940
      %v9019 = vunpack.c.h.b16 %v8940
      %v9020 = vunpack.c.l.b16 %v8941
      %v9021 = vunpack.c.h.b16 %v8941
      %v9022 = vunpack.c.l.b16 %v8942
      %v9023 = vunpack.c.h.b16 %v8942
      %v9024 = vunpack.c.l.b16 %v8943
      %v9025 = vunpack.c.h.b16 %v8943
      %v9026 = vunpack.c.l.b16 %v8944
      %v9027 = vunpack.c.h.b16 %v8944
      %v9028 = vunpack.c.l.b16 %v8945
      %v9029 = vunpack.c.h.b16 %v8945
      %v9030 = vunpack.c.l.b16 %v8946
      %v9031 = vunpack.c.h.b16 %v8946
      %v9032 = vunpack.c.l.b16 %v8947
      %v9033 = vunpack.c.h.b16 %v8947
      %v9034 = vunpack.c.l.b16 %v8948
      %v9035 = vunpack.c.h.b16 %v8948
      %v9036 = vunpack.c.l.b16 %v8949
      %v9037 = vunpack.c.h.b16 %v8949
      %v9038 = vunpack.c.l.b16 %v8950
      %v9039 = vunpack.c.h.b16 %v8950
      %v9040 = vunpack.c.l.b16 %v8951
      %v9041 = vunpack.c.h.b16 %v8951
      %v9042 = vunpack.c.l.b16 %v8952
      %v9043 = vunpack.c.h.b16 %v8952
      %v9044 = vunpack.c.l.b16 %v8953
      %v9045 = vunpack.c.h.b16 %v8953
      %v9046 = vunpack.c.l.b16 %v8954
      %v9047 = vunpack.c.h.b16 %v8954
      %v9048 = vunpack.c.l.b16 %v8955
      %v9049 = vunpack.c.h.b16 %v8955
      %v9050 = vunpack.c.l.b16 %v8956
      %v9051 = vunpack.c.h.b16 %v8956
      %v9052 = vunpack.c.l.b16 %v8957
      %v9053 = vunpack.c.h.b16 %v8957
      %v9054 = vpack.c.b16 %v8992, %v8990
      %v9055 = vpack.c.b16 %v8993, %v8991
      %v9056 = vpack.c.b16 %v8996, %v8994
      %v9057 = vpack.c.b16 %v8997, %v8995
      %v9058 = vpack.c.b16 %v9000, %v8998
      %v9059 = vpack.c.b16 %v9001, %v8999
      %v9060 = vpack.c.b16 %v9004, %v9002
      %v9061 = vpack.c.b16 %v9005, %v9003
      %v9062 = vpack.c.b16 %v9008, %v9006
      %v9063 = vpack.c.b16 %v9009, %v9007
      %v9064 = vpack.c.b16 %v9012, %v9010
      %v9065 = vpack.c.b16 %v9013, %v9011
      %v9066 = vpack.c.b16 %v9016, %v9014
      %v9067 = vpack.c.b16 %v9017, %v9015
      %v9068 = vpack.c.b16 %v9020, %v9018
      %v9069 = vpack.c.b16 %v9021, %v9019
      %v9070 = vpack.c.b16 %v9024, %v9022
      %v9071 = vpack.c.b16 %v9025, %v9023
      %v9072 = vpack.c.b16 %v9028, %v9026
      %v9073 = vpack.c.b16 %v9029, %v9027
      %v9074 = vpack.c.b16 %v9032, %v9030
      %v9075 = vpack.c.b16 %v9033, %v9031
      %v9076 = vpack.c.b16 %v9036, %v9034
      %v9077 = vpack.c.b16 %v9037, %v9035
      %v9078 = vpack.c.b16 %v9040, %v9038
      %v9079 = vpack.c.b16 %v9041, %v9039
      %v9080 = vpack.c.b16 %v9044, %v9042
      %v9081 = vpack.c.b16 %v9045, %v9043
      %v9082 = vpack.c.b16 %v9048, %v9046
      %v9083 = vpack.c.b16 %v9049, %v9047
      %v9084 = vpack.c.b16 %v9052, %v9050
      %v9085 = vpack.c.b16 %v9053, %v9051
      %9118 = vmatprep.subr.bf16.mxu0 %v9069
      %9119 = vmatpush1.bf16.msra.mxu0 %v9068
      %9120 = vmatprep.subr.bf16.mxu0 %v9067
      %9121 = vmatpush1.bf16.msra.mxu0 %v9066
      %9122 = vmatprep.subr.bf16.mxu0 %v9065
      %9123 = vmatpush1.bf16.msra.mxu0 %v9064
      %9124 = vmatprep.subr.bf16.mxu0 %v9063
      %9125 = vmatpush1.bf16.msra.mxu0 %v9062
      %9126 = vmatprep.subr.bf16.mxu0 %v9061
      %9127 = vmatpush1.bf16.msra.mxu0 %v9060
      %9128 = vmatprep.subr.bf16.mxu0 %v9059
      %9129 = vmatpush1.bf16.msra.mxu0 %v9058
      %9130 = vmatprep.subr.bf16.mxu0 %v9057
      %9131 = vmatpush1.bf16.msra.mxu0 %v9056
      %9132 = vmatprep.subr.bf16.mxu0 %v9055
      %9133 = vmatpush1.bf16.msra.mxu0 %v9054
      %9134 = vmatprep.subr.bf16.mxu0 %v9085
      %9135 = vmatpush2.bf16.msra.mxu0 %v9084
      %9136 = vmatprep.subr.bf16.mxu0 %v9083
      %9137 = vmatpush2.bf16.msra.mxu0 %v9082
      %9138 = vmatprep.subr.bf16.mxu0 %v9081
      %9139 = vmatpush2.bf16.msra.mxu0 %v9080
      %9140 = vmatprep.subr.bf16.mxu0 %v9079
      %9141 = vmatpush2.bf16.msra.mxu0 %v9078
      %9142 = vmatprep.subr.bf16.mxu0 %v9077
      %9143 = vmatpush2.bf16.msra.mxu0 %v9076
      %9144 = vmatprep.subr.bf16.mxu0 %v9075
      %9145 = vmatpush2.bf16.msra.mxu0 %v9074
      %9146 = vmatprep.subr.bf16.mxu0 %v9073
      %9147 = vmatpush2.bf16.msra.mxu0 %v9072
      %9148 = vmatprep.subr.bf16.mxu0 %v9071
      %9149 = vmatpush2.bf16.msra.mxu0 %v9070
      %9150 = vmatprep.mubr.bf16.mxu0 %v8918
      %9151 = vmatmul.mubr.bf16.gmra.mxu0 %v8917
      %v9152 = vpop.f32.mrf.mxu0
      %v9153 = vadd.f32 0.0, %v9152
      %v9154 = vpop.f32.mrf.mxu0
      %v9155 = vadd.f32 0.0, %v9154
      %v9156 = vpop.f32.mrf.mxu0
      %v9157 = vadd.f32 0.0, %v9156
      %v9158 = vpop.f32.mrf.mxu0
      %v9159 = vadd.f32 0.0, %v9158
      %9160 = vmatprep.mubr.bf16.mxu0 %v8920
      %9161 = vmatmul.mubr.bf16.gmra.mxu0 %v8919
      %v9162 = vpop.f32.mrf.mxu0
      %v9163 = vadd.f32 0.0, %v9162
      %v9164 = vpop.f32.mrf.mxu0
      %v9165 = vadd.f32 0.0, %v9164
      %v9166 = vpop.f32.mrf.mxu0
      %v9167 = vadd.f32 0.0, %v9166
      %v9168 = vpop.f32.mrf.mxu0
      %v9169 = vadd.f32 0.0, %v9168
      %9170 = vmatprep.mubr.bf16.mxu0 %v8922
      %9171 = vmatmul.mubr.bf16.gmra.mxu0 %v8921
      %v9172 = vpop.f32.mrf.mxu0
      %v9173 = vadd.f32 0.0, %v9172
      %v9174 = vpop.f32.mrf.mxu0
      %v9175 = vadd.f32 0.0, %v9174
      %v9176 = vpop.f32.mrf.mxu0
      %v9177 = vadd.f32 0.0, %v9176
      %v9178 = vpop.f32.mrf.mxu0
      %v9179 = vadd.f32 0.0, %v9178
      %9180 = vmatprep.mubr.bf16.mxu0 %v8924
      %9181 = vmatmul.mubr.bf16.gmra.mxu0 %v8923
      %v9182 = vpop.f32.mrf.mxu0
      %v9183 = vadd.f32 0.0, %v9182
      %v9184 = vpop.f32.mrf.mxu0
      %v9185 = vadd.f32 0.0, %v9184
      %v9186 = vpop.f32.mrf.mxu0
      %v9187 = vadd.f32 0.0, %v9186
      %v9188 = vpop.f32.mrf.mxu0
      %v9189 = vadd.f32 0.0, %v9188
      %9190 = vdwg.mxu0
      %v9191 = vadd.f32 %v8773, %v9153
      %v9192 = vadd.f32 %v8774, %v9155
      %v9193 = vadd.f32 %v8775, %v9157
      %v9194 = vadd.f32 %v8776, %v9159
      %v9195 = vadd.f32 %v8777, %v9163
      %v9196 = vadd.f32 %v8778, %v9165
      %v9197 = vadd.f32 %v8779, %v9167
      %v9198 = vadd.f32 %v8780, %v9169
      %v9199 = vadd.f32 %v8781, %v9173
      %v9200 = vadd.f32 %v8782, %v9175
      %v9201 = vadd.f32 %v8783, %v9177
      %v9202 = vadd.f32 %v8784, %v9179
      %v9203 = vadd.f32 %v8785, %v9183
      %v9204 = vadd.f32 %v8786, %v9185
      %v9205 = vadd.f32 %v8787, %v9187
      %v9206 = vadd.f32 %v8788, %v9189
      %s9207 = scalar_lea.vmem [#allocation5], 64
      %v9208 = vld [vmem:[%s9207] sm:$0xff]
      %v9209 = vld [vmem:[%s9207 + $0x8] sm:$0xff]
      %v9210 = vld [vmem:[%s9207 + $0x20] sm:$0xff]
      %v9211 = vld [vmem:[%s9207 + $0x28] sm:$0xff]
      %v9212 = vld [vmem:[%s9207 + $0x40] sm:$0xff]
      %v9213 = vld [vmem:[%s9207 + $0x48] sm:$0xff]
      %v9214 = vld [vmem:[%s9207 + $0x60] sm:$0xff]
      %v9215 = vld [vmem:[%s9207 + $0x68] sm:$0xff]
      %v9216 = vld [vmem:[%s9207 + $0x80] sm:$0xff]
      %v9217 = vld [vmem:[%s9207 + $0x88] sm:$0xff]
      %v9218 = vld [vmem:[%s9207 + $0xa0] sm:$0xff]
      %v9219 = vld [vmem:[%s9207 + $0xa8] sm:$0xff]
      %v9220 = vld [vmem:[%s9207 + $0xc0] sm:$0xff]
      %v9221 = vld [vmem:[%s9207 + $0xc8] sm:$0xff]
      %v9222 = vld [vmem:[%s9207 + $0xe0] sm:$0xff]
      %v9223 = vld [vmem:[%s9207 + $0xe8] sm:$0xff]
      %v9224 = vpack.c.bf16 %v9210, %v9208
      %v9225 = vpack.c.bf16 %v9211, %v9209
      %v9226 = vpack.c.bf16 %v9214, %v9212
      %v9227 = vpack.c.bf16 %v9215, %v9213
      %v9228 = vpack.c.bf16 %v9218, %v9216
      %v9229 = vpack.c.bf16 %v9219, %v9217
      %v9230 = vpack.c.bf16 %v9222, %v9220
      %v9231 = vpack.c.bf16 %v9223, %v9221
      %s9232 = scalar_lea.vmem %s15, 1536
      %v9233 = vld [vmem:[%s9232] sm:$0xff]
      %v9234 = vld [vmem:[%s9232 + $0x8] sm:$0xff]
      %v9235 = vld [vmem:[%s9232 + $0x10] sm:$0xff]
      %v9236 = vld [vmem:[%s9232 + $0x18] sm:$0xff]
      %v9237 = vld [vmem:[%s9232 + $0x20] sm:$0xff]
      %v9238 = vld [vmem:[%s9232 + $0x28] sm:$0xff]
      %v9239 = vld [vmem:[%s9232 + $0x30] sm:$0xff]
      %v9240 = vld [vmem:[%s9232 + $0x38] sm:$0xff]
      %v9241 = vld [vmem:[%s9232 + $0x40] sm:$0xff]
      %v9242 = vld [vmem:[%s9232 + $0x48] sm:$0xff]
      %v9243 = vld [vmem:[%s9232 + $0x50] sm:$0xff]
      %v9244 = vld [vmem:[%s9232 + $0x58] sm:$0xff]
      %v9245 = vld [vmem:[%s9232 + $0x60] sm:$0xff]
      %v9246 = vld [vmem:[%s9232 + $0x68] sm:$0xff]
      %v9247 = vld [vmem:[%s9232 + $0x70] sm:$0xff]
      %v9248 = vld [vmem:[%s9232 + $0x78] sm:$0xff]
      %v9249 = vld [vmem:[%s9232 + $0x80] sm:$0xff]
      %v9250 = vld [vmem:[%s9232 + $0x88] sm:$0xff]
      %v9251 = vld [vmem:[%s9232 + $0x90] sm:$0xff]
      %v9252 = vld [vmem:[%s9232 + $0x98] sm:$0xff]
      %v9253 = vld [vmem:[%s9232 + $0xa0] sm:$0xff]
      %v9254 = vld [vmem:[%s9232 + $0xa8] sm:$0xff]
      %v9255 = vld [vmem:[%s9232 + $0xb0] sm:$0xff]
      %v9256 = vld [vmem:[%s9232 + $0xb8] sm:$0xff]
      %v9257 = vld [vmem:[%s9232 + $0xc0] sm:$0xff]
      %v9258 = vld [vmem:[%s9232 + $0xc8] sm:$0xff]
      %v9259 = vld [vmem:[%s9232 + $0xd0] sm:$0xff]
      %v9260 = vld [vmem:[%s9232 + $0xd8] sm:$0xff]
      %v9261 = vld [vmem:[%s9232 + $0xe0] sm:$0xff]
      %v9262 = vld [vmem:[%s9232 + $0xe8] sm:$0xff]
      %v9263 = vld [vmem:[%s9232 + $0xf0] sm:$0xff]
      %v9264 = vld [vmem:[%s9232 + $0xf8] sm:$0xff]
      %v9297 = vunpack.c.l.b16 %v9233
      %v9298 = vunpack.c.h.b16 %v9233
      %v9299 = vunpack.c.l.b16 %v9234
      %v9300 = vunpack.c.h.b16 %v9234
      %v9301 = vunpack.c.l.b16 %v9235
      %v9302 = vunpack.c.h.b16 %v9235
      %v9303 = vunpack.c.l.b16 %v9236
      %v9304 = vunpack.c.h.b16 %v9236
      %v9305 = vunpack.c.l.b16 %v9237
      %v9306 = vunpack.c.h.b16 %v9237
      %v9307 = vunpack.c.l.b16 %v9238
      %v9308 = vunpack.c.h.b16 %v9238
      %v9309 = vunpack.c.l.b16 %v9239
      %v9310 = vunpack.c.h.b16 %v9239
      %v9311 = vunpack.c.l.b16 %v9240
      %v9312 = vunpack.c.h.b16 %v9240
      %v9313 = vunpack.c.l.b16 %v9241
      %v9314 = vunpack.c.h.b16 %v9241
      %v9315 = vunpack.c.l.b16 %v9242
      %v9316 = vunpack.c.h.b16 %v9242
      %v9317 = vunpack.c.l.b16 %v9243
      %v9318 = vunpack.c.h.b16 %v9243
      %v9319 = vunpack.c.l.b16 %v9244
      %v9320 = vunpack.c.h.b16 %v9244
      %v9321 = vunpack.c.l.b16 %v9245
      %v9322 = vunpack.c.h.b16 %v9245
      %v9323 = vunpack.c.l.b16 %v9246
      %v9324 = vunpack.c.h.b16 %v9246
      %v9325 = vunpack.c.l.b16 %v9247
      %v9326 = vunpack.c.h.b16 %v9247
      %v9327 = vunpack.c.l.b16 %v9248
      %v9328 = vunpack.c.h.b16 %v9248
      %v9329 = vunpack.c.l.b16 %v9249
      %v9330 = vunpack.c.h.b16 %v9249
      %v9331 = vunpack.c.l.b16 %v9250
      %v9332 = vunpack.c.h.b16 %v9250
      %v9333 = vunpack.c.l.b16 %v9251
      %v9334 = vunpack.c.h.b16 %v9251
      %v9335 = vunpack.c.l.b16 %v9252
      %v9336 = vunpack.c.h.b16 %v9252
      %v9337 = vunpack.c.l.b16 %v9253
      %v9338 = vunpack.c.h.b16 %v9253
      %v9339 = vunpack.c.l.b16 %v9254
      %v9340 = vunpack.c.h.b16 %v9254
      %v9341 = vunpack.c.l.b16 %v9255
      %v9342 = vunpack.c.h.b16 %v9255
      %v9343 = vunpack.c.l.b16 %v9256
      %v9344 = vunpack.c.h.b16 %v9256
      %v9345 = vunpack.c.l.b16 %v9257
      %v9346 = vunpack.c.h.b16 %v9257
      %v9347 = vunpack.c.l.b16 %v9258
      %v9348 = vunpack.c.h.b16 %v9258
      %v9349 = vunpack.c.l.b16 %v9259
      %v9350 = vunpack.c.h.b16 %v9259
      %v9351 = vunpack.c.l.b16 %v9260
      %v9352 = vunpack.c.h.b16 %v9260
      %v9353 = vunpack.c.l.b16 %v9261
      %v9354 = vunpack.c.h.b16 %v9261
      %v9355 = vunpack.c.l.b16 %v9262
      %v9356 = vunpack.c.h.b16 %v9262
      %v9357 = vunpack.c.l.b16 %v9263
      %v9358 = vunpack.c.h.b16 %v9263
      %v9359 = vunpack.c.l.b16 %v9264
      %v9360 = vunpack.c.h.b16 %v9264
      %v9361 = vpack.c.b16 %v9299, %v9297
      %v9362 = vpack.c.b16 %v9300, %v9298
      %v9363 = vpack.c.b16 %v9303, %v9301
      %v9364 = vpack.c.b16 %v9304, %v9302
      %v9365 = vpack.c.b16 %v9307, %v9305
      %v9366 = vpack.c.b16 %v9308, %v9306
      %v9367 = vpack.c.b16 %v9311, %v9309
      %v9368 = vpack.c.b16 %v9312, %v9310
      %v9369 = vpack.c.b16 %v9315, %v9313
      %v9370 = vpack.c.b16 %v9316, %v9314
      %v9371 = vpack.c.b16 %v9319, %v9317
      %v9372 = vpack.c.b16 %v9320, %v9318
      %v9373 = vpack.c.b16 %v9323, %v9321
      %v9374 = vpack.c.b16 %v9324, %v9322
      %v9375 = vpack.c.b16 %v9327, %v9325
      %v9376 = vpack.c.b16 %v9328, %v9326
      %v9377 = vpack.c.b16 %v9331, %v9329
      %v9378 = vpack.c.b16 %v9332, %v9330
      %v9379 = vpack.c.b16 %v9335, %v9333
      %v9380 = vpack.c.b16 %v9336, %v9334
      %v9381 = vpack.c.b16 %v9339, %v9337
      %v9382 = vpack.c.b16 %v9340, %v9338
      %v9383 = vpack.c.b16 %v9343, %v9341
      %v9384 = vpack.c.b16 %v9344, %v9342
      %v9385 = vpack.c.b16 %v9347, %v9345
      %v9386 = vpack.c.b16 %v9348, %v9346
      %v9387 = vpack.c.b16 %v9351, %v9349
      %v9388 = vpack.c.b16 %v9352, %v9350
      %v9389 = vpack.c.b16 %v9355, %v9353
      %v9390 = vpack.c.b16 %v9356, %v9354
      %v9391 = vpack.c.b16 %v9359, %v9357
      %v9392 = vpack.c.b16 %v9360, %v9358
      %9425 = vmatprep.subr.bf16.mxu0 %v9376
      %9426 = vmatpush1.bf16.msra.mxu0 %v9375
      %9427 = vmatprep.subr.bf16.mxu0 %v9374
      %9428 = vmatpush1.bf16.msra.mxu0 %v9373
      %9429 = vmatprep.subr.bf16.mxu0 %v9372
      %9430 = vmatpush1.bf16.msra.mxu0 %v9371
      %9431 = vmatprep.subr.bf16.mxu0 %v9370
      %9432 = vmatpush1.bf16.msra.mxu0 %v9369
      %9433 = vmatprep.subr.bf16.mxu0 %v9368
      %9434 = vmatpush1.bf16.msra.mxu0 %v9367
      %9435 = vmatprep.subr.bf16.mxu0 %v9366
      %9436 = vmatpush1.bf16.msra.mxu0 %v9365
      %9437 = vmatprep.subr.bf16.mxu0 %v9364
      %9438 = vmatpush1.bf16.msra.mxu0 %v9363
      %9439 = vmatprep.subr.bf16.mxu0 %v9362
      %9440 = vmatpush1.bf16.msra.mxu0 %v9361
      %9441 = vmatprep.subr.bf16.mxu0 %v9392
      %9442 = vmatpush2.bf16.msra.mxu0 %v9391
      %9443 = vmatprep.subr.bf16.mxu0 %v9390
      %9444 = vmatpush2.bf16.msra.mxu0 %v9389
      %9445 = vmatprep.subr.bf16.mxu0 %v9388
      %9446 = vmatpush2.bf16.msra.mxu0 %v9387
      %9447 = vmatprep.subr.bf16.mxu0 %v9386
      %9448 = vmatpush2.bf16.msra.mxu0 %v9385
      %9449 = vmatprep.subr.bf16.mxu0 %v9384
      %9450 = vmatpush2.bf16.msra.mxu0 %v9383
      %9451 = vmatprep.subr.bf16.mxu0 %v9382
      %9452 = vmatpush2.bf16.msra.mxu0 %v9381
      %9453 = vmatprep.subr.bf16.mxu0 %v9380
      %9454 = vmatpush2.bf16.msra.mxu0 %v9379
      %9455 = vmatprep.subr.bf16.mxu0 %v9378
      %9456 = vmatpush2.bf16.msra.mxu0 %v9377
      %9457 = vmatprep.mubr.bf16.mxu0 %v9225
      %9458 = vmatmul.mubr.bf16.gmra.mxu0 %v9224
      %v9459 = vpop.f32.mrf.mxu0
      %v9460 = vadd.f32 0.0, %v9459
      %v9461 = vpop.f32.mrf.mxu0
      %v9462 = vadd.f32 0.0, %v9461
      %v9463 = vpop.f32.mrf.mxu0
      %v9464 = vadd.f32 0.0, %v9463
      %v9465 = vpop.f32.mrf.mxu0
      %v9466 = vadd.f32 0.0, %v9465
      %9467 = vmatprep.mubr.bf16.mxu0 %v9227
      %9468 = vmatmul.mubr.bf16.gmra.mxu0 %v9226
      %v9469 = vpop.f32.mrf.mxu0
      %v9470 = vadd.f32 0.0, %v9469
      %v9471 = vpop.f32.mrf.mxu0
      %v9472 = vadd.f32 0.0, %v9471
      %v9473 = vpop.f32.mrf.mxu0
      %v9474 = vadd.f32 0.0, %v9473
      %v9475 = vpop.f32.mrf.mxu0
      %v9476 = vadd.f32 0.0, %v9475
      %9477 = vmatprep.mubr.bf16.mxu0 %v9229
      %9478 = vmatmul.mubr.bf16.gmra.mxu0 %v9228
      %v9479 = vpop.f32.mrf.mxu0
      %v9480 = vadd.f32 0.0, %v9479
      %v9481 = vpop.f32.mrf.mxu0
      %v9482 = vadd.f32 0.0, %v9481
      %v9483 = vpop.f32.mrf.mxu0
      %v9484 = vadd.f32 0.0, %v9483
      %v9485 = vpop.f32.mrf.mxu0
      %v9486 = vadd.f32 0.0, %v9485
      %9487 = vmatprep.mubr.bf16.mxu0 %v9231
      %9488 = vmatmul.mubr.bf16.gmra.mxu0 %v9230
      %v9489 = vpop.f32.mrf.mxu0
      %v9490 = vadd.f32 0.0, %v9489
      %v9491 = vpop.f32.mrf.mxu0
      %v9492 = vadd.f32 0.0, %v9491
      %v9493 = vpop.f32.mrf.mxu0
      %v9494 = vadd.f32 0.0, %v9493
      %v9495 = vpop.f32.mrf.mxu0
      %v9496 = vadd.f32 0.0, %v9495
      %9497 = vdwg.mxu0
      %v9498 = vadd.f32 %v9191, %v9460
      %v9499 = vadd.f32 %v9192, %v9462
      %v9500 = vadd.f32 %v9193, %v9464
      %v9501 = vadd.f32 %v9194, %v9466
      %v9502 = vadd.f32 %v9195, %v9470
      %v9503 = vadd.f32 %v9196, %v9472
      %v9504 = vadd.f32 %v9197, %v9474
      %v9505 = vadd.f32 %v9198, %v9476
      %v9506 = vadd.f32 %v9199, %v9480
      %v9507 = vadd.f32 %v9200, %v9482
      %v9508 = vadd.f32 %v9201, %v9484
      %v9509 = vadd.f32 %v9202, %v9486
      %v9510 = vadd.f32 %v9203, %v9490
      %v9511 = vadd.f32 %v9204, %v9492
      %v9512 = vadd.f32 %v9205, %v9494
      %v9513 = vadd.f32 %v9206, %v9496
      %v9514 = vld [vmem:[%s9207] sm:$0xfe]
      %v9515 = vld [vmem:[%s9207 + $0x8] sm:$0xfe]
      %v9516 = vld [vmem:[%s9207 + $0x10] sm:$0x1]
      %v9517 = vld [vmem:[%s9207 + $0x18] sm:$0x1]
      %v9518 = vld [vmem:[%s9207 + $0x20] sm:$0xfe]
      %v9519 = vld [vmem:[%s9207 + $0x28] sm:$0xfe]
      %v9520 = vld [vmem:[%s9207 + $0x30] sm:$0x1]
      %v9521 = vld [vmem:[%s9207 + $0x38] sm:$0x1]
      %v9522 = vld [vmem:[%s9207 + $0x40] sm:$0xfe]
      %v9523 = vld [vmem:[%s9207 + $0x48] sm:$0xfe]
      %v9524 = vld [vmem:[%s9207 + $0x50] sm:$0x1]
      %v9525 = vld [vmem:[%s9207 + $0x58] sm:$0x1]
      %v9526 = vld [vmem:[%s9207 + $0x60] sm:$0xfe]
      %v9527 = vld [vmem:[%s9207 + $0x68] sm:$0xfe]
      %v9528 = vld [vmem:[%s9207 + $0x70] sm:$0x1]
      %v9529 = vld [vmem:[%s9207 + $0x78] sm:$0x1]
      %v9530 = vld [vmem:[%s9207 + $0x80] sm:$0xfe]
      %v9531 = vld [vmem:[%s9207 + $0x88] sm:$0xfe]
      %v9532 = vld [vmem:[%s9207 + $0x90] sm:$0x1]
      %v9533 = vld [vmem:[%s9207 + $0x98] sm:$0x1]
      %v9534 = vld [vmem:[%s9207 + $0xa0] sm:$0xfe]
      %v9535 = vld [vmem:[%s9207 + $0xa8] sm:$0xfe]
      %v9536 = vld [vmem:[%s9207 + $0xb0] sm:$0x1]
      %v9537 = vld [vmem:[%s9207 + $0xb8] sm:$0x1]
      %v9538 = vld [vmem:[%s9207 + $0xc0] sm:$0xfe]
      %v9539 = vld [vmem:[%s9207 + $0xc8] sm:$0xfe]
      %v9540 = vld [vmem:[%s9207 + $0xd0] sm:$0x1]
      %v9541 = vld [vmem:[%s9207 + $0xd8] sm:$0x1]
      %v9542 = vld [vmem:[%s9207 + $0xe0] sm:$0xfe]
      %v9543 = vld [vmem:[%s9207 + $0xe8] sm:$0xfe]
      %v9544 = vld [vmem:[%s9207 + $0xf0] sm:$0x1]
      %v9545 = vld [vmem:[%s9207 + $0xf8] sm:$0x1]
      %v9578 = vrot.slane %v9514, 1
      %v9579 = vrot.slane %v9516, 1
      %v9580 = vsel %vm7291, %v9578, %v9579
      %v9581 = vrot.slane %v9515, 1
      %v9582 = vrot.slane %v9517, 1
      %v9583 = vsel %vm7291, %v9581, %v9582
      %v9584 = vrot.slane %v9518, 1
      %v9585 = vrot.slane %v9520, 1
      %v9586 = vsel %vm7291, %v9584, %v9585
      %v9587 = vrot.slane %v9519, 1
      %v9588 = vrot.slane %v9521, 1
      %v9589 = vsel %vm7291, %v9587, %v9588
      %v9590 = vrot.slane %v9522, 1
      %v9591 = vrot.slane %v9524, 1
      %v9592 = vsel %vm7291, %v9590, %v9591
      %v9593 = vrot.slane %v9523, 1
      %v9594 = vrot.slane %v9525, 1
      %v9595 = vsel %vm7291, %v9593, %v9594
      %v9596 = vrot.slane %v9526, 1
      %v9597 = vrot.slane %v9528, 1
      %v9598 = vsel %vm7291, %v9596, %v9597
      %v9599 = vrot.slane %v9527, 1
      %v9600 = vrot.slane %v9529, 1
      %v9601 = vsel %vm7291, %v9599, %v9600
      %v9602 = vrot.slane %v9530, 1
      %v9603 = vrot.slane %v9532, 1
      %v9604 = vsel %vm7291, %v9602, %v9603
      %v9605 = vrot.slane %v9531, 1
      %v9606 = vrot.slane %v9533, 1
      %v9607 = vsel %vm7291, %v9605, %v9606
      %v9608 = vrot.slane %v9534, 1
      %v9609 = vrot.slane %v9536, 1
      %v9610 = vsel %vm7291, %v9608, %v9609
      %v9611 = vrot.slane %v9535, 1
      %v9612 = vrot.slane %v9537, 1
      %v9613 = vsel %vm7291, %v9611, %v9612
      %v9614 = vrot.slane %v9538, 1
      %v9615 = vrot.slane %v9540, 1
      %v9616 = vsel %vm7291, %v9614, %v9615
      %v9617 = vrot.slane %v9539, 1
      %v9618 = vrot.slane %v9541, 1
      %v9619 = vsel %vm7291, %v9617, %v9618
      %v9620 = vrot.slane %v9542, 1
      %v9621 = vrot.slane %v9544, 1
      %v9622 = vsel %vm7291, %v9620, %v9621
      %v9623 = vrot.slane %v9543, 1
      %v9624 = vrot.slane %v9545, 1
      %v9625 = vsel %vm7291, %v9623, %v9624
      %v9642 = vpack.c.bf16 %v9586, %v9580
      %v9643 = vpack.c.bf16 %v9589, %v9583
      %v9644 = vpack.c.bf16 %v9598, %v9592
      %v9645 = vpack.c.bf16 %v9601, %v9595
      %v9646 = vpack.c.bf16 %v9610, %v9604
      %v9647 = vpack.c.bf16 %v9613, %v9607
      %v9648 = vpack.c.bf16 %v9622, %v9616
      %v9649 = vpack.c.bf16 %v9625, %v9619
      %s9650 = scalar_lea.vmem %s15, 1792
      %v9651 = vld [vmem:[%s9650] sm:$0xff]
      %v9652 = vld [vmem:[%s9650 + $0x8] sm:$0xff]
      %v9653 = vld [vmem:[%s9650 + $0x10] sm:$0xff]
      %v9654 = vld [vmem:[%s9650 + $0x18] sm:$0xff]
      %v9655 = vld [vmem:[%s9650 + $0x20] sm:$0xff]
      %v9656 = vld [vmem:[%s9650 + $0x28] sm:$0xff]
      %v9657 = vld [vmem:[%s9650 + $0x30] sm:$0xff]
      %v9658 = vld [vmem:[%s9650 + $0x38] sm:$0xff]
      %v9659 = vld [vmem:[%s9650 + $0x40] sm:$0xff]
      %v9660 = vld [vmem:[%s9650 + $0x48] sm:$0xff]
      %v9661 = vld [vmem:[%s9650 + $0x50] sm:$0xff]
      %v9662 = vld [vmem:[%s9650 + $0x58] sm:$0xff]
      %v9663 = vld [vmem:[%s9650 + $0x60] sm:$0xff]
      %v9664 = vld [vmem:[%s9650 + $0x68] sm:$0xff]
      %v9665 = vld [vmem:[%s9650 + $0x70] sm:$0xff]
      %v9666 = vld [vmem:[%s9650 + $0x78] sm:$0xff]
      %v9667 = vld [vmem:[%s9650 + $0x80] sm:$0xff]
      %v9668 = vld [vmem:[%s9650 + $0x88] sm:$0xff]
      %v9669 = vld [vmem:[%s9650 + $0x90] sm:$0xff]
      %v9670 = vld [vmem:[%s9650 + $0x98] sm:$0xff]
      %v9671 = vld [vmem:[%s9650 + $0xa0] sm:$0xff]
      %v9672 = vld [vmem:[%s9650 + $0xa8] sm:$0xff]
      %v9673 = vld [vmem:[%s9650 + $0xb0] sm:$0xff]
      %v9674 = vld [vmem:[%s9650 + $0xb8] sm:$0xff]
      %v9675 = vld [vmem:[%s9650 + $0xc0] sm:$0xff]
      %v9676 = vld [vmem:[%s9650 + $0xc8] sm:$0xff]
      %v9677 = vld [vmem:[%s9650 + $0xd0] sm:$0xff]
      %v9678 = vld [vmem:[%s9650 + $0xd8] sm:$0xff]
      %v9679 = vld [vmem:[%s9650 + $0xe0] sm:$0xff]
      %v9680 = vld [vmem:[%s9650 + $0xe8] sm:$0xff]
      %v9681 = vld [vmem:[%s9650 + $0xf0] sm:$0xff]
      %v9682 = vld [vmem:[%s9650 + $0xf8] sm:$0xff]
      %v9715 = vunpack.c.l.b16 %v9651
      %v9716 = vunpack.c.h.b16 %v9651
      %v9717 = vunpack.c.l.b16 %v9652
      %v9718 = vunpack.c.h.b16 %v9652
      %v9719 = vunpack.c.l.b16 %v9653
      %v9720 = vunpack.c.h.b16 %v9653
      %v9721 = vunpack.c.l.b16 %v9654
      %v9722 = vunpack.c.h.b16 %v9654
      %v9723 = vunpack.c.l.b16 %v9655
      %v9724 = vunpack.c.h.b16 %v9655
      %v9725 = vunpack.c.l.b16 %v9656
      %v9726 = vunpack.c.h.b16 %v9656
      %v9727 = vunpack.c.l.b16 %v9657
      %v9728 = vunpack.c.h.b16 %v9657
      %v9729 = vunpack.c.l.b16 %v9658
      %v9730 = vunpack.c.h.b16 %v9658
      %v9731 = vunpack.c.l.b16 %v9659
      %v9732 = vunpack.c.h.b16 %v9659
      %v9733 = vunpack.c.l.b16 %v9660
      %v9734 = vunpack.c.h.b16 %v9660
      %v9735 = vunpack.c.l.b16 %v9661
      %v9736 = vunpack.c.h.b16 %v9661
      %v9737 = vunpack.c.l.b16 %v9662
      %v9738 = vunpack.c.h.b16 %v9662
      %v9739 = vunpack.c.l.b16 %v9663
      %v9740 = vunpack.c.h.b16 %v9663
      %v9741 = vunpack.c.l.b16 %v9664
      %v9742 = vunpack.c.h.b16 %v9664
      %v9743 = vunpack.c.l.b16 %v9665
      %v9744 = vunpack.c.h.b16 %v9665
      %v9745 = vunpack.c.l.b16 %v9666
      %v9746 = vunpack.c.h.b16 %v9666
      %v9747 = vunpack.c.l.b16 %v9667
      %v9748 = vunpack.c.h.b16 %v9667
      %v9749 = vunpack.c.l.b16 %v9668
      %v9750 = vunpack.c.h.b16 %v9668
      %v9751 = vunpack.c.l.b16 %v9669
      %v9752 = vunpack.c.h.b16 %v9669
      %v9753 = vunpack.c.l.b16 %v9670
      %v9754 = vunpack.c.h.b16 %v9670
      %v9755 = vunpack.c.l.b16 %v9671
      %v9756 = vunpack.c.h.b16 %v9671
      %v9757 = vunpack.c.l.b16 %v9672
      %v9758 = vunpack.c.h.b16 %v9672
      %v9759 = vunpack.c.l.b16 %v9673
      %v9760 = vunpack.c.h.b16 %v9673
      %v9761 = vunpack.c.l.b16 %v9674
      %v9762 = vunpack.c.h.b16 %v9674
      %v9763 = vunpack.c.l.b16 %v9675
      %v9764 = vunpack.c.h.b16 %v9675
      %v9765 = vunpack.c.l.b16 %v9676
      %v9766 = vunpack.c.h.b16 %v9676
      %v9767 = vunpack.c.l.b16 %v9677
      %v9768 = vunpack.c.h.b16 %v9677
      %v9769 = vunpack.c.l.b16 %v9678
      %v9770 = vunpack.c.h.b16 %v9678
      %v9771 = vunpack.c.l.b16 %v9679
      %v9772 = vunpack.c.h.b16 %v9679
      %v9773 = vunpack.c.l.b16 %v9680
      %v9774 = vunpack.c.h.b16 %v9680
      %v9775 = vunpack.c.l.b16 %v9681
      %v9776 = vunpack.c.h.b16 %v9681
      %v9777 = vunpack.c.l.b16 %v9682
      %v9778 = vunpack.c.h.b16 %v9682
      %v9779 = vpack.c.b16 %v9717, %v9715
      %v9780 = vpack.c.b16 %v9718, %v9716
      %v9781 = vpack.c.b16 %v9721, %v9719
      %v9782 = vpack.c.b16 %v9722, %v9720
      %v9783 = vpack.c.b16 %v9725, %v9723
      %v9784 = vpack.c.b16 %v9726, %v9724
      %v9785 = vpack.c.b16 %v9729, %v9727
      %v9786 = vpack.c.b16 %v9730, %v9728
      %v9787 = vpack.c.b16 %v9733, %v9731
      %v9788 = vpack.c.b16 %v9734, %v9732
      %v9789 = vpack.c.b16 %v9737, %v9735
      %v9790 = vpack.c.b16 %v9738, %v9736
      %v9791 = vpack.c.b16 %v9741, %v9739
      %v9792 = vpack.c.b16 %v9742, %v9740
      %v9793 = vpack.c.b16 %v9745, %v9743
      %v9794 = vpack.c.b16 %v9746, %v9744
      %v9795 = vpack.c.b16 %v9749, %v9747
      %v9796 = vpack.c.b16 %v9750, %v9748
      %v9797 = vpack.c.b16 %v9753, %v9751
      %v9798 = vpack.c.b16 %v9754, %v9752
      %v9799 = vpack.c.b16 %v9757, %v9755
      %v9800 = vpack.c.b16 %v9758, %v9756
      %v9801 = vpack.c.b16 %v9761, %v9759
      %v9802 = vpack.c.b16 %v9762, %v9760
      %v9803 = vpack.c.b16 %v9765, %v9763
      %v9804 = vpack.c.b16 %v9766, %v9764
      %v9805 = vpack.c.b16 %v9769, %v9767
      %v9806 = vpack.c.b16 %v9770, %v9768
      %v9807 = vpack.c.b16 %v9773, %v9771
      %v9808 = vpack.c.b16 %v9774, %v9772
      %v9809 = vpack.c.b16 %v9777, %v9775
      %v9810 = vpack.c.b16 %v9778, %v9776
      %9843 = vmatprep.subr.bf16.mxu0 %v9794
      %9844 = vmatpush1.bf16.msra.mxu0 %v9793
      %9845 = vmatprep.subr.bf16.mxu0 %v9792
      %9846 = vmatpush1.bf16.msra.mxu0 %v9791
      %9847 = vmatprep.subr.bf16.mxu0 %v9790
      %9848 = vmatpush1.bf16.msra.mxu0 %v9789
      %9849 = vmatprep.subr.bf16.mxu0 %v9788
      %9850 = vmatpush1.bf16.msra.mxu0 %v9787
      %9851 = vmatprep.subr.bf16.mxu0 %v9786
      %9852 = vmatpush1.bf16.msra.mxu0 %v9785
      %9853 = vmatprep.subr.bf16.mxu0 %v9784
      %9854 = vmatpush1.bf16.msra.mxu0 %v9783
      %9855 = vmatprep.subr.bf16.mxu0 %v9782
      %9856 = vmatpush1.bf16.msra.mxu0 %v9781
      %9857 = vmatprep.subr.bf16.mxu0 %v9780
      %9858 = vmatpush1.bf16.msra.mxu0 %v9779
      %9859 = vmatprep.subr.bf16.mxu0 %v9810
      %9860 = vmatpush2.bf16.msra.mxu0 %v9809
      %9861 = vmatprep.subr.bf16.mxu0 %v9808
      %9862 = vmatpush2.bf16.msra.mxu0 %v9807
      %9863 = vmatprep.subr.bf16.mxu0 %v9806
      %9864 = vmatpush2.bf16.msra.mxu0 %v9805
      %9865 = vmatprep.subr.bf16.mxu0 %v9804
      %9866 = vmatpush2.bf16.msra.mxu0 %v9803
      %9867 = vmatprep.subr.bf16.mxu0 %v9802
      %9868 = vmatpush2.bf16.msra.mxu0 %v9801
      %9869 = vmatprep.subr.bf16.mxu0 %v9800
      %9870 = vmatpush2.bf16.msra.mxu0 %v9799
      %9871 = vmatprep.subr.bf16.mxu0 %v9798
      %9872 = vmatpush2.bf16.msra.mxu0 %v9797
      %9873 = vmatprep.subr.bf16.mxu0 %v9796
      %9874 = vmatpush2.bf16.msra.mxu0 %v9795
      %9875 = vmatprep.mubr.bf16.mxu0 %v9643
      %9876 = vmatmul.mubr.bf16.gmra.mxu0 %v9642
      %v9877 = vpop.f32.mrf.mxu0
      %v9878 = vadd.f32 0.0, %v9877
      %v9879 = vpop.f32.mrf.mxu0
      %v9880 = vadd.f32 0.0, %v9879
      %v9881 = vpop.f32.mrf.mxu0
      %v9882 = vadd.f32 0.0, %v9881
      %v9883 = vpop.f32.mrf.mxu0
      %v9884 = vadd.f32 0.0, %v9883
      %9885 = vmatprep.mubr.bf16.mxu0 %v9645
      %9886 = vmatmul.mubr.bf16.gmra.mxu0 %v9644
      %v9887 = vpop.f32.mrf.mxu0
      %v9888 = vadd.f32 0.0, %v9887
      %v9889 = vpop.f32.mrf.mxu0
      %v9890 = vadd.f32 0.0, %v9889
      %v9891 = vpop.f32.mrf.mxu0
      %v9892 = vadd.f32 0.0, %v9891
      %v9893 = vpop.f32.mrf.mxu0
      %v9894 = vadd.f32 0.0, %v9893
      %9895 = vmatprep.mubr.bf16.mxu0 %v9647
      %9896 = vmatmul.mubr.bf16.gmra.mxu0 %v9646
      %v9897 = vpop.f32.mrf.mxu0
      %v9898 = vadd.f32 0.0, %v9897
      %v9899 = vpop.f32.mrf.mxu0
      %v9900 = vadd.f32 0.0, %v9899
      %v9901 = vpop.f32.mrf.mxu0
      %v9902 = vadd.f32 0.0, %v9901
      %v9903 = vpop.f32.mrf.mxu0
      %v9904 = vadd.f32 0.0, %v9903
      %9905 = vmatprep.mubr.bf16.mxu0 %v9649
      %9906 = vmatmul.mubr.bf16.gmra.mxu0 %v9648
      %v9907 = vpop.f32.mrf.mxu0
      %v9908 = vadd.f32 0.0, %v9907
      %v9909 = vpop.f32.mrf.mxu0
      %v9910 = vadd.f32 0.0, %v9909
      %v9911 = vpop.f32.mrf.mxu0
      %v9912 = vadd.f32 0.0, %v9911
      %v9913 = vpop.f32.mrf.mxu0
      %v9914 = vadd.f32 0.0, %v9913
      %9915 = vdwg.mxu0
      %v9916 = vadd.f32 %v9498, %v9878
      %v9917 = vadd.f32 %v9499, %v9880
      %v9918 = vadd.f32 %v9500, %v9882
      %v9919 = vadd.f32 %v9501, %v9884
      %v9920 = vadd.f32 %v9502, %v9888
      %v9921 = vadd.f32 %v9503, %v9890
      %v9922 = vadd.f32 %v9504, %v9892
      %v9923 = vadd.f32 %v9505, %v9894
      %v9924 = vadd.f32 %v9506, %v9898
      %v9925 = vadd.f32 %v9507, %v9900
      %v9926 = vadd.f32 %v9508, %v9902
      %v9927 = vadd.f32 %v9509, %v9904
      %v9928 = vadd.f32 %v9510, %v9908
      %v9929 = vadd.f32 %v9511, %v9910
      %v9930 = vadd.f32 %v9512, %v9912
      %v9931 = vadd.f32 %v9513, %v9914
      %v9932 = vld [vmem:[%s9207] sm:$0xfc]
      %v9933 = vld [vmem:[%s9207 + $0x8] sm:$0xfc]
      %v9934 = vld [vmem:[%s9207 + $0x10] sm:$0x3]
      %v9935 = vld [vmem:[%s9207 + $0x18] sm:$0x3]
      %v9936 = vld [vmem:[%s9207 + $0x20] sm:$0xfc]
      %v9937 = vld [vmem:[%s9207 + $0x28] sm:$0xfc]
      %v9938 = vld [vmem:[%s9207 + $0x30] sm:$0x3]
      %v9939 = vld [vmem:[%s9207 + $0x38] sm:$0x3]
      %v9940 = vld [vmem:[%s9207 + $0x40] sm:$0xfc]
      %v9941 = vld [vmem:[%s9207 + $0x48] sm:$0xfc]
      %v9942 = vld [vmem:[%s9207 + $0x50] sm:$0x3]
      %v9943 = vld [vmem:[%s9207 + $0x58] sm:$0x3]
      %v9944 = vld [vmem:[%s9207 + $0x60] sm:$0xfc]
      %v9945 = vld [vmem:[%s9207 + $0x68] sm:$0xfc]
      %v9946 = vld [vmem:[%s9207 + $0x70] sm:$0x3]
      %v9947 = vld [vmem:[%s9207 + $0x78] sm:$0x3]
      %v9948 = vld [vmem:[%s9207 + $0x80] sm:$0xfc]
      %v9949 = vld [vmem:[%s9207 + $0x88] sm:$0xfc]
      %v9950 = vld [vmem:[%s9207 + $0x90] sm:$0x3]
      %v9951 = vld [vmem:[%s9207 + $0x98] sm:$0x3]
      %v9952 = vld [vmem:[%s9207 + $0xa0] sm:$0xfc]
      %v9953 = vld [vmem:[%s9207 + $0xa8] sm:$0xfc]
      %v9954 = vld [vmem:[%s9207 + $0xb0] sm:$0x3]
      %v9955 = vld [vmem:[%s9207 + $0xb8] sm:$0x3]
      %v9956 = vld [vmem:[%s9207 + $0xc0] sm:$0xfc]
      %v9957 = vld [vmem:[%s9207 + $0xc8] sm:$0xfc]
      %v9958 = vld [vmem:[%s9207 + $0xd0] sm:$0x3]
      %v9959 = vld [vmem:[%s9207 + $0xd8] sm:$0x3]
      %v9960 = vld [vmem:[%s9207 + $0xe0] sm:$0xfc]
      %v9961 = vld [vmem:[%s9207 + $0xe8] sm:$0xfc]
      %v9962 = vld [vmem:[%s9207 + $0xf0] sm:$0x3]
      %v9963 = vld [vmem:[%s9207 + $0xf8] sm:$0x3]
      %v9996 = vrot.slane %v9932, 2
      %v9997 = vrot.slane %v9934, 2
      %v9998 = vsel %vm7710, %v9996, %v9997
      %v9999 = vrot.slane %v9933, 2
      %v10000 = vrot.slane %v9935, 2
      %v10001 = vsel %vm7710, %v9999, %v10000
      %v10002 = vrot.slane %v9936, 2
      %v10003 = vrot.slane %v9938, 2
      %v10004 = vsel %vm7710, %v10002, %v10003
      %v10005 = vrot.slane %v9937, 2
      %v10006 = vrot.slane %v9939, 2
      %v10007 = vsel %vm7710, %v10005, %v10006
      %v10008 = vrot.slane %v9940, 2
      %v10009 = vrot.slane %v9942, 2
      %v10010 = vsel %vm7710, %v10008, %v10009
      %v10011 = vrot.slane %v9941, 2
      %v10012 = vrot.slane %v9943, 2
      %v10013 = vsel %vm7710, %v10011, %v10012
      %v10014 = vrot.slane %v9944, 2
      %v10015 = vrot.slane %v9946, 2
      %v10016 = vsel %vm7710, %v10014, %v10015
      %v10017 = vrot.slane %v9945, 2
      %v10018 = vrot.slane %v9947, 2
      %v10019 = vsel %vm7710, %v10017, %v10018
      %v10020 = vrot.slane %v9948, 2
      %v10021 = vrot.slane %v9950, 2
      %v10022 = vsel %vm7710, %v10020, %v10021
      %v10023 = vrot.slane %v9949, 2
      %v10024 = vrot.slane %v9951, 2
      %v10025 = vsel %vm7710, %v10023, %v10024
      %v10026 = vrot.slane %v9952, 2
      %v10027 = vrot.slane %v9954, 2
      %v10028 = vsel %vm7710, %v10026, %v10027
      %v10029 = vrot.slane %v9953, 2
      %v10030 = vrot.slane %v9955, 2
      %v10031 = vsel %vm7710, %v10029, %v10030
      %v10032 = vrot.slane %v9956, 2
      %v10033 = vrot.slane %v9958, 2
      %v10034 = vsel %vm7710, %v10032, %v10033
      %v10035 = vrot.slane %v9957, 2
      %v10036 = vrot.slane %v9959, 2
      %v10037 = vsel %vm7710, %v10035, %v10036
      %v10038 = vrot.slane %v9960, 2
      %v10039 = vrot.slane %v9962, 2
      %v10040 = vsel %vm7710, %v10038, %v10039
      %v10041 = vrot.slane %v9961, 2
      %v10042 = vrot.slane %v9963, 2
      %v10043 = vsel %vm7710, %v10041, %v10042
      %v10060 = vpack.c.bf16 %v10004, %v9998
      %v10061 = vpack.c.bf16 %v10007, %v10001
      %v10062 = vpack.c.bf16 %v10016, %v10010
      %v10063 = vpack.c.bf16 %v10019, %v10013
      %v10064 = vpack.c.bf16 %v10028, %v10022
      %v10065 = vpack.c.bf16 %v10031, %v10025
      %v10066 = vpack.c.bf16 %v10040, %v10034
      %v10067 = vpack.c.bf16 %v10043, %v10037
      %s10068 = scalar_lea.vmem %s15, 2048
      %v10069 = vld [vmem:[%s10068] sm:$0xff]
      %v10070 = vld [vmem:[%s10068 + $0x8] sm:$0xff]
      %v10071 = vld [vmem:[%s10068 + $0x10] sm:$0xff]
      %v10072 = vld [vmem:[%s10068 + $0x18] sm:$0xff]
      %v10073 = vld [vmem:[%s10068 + $0x20] sm:$0xff]
      %v10074 = vld [vmem:[%s10068 + $0x28] sm:$0xff]
      %v10075 = vld [vmem:[%s10068 + $0x30] sm:$0xff]
      %v10076 = vld [vmem:[%s10068 + $0x38] sm:$0xff]
      %v10077 = vld [vmem:[%s10068 + $0x40] sm:$0xff]
      %v10078 = vld [vmem:[%s10068 + $0x48] sm:$0xff]
      %v10079 = vld [vmem:[%s10068 + $0x50] sm:$0xff]
      %v10080 = vld [vmem:[%s10068 + $0x58] sm:$0xff]
      %v10081 = vld [vmem:[%s10068 + $0x60] sm:$0xff]
      %v10082 = vld [vmem:[%s10068 + $0x68] sm:$0xff]
      %v10083 = vld [vmem:[%s10068 + $0x70] sm:$0xff]
      %v10084 = vld [vmem:[%s10068 + $0x78] sm:$0xff]
      %v10085 = vld [vmem:[%s10068 + $0x80] sm:$0xff]
      %v10086 = vld [vmem:[%s10068 + $0x88] sm:$0xff]
      %v10087 = vld [vmem:[%s10068 + $0x90] sm:$0xff]
      %v10088 = vld [vmem:[%s10068 + $0x98] sm:$0xff]
      %v10089 = vld [vmem:[%s10068 + $0xa0] sm:$0xff]
      %v10090 = vld [vmem:[%s10068 + $0xa8] sm:$0xff]
      %v10091 = vld [vmem:[%s10068 + $0xb0] sm:$0xff]
      %v10092 = vld [vmem:[%s10068 + $0xb8] sm:$0xff]
      %v10093 = vld [vmem:[%s10068 + $0xc0] sm:$0xff]
      %v10094 = vld [vmem:[%s10068 + $0xc8] sm:$0xff]
      %v10095 = vld [vmem:[%s10068 + $0xd0] sm:$0xff]
      %v10096 = vld [vmem:[%s10068 + $0xd8] sm:$0xff]
      %v10097 = vld [vmem:[%s10068 + $0xe0] sm:$0xff]
      %v10098 = vld [vmem:[%s10068 + $0xe8] sm:$0xff]
      %v10099 = vld [vmem:[%s10068 + $0xf0] sm:$0xff]
      %v10100 = vld [vmem:[%s10068 + $0xf8] sm:$0xff]
      %v10133 = vunpack.c.l.b16 %v10069
      %v10134 = vunpack.c.h.b16 %v10069
      %v10135 = vunpack.c.l.b16 %v10070
      %v10136 = vunpack.c.h.b16 %v10070
      %v10137 = vunpack.c.l.b16 %v10071
      %v10138 = vunpack.c.h.b16 %v10071
      %v10139 = vunpack.c.l.b16 %v10072
      %v10140 = vunpack.c.h.b16 %v10072
      %v10141 = vunpack.c.l.b16 %v10073
      %v10142 = vunpack.c.h.b16 %v10073
      %v10143 = vunpack.c.l.b16 %v10074
      %v10144 = vunpack.c.h.b16 %v10074
      %v10145 = vunpack.c.l.b16 %v10075
      %v10146 = vunpack.c.h.b16 %v10075
      %v10147 = vunpack.c.l.b16 %v10076
      %v10148 = vunpack.c.h.b16 %v10076
      %v10149 = vunpack.c.l.b16 %v10077
      %v10150 = vunpack.c.h.b16 %v10077
      %v10151 = vunpack.c.l.b16 %v10078
      %v10152 = vunpack.c.h.b16 %v10078
      %v10153 = vunpack.c.l.b16 %v10079
      %v10154 = vunpack.c.h.b16 %v10079
      %v10155 = vunpack.c.l.b16 %v10080
      %v10156 = vunpack.c.h.b16 %v10080
      %v10157 = vunpack.c.l.b16 %v10081
      %v10158 = vunpack.c.h.b16 %v10081
      %v10159 = vunpack.c.l.b16 %v10082
      %v10160 = vunpack.c.h.b16 %v10082
      %v10161 = vunpack.c.l.b16 %v10083
      %v10162 = vunpack.c.h.b16 %v10083
      %v10163 = vunpack.c.l.b16 %v10084
      %v10164 = vunpack.c.h.b16 %v10084
      %v10165 = vunpack.c.l.b16 %v10085
      %v10166 = vunpack.c.h.b16 %v10085
      %v10167 = vunpack.c.l.b16 %v10086
      %v10168 = vunpack.c.h.b16 %v10086
      %v10169 = vunpack.c.l.b16 %v10087
      %v10170 = vunpack.c.h.b16 %v10087
      %v10171 = vunpack.c.l.b16 %v10088
      %v10172 = vunpack.c.h.b16 %v10088
      %v10173 = vunpack.c.l.b16 %v10089
      %v10174 = vunpack.c.h.b16 %v10089
      %v10175 = vunpack.c.l.b16 %v10090
      %v10176 = vunpack.c.h.b16 %v10090
      %v10177 = vunpack.c.l.b16 %v10091
      %v10178 = vunpack.c.h.b16 %v10091
      %v10179 = vunpack.c.l.b16 %v10092
      %v10180 = vunpack.c.h.b16 %v10092
      %v10181 = vunpack.c.l.b16 %v10093
      %v10182 = vunpack.c.h.b16 %v10093
      %v10183 = vunpack.c.l.b16 %v10094
      %v10184 = vunpack.c.h.b16 %v10094
      %v10185 = vunpack.c.l.b16 %v10095
      %v10186 = vunpack.c.h.b16 %v10095
      %v10187 = vunpack.c.l.b16 %v10096
      %v10188 = vunpack.c.h.b16 %v10096
      %v10189 = vunpack.c.l.b16 %v10097
      %v10190 = vunpack.c.h.b16 %v10097
      %v10191 = vunpack.c.l.b16 %v10098
      %v10192 = vunpack.c.h.b16 %v10098
      %v10193 = vunpack.c.l.b16 %v10099
      %v10194 = vunpack.c.h.b16 %v10099
      %v10195 = vunpack.c.l.b16 %v10100
      %v10196 = vunpack.c.h.b16 %v10100
      %v10197 = vpack.c.b16 %v10135, %v10133
      %v10198 = vpack.c.b16 %v10136, %v10134
      %v10199 = vpack.c.b16 %v10139, %v10137
      %v10200 = vpack.c.b16 %v10140, %v10138
      %v10201 = vpack.c.b16 %v10143, %v10141
      %v10202 = vpack.c.b16 %v10144, %v10142
      %v10203 = vpack.c.b16 %v10147, %v10145
      %v10204 = vpack.c.b16 %v10148, %v10146
      %v10205 = vpack.c.b16 %v10151, %v10149
      %v10206 = vpack.c.b16 %v10152, %v10150
      %v10207 = vpack.c.b16 %v10155, %v10153
      %v10208 = vpack.c.b16 %v10156, %v10154
      %v10209 = vpack.c.b16 %v10159, %v10157
      %v10210 = vpack.c.b16 %v10160, %v10158
      %v10211 = vpack.c.b16 %v10163, %v10161
      %v10212 = vpack.c.b16 %v10164, %v10162
      %v10213 = vpack.c.b16 %v10167, %v10165
      %v10214 = vpack.c.b16 %v10168, %v10166
      %v10215 = vpack.c.b16 %v10171, %v10169
      %v10216 = vpack.c.b16 %v10172, %v10170
      %v10217 = vpack.c.b16 %v10175, %v10173
      %v10218 = vpack.c.b16 %v10176, %v10174
      %v10219 = vpack.c.b16 %v10179, %v10177
      %v10220 = vpack.c.b16 %v10180, %v10178
      %v10221 = vpack.c.b16 %v10183, %v10181
      %v10222 = vpack.c.b16 %v10184, %v10182
      %v10223 = vpack.c.b16 %v10187, %v10185
      %v10224 = vpack.c.b16 %v10188, %v10186
      %v10225 = vpack.c.b16 %v10191, %v10189
      %v10226 = vpack.c.b16 %v10192, %v10190
      %v10227 = vpack.c.b16 %v10195, %v10193
      %v10228 = vpack.c.b16 %v10196, %v10194
      %10261 = vmatprep.subr.bf16.mxu0 %v10212
      %10262 = vmatpush1.bf16.msra.mxu0 %v10211
      %10263 = vmatprep.subr.bf16.mxu0 %v10210
      %10264 = vmatpush1.bf16.msra.mxu0 %v10209
      %10265 = vmatprep.subr.bf16.mxu0 %v10208
      %10266 = vmatpush1.bf16.msra.mxu0 %v10207
      %10267 = vmatprep.subr.bf16.mxu0 %v10206
      %10268 = vmatpush1.bf16.msra.mxu0 %v10205
      %10269 = vmatprep.subr.bf16.mxu0 %v10204
      %10270 = vmatpush1.bf16.msra.mxu0 %v10203
      %10271 = vmatprep.subr.bf16.mxu0 %v10202
      %10272 = vmatpush1.bf16.msra.mxu0 %v10201
      %10273 = vmatprep.subr.bf16.mxu0 %v10200
      %10274 = vmatpush1.bf16.msra.mxu0 %v10199
      %10275 = vmatprep.subr.bf16.mxu0 %v10198
      %10276 = vmatpush1.bf16.msra.mxu0 %v10197
      %10277 = vmatprep.subr.bf16.mxu0 %v10228
      %10278 = vmatpush2.bf16.msra.mxu0 %v10227
      %10279 = vmatprep.subr.bf16.mxu0 %v10226
      %10280 = vmatpush2.bf16.msra.mxu0 %v10225
      %10281 = vmatprep.subr.bf16.mxu0 %v10224
      %10282 = vmatpush2.bf16.msra.mxu0 %v10223
      %10283 = vmatprep.subr.bf16.mxu0 %v10222
      %10284 = vmatpush2.bf16.msra.mxu0 %v10221
      %10285 = vmatprep.subr.bf16.mxu0 %v10220
      %10286 = vmatpush2.bf16.msra.mxu0 %v10219
      %10287 = vmatprep.subr.bf16.mxu0 %v10218
      %10288 = vmatpush2.bf16.msra.mxu0 %v10217
      %10289 = vmatprep.subr.bf16.mxu0 %v10216
      %10290 = vmatpush2.bf16.msra.mxu0 %v10215
      %10291 = vmatprep.subr.bf16.mxu0 %v10214
      %10292 = vmatpush2.bf16.msra.mxu0 %v10213
      %10293 = vmatprep.mubr.bf16.mxu0 %v10061
      %10294 = vmatmul.mubr.bf16.gmra.mxu0 %v10060
      %v10295 = vpop.f32.mrf.mxu0
      %v10296 = vadd.f32 0.0, %v10295
      %v10297 = vpop.f32.mrf.mxu0
      %v10298 = vadd.f32 0.0, %v10297
      %v10299 = vpop.f32.mrf.mxu0
      %v10300 = vadd.f32 0.0, %v10299
      %v10301 = vpop.f32.mrf.mxu0
      %v10302 = vadd.f32 0.0, %v10301
      %10303 = vmatprep.mubr.bf16.mxu0 %v10063
      %10304 = vmatmul.mubr.bf16.gmra.mxu0 %v10062
      %v10305 = vpop.f32.mrf.mxu0
      %v10306 = vadd.f32 0.0, %v10305
      %v10307 = vpop.f32.mrf.mxu0
      %v10308 = vadd.f32 0.0, %v10307
      %v10309 = vpop.f32.mrf.mxu0
      %v10310 = vadd.f32 0.0, %v10309
      %v10311 = vpop.f32.mrf.mxu0
      %v10312 = vadd.f32 0.0, %v10311
      %10313 = vmatprep.mubr.bf16.mxu0 %v10065
      %10314 = vmatmul.mubr.bf16.gmra.mxu0 %v10064
      %v10315 = vpop.f32.mrf.mxu0
      %v10316 = vadd.f32 0.0, %v10315
      %v10317 = vpop.f32.mrf.mxu0
      %v10318 = vadd.f32 0.0, %v10317
      %v10319 = vpop.f32.mrf.mxu0
      %v10320 = vadd.f32 0.0, %v10319
      %v10321 = vpop.f32.mrf.mxu0
      %v10322 = vadd.f32 0.0, %v10321
      %10323 = vmatprep.mubr.bf16.mxu0 %v10067
      %10324 = vmatmul.mubr.bf16.gmra.mxu0 %v10066
      %v10325 = vpop.f32.mrf.mxu0
      %v10326 = vadd.f32 0.0, %v10325
      %v10327 = vpop.f32.mrf.mxu0
      %v10328 = vadd.f32 0.0, %v10327
      %v10329 = vpop.f32.mrf.mxu0
      %v10330 = vadd.f32 0.0, %v10329
      %v10331 = vpop.f32.mrf.mxu0
      %v10332 = vadd.f32 0.0, %v10331
      %10333 = vdwg.mxu0
      %v10334 = vadd.f32 %v9916, %v10296
      %v10335 = vadd.f32 %v9917, %v10298
      %v10336 = vadd.f32 %v9918, %v10300
      %v10337 = vadd.f32 %v9919, %v10302
      %v10338 = vadd.f32 %v9920, %v10306
      %v10339 = vadd.f32 %v9921, %v10308
      %v10340 = vadd.f32 %v9922, %v10310
      %v10341 = vadd.f32 %v9923, %v10312
      %v10342 = vadd.f32 %v9924, %v10316
      %v10343 = vadd.f32 %v9925, %v10318
      %v10344 = vadd.f32 %v9926, %v10320
      %v10345 = vadd.f32 %v9927, %v10322
      %v10346 = vadd.f32 %v9928, %v10326
      %v10347 = vadd.f32 %v9929, %v10328
      %v10348 = vadd.f32 %v9930, %v10330
      %v10349 = vadd.f32 %v9931, %v10332
      %10350 = vst [vmem:[%s548] sm:$0xff] %v10334
      %vm10351 = vcmask 523264
      %10352 = vst.msk [vmem:[%s548 + $0x8] sm:$0xff] %vm10351, %v10335
      %10353 = vst [vmem:[%s548 + $0x10] sm:$0xff] %v10336
      %10354 = vst.msk [vmem:[%s548 + $0x18] sm:$0xff] %vm10351, %v10337
      %10355 = vst [vmem:[%s548 + $0x20] sm:$0xff] %v10338
      %10356 = vst.msk [vmem:[%s548 + $0x28] sm:$0xff] %vm10351, %v10339
      %10357 = vst [vmem:[%s548 + $0x30] sm:$0xff] %v10340
      %10358 = vst.msk [vmem:[%s548 + $0x38] sm:$0xff] %vm10351, %v10341
      %10359 = vst [vmem:[%s548 + $0x40] sm:$0xff] %v10342
      %10360 = vst.msk [vmem:[%s548 + $0x48] sm:$0xff] %vm10351, %v10343
      %10361 = vst [vmem:[%s548 + $0x50] sm:$0xff] %v10344
      %10362 = vst.msk [vmem:[%s548 + $0x58] sm:$0xff] %vm10351, %v10345
      %10363 = vst [vmem:[%s548 + $0x60] sm:$0xff] %v10346
      %10364 = vst.msk [vmem:[%s548 + $0x68] sm:$0xff] %vm10351, %v10347
      %10365 = vst [vmem:[%s548 + $0x70] sm:$0xff] %v10348
      %10366 = vst.msk [vmem:[%s548 + $0x78] sm:$0xff] %vm10351, %v10349
      %p10367 = scmp.lt.s32.totalorder %s28, 1
      %s10368 = scalar_select %p10367, %s28, 1
      %s10369 = smul.addr %s10368, 16
      %s10370 = smul.addr %s10369, 8
      %s10371 = scalar_lea.vmem %s17, %s10370
      // Predicated region
      $region89: #{_lambda_.1} parent=87 // pred_check
        %p10372 = pneg %p408
      $region90: #{_lambda_.1} parent=87 // pred_check_branch
        %10374 = sbr.rel (%p10372) target = $region92
      $region91: #{_lambda_.1} parent=87 // pred_region
        _
      $region92: #{_lambda_.1} parent=87 // pred_fallthru
        _
    $region88: #{_lambda_.1} parent=5 // pred_fallthru
      _
    %p10375 = scmp.le.s32.totalorder 2, %s23
    // Predicated region
    $region93: #{_lambda_.1} parent=5 // pred_check
      %p10376 = pneg %p10375
    $region94: #{_lambda_.1} parent=5 // pred_check_branch
      %10378 = sbr.rel (%p10376) target = $region96
    $region95: #{_lambda_.1} parent=5 // pred_region
      %s10379 = ssub.s32 %s23, 2
      // Predicated region
      $region97: #{_lambda_.1} parent=95 // pred_check
        %p10380 = pneg %p414
      $region98: #{_lambda_.1} parent=95 // pred_check_branch
        %10382 = sbr.rel (%p10380) target = $region100
      $region99: #{_lambda_.1} parent=95 // pred_region
        %p10383 = scmp.lt.s32.totalorder %s29, 1
        %s10384 = scalar_select %p10383, %s29, 1
        %s10385 = smul.addr %s10384, 16
        %s10386 = smul.addr %s10385, 8
        %s10387 = scalar_lea.vmem %s17, %s10386
      $region100: #{_lambda_.1} parent=95 // pred_fallthru
        _
    $region96: #{_lambda_.1} parent=5 // pred_fallthru
      _
  $region6: #{_lambda_.1} parent=0 // loop_footer
    %s27 = sadd.s32 1, %s23
  $region7: #{_lambda_.1} parent=0 // loop_footer_branch
    %22 = sbr.rel target = $region3
  $region8: #{_lambda_.1} parent=0 // loop_exit
    _

</llo_original>
